<compile_context>
chip_gen: v6e
topology: v6e:2x2x1
jax: 0.10.0
libtpu: 0.0.40
codegen_flags: <defaults>
</compile_context>

<pallas_src>
import math
import jax
import jax.numpy as jnp
from jax import lax
from jax.experimental import pallas as pl
from jax.experimental.pallas import tpu as pltpu

# ----------------------- synthetic model_config ------------------------------
SIG_LEN   = 2560                      # samples per sensor (acc / mic)
N_FRAMES  = 16
FRAME_LEN = SIG_LEN // N_FRAMES       # 160
N_FREQ    = 16                        # kept freq bins -> 16x16 spectrogram
PATCH     = 4                         # patch_sidelength
D_PATCHES = PATCH * PATCH             # 16
N_PATCHES = (N_FREQ // PATCH) * (N_FRAMES // PATCH)   # 16 per sensor
SENSOR_FUSION = 1
N_SENSORS = 1 + SENSOR_FUSION         # 2
SEQ       = N_PATCHES * N_SENSORS     # 32 tokens
D_MODEL   = 32
N_HEAD    = 4
D_HEAD    = D_MODEL // N_HEAD
D_FF      = 64
N_LAYERS  = 2
N_CLASSES = 4
LN_EPS    = 1e-5
N_SPEC    = N_FRAMES * N_FREQ         # 256 (frame, freq) bins per sensor image
NEG_BIG   = -1e9                      # additive attention mask for cross-batch pairs

# ----------------------------- small helpers ----------------------------------

def _iota(shape, dim):
    return lax.broadcasted_iota(jnp.int32, shape, dim)


def _idiv(x, n):
    # x // n for power-of-two n (shift, guaranteed to lower on the VPU)
    return x >> (n.bit_length() - 1)


def _imod(x, n):
    # x % n for power-of-two n
    return x & (n - 1)


def _layernorm(x, g, b):
    mu = jnp.mean(x, axis=-1, keepdims=True)
    xc = x - mu
    var = jnp.mean(xc * xc, axis=-1, keepdims=True)
    return xc * lax.rsqrt(var + LN_EPS) * g + b

# ----------------------------- Pallas kernel ----------------------------------

def tstc_kernel(sig_ref, basis_ref, wloc_ref, pe_ref,
                g1_ref, b1_ref, wqkv_ref, bqkv_ref, wo_ref, bo_ref,
                g2_ref, b2_ref, w1_ref, bb1_ref, w2_ref, bb2_ref,
                wh1_ref, bh1_ref, wh2_ref, bh2_ref, wh3_ref, bh3_ref,
                o_ref):
    f32 = jnp.float32
    bf16 = jnp.bfloat16

    n_rows = sig_ref.shape[0]            # (N_SENSORS * B) * N_FRAMES framed rows
    n_img = n_rows // N_FRAMES           # 2B sensor images
    batch = n_img // N_SENSORS           # B
    n_tok = batch * SEQ                  # B * SEQ token rows

    # ---- STFT power spectrogram: block-diagonal structure exploited by framing the
    #      signal host-side; one (n_rows,160)@(160,32) bf16 matmul gives re|im bins. ----
    ri = jnp.dot(sig_ref[...].astype(bf16), basis_ref[...],
                 preferred_element_type=f32)                    # (n_rows, 2*N_FREQ)
    re = ri[:, :N_FREQ]
    im = ri[:, N_FREQ:]
    spec_frame = re * re + im * im                              # (n_rows, N_FREQ) f32

    # ---- patch gather (nn.Unfold ordering) + linear patch embedding.
    #      All 0/1 selection matrices are generated in-kernel from iota. ----
    # (a) replicate the 16 freq bins of each frame row across all 256 (frame,freq) lanes
    c1 = _iota((N_FREQ, N_SPEC), 1)
    r1 = _iota((N_FREQ, N_SPEC), 0)
    efreq = jnp.where(_imod(c1, N_FREQ) == r1, 1.0, 0.0).astype(bf16)
    spec_wide = jnp.dot(spec_frame.astype(bf16), efreq,
                        preferred_element_type=f32)             # (n_rows, 256)
    # (b) keep only the lane block that matches this row's frame index
    c2 = _iota((n_rows, N_SPEC), 1)
    r2 = _iota((n_rows, N_SPEC), 0)
    spec_fr = jnp.where(_idiv(c2, N_FREQ) == _imod(r2, N_FRAMES), spec_wide, 0.0)
    # (c) gather the 16 frame rows of each token's image -> per-token full spectrogram
    rt = _iota((n_tok, n_rows), 0)
    ct = _iota((n_tok, n_rows), 1)
    img_of_tok = _idiv(rt, SEQ) * N_SENSORS + _idiv(_imod(rt, SEQ), N_PATCHES)
    gimg = jnp.where(_idiv(ct, N_FRAMES) == img_of_tok, 1.0, 0.0).astype(bf16)
    spec_tok = jnp.dot(gimg, spec_fr.astype(bf16),
                       preferred_element_type=f32)              # (n_tok, 256)
    # (d) keep only this token's patch bins, then shared patch embedding (w_local is the
    #     lp_layer weight broadcast per (frame,freq) bin by its patch-local index)
    c3 = _iota((n_tok, N_SPEC), 1)
    r3 = _iota((n_tok, N_SPEC), 0)
    t_idx = _idiv(c3, N_FREQ)
    f_idx = _imod(c3, N_FREQ)
    patch_of_c = _idiv(f_idx, PATCH) * (N_FRAMES // PATCH) + _idiv(t_idx, PATCH)
    spec_patch = jnp.where(patch_of_c == _imod(r3, N_PATCHES), spec_tok, 0.0)
    tok = jnp.dot(spec_patch.astype(bf16), wloc_ref[...],
                  preferred_element_type=f32)                   # (n_tok, D_MODEL)

    # ---- positional encoding (pre-tiled host-side; pe_dropout is identity in eval) ----
    x = tok + pe_ref[...]

    # ---- block-diagonal additive mask so attention for all batches runs at once ----
    ra = _iota((n_tok, n_tok), 0)
    ca = _iota((n_tok, n_tok), 1)
    attn_bias = jnp.where(_idiv(ra, SEQ) == _idiv(ca, SEQ), 0.0, NEG_BIG)

    scale = 1.0 / math.sqrt(D_HEAD)

    # ---- transformer encoder stack (pre-LN, relu FFN), fully unrolled ----
    for l in range(N_LAYERS):
        # self-attention block
        h = _layernorm(x, g1_ref[l], b1_ref[l])
        qkv = jnp.dot(h.astype(bf16), wqkv_ref[l],
                      preferred_element_type=f32) + bqkv_ref[l]          # (n_tok, 3D)
        q = qkv[:, 0 * D_MODEL:1 * D_MODEL]
        k = qkv[:, 1 * D_MODEL:2 * D_MODEL]
        v = qkv[:, 2 * D_MODEL:3 * D_MODEL]

        ctx_heads = []
        for hh in range(N_HEAD):
            cs = slice(hh * D_HEAD, (hh + 1) * D_HEAD)
            qh = q[:, cs].astype(bf16)
            kh = k[:, cs].astype(bf16)
            vh = v[:, cs].astype(bf16)
            # q @ k^T over all batches at once (no transpose materialized)
            s = lax.dot_general(qh, kh, (((1,), (1,)), ((), ())),
                                preferred_element_type=f32) * scale + attn_bias
            s = s - jnp.max(s, axis=-1, keepdims=True)
            e = jnp.exp(s)
            p = e * pl.reciprocal(jnp.sum(e, axis=-1, keepdims=True), approx=True)
            ctx_heads.append(jnp.dot(p.astype(bf16), vh,
                                     preferred_element_type=f32))        # (n_tok, dh)
        ctx = jnp.concatenate(ctx_heads, axis=1)                         # (n_tok, D)
        attn = jnp.dot(ctx.astype(bf16), wo_ref[l],
                       preferred_element_type=f32) + bo_ref[l]
        x = x + attn

        # feed-forward block
        h2 = _layernorm(x, g2_ref[l], b2_ref[l])
        f = jnp.maximum(jnp.dot(h2.astype(bf16), w1_ref[l],
                                preferred_element_type=f32) + bb1_ref[l], 0.0)
        x = x + jnp.dot(f.astype(bf16), w2_ref[l],
                        preferred_element_type=f32) + bb2_ref[l]

    # ---- flatten(SEQ*D) per batch + MLP head + softmax.
    #      flatten = lane-expand matmul (iota-generated) -> block mask -> wh1 matmul ->
    #      per-batch row-sum matmul; tokens-in-rows layout never changes. ----
    fl = SEQ * D_MODEL
    de = _iota((D_MODEL, fl), 0)
    je = _iota((D_MODEL, fl), 1)
    expand = jnp.where(_imod(je, D_MODEL) == de, 1.0, 0.0).astype(bf16)
    xe = jnp.dot(x.astype(bf16), expand, preferred_element_type=f32)     # (n_tok, fl)
    rb = _iota((n_tok, fl), 0)
    jb = _iota((n_tok, fl), 1)
    xe = jnp.where(_idiv(jb, D_MODEL) == _imod(rb, SEQ), xe, 0.0)
    contrib = jnp.dot(xe.astype(bf16), wh1_ref[...],
                      preferred_element_type=f32)                        # (n_tok, 512)
    rs = _iota((batch, n_tok), 0)
    cc = _iota((batch, n_tok), 1)
    bsum = jnp.where(_idiv(cc, SEQ) == rs, 1.0, 0.0)                     # f32, exact sum
    hd1 = jnp.dot(bsum, contrib, preferred_element_type=f32) + bh1_ref[...]   # (B, 512)
    hd1 = jnp.maximum(hd1, 0.0)
    hd2 = jnp.maximum(jnp.dot(hd1.astype(bf16), wh2_ref[...],
                              preferred_element_type=f32) + bh2_ref[...], 0.0)
    logits = jnp.dot(hd2.astype(bf16), wh3_ref[...],
                     preferred_element_type=f32) + bh3_ref[...]          # (B, 4)
    m = jnp.max(logits, axis=-1, keepdims=True)
    e = jnp.exp(logits - m)
    o_ref[...] = e / jnp.sum(e, axis=-1, keepdims=True)

# ----------------------------- wrapper -----------------------------------------

def forward(x, params):
    B = x.shape[0]
    n_img = N_SENSORS * B

    # rows = (batch, sensor, frame): acc_b then mic_b frames — pure contiguous reshape.
    sig = x.reshape(n_img * N_FRAMES, FRAME_LEN)
    # pre-tile the positional encoding to all batches host-side (tiny)
    pe_tiled = jnp.tile(params["pe"], (B, 1))                            # (B*SEQ, D)

    return pl.pallas_call(
        tstc_kernel,
        out_shape=jax.ShapeDtypeStruct((B, N_CLASSES), jnp.float32),
        compiler_params=pltpu.CompilerParams(vmem_limit_bytes=16 * 1024 * 1024),
    )(sig, params["basis"], params["w_local"], pe_tiled,
      params["g1"], params["b1"], params["wqkv"], params["bqkv"],
      params["wo"], params["bo"], params["g2"], params["b2"],
      params["w1"], params["bb1"], params["w2"], params["bb2"],
      params["wh1"], params["bh1"], params["wh2"], params["bh2"],
      params["wh3"], params["bh3"])

# ----------------------------- parameters --------------------------------------

def init_params(key):
    f32 = jnp.float32
    bf16 = jnp.bfloat16
    ks = jax.random.split(key, 2 + N_LAYERS + 6)

    def u(k, shape, scale):
        return jax.random.uniform(k, shape, f32, -scale, scale)

    params = {}

    # Hann-windowed DFT basis for a SINGLE frame, columns [ re | im ].
    # Block-diagonal structure over frames is exploited by framing the signal instead
    # of building a (2560, 512) mostly-zero basis.
    n = jnp.arange(FRAME_LEN, dtype=f32)
    f = jnp.arange(N_FREQ, dtype=f32)
    win = 0.5 - 0.5 * jnp.cos(2.0 * jnp.pi * n / FRAME_LEN)
    ang = 2.0 * jnp.pi * n[:, None] * f[None, :] / FRAME_LEN
    cosb = win[:, None] * jnp.cos(ang)                                   # (160, 16)
    sinb = -win[:, None] * jnp.sin(ang)
    params["basis"] = jnp.concatenate([cosb, sinb], axis=1).astype(bf16)  # (160, 32)

    # lp_layer weight (no bias), broadcast to all 256 (frame,freq) bins via the
    # patch-local index, so the embedding is (masked spec) @ w_local.
    w_lp = u(ks[0], (D_PATCHES, D_MODEL), 1.0 / math.sqrt(D_PATCHES))
    t_idx = jnp.arange(N_SPEC) // N_FREQ
    f_idx = jnp.arange(N_SPEC) % N_FREQ
    local_of_c = (f_idx % PATCH) * PATCH + (t_idx % PATCH)
    params["w_local"] = w_lp[local_of_c].astype(bf16)                    # (256, 32)

    params["pe"] = u(ks[1], (SEQ, D_MODEL), 0.02)

    # stacked encoder-layer parameters (leading dim = layer); weights bf16, biases f32
    sd = 1.0 / math.sqrt(D_MODEL)
    sf = 1.0 / math.sqrt(D_FF)
    lkeys = [jax.random.split(ks[2 + i], 8) for i in range(N_LAYERS)]

    def stack(fn, dtype):
        return jnp.stack([fn(i) for i in range(N_LAYERS)], axis=0).astype(dtype)

    params["g1"]   = jnp.ones((N_LAYERS, 1, D_MODEL), f32)
    params["b1"]   = jnp.zeros((N_LAYERS, 1, D_MODEL), f32)
    params["wqkv"] = stack(lambda i: u(lkeys[i][0], (D_MODEL, 3 * D_MODEL), sd), bf16)
    params["bqkv"] = stack(lambda i: u(lkeys[i][1], (1, 3 * D_MODEL), sd), f32)
    params["wo"]   = stack(lambda i: u(lkeys[i][2], (D_MODEL, D_MODEL), sd), bf16)
    params["bo"]   = stack(lambda i: u(lkeys[i][3], (1, D_MODEL), sd), f32)
    params["g2"]   = jnp.ones((N_LAYERS, 1, D_MODEL), f32)
    params["b2"]   = jnp.zeros((N_LAYERS, 1, D_MODEL), f32)
    params["w1"]   = stack(lambda i: u(lkeys[i][4], (D_MODEL, D_FF), sd), bf16)
    params["bb1"]  = stack(lambda i: u(lkeys[i][5], (1, D_FF), sd), f32)
    params["w2"]   = stack(lambda i: u(lkeys[i][6], (D_FF, D_MODEL), sf), bf16)
    params["bb2"]  = stack(lambda i: u(lkeys[i][7], (1, D_MODEL), sf), f32)

    # head: ln1/ln2/ln4 weights (bf16) + biases (f32)
    sh = 1.0 / math.sqrt(SEQ * D_MODEL)
    hk = ks[2 + N_LAYERS:]
    params["wh1"] = u(hk[0], (SEQ * D_MODEL, 512), sh).astype(bf16)
    params["bh1"] = u(hk[1], (1, 512), sh)
    params["wh2"] = u(hk[2], (512, 128), 1.0 / math.sqrt(512)).astype(bf16)
    params["bh2"] = u(hk[3], (1, 128), 1.0 / math.sqrt(512))
    params["wh3"] = u(hk[4], (128, N_CLASSES), 1.0 / math.sqrt(128)).astype(bf16)
    params["bh3"] = u(hk[5], (1, N_CLASSES), 1.0 / math.sqrt(128))
    return params

# --------------------------------- main -----------------------------------------

if __name__ == "__main__":
    key = jax.random.PRNGKey(0)
    kx, kp = jax.random.split(key)
    B = 2
    x = jax.random.normal(kx, (B, 2 * SIG_LEN), jnp.float32)   # acc | mic concatenated
    params = init_params(kp)

    out = jax.jit(forward)(x, params)
    out = jax.block_until_ready(out)

    assert out.shape == (B, N_CLASSES)
    assert bool(jnp.all(jnp.isfinite(out)))
    # rows of the softmax output must sum to 1
    assert bool(jnp.all(jnp.abs(jnp.sum(out, axis=-1) - 1.0) < 1e-5))
    print("KERNEL_OK")
</pallas_src>

<mosaic_0001>
module attributes {stable_mosaic.version = 11 : i64} {
  func.func @tstc_kernel(%arg0: memref<64x160xf32, #tpu.memory_space<vmem>>, %arg1: memref<160x32xbf16, #tpu.memory_space<vmem>>, %arg2: memref<256x32xbf16, #tpu.memory_space<vmem>>, %arg3: memref<64x32xf32, #tpu.memory_space<vmem>>, %arg4: memref<2x1x32xf32, #tpu.memory_space<vmem>>, %arg5: memref<2x1x32xf32, #tpu.memory_space<vmem>>, %arg6: memref<2x32x96xbf16, #tpu.memory_space<vmem>>, %arg7: memref<2x1x96xf32, #tpu.memory_space<vmem>>, %arg8: memref<2x32x32xbf16, #tpu.memory_space<vmem>>, %arg9: memref<2x1x32xf32, #tpu.memory_space<vmem>>, %arg10: memref<2x1x32xf32, #tpu.memory_space<vmem>>, %arg11: memref<2x1x32xf32, #tpu.memory_space<vmem>>, %arg12: memref<2x32x64xbf16, #tpu.memory_space<vmem>>, %arg13: memref<2x1x64xf32, #tpu.memory_space<vmem>>, %arg14: memref<2x64x32xbf16, #tpu.memory_space<vmem>>, %arg15: memref<2x1x32xf32, #tpu.memory_space<vmem>>, %arg16: memref<1024x512xbf16, #tpu.memory_space<vmem>>, %arg17: memref<1x512xf32, #tpu.memory_space<vmem>>, %arg18: memref<512x128xbf16, #tpu.memory_space<vmem>>, %arg19: memref<1x128xf32, #tpu.memory_space<vmem>>, %arg20: memref<128x4xbf16, #tpu.memory_space<vmem>>, %arg21: memref<1x4xf32, #tpu.memory_space<vmem>>, %arg22: memref<2x4xf32, #tpu.memory_space<vmem>>) attributes {dimension_semantics = [], scalar_prefetch = 0 : i64, scratch_operands = 0 : i64, tpu.core_type = #tpu.core_type<tc>} {
    %c0 = arith.constant 0 : index
    %c0_0 = arith.constant 0 : index
    %0 = vector.load %arg0[%c0, %c0_0] : memref<64x160xf32, #tpu.memory_space<vmem>>, vector<64x160xf32>
    %1 = arith.truncf %0 : vector<64x160xf32> to vector<64x160xbf16>
    %c0_1 = arith.constant 0 : index
    %c0_2 = arith.constant 0 : index
    %2 = vector.load %arg1[%c0_1, %c0_2] : memref<160x32xbf16, #tpu.memory_space<vmem>>, vector<160x32xbf16>
    %cst = arith.constant dense<0.000000e+00> : vector<64x32xf32>
    %3 = tpu.matmul %1, %2, %cst {dimension_numbers = #tpu.dot_dimension_numbers<[1], [0], [0], [1], [0, 0, 1, 1], [], []>} : vector<64x160xbf16>, vector<160x32xbf16>, vector<64x32xf32> -> vector<64x32xf32>
    %4 = vector.extract_strided_slice %3 {offsets = [0, 0], sizes = [64, 16], strides = [1, 1]} : vector<64x32xf32> to vector<64x16xf32>
    %5 = vector.extract_strided_slice %3 {offsets = [0, 16], sizes = [64, 16], strides = [1, 1]} : vector<64x32xf32> to vector<64x16xf32>
    %6 = arith.mulf %4, %4 : vector<64x16xf32>
    %7 = arith.mulf %5, %5 : vector<64x16xf32>
    %8 = arith.addf %6, %7 : vector<64x16xf32>
    %9 = tpu.iota {dimensions = array<i32: 1>} : vector<16x256xi32>
    %10 = tpu.iota {dimensions = array<i32: 0>} : vector<16x256xi32>
    %c15_i32 = arith.constant 15 : i32
    %11 = vector.broadcast %c15_i32 : i32 to vector<16x256xi32>
    %12 = arith.andi %9, %11 : vector<16x256xi32>
    %13 = arith.cmpi eq, %12, %10 : vector<16x256xi32>
    %cst_3 = arith.constant 1.000000e+00 : f32
    %cst_4 = arith.constant 0.000000e+00 : f32
    %14 = vector.broadcast %cst_3 : f32 to vector<16x256xf32>
    %15 = vector.broadcast %cst_4 : f32 to vector<16x256xf32>
    %16 = arith.select %13, %14, %15 : vector<16x256xi1>, vector<16x256xf32>
    %17 = arith.truncf %16 : vector<16x256xf32> to vector<16x256xbf16>
    %18 = arith.truncf %8 : vector<64x16xf32> to vector<64x16xbf16>
    %cst_5 = arith.constant dense<0.000000e+00> : vector<64x256xf32>
    %19 = tpu.matmul %18, %17, %cst_5 {dimension_numbers = #tpu.dot_dimension_numbers<[1], [0], [0], [1], [0, 0, 1, 1], [], []>} : vector<64x16xbf16>, vector<16x256xbf16>, vector<64x256xf32> -> vector<64x256xf32>
    %20 = tpu.iota {dimensions = array<i32: 1>} : vector<64x256xi32>
    %21 = tpu.iota {dimensions = array<i32: 0>} : vector<64x256xi32>
    %c4_i32 = arith.constant 4 : i32
    %22 = vector.broadcast %c4_i32 : i32 to vector<64x256xi32>
    %23 = arith.shrsi %20, %22 : vector<64x256xi32>
    %c15_i32_6 = arith.constant 15 : i32
    %24 = vector.broadcast %c15_i32_6 : i32 to vector<64x256xi32>
    %25 = arith.andi %21, %24 : vector<64x256xi32>
    %26 = arith.cmpi eq, %23, %25 : vector<64x256xi32>
    %cst_7 = arith.constant 0.000000e+00 : f32
    %27 = vector.broadcast %cst_7 : f32 to vector<64x256xf32>
    %28 = arith.select %26, %19, %27 : vector<64x256xi1>, vector<64x256xf32>
    %29 = tpu.iota {dimensions = array<i32: 0>} : vector<64x64xi32>
    %30 = tpu.iota {dimensions = array<i32: 1>} : vector<64x64xi32>
    %c5_i32 = arith.constant 5 : i32
    %31 = vector.broadcast %c5_i32 : i32 to vector<64x64xi32>
    %32 = arith.shrsi %29, %31 : vector<64x64xi32>
    %c2_i32 = arith.constant 2 : i32
    %33 = vector.broadcast %c2_i32 : i32 to vector<64x64xi32>
    %34 = arith.muli %32, %33 : vector<64x64xi32>
    %c31_i32 = arith.constant 31 : i32
    %35 = vector.broadcast %c31_i32 : i32 to vector<64x64xi32>
    %36 = arith.andi %29, %35 : vector<64x64xi32>
    %c4_i32_8 = arith.constant 4 : i32
    %37 = vector.broadcast %c4_i32_8 : i32 to vector<64x64xi32>
    %38 = arith.shrsi %36, %37 : vector<64x64xi32>
    %39 = arith.addi %34, %38 : vector<64x64xi32>
    %c4_i32_9 = arith.constant 4 : i32
    %40 = vector.broadcast %c4_i32_9 : i32 to vector<64x64xi32>
    %41 = arith.shrsi %30, %40 : vector<64x64xi32>
    %42 = arith.cmpi eq, %41, %39 : vector<64x64xi32>
    %cst_10 = arith.constant 1.000000e+00 : f32
    %cst_11 = arith.constant 0.000000e+00 : f32
    %43 = vector.broadcast %cst_10 : f32 to vector<64x64xf32>
    %44 = vector.broadcast %cst_11 : f32 to vector<64x64xf32>
    %45 = arith.select %42, %43, %44 : vector<64x64xi1>, vector<64x64xf32>
    %46 = arith.truncf %45 : vector<64x64xf32> to vector<64x64xbf16>
    %47 = arith.truncf %28 : vector<64x256xf32> to vector<64x256xbf16>
    %cst_12 = arith.constant dense<0.000000e+00> : vector<64x256xf32>
    %48 = tpu.matmul %46, %47, %cst_12 {dimension_numbers = #tpu.dot_dimension_numbers<[1], [0], [0], [1], [0, 0, 1, 1], [], []>} : vector<64x64xbf16>, vector<64x256xbf16>, vector<64x256xf32> -> vector<64x256xf32>
    %49 = tpu.iota {dimensions = array<i32: 1>} : vector<64x256xi32>
    %50 = tpu.iota {dimensions = array<i32: 0>} : vector<64x256xi32>
    %c4_i32_13 = arith.constant 4 : i32
    %51 = vector.broadcast %c4_i32_13 : i32 to vector<64x256xi32>
    %52 = arith.shrsi %49, %51 : vector<64x256xi32>
    %c15_i32_14 = arith.constant 15 : i32
    %53 = vector.broadcast %c15_i32_14 : i32 to vector<64x256xi32>
    %54 = arith.andi %49, %53 : vector<64x256xi32>
    %c2_i32_15 = arith.constant 2 : i32
    %55 = vector.broadcast %c2_i32_15 : i32 to vector<64x256xi32>
    %56 = arith.shrsi %54, %55 : vector<64x256xi32>
    %c4_i32_16 = arith.constant 4 : i32
    %57 = vector.broadcast %c4_i32_16 : i32 to vector<64x256xi32>
    %58 = arith.muli %56, %57 : vector<64x256xi32>
    %c2_i32_17 = arith.constant 2 : i32
    %59 = vector.broadcast %c2_i32_17 : i32 to vector<64x256xi32>
    %60 = arith.shrsi %52, %59 : vector<64x256xi32>
    %61 = arith.addi %58, %60 : vector<64x256xi32>
    %c15_i32_18 = arith.constant 15 : i32
    %62 = vector.broadcast %c15_i32_18 : i32 to vector<64x256xi32>
    %63 = arith.andi %50, %62 : vector<64x256xi32>
    %64 = arith.cmpi eq, %61, %63 : vector<64x256xi32>
    %cst_19 = arith.constant 0.000000e+00 : f32
    %65 = vector.broadcast %cst_19 : f32 to vector<64x256xf32>
    %66 = arith.select %64, %48, %65 : vector<64x256xi1>, vector<64x256xf32>
    %67 = arith.truncf %66 : vector<64x256xf32> to vector<64x256xbf16>
    %c0_20 = arith.constant 0 : index
    %c0_21 = arith.constant 0 : index
    %68 = vector.load %arg2[%c0_20, %c0_21] : memref<256x32xbf16, #tpu.memory_space<vmem>>, vector<256x32xbf16>
    %cst_22 = arith.constant dense<0.000000e+00> : vector<64x32xf32>
    %69 = tpu.matmul %67, %68, %cst_22 {dimension_numbers = #tpu.dot_dimension_numbers<[1], [0], [0], [1], [0, 0, 1, 1], [], []>} : vector<64x256xbf16>, vector<256x32xbf16>, vector<64x32xf32> -> vector<64x32xf32>
    %c0_23 = arith.constant 0 : index
    %c0_24 = arith.constant 0 : index
    %70 = vector.load %arg3[%c0_23, %c0_24] : memref<64x32xf32, #tpu.memory_space<vmem>>, vector<64x32xf32>
    %71 = arith.addf %69, %70 : vector<64x32xf32>
    %72 = tpu.iota {dimensions = array<i32: 0>} : vector<64x64xi32>
    %73 = tpu.iota {dimensions = array<i32: 1>} : vector<64x64xi32>
    %c5_i32_25 = arith.constant 5 : i32
    %74 = vector.broadcast %c5_i32_25 : i32 to vector<64x64xi32>
    %75 = arith.shrsi %72, %74 : vector<64x64xi32>
    %c5_i32_26 = arith.constant 5 : i32
    %76 = vector.broadcast %c5_i32_26 : i32 to vector<64x64xi32>
    %77 = arith.shrsi %73, %76 : vector<64x64xi32>
    %78 = arith.cmpi eq, %75, %77 : vector<64x64xi32>
    %cst_27 = arith.constant 0.000000e+00 : f32
    %cst_28 = arith.constant -1.000000e+09 : f32
    %79 = vector.broadcast %cst_27 : f32 to vector<64x64xf32>
    %80 = vector.broadcast %cst_28 : f32 to vector<64x64xf32>
    %81 = arith.select %78, %79, %80 : vector<64x64xi1>, vector<64x64xf32>
    %c0_29 = arith.constant 0 : index
    %c0_30 = arith.constant 0 : index
    %c0_31 = arith.constant 0 : index
    %82 = vector.load %arg4[%c0_29, %c0_30, %c0_31] : memref<2x1x32xf32, #tpu.memory_space<vmem>>, vector<1x1x32xf32>
    %83 = vector.shape_cast %82 : vector<1x1x32xf32> to vector<1x32xf32>
    %c0_32 = arith.constant 0 : index
    %c0_33 = arith.constant 0 : index
    %c0_34 = arith.constant 0 : index
    %84 = vector.load %arg5[%c0_32, %c0_33, %c0_34] : memref<2x1x32xf32, #tpu.memory_space<vmem>>, vector<1x1x32xf32>
    %85 = vector.shape_cast %84 : vector<1x1x32xf32> to vector<1x32xf32>
    %cst_35 = arith.constant dense<0.000000e+00> : vector<64xf32>
    %86 = vector.multi_reduction <add>, %71, %cst_35 [1] : vector<64x32xf32> to vector<64xf32>
    %87 = vector.shape_cast %86 : vector<64xf32> to vector<64x1xf32>
    %cst_36 = arith.constant 3.200000e+01 : f32
    %88 = vector.broadcast %cst_36 : f32 to vector<64x1xf32>
    %89 = arith.divf %87, %88 : vector<64x1xf32>
    %90 = vector.broadcast %89 : vector<64x1xf32> to vector<64x32xf32>
    %91 = arith.subf %71, %90 : vector<64x32xf32>
    %92 = arith.mulf %91, %91 : vector<64x32xf32>
    %cst_37 = arith.constant dense<0.000000e+00> : vector<64xf32>
    %93 = vector.multi_reduction <add>, %92, %cst_37 [1] : vector<64x32xf32> to vector<64xf32>
    %94 = vector.shape_cast %93 : vector<64xf32> to vector<64x1xf32>
    %cst_38 = arith.constant 3.200000e+01 : f32
    %95 = vector.broadcast %cst_38 : f32 to vector<64x1xf32>
    %96 = arith.divf %94, %95 : vector<64x1xf32>
    %cst_39 = arith.constant 9.99999974E-6 : f32
    %97 = vector.broadcast %cst_39 : f32 to vector<64x1xf32>
    %98 = arith.addf %96, %97 : vector<64x1xf32>
    %99 = math.rsqrt %98 : vector<64x1xf32>
    %100 = vector.broadcast %99 : vector<64x1xf32> to vector<64x32xf32>
    %101 = arith.mulf %91, %100 : vector<64x32xf32>
    %102 = vector.broadcast %83 : vector<1x32xf32> to vector<64x32xf32>
    %103 = arith.mulf %101, %102 : vector<64x32xf32>
    %104 = vector.broadcast %85 : vector<1x32xf32> to vector<64x32xf32>
    %105 = arith.addf %103, %104 : vector<64x32xf32>
    %106 = arith.truncf %105 : vector<64x32xf32> to vector<64x32xbf16>
    %c0_40 = arith.constant 0 : index
    %c0_41 = arith.constant 0 : index
    %c0_42 = arith.constant 0 : index
    %107 = vector.load %arg6[%c0_40, %c0_41, %c0_42] : memref<2x32x96xbf16, #tpu.memory_space<vmem>>, vector<1x32x96xbf16>
    %108 = vector.shape_cast %107 : vector<1x32x96xbf16> to vector<32x96xbf16>
    %cst_43 = arith.constant dense<0.000000e+00> : vector<64x96xf32>
    %109 = tpu.matmul %106, %108, %cst_43 {dimension_numbers = #tpu.dot_dimension_numbers<[1], [0], [0], [1], [0, 0, 1, 1], [], []>} : vector<64x32xbf16>, vector<32x96xbf16>, vector<64x96xf32> -> vector<64x96xf32>
    %c0_44 = arith.constant 0 : index
    %c0_45 = arith.constant 0 : index
    %c0_46 = arith.constant 0 : index
    %110 = vector.load %arg7[%c0_44, %c0_45, %c0_46] : memref<2x1x96xf32, #tpu.memory_space<vmem>>, vector<1x1x96xf32>
    %111 = vector.shape_cast %110 : vector<1x1x96xf32> to vector<1x96xf32>
    %112 = vector.broadcast %111 : vector<1x96xf32> to vector<64x96xf32>
    %113 = arith.addf %109, %112 : vector<64x96xf32>
    %114 = vector.extract_strided_slice %113 {offsets = [0, 0], sizes = [64, 32], strides = [1, 1]} : vector<64x96xf32> to vector<64x32xf32>
    %115 = vector.extract_strided_slice %113 {offsets = [0, 32], sizes = [64, 32], strides = [1, 1]} : vector<64x96xf32> to vector<64x32xf32>
    %116 = vector.extract_strided_slice %113 {offsets = [0, 64], sizes = [64, 32], strides = [1, 1]} : vector<64x96xf32> to vector<64x32xf32>
    %117 = vector.extract_strided_slice %114 {offsets = [0, 0], sizes = [64, 8], strides = [1, 1]} : vector<64x32xf32> to vector<64x8xf32>
    %118 = arith.truncf %117 : vector<64x8xf32> to vector<64x8xbf16>
    %119 = vector.extract_strided_slice %115 {offsets = [0, 0], sizes = [64, 8], strides = [1, 1]} : vector<64x32xf32> to vector<64x8xf32>
    %120 = arith.truncf %119 : vector<64x8xf32> to vector<64x8xbf16>
    %121 = vector.extract_strided_slice %116 {offsets = [0, 0], sizes = [64, 8], strides = [1, 1]} : vector<64x32xf32> to vector<64x8xf32>
    %122 = arith.truncf %121 : vector<64x8xf32> to vector<64x8xbf16>
    %cst_47 = arith.constant dense<0.000000e+00> : vector<64x64xf32>
    %123 = tpu.matmul %118, %120, %cst_47 {dimension_numbers = #tpu.dot_dimension_numbers<[1], [1], [0], [0], [0, 0, 1, 0], [], []>} : vector<64x8xbf16>, vector<64x8xbf16>, vector<64x64xf32> -> vector<64x64xf32>
    %cst_48 = arith.constant 0.353553385 : f32
    %124 = vector.broadcast %cst_48 : f32 to vector<64x64xf32>
    %125 = arith.mulf %123, %124 : vector<64x64xf32>
    %126 = arith.addf %125, %81 : vector<64x64xf32>
    %cst_49 = arith.constant dense<0xFF800000> : vector<64xf32>
    %127 = vector.multi_reduction <maximumf>, %126, %cst_49 [1] : vector<64x64xf32> to vector<64xf32>
    %128 = vector.shape_cast %127 : vector<64xf32> to vector<64x1xf32>
    %129 = vector.broadcast %128 : vector<64x1xf32> to vector<64x64xf32>
    %130 = arith.subf %126, %129 : vector<64x64xf32>
    %131 = math.exp %130 : vector<64x64xf32>
    %cst_50 = arith.constant dense<0.000000e+00> : vector<64xf32>
    %132 = vector.multi_reduction <add>, %131, %cst_50 [1] : vector<64x64xf32> to vector<64xf32>
    %133 = vector.shape_cast %132 : vector<64xf32> to vector<64x1xf32>
    %134 = tpu.reciprocal %133 {approx = true} : vector<64x1xf32> -> vector<64x1xf32>
    %135 = vector.broadcast %134 : vector<64x1xf32> to vector<64x64xf32>
    %136 = arith.mulf %131, %135 : vector<64x64xf32>
    %137 = arith.truncf %136 : vector<64x64xf32> to vector<64x64xbf16>
    %cst_51 = arith.constant dense<0.000000e+00> : vector<64x8xf32>
    %138 = tpu.matmul %137, %122, %cst_51 {dimension_numbers = #tpu.dot_dimension_numbers<[1], [0], [0], [1], [0, 0, 1, 1], [], []>} : vector<64x64xbf16>, vector<64x8xbf16>, vector<64x8xf32> -> vector<64x8xf32>
    %139 = vector.extract_strided_slice %114 {offsets = [0, 8], sizes = [64, 8], strides = [1, 1]} : vector<64x32xf32> to vector<64x8xf32>
    %140 = arith.truncf %139 : vector<64x8xf32> to vector<64x8xbf16>
    %141 = vector.extract_strided_slice %115 {offsets = [0, 8], sizes = [64, 8], strides = [1, 1]} : vector<64x32xf32> to vector<64x8xf32>
    %142 = arith.truncf %141 : vector<64x8xf32> to vector<64x8xbf16>
    %143 = vector.extract_strided_slice %116 {offsets = [0, 8], sizes = [64, 8], strides = [1, 1]} : vector<64x32xf32> to vector<64x8xf32>
    %144 = arith.truncf %143 : vector<64x8xf32> to vector<64x8xbf16>
    %cst_52 = arith.constant dense<0.000000e+00> : vector<64x64xf32>
    %145 = tpu.matmul %140, %142, %cst_52 {dimension_numbers = #tpu.dot_dimension_numbers<[1], [1], [0], [0], [0, 0, 1, 0], [], []>} : vector<64x8xbf16>, vector<64x8xbf16>, vector<64x64xf32> -> vector<64x64xf32>
    %cst_53 = arith.constant 0.353553385 : f32
    %146 = vector.broadcast %cst_53 : f32 to vector<64x64xf32>
    %147 = arith.mulf %145, %146 : vector<64x64xf32>
    %148 = arith.addf %147, %81 : vector<64x64xf32>
    %cst_54 = arith.constant dense<0xFF800000> : vector<64xf32>
    %149 = vector.multi_reduction <maximumf>, %148, %cst_54 [1] : vector<64x64xf32> to vector<64xf32>
    %150 = vector.shape_cast %149 : vector<64xf32> to vector<64x1xf32>
    %151 = vector.broadcast %150 : vector<64x1xf32> to vector<64x64xf32>
    %152 = arith.subf %148, %151 : vector<64x64xf32>
    %153 = math.exp %152 : vector<64x64xf32>
    %cst_55 = arith.constant dense<0.000000e+00> : vector<64xf32>
    %154 = vector.multi_reduction <add>, %153, %cst_55 [1] : vector<64x64xf32> to vector<64xf32>
    %155 = vector.shape_cast %154 : vector<64xf32> to vector<64x1xf32>
    %156 = tpu.reciprocal %155 {approx = true} : vector<64x1xf32> -> vector<64x1xf32>
    %157 = vector.broadcast %156 : vector<64x1xf32> to vector<64x64xf32>
    %158 = arith.mulf %153, %157 : vector<64x64xf32>
    %159 = arith.truncf %158 : vector<64x64xf32> to vector<64x64xbf16>
    %cst_56 = arith.constant dense<0.000000e+00> : vector<64x8xf32>
    %160 = tpu.matmul %159, %144, %cst_56 {dimension_numbers = #tpu.dot_dimension_numbers<[1], [0], [0], [1], [0, 0, 1, 1], [], []>} : vector<64x64xbf16>, vector<64x8xbf16>, vector<64x8xf32> -> vector<64x8xf32>
    %161 = vector.extract_strided_slice %114 {offsets = [0, 16], sizes = [64, 8], strides = [1, 1]} : vector<64x32xf32> to vector<64x8xf32>
    %162 = arith.truncf %161 : vector<64x8xf32> to vector<64x8xbf16>
    %163 = vector.extract_strided_slice %115 {offsets = [0, 16], sizes = [64, 8], strides = [1, 1]} : vector<64x32xf32> to vector<64x8xf32>
    %164 = arith.truncf %163 : vector<64x8xf32> to vector<64x8xbf16>
    %165 = vector.extract_strided_slice %116 {offsets = [0, 16], sizes = [64, 8], strides = [1, 1]} : vector<64x32xf32> to vector<64x8xf32>
    %166 = arith.truncf %165 : vector<64x8xf32> to vector<64x8xbf16>
    %cst_57 = arith.constant dense<0.000000e+00> : vector<64x64xf32>
    %167 = tpu.matmul %162, %164, %cst_57 {dimension_numbers = #tpu.dot_dimension_numbers<[1], [1], [0], [0], [0, 0, 1, 0], [], []>} : vector<64x8xbf16>, vector<64x8xbf16>, vector<64x64xf32> -> vector<64x64xf32>
    %cst_58 = arith.constant 0.353553385 : f32
    %168 = vector.broadcast %cst_58 : f32 to vector<64x64xf32>
    %169 = arith.mulf %167, %168 : vector<64x64xf32>
    %170 = arith.addf %169, %81 : vector<64x64xf32>
    %cst_59 = arith.constant dense<0xFF800000> : vector<64xf32>
    %171 = vector.multi_reduction <maximumf>, %170, %cst_59 [1] : vector<64x64xf32> to vector<64xf32>
    %172 = vector.shape_cast %171 : vector<64xf32> to vector<64x1xf32>
    %173 = vector.broadcast %172 : vector<64x1xf32> to vector<64x64xf32>
    %174 = arith.subf %170, %173 : vector<64x64xf32>
    %175 = math.exp %174 : vector<64x64xf32>
    %cst_60 = arith.constant dense<0.000000e+00> : vector<64xf32>
    %176 = vector.multi_reduction <add>, %175, %cst_60 [1] : vector<64x64xf32> to vector<64xf32>
    %177 = vector.shape_cast %176 : vector<64xf32> to vector<64x1xf32>
    %178 = tpu.reciprocal %177 {approx = true} : vector<64x1xf32> -> vector<64x1xf32>
    %179 = vector.broadcast %178 : vector<64x1xf32> to vector<64x64xf32>
    %180 = arith.mulf %175, %179 : vector<64x64xf32>
    %181 = arith.truncf %180 : vector<64x64xf32> to vector<64x64xbf16>
    %cst_61 = arith.constant dense<0.000000e+00> : vector<64x8xf32>
    %182 = tpu.matmul %181, %166, %cst_61 {dimension_numbers = #tpu.dot_dimension_numbers<[1], [0], [0], [1], [0, 0, 1, 1], [], []>} : vector<64x64xbf16>, vector<64x8xbf16>, vector<64x8xf32> -> vector<64x8xf32>
    %183 = vector.extract_strided_slice %114 {offsets = [0, 24], sizes = [64, 8], strides = [1, 1]} : vector<64x32xf32> to vector<64x8xf32>
    %184 = arith.truncf %183 : vector<64x8xf32> to vector<64x8xbf16>
    %185 = vector.extract_strided_slice %115 {offsets = [0, 24], sizes = [64, 8], strides = [1, 1]} : vector<64x32xf32> to vector<64x8xf32>
    %186 = arith.truncf %185 : vector<64x8xf32> to vector<64x8xbf16>
    %187 = vector.extract_strided_slice %116 {offsets = [0, 24], sizes = [64, 8], strides = [1, 1]} : vector<64x32xf32> to vector<64x8xf32>
    %188 = arith.truncf %187 : vector<64x8xf32> to vector<64x8xbf16>
    %cst_62 = arith.constant dense<0.000000e+00> : vector<64x64xf32>
    %189 = tpu.matmul %184, %186, %cst_62 {dimension_numbers = #tpu.dot_dimension_numbers<[1], [1], [0], [0], [0, 0, 1, 0], [], []>} : vector<64x8xbf16>, vector<64x8xbf16>, vector<64x64xf32> -> vector<64x64xf32>
    %cst_63 = arith.constant 0.353553385 : f32
    %190 = vector.broadcast %cst_63 : f32 to vector<64x64xf32>
    %191 = arith.mulf %189, %190 : vector<64x64xf32>
    %192 = arith.addf %191, %81 : vector<64x64xf32>
    %cst_64 = arith.constant dense<0xFF800000> : vector<64xf32>
    %193 = vector.multi_reduction <maximumf>, %192, %cst_64 [1] : vector<64x64xf32> to vector<64xf32>
    %194 = vector.shape_cast %193 : vector<64xf32> to vector<64x1xf32>
    %195 = vector.broadcast %194 : vector<64x1xf32> to vector<64x64xf32>
    %196 = arith.subf %192, %195 : vector<64x64xf32>
    %197 = math.exp %196 : vector<64x64xf32>
    %cst_65 = arith.constant dense<0.000000e+00> : vector<64xf32>
    %198 = vector.multi_reduction <add>, %197, %cst_65 [1] : vector<64x64xf32> to vector<64xf32>
    %199 = vector.shape_cast %198 : vector<64xf32> to vector<64x1xf32>
    %200 = tpu.reciprocal %199 {approx = true} : vector<64x1xf32> -> vector<64x1xf32>
    %201 = vector.broadcast %200 : vector<64x1xf32> to vector<64x64xf32>
    %202 = arith.mulf %197, %201 : vector<64x64xf32>
    %203 = arith.truncf %202 : vector<64x64xf32> to vector<64x64xbf16>
    %cst_66 = arith.constant dense<0.000000e+00> : vector<64x8xf32>
    %204 = tpu.matmul %203, %188, %cst_66 {dimension_numbers = #tpu.dot_dimension_numbers<[1], [0], [0], [1], [0, 0, 1, 1], [], []>} : vector<64x64xbf16>, vector<64x8xbf16>, vector<64x8xf32> -> vector<64x8xf32>
    %205 = tpu.concatenate %138, %160, %182, %204 in 1 : vector<64x8xf32>, vector<64x8xf32>, vector<64x8xf32>, vector<64x8xf32> -> vector<64x32xf32>
    %206 = arith.truncf %205 : vector<64x32xf32> to vector<64x32xbf16>
    %c0_67 = arith.constant 0 : index
    %c0_68 = arith.constant 0 : index
    %c0_69 = arith.constant 0 : index
    %207 = vector.load %arg8[%c0_67, %c0_68, %c0_69] : memref<2x32x32xbf16, #tpu.memory_space<vmem>>, vector<1x32x32xbf16>
    %208 = vector.shape_cast %207 : vector<1x32x32xbf16> to vector<32x32xbf16>
    %cst_70 = arith.constant dense<0.000000e+00> : vector<64x32xf32>
    %209 = tpu.matmul %206, %208, %cst_70 {dimension_numbers = #tpu.dot_dimension_numbers<[1], [0], [0], [1], [0, 0, 1, 1], [], []>} : vector<64x32xbf16>, vector<32x32xbf16>, vector<64x32xf32> -> vector<64x32xf32>
    %c0_71 = arith.constant 0 : index
    %c0_72 = arith.constant 0 : index
    %c0_73 = arith.constant 0 : index
    %210 = vector.load %arg9[%c0_71, %c0_72, %c0_73] : memref<2x1x32xf32, #tpu.memory_space<vmem>>, vector<1x1x32xf32>
    %211 = vector.shape_cast %210 : vector<1x1x32xf32> to vector<1x32xf32>
    %212 = vector.broadcast %211 : vector<1x32xf32> to vector<64x32xf32>
    %213 = arith.addf %209, %212 : vector<64x32xf32>
    %214 = arith.addf %71, %213 : vector<64x32xf32>
    %c0_74 = arith.constant 0 : index
    %c0_75 = arith.constant 0 : index
    %c0_76 = arith.constant 0 : index
    %215 = vector.load %arg10[%c0_74, %c0_75, %c0_76] : memref<2x1x32xf32, #tpu.memory_space<vmem>>, vector<1x1x32xf32>
    %216 = vector.shape_cast %215 : vector<1x1x32xf32> to vector<1x32xf32>
    %c0_77 = arith.constant 0 : index
    %c0_78 = arith.constant 0 : index
    %c0_79 = arith.constant 0 : index
    %217 = vector.load %arg11[%c0_77, %c0_78, %c0_79] : memref<2x1x32xf32, #tpu.memory_space<vmem>>, vector<1x1x32xf32>
    %218 = vector.shape_cast %217 : vector<1x1x32xf32> to vector<1x32xf32>
    %cst_80 = arith.constant dense<0.000000e+00> : vector<64xf32>
    %219 = vector.multi_reduction <add>, %214, %cst_80 [1] : vector<64x32xf32> to vector<64xf32>
    %220 = vector.shape_cast %219 : vector<64xf32> to vector<64x1xf32>
    %cst_81 = arith.constant 3.200000e+01 : f32
    %221 = vector.broadcast %cst_81 : f32 to vector<64x1xf32>
    %222 = arith.divf %220, %221 : vector<64x1xf32>
    %223 = vector.broadcast %222 : vector<64x1xf32> to vector<64x32xf32>
    %224 = arith.subf %214, %223 : vector<64x32xf32>
    %225 = arith.mulf %224, %224 : vector<64x32xf32>
    %cst_82 = arith.constant dense<0.000000e+00> : vector<64xf32>
    %226 = vector.multi_reduction <add>, %225, %cst_82 [1] : vector<64x32xf32> to vector<64xf32>
    %227 = vector.shape_cast %226 : vector<64xf32> to vector<64x1xf32>
    %cst_83 = arith.constant 3.200000e+01 : f32
    %228 = vector.broadcast %cst_83 : f32 to vector<64x1xf32>
    %229 = arith.divf %227, %228 : vector<64x1xf32>
    %cst_84 = arith.constant 9.99999974E-6 : f32
    %230 = vector.broadcast %cst_84 : f32 to vector<64x1xf32>
    %231 = arith.addf %229, %230 : vector<64x1xf32>
    %232 = math.rsqrt %231 : vector<64x1xf32>
    %233 = vector.broadcast %232 : vector<64x1xf32> to vector<64x32xf32>
    %234 = arith.mulf %224, %233 : vector<64x32xf32>
    %235 = vector.broadcast %216 : vector<1x32xf32> to vector<64x32xf32>
    %236 = arith.mulf %234, %235 : vector<64x32xf32>
    %237 = vector.broadcast %218 : vector<1x32xf32> to vector<64x32xf32>
    %238 = arith.addf %236, %237 : vector<64x32xf32>
    %239 = arith.truncf %238 : vector<64x32xf32> to vector<64x32xbf16>
    %c0_85 = arith.constant 0 : index
    %c0_86 = arith.constant 0 : index
    %c0_87 = arith.constant 0 : index
    %240 = vector.load %arg12[%c0_85, %c0_86, %c0_87] : memref<2x32x64xbf16, #tpu.memory_space<vmem>>, vector<1x32x64xbf16>
    %241 = vector.shape_cast %240 : vector<1x32x64xbf16> to vector<32x64xbf16>
    %cst_88 = arith.constant dense<0.000000e+00> : vector<64x64xf32>
    %242 = tpu.matmul %239, %241, %cst_88 {dimension_numbers = #tpu.dot_dimension_numbers<[1], [0], [0], [1], [0, 0, 1, 1], [], []>} : vector<64x32xbf16>, vector<32x64xbf16>, vector<64x64xf32> -> vector<64x64xf32>
    %c0_89 = arith.constant 0 : index
    %c0_90 = arith.constant 0 : index
    %c0_91 = arith.constant 0 : index
    %243 = vector.load %arg13[%c0_89, %c0_90, %c0_91] : memref<2x1x64xf32, #tpu.memory_space<vmem>>, vector<1x1x64xf32>
    %244 = vector.shape_cast %243 : vector<1x1x64xf32> to vector<1x64xf32>
    %245 = vector.broadcast %244 : vector<1x64xf32> to vector<64x64xf32>
    %246 = arith.addf %242, %245 : vector<64x64xf32>
    %cst_92 = arith.constant 0.000000e+00 : f32
    %247 = vector.broadcast %cst_92 : f32 to vector<64x64xf32>
    %248 = arith.maximumf %246, %247 : vector<64x64xf32>
    %249 = arith.truncf %248 : vector<64x64xf32> to vector<64x64xbf16>
    %c0_93 = arith.constant 0 : index
    %c0_94 = arith.constant 0 : index
    %c0_95 = arith.constant 0 : index
    %250 = vector.load %arg14[%c0_93, %c0_94, %c0_95] : memref<2x64x32xbf16, #tpu.memory_space<vmem>>, vector<1x64x32xbf16>
    %251 = vector.shape_cast %250 : vector<1x64x32xbf16> to vector<64x32xbf16>
    %cst_96 = arith.constant dense<0.000000e+00> : vector<64x32xf32>
    %252 = tpu.matmul %249, %251, %cst_96 {dimension_numbers = #tpu.dot_dimension_numbers<[1], [0], [0], [1], [0, 0, 1, 1], [], []>} : vector<64x64xbf16>, vector<64x32xbf16>, vector<64x32xf32> -> vector<64x32xf32>
    %253 = arith.addf %214, %252 : vector<64x32xf32>
    %c0_97 = arith.constant 0 : index
    %c0_98 = arith.constant 0 : index
    %c0_99 = arith.constant 0 : index
    %254 = vector.load %arg15[%c0_97, %c0_98, %c0_99] : memref<2x1x32xf32, #tpu.memory_space<vmem>>, vector<1x1x32xf32>
    %255 = vector.shape_cast %254 : vector<1x1x32xf32> to vector<1x32xf32>
    %256 = vector.broadcast %255 : vector<1x32xf32> to vector<64x32xf32>
    %257 = arith.addf %253, %256 : vector<64x32xf32>
    %c1 = arith.constant 1 : index
    %c0_100 = arith.constant 0 : index
    %c0_101 = arith.constant 0 : index
    %258 = vector.load %arg4[%c1, %c0_100, %c0_101] : memref<2x1x32xf32, #tpu.memory_space<vmem>>, vector<1x1x32xf32>
    %259 = vector.shape_cast %258 : vector<1x1x32xf32> to vector<1x32xf32>
    %c1_102 = arith.constant 1 : index
    %c0_103 = arith.constant 0 : index
    %c0_104 = arith.constant 0 : index
    %260 = vector.load %arg5[%c1_102, %c0_103, %c0_104] : memref<2x1x32xf32, #tpu.memory_space<vmem>>, vector<1x1x32xf32>
    %261 = vector.shape_cast %260 : vector<1x1x32xf32> to vector<1x32xf32>
    %cst_105 = arith.constant dense<0.000000e+00> : vector<64xf32>
    %262 = vector.multi_reduction <add>, %257, %cst_105 [1] : vector<64x32xf32> to vector<64xf32>
    %263 = vector.shape_cast %262 : vector<64xf32> to vector<64x1xf32>
    %cst_106 = arith.constant 3.200000e+01 : f32
    %264 = vector.broadcast %cst_106 : f32 to vector<64x1xf32>
    %265 = arith.divf %263, %264 : vector<64x1xf32>
    %266 = vector.broadcast %265 : vector<64x1xf32> to vector<64x32xf32>
    %267 = arith.subf %257, %266 : vector<64x32xf32>
    %268 = arith.mulf %267, %267 : vector<64x32xf32>
    %cst_107 = arith.constant dense<0.000000e+00> : vector<64xf32>
    %269 = vector.multi_reduction <add>, %268, %cst_107 [1] : vector<64x32xf32> to vector<64xf32>
    %270 = vector.shape_cast %269 : vector<64xf32> to vector<64x1xf32>
    %cst_108 = arith.constant 3.200000e+01 : f32
    %271 = vector.broadcast %cst_108 : f32 to vector<64x1xf32>
    %272 = arith.divf %270, %271 : vector<64x1xf32>
    %cst_109 = arith.constant 9.99999974E-6 : f32
    %273 = vector.broadcast %cst_109 : f32 to vector<64x1xf32>
    %274 = arith.addf %272, %273 : vector<64x1xf32>
    %275 = math.rsqrt %274 : vector<64x1xf32>
    %276 = vector.broadcast %275 : vector<64x1xf32> to vector<64x32xf32>
    %277 = arith.mulf %267, %276 : vector<64x32xf32>
    %278 = vector.broadcast %259 : vector<1x32xf32> to vector<64x32xf32>
    %279 = arith.mulf %277, %278 : vector<64x32xf32>
    %280 = vector.broadcast %261 : vector<1x32xf32> to vector<64x32xf32>
    %281 = arith.addf %279, %280 : vector<64x32xf32>
    %282 = arith.truncf %281 : vector<64x32xf32> to vector<64x32xbf16>
    %c1_110 = arith.constant 1 : index
    %c0_111 = arith.constant 0 : index
    %c0_112 = arith.constant 0 : index
    %283 = vector.load %arg6[%c1_110, %c0_111, %c0_112] : memref<2x32x96xbf16, #tpu.memory_space<vmem>>, vector<1x32x96xbf16>
    %284 = vector.shape_cast %283 : vector<1x32x96xbf16> to vector<32x96xbf16>
    %cst_113 = arith.constant dense<0.000000e+00> : vector<64x96xf32>
    %285 = tpu.matmul %282, %284, %cst_113 {dimension_numbers = #tpu.dot_dimension_numbers<[1], [0], [0], [1], [0, 0, 1, 1], [], []>} : vector<64x32xbf16>, vector<32x96xbf16>, vector<64x96xf32> -> vector<64x96xf32>
    %c1_114 = arith.constant 1 : index
    %c0_115 = arith.constant 0 : index
    %c0_116 = arith.constant 0 : index
    %286 = vector.load %arg7[%c1_114, %c0_115, %c0_116] : memref<2x1x96xf32, #tpu.memory_space<vmem>>, vector<1x1x96xf32>
    %287 = vector.shape_cast %286 : vector<1x1x96xf32> to vector<1x96xf32>
    %288 = vector.broadcast %287 : vector<1x96xf32> to vector<64x96xf32>
    %289 = arith.addf %285, %288 : vector<64x96xf32>
    %290 = vector.extract_strided_slice %289 {offsets = [0, 0], sizes = [64, 32], strides = [1, 1]} : vector<64x96xf32> to vector<64x32xf32>
    %291 = vector.extract_strided_slice %289 {offsets = [0, 32], sizes = [64, 32], strides = [1, 1]} : vector<64x96xf32> to vector<64x32xf32>
    %292 = vector.extract_strided_slice %289 {offsets = [0, 64], sizes = [64, 32], strides = [1, 1]} : vector<64x96xf32> to vector<64x32xf32>
    %293 = vector.extract_strided_slice %290 {offsets = [0, 0], sizes = [64, 8], strides = [1, 1]} : vector<64x32xf32> to vector<64x8xf32>
    %294 = arith.truncf %293 : vector<64x8xf32> to vector<64x8xbf16>
    %295 = vector.extract_strided_slice %291 {offsets = [0, 0], sizes = [64, 8], strides = [1, 1]} : vector<64x32xf32> to vector<64x8xf32>
    %296 = arith.truncf %295 : vector<64x8xf32> to vector<64x8xbf16>
    %297 = vector.extract_strided_slice %292 {offsets = [0, 0], sizes = [64, 8], strides = [1, 1]} : vector<64x32xf32> to vector<64x8xf32>
    %298 = arith.truncf %297 : vector<64x8xf32> to vector<64x8xbf16>
    %cst_117 = arith.constant dense<0.000000e+00> : vector<64x64xf32>
    %299 = tpu.matmul %294, %296, %cst_117 {dimension_numbers = #tpu.dot_dimension_numbers<[1], [1], [0], [0], [0, 0, 1, 0], [], []>} : vector<64x8xbf16>, vector<64x8xbf16>, vector<64x64xf32> -> vector<64x64xf32>
    %cst_118 = arith.constant 0.353553385 : f32
    %300 = vector.broadcast %cst_118 : f32 to vector<64x64xf32>
    %301 = arith.mulf %299, %300 : vector<64x64xf32>
    %302 = arith.addf %301, %81 : vector<64x64xf32>
    %cst_119 = arith.constant dense<0xFF800000> : vector<64xf32>
    %303 = vector.multi_reduction <maximumf>, %302, %cst_119 [1] : vector<64x64xf32> to vector<64xf32>
    %304 = vector.shape_cast %303 : vector<64xf32> to vector<64x1xf32>
    %305 = vector.broadcast %304 : vector<64x1xf32> to vector<64x64xf32>
    %306 = arith.subf %302, %305 : vector<64x64xf32>
    %307 = math.exp %306 : vector<64x64xf32>
    %cst_120 = arith.constant dense<0.000000e+00> : vector<64xf32>
    %308 = vector.multi_reduction <add>, %307, %cst_120 [1] : vector<64x64xf32> to vector<64xf32>
    %309 = vector.shape_cast %308 : vector<64xf32> to vector<64x1xf32>
    %310 = tpu.reciprocal %309 {approx = true} : vector<64x1xf32> -> vector<64x1xf32>
    %311 = vector.broadcast %310 : vector<64x1xf32> to vector<64x64xf32>
    %312 = arith.mulf %307, %311 : vector<64x64xf32>
    %313 = arith.truncf %312 : vector<64x64xf32> to vector<64x64xbf16>
    %cst_121 = arith.constant dense<0.000000e+00> : vector<64x8xf32>
    %314 = tpu.matmul %313, %298, %cst_121 {dimension_numbers = #tpu.dot_dimension_numbers<[1], [0], [0], [1], [0, 0, 1, 1], [], []>} : vector<64x64xbf16>, vector<64x8xbf16>, vector<64x8xf32> -> vector<64x8xf32>
    %315 = vector.extract_strided_slice %290 {offsets = [0, 8], sizes = [64, 8], strides = [1, 1]} : vector<64x32xf32> to vector<64x8xf32>
    %316 = arith.truncf %315 : vector<64x8xf32> to vector<64x8xbf16>
    %317 = vector.extract_strided_slice %291 {offsets = [0, 8], sizes = [64, 8], strides = [1, 1]} : vector<64x32xf32> to vector<64x8xf32>
    %318 = arith.truncf %317 : vector<64x8xf32> to vector<64x8xbf16>
    %319 = vector.extract_strided_slice %292 {offsets = [0, 8], sizes = [64, 8], strides = [1, 1]} : vector<64x32xf32> to vector<64x8xf32>
    %320 = arith.truncf %319 : vector<64x8xf32> to vector<64x8xbf16>
    %cst_122 = arith.constant dense<0.000000e+00> : vector<64x64xf32>
    %321 = tpu.matmul %316, %318, %cst_122 {dimension_numbers = #tpu.dot_dimension_numbers<[1], [1], [0], [0], [0, 0, 1, 0], [], []>} : vector<64x8xbf16>, vector<64x8xbf16>, vector<64x64xf32> -> vector<64x64xf32>
    %cst_123 = arith.constant 0.353553385 : f32
    %322 = vector.broadcast %cst_123 : f32 to vector<64x64xf32>
    %323 = arith.mulf %321, %322 : vector<64x64xf32>
    %324 = arith.addf %323, %81 : vector<64x64xf32>
    %cst_124 = arith.constant dense<0xFF800000> : vector<64xf32>
    %325 = vector.multi_reduction <maximumf>, %324, %cst_124 [1] : vector<64x64xf32> to vector<64xf32>
    %326 = vector.shape_cast %325 : vector<64xf32> to vector<64x1xf32>
    %327 = vector.broadcast %326 : vector<64x1xf32> to vector<64x64xf32>
    %328 = arith.subf %324, %327 : vector<64x64xf32>
    %329 = math.exp %328 : vector<64x64xf32>
    %cst_125 = arith.constant dense<0.000000e+00> : vector<64xf32>
    %330 = vector.multi_reduction <add>, %329, %cst_125 [1] : vector<64x64xf32> to vector<64xf32>
    %331 = vector.shape_cast %330 : vector<64xf32> to vector<64x1xf32>
    %332 = tpu.reciprocal %331 {approx = true} : vector<64x1xf32> -> vector<64x1xf32>
    %333 = vector.broadcast %332 : vector<64x1xf32> to vector<64x64xf32>
    %334 = arith.mulf %329, %333 : vector<64x64xf32>
    %335 = arith.truncf %334 : vector<64x64xf32> to vector<64x64xbf16>
    %cst_126 = arith.constant dense<0.000000e+00> : vector<64x8xf32>
    %336 = tpu.matmul %335, %320, %cst_126 {dimension_numbers = #tpu.dot_dimension_numbers<[1], [0], [0], [1], [0, 0, 1, 1], [], []>} : vector<64x64xbf16>, vector<64x8xbf16>, vector<64x8xf32> -> vector<64x8xf32>
    %337 = vector.extract_strided_slice %290 {offsets = [0, 16], sizes = [64, 8], strides = [1, 1]} : vector<64x32xf32> to vector<64x8xf32>
    %338 = arith.truncf %337 : vector<64x8xf32> to vector<64x8xbf16>
    %339 = vector.extract_strided_slice %291 {offsets = [0, 16], sizes = [64, 8], strides = [1, 1]} : vector<64x32xf32> to vector<64x8xf32>
    %340 = arith.truncf %339 : vector<64x8xf32> to vector<64x8xbf16>
    %341 = vector.extract_strided_slice %292 {offsets = [0, 16], sizes = [64, 8], strides = [1, 1]} : vector<64x32xf32> to vector<64x8xf32>
    %342 = arith.truncf %341 : vector<64x8xf32> to vector<64x8xbf16>
    %cst_127 = arith.constant dense<0.000000e+00> : vector<64x64xf32>
    %343 = tpu.matmul %338, %340, %cst_127 {dimension_numbers = #tpu.dot_dimension_numbers<[1], [1], [0], [0], [0, 0, 1, 0], [], []>} : vector<64x8xbf16>, vector<64x8xbf16>, vector<64x64xf32> -> vector<64x64xf32>
    %cst_128 = arith.constant 0.353553385 : f32
    %344 = vector.broadcast %cst_128 : f32 to vector<64x64xf32>
    %345 = arith.mulf %343, %344 : vector<64x64xf32>
    %346 = arith.addf %345, %81 : vector<64x64xf32>
    %cst_129 = arith.constant dense<0xFF800000> : vector<64xf32>
    %347 = vector.multi_reduction <maximumf>, %346, %cst_129 [1] : vector<64x64xf32> to vector<64xf32>
    %348 = vector.shape_cast %347 : vector<64xf32> to vector<64x1xf32>
    %349 = vector.broadcast %348 : vector<64x1xf32> to vector<64x64xf32>
    %350 = arith.subf %346, %349 : vector<64x64xf32>
    %351 = math.exp %350 : vector<64x64xf32>
    %cst_130 = arith.constant dense<0.000000e+00> : vector<64xf32>
    %352 = vector.multi_reduction <add>, %351, %cst_130 [1] : vector<64x64xf32> to vector<64xf32>
    %353 = vector.shape_cast %352 : vector<64xf32> to vector<64x1xf32>
    %354 = tpu.reciprocal %353 {approx = true} : vector<64x1xf32> -> vector<64x1xf32>
    %355 = vector.broadcast %354 : vector<64x1xf32> to vector<64x64xf32>
    %356 = arith.mulf %351, %355 : vector<64x64xf32>
    %357 = arith.truncf %356 : vector<64x64xf32> to vector<64x64xbf16>
    %cst_131 = arith.constant dense<0.000000e+00> : vector<64x8xf32>
    %358 = tpu.matmul %357, %342, %cst_131 {dimension_numbers = #tpu.dot_dimension_numbers<[1], [0], [0], [1], [0, 0, 1, 1], [], []>} : vector<64x64xbf16>, vector<64x8xbf16>, vector<64x8xf32> -> vector<64x8xf32>
    %359 = vector.extract_strided_slice %290 {offsets = [0, 24], sizes = [64, 8], strides = [1, 1]} : vector<64x32xf32> to vector<64x8xf32>
    %360 = arith.truncf %359 : vector<64x8xf32> to vector<64x8xbf16>
    %361 = vector.extract_strided_slice %291 {offsets = [0, 24], sizes = [64, 8], strides = [1, 1]} : vector<64x32xf32> to vector<64x8xf32>
    %362 = arith.truncf %361 : vector<64x8xf32> to vector<64x8xbf16>
    %363 = vector.extract_strided_slice %292 {offsets = [0, 24], sizes = [64, 8], strides = [1, 1]} : vector<64x32xf32> to vector<64x8xf32>
    %364 = arith.truncf %363 : vector<64x8xf32> to vector<64x8xbf16>
    %cst_132 = arith.constant dense<0.000000e+00> : vector<64x64xf32>
    %365 = tpu.matmul %360, %362, %cst_132 {dimension_numbers = #tpu.dot_dimension_numbers<[1], [1], [0], [0], [0, 0, 1, 0], [], []>} : vector<64x8xbf16>, vector<64x8xbf16>, vector<64x64xf32> -> vector<64x64xf32>
    %cst_133 = arith.constant 0.353553385 : f32
    %366 = vector.broadcast %cst_133 : f32 to vector<64x64xf32>
    %367 = arith.mulf %365, %366 : vector<64x64xf32>
    %368 = arith.addf %367, %81 : vector<64x64xf32>
    %cst_134 = arith.constant dense<0xFF800000> : vector<64xf32>
    %369 = vector.multi_reduction <maximumf>, %368, %cst_134 [1] : vector<64x64xf32> to vector<64xf32>
    %370 = vector.shape_cast %369 : vector<64xf32> to vector<64x1xf32>
    %371 = vector.broadcast %370 : vector<64x1xf32> to vector<64x64xf32>
    %372 = arith.subf %368, %371 : vector<64x64xf32>
    %373 = math.exp %372 : vector<64x64xf32>
    %cst_135 = arith.constant dense<0.000000e+00> : vector<64xf32>
    %374 = vector.multi_reduction <add>, %373, %cst_135 [1] : vector<64x64xf32> to vector<64xf32>
    %375 = vector.shape_cast %374 : vector<64xf32> to vector<64x1xf32>
    %376 = tpu.reciprocal %375 {approx = true} : vector<64x1xf32> -> vector<64x1xf32>
    %377 = vector.broadcast %376 : vector<64x1xf32> to vector<64x64xf32>
    %378 = arith.mulf %373, %377 : vector<64x64xf32>
    %379 = arith.truncf %378 : vector<64x64xf32> to vector<64x64xbf16>
    %cst_136 = arith.constant dense<0.000000e+00> : vector<64x8xf32>
    %380 = tpu.matmul %379, %364, %cst_136 {dimension_numbers = #tpu.dot_dimension_numbers<[1], [0], [0], [1], [0, 0, 1, 1], [], []>} : vector<64x64xbf16>, vector<64x8xbf16>, vector<64x8xf32> -> vector<64x8xf32>
    %381 = tpu.concatenate %314, %336, %358, %380 in 1 : vector<64x8xf32>, vector<64x8xf32>, vector<64x8xf32>, vector<64x8xf32> -> vector<64x32xf32>
    %382 = arith.truncf %381 : vector<64x32xf32> to vector<64x32xbf16>
    %c1_137 = arith.constant 1 : index
    %c0_138 = arith.constant 0 : index
    %c0_139 = arith.constant 0 : index
    %383 = vector.load %arg8[%c1_137, %c0_138, %c0_139] : memref<2x32x32xbf16, #tpu.memory_space<vmem>>, vector<1x32x32xbf16>
    %384 = vector.shape_cast %383 : vector<1x32x32xbf16> to vector<32x32xbf16>
    %cst_140 = arith.constant dense<0.000000e+00> : vector<64x32xf32>
    %385 = tpu.matmul %382, %384, %cst_140 {dimension_numbers = #tpu.dot_dimension_numbers<[1], [0], [0], [1], [0, 0, 1, 1], [], []>} : vector<64x32xbf16>, vector<32x32xbf16>, vector<64x32xf32> -> vector<64x32xf32>
    %c1_141 = arith.constant 1 : index
    %c0_142 = arith.constant 0 : index
    %c0_143 = arith.constant 0 : index
    %386 = vector.load %arg9[%c1_141, %c0_142, %c0_143] : memref<2x1x32xf32, #tpu.memory_space<vmem>>, vector<1x1x32xf32>
    %387 = vector.shape_cast %386 : vector<1x1x32xf32> to vector<1x32xf32>
    %388 = vector.broadcast %387 : vector<1x32xf32> to vector<64x32xf32>
    %389 = arith.addf %385, %388 : vector<64x32xf32>
    %390 = arith.addf %257, %389 : vector<64x32xf32>
    %c1_144 = arith.constant 1 : index
    %c0_145 = arith.constant 0 : index
    %c0_146 = arith.constant 0 : index
    %391 = vector.load %arg10[%c1_144, %c0_145, %c0_146] : memref<2x1x32xf32, #tpu.memory_space<vmem>>, vector<1x1x32xf32>
    %392 = vector.shape_cast %391 : vector<1x1x32xf32> to vector<1x32xf32>
    %c1_147 = arith.constant 1 : index
    %c0_148 = arith.constant 0 : index
    %c0_149 = arith.constant 0 : index
    %393 = vector.load %arg11[%c1_147, %c0_148, %c0_149] : memref<2x1x32xf32, #tpu.memory_space<vmem>>, vector<1x1x32xf32>
    %394 = vector.shape_cast %393 : vector<1x1x32xf32> to vector<1x32xf32>
    %cst_150 = arith.constant dense<0.000000e+00> : vector<64xf32>
    %395 = vector.multi_reduction <add>, %390, %cst_150 [1] : vector<64x32xf32> to vector<64xf32>
    %396 = vector.shape_cast %395 : vector<64xf32> to vector<64x1xf32>
    %cst_151 = arith.constant 3.200000e+01 : f32
    %397 = vector.broadcast %cst_151 : f32 to vector<64x1xf32>
    %398 = arith.divf %396, %397 : vector<64x1xf32>
    %399 = vector.broadcast %398 : vector<64x1xf32> to vector<64x32xf32>
    %400 = arith.subf %390, %399 : vector<64x32xf32>
    %401 = arith.mulf %400, %400 : vector<64x32xf32>
    %cst_152 = arith.constant dense<0.000000e+00> : vector<64xf32>
    %402 = vector.multi_reduction <add>, %401, %cst_152 [1] : vector<64x32xf32> to vector<64xf32>
    %403 = vector.shape_cast %402 : vector<64xf32> to vector<64x1xf32>
    %cst_153 = arith.constant 3.200000e+01 : f32
    %404 = vector.broadcast %cst_153 : f32 to vector<64x1xf32>
    %405 = arith.divf %403, %404 : vector<64x1xf32>
    %cst_154 = arith.constant 9.99999974E-6 : f32
    %406 = vector.broadcast %cst_154 : f32 to vector<64x1xf32>
    %407 = arith.addf %405, %406 : vector<64x1xf32>
    %408 = math.rsqrt %407 : vector<64x1xf32>
    %409 = vector.broadcast %408 : vector<64x1xf32> to vector<64x32xf32>
    %410 = arith.mulf %400, %409 : vector<64x32xf32>
    %411 = vector.broadcast %392 : vector<1x32xf32> to vector<64x32xf32>
    %412 = arith.mulf %410, %411 : vector<64x32xf32>
    %413 = vector.broadcast %394 : vector<1x32xf32> to vector<64x32xf32>
    %414 = arith.addf %412, %413 : vector<64x32xf32>
    %415 = arith.truncf %414 : vector<64x32xf32> to vector<64x32xbf16>
    %c1_155 = arith.constant 1 : index
    %c0_156 = arith.constant 0 : index
    %c0_157 = arith.constant 0 : index
    %416 = vector.load %arg12[%c1_155, %c0_156, %c0_157] : memref<2x32x64xbf16, #tpu.memory_space<vmem>>, vector<1x32x64xbf16>
    %417 = vector.shape_cast %416 : vector<1x32x64xbf16> to vector<32x64xbf16>
    %cst_158 = arith.constant dense<0.000000e+00> : vector<64x64xf32>
    %418 = tpu.matmul %415, %417, %cst_158 {dimension_numbers = #tpu.dot_dimension_numbers<[1], [0], [0], [1], [0, 0, 1, 1], [], []>} : vector<64x32xbf16>, vector<32x64xbf16>, vector<64x64xf32> -> vector<64x64xf32>
    %c1_159 = arith.constant 1 : index
    %c0_160 = arith.constant 0 : index
    %c0_161 = arith.constant 0 : index
    %419 = vector.load %arg13[%c1_159, %c0_160, %c0_161] : memref<2x1x64xf32, #tpu.memory_space<vmem>>, vector<1x1x64xf32>
    %420 = vector.shape_cast %419 : vector<1x1x64xf32> to vector<1x64xf32>
    %421 = vector.broadcast %420 : vector<1x64xf32> to vector<64x64xf32>
    %422 = arith.addf %418, %421 : vector<64x64xf32>
    %cst_162 = arith.constant 0.000000e+00 : f32
    %423 = vector.broadcast %cst_162 : f32 to vector<64x64xf32>
    %424 = arith.maximumf %422, %423 : vector<64x64xf32>
    %425 = arith.truncf %424 : vector<64x64xf32> to vector<64x64xbf16>
    %c1_163 = arith.constant 1 : index
    %c0_164 = arith.constant 0 : index
    %c0_165 = arith.constant 0 : index
    %426 = vector.load %arg14[%c1_163, %c0_164, %c0_165] : memref<2x64x32xbf16, #tpu.memory_space<vmem>>, vector<1x64x32xbf16>
    %427 = vector.shape_cast %426 : vector<1x64x32xbf16> to vector<64x32xbf16>
    %cst_166 = arith.constant dense<0.000000e+00> : vector<64x32xf32>
    %428 = tpu.matmul %425, %427, %cst_166 {dimension_numbers = #tpu.dot_dimension_numbers<[1], [0], [0], [1], [0, 0, 1, 1], [], []>} : vector<64x64xbf16>, vector<64x32xbf16>, vector<64x32xf32> -> vector<64x32xf32>
    %429 = arith.addf %390, %428 : vector<64x32xf32>
    %c1_167 = arith.constant 1 : index
    %c0_168 = arith.constant 0 : index
    %c0_169 = arith.constant 0 : index
    %430 = vector.load %arg15[%c1_167, %c0_168, %c0_169] : memref<2x1x32xf32, #tpu.memory_space<vmem>>, vector<1x1x32xf32>
    %431 = vector.shape_cast %430 : vector<1x1x32xf32> to vector<1x32xf32>
    %432 = vector.broadcast %431 : vector<1x32xf32> to vector<64x32xf32>
    %433 = arith.addf %429, %432 : vector<64x32xf32>
    %434 = tpu.iota {dimensions = array<i32: 0>} : vector<32x1024xi32>
    %435 = tpu.iota {dimensions = array<i32: 1>} : vector<32x1024xi32>
    %c31_i32_170 = arith.constant 31 : i32
    %436 = vector.broadcast %c31_i32_170 : i32 to vector<32x1024xi32>
    %437 = arith.andi %435, %436 : vector<32x1024xi32>
    %438 = arith.cmpi eq, %437, %434 : vector<32x1024xi32>
    %cst_171 = arith.constant 1.000000e+00 : f32
    %cst_172 = arith.constant 0.000000e+00 : f32
    %439 = vector.broadcast %cst_171 : f32 to vector<32x1024xf32>
    %440 = vector.broadcast %cst_172 : f32 to vector<32x1024xf32>
    %441 = arith.select %438, %439, %440 : vector<32x1024xi1>, vector<32x1024xf32>
    %442 = arith.truncf %441 : vector<32x1024xf32> to vector<32x1024xbf16>
    %443 = arith.truncf %433 : vector<64x32xf32> to vector<64x32xbf16>
    %cst_173 = arith.constant dense<0.000000e+00> : vector<64x1024xf32>
    %444 = tpu.matmul %443, %442, %cst_173 {dimension_numbers = #tpu.dot_dimension_numbers<[1], [0], [0], [1], [0, 0, 1, 1], [], []>} : vector<64x32xbf16>, vector<32x1024xbf16>, vector<64x1024xf32> -> vector<64x1024xf32>
    %445 = tpu.iota {dimensions = array<i32: 0>} : vector<64x1024xi32>
    %446 = tpu.iota {dimensions = array<i32: 1>} : vector<64x1024xi32>
    %c5_i32_174 = arith.constant 5 : i32
    %447 = vector.broadcast %c5_i32_174 : i32 to vector<64x1024xi32>
    %448 = arith.shrsi %446, %447 : vector<64x1024xi32>
    %c31_i32_175 = arith.constant 31 : i32
    %449 = vector.broadcast %c31_i32_175 : i32 to vector<64x1024xi32>
    %450 = arith.andi %445, %449 : vector<64x1024xi32>
    %451 = arith.cmpi eq, %448, %450 : vector<64x1024xi32>
    %cst_176 = arith.constant 0.000000e+00 : f32
    %452 = vector.broadcast %cst_176 : f32 to vector<64x1024xf32>
    %453 = arith.select %451, %444, %452 : vector<64x1024xi1>, vector<64x1024xf32>
    %454 = arith.truncf %453 : vector<64x1024xf32> to vector<64x1024xbf16>
    %c0_177 = arith.constant 0 : index
    %c0_178 = arith.constant 0 : index
    %455 = vector.load %arg16[%c0_177, %c0_178] : memref<1024x512xbf16, #tpu.memory_space<vmem>>, vector<1024x512xbf16>
    %cst_179 = arith.constant dense<0.000000e+00> : vector<64x512xf32>
    %456 = tpu.matmul %454, %455, %cst_179 {dimension_numbers = #tpu.dot_dimension_numbers<[1], [0], [0], [1], [0, 0, 1, 1], [], []>} : vector<64x1024xbf16>, vector<1024x512xbf16>, vector<64x512xf32> -> vector<64x512xf32>
    %457 = tpu.iota {dimensions = array<i32: 0>} : vector<2x64xi32>
    %458 = tpu.iota {dimensions = array<i32: 1>} : vector<2x64xi32>
    %c5_i32_180 = arith.constant 5 : i32
    %459 = vector.broadcast %c5_i32_180 : i32 to vector<2x64xi32>
    %460 = arith.shrsi %458, %459 : vector<2x64xi32>
    %461 = arith.cmpi eq, %460, %457 : vector<2x64xi32>
    %cst_181 = arith.constant 1.000000e+00 : f32
    %cst_182 = arith.constant 0.000000e+00 : f32
    %462 = vector.broadcast %cst_181 : f32 to vector<2x64xf32>
    %463 = vector.broadcast %cst_182 : f32 to vector<2x64xf32>
    %464 = arith.select %461, %462, %463 : vector<2x64xi1>, vector<2x64xf32>
    %cst_183 = arith.constant dense<0.000000e+00> : vector<2x512xf32>
    %465 = tpu.matmul %464, %456, %cst_183 {dimension_numbers = #tpu.dot_dimension_numbers<[1], [0], [0], [1], [0, 0, 1, 1], [], []>} : vector<2x64xf32>, vector<64x512xf32>, vector<2x512xf32> -> vector<2x512xf32>
    %c0_184 = arith.constant 0 : index
    %c0_185 = arith.constant 0 : index
    %466 = vector.load %arg17[%c0_184, %c0_185] : memref<1x512xf32, #tpu.memory_space<vmem>>, vector<1x512xf32>
    %467 = vector.broadcast %466 : vector<1x512xf32> to vector<2x512xf32>
    %468 = arith.addf %465, %467 : vector<2x512xf32>
    %cst_186 = arith.constant 0.000000e+00 : f32
    %469 = vector.broadcast %cst_186 : f32 to vector<2x512xf32>
    %470 = arith.maximumf %468, %469 : vector<2x512xf32>
    %471 = arith.truncf %470 : vector<2x512xf32> to vector<2x512xbf16>
    %c0_187 = arith.constant 0 : index
    %c0_188 = arith.constant 0 : index
    %472 = vector.load %arg18[%c0_187, %c0_188] : memref<512x128xbf16, #tpu.memory_space<vmem>>, vector<512x128xbf16>
    %cst_189 = arith.constant dense<0.000000e+00> : vector<2x128xf32>
    %473 = tpu.matmul %471, %472, %cst_189 {dimension_numbers = #tpu.dot_dimension_numbers<[1], [0], [0], [1], [0, 0, 1, 1], [], []>} : vector<2x512xbf16>, vector<512x128xbf16>, vector<2x128xf32> -> vector<2x128xf32>
    %c0_190 = arith.constant 0 : index
    %c0_191 = arith.constant 0 : index
    %474 = vector.load %arg19[%c0_190, %c0_191] : memref<1x128xf32, #tpu.memory_space<vmem>>, vector<1x128xf32>
    %475 = vector.broadcast %474 : vector<1x128xf32> to vector<2x128xf32>
    %476 = arith.addf %473, %475 : vector<2x128xf32>
    %cst_192 = arith.constant 0.000000e+00 : f32
    %477 = vector.broadcast %cst_192 : f32 to vector<2x128xf32>
    %478 = arith.maximumf %476, %477 : vector<2x128xf32>
    %479 = arith.truncf %478 : vector<2x128xf32> to vector<2x128xbf16>
    %c0_193 = arith.constant 0 : index
    %c0_194 = arith.constant 0 : index
    %480 = vector.load %arg20[%c0_193, %c0_194] : memref<128x4xbf16, #tpu.memory_space<vmem>>, vector<128x4xbf16>
    %cst_195 = arith.constant dense<0.000000e+00> : vector<2x4xf32>
    %481 = tpu.matmul %479, %480, %cst_195 {dimension_numbers = #tpu.dot_dimension_numbers<[1], [0], [0], [1], [0, 0, 1, 1], [], []>} : vector<2x128xbf16>, vector<128x4xbf16>, vector<2x4xf32> -> vector<2x4xf32>
    %c0_196 = arith.constant 0 : index
    %c0_197 = arith.constant 0 : index
    %482 = vector.load %arg21[%c0_196, %c0_197] : memref<1x4xf32, #tpu.memory_space<vmem>>, vector<1x4xf32>
    %483 = vector.broadcast %482 : vector<1x4xf32> to vector<2x4xf32>
    %484 = arith.addf %481, %483 : vector<2x4xf32>
    %cst_198 = arith.constant dense<0xFF800000> : vector<2xf32>
    %485 = vector.multi_reduction <maximumf>, %484, %cst_198 [1] : vector<2x4xf32> to vector<2xf32>
    %486 = vector.shape_cast %485 : vector<2xf32> to vector<2x1xf32>
    %487 = vector.broadcast %486 : vector<2x1xf32> to vector<2x4xf32>
    %488 = arith.subf %484, %487 : vector<2x4xf32>
    %489 = math.exp %488 : vector<2x4xf32>
    %cst_199 = arith.constant dense<0.000000e+00> : vector<2xf32>
    %490 = vector.multi_reduction <add>, %489, %cst_199 [1] : vector<2x4xf32> to vector<2xf32>
    %491 = vector.shape_cast %490 : vector<2xf32> to vector<2x1xf32>
    %492 = vector.broadcast %491 : vector<2x1xf32> to vector<2x4xf32>
    %493 = arith.divf %489, %492 : vector<2x4xf32>
    %c0_200 = arith.constant 0 : index
    %c0_201 = arith.constant 0 : index
    %494 = vector.load %arg22[%c0_200, %c0_201] : memref<2x4xf32, #tpu.memory_space<vmem>>, vector<2x4xf32>
    tpu.vector_store %arg22[%c0_200, %c0_201], %493 {strides = array<i32>} : memref<2x4xf32, #tpu.memory_space<vmem>>, vector<2x4xf32>,
    return
  }
}

</mosaic_0001>

<llo_original>
// kernel: forward.1
$region0: #{forward.1}
  #allocation0 [shape = 'u32[]', space=smem, size = 0x4, offset = 0x4, fixed_abs, tag = 'smem constant byte address 0x4 - core index']
  #allocation1 [shape = 'u32[144,128]{1,0:T(1,128)}', space=vmem, size = 0x12000, scoped, tag = 'internal scratch']
  %s0 = inlined_call_operand.vmem [shape: f32[64,160], index: 0, kind: input, shape index: {}]
  %s1 = inlined_call_operand.vmem [shape: bf16[160,32], index: 1, kind: input, shape index: {}]
  %s2 = inlined_call_operand.vmem [shape: bf16[256,32], index: 2, kind: input, shape index: {}]
  %s3 = inlined_call_operand.vmem [shape: f32[64,32], index: 3, kind: input, shape index: {}]
  %s4 = inlined_call_operand.vmem [shape: f32[2,1,32], index: 4, kind: input, shape index: {}]
  %s5 = inlined_call_operand.vmem [shape: f32[2,1,32], index: 5, kind: input, shape index: {}]
  %s6 = inlined_call_operand.vmem [shape: bf16[2,32,96], index: 6, kind: input, shape index: {}]
  %s7 = inlined_call_operand.vmem [shape: f32[2,1,96], index: 7, kind: input, shape index: {}]
  %s8 = inlined_call_operand.vmem [shape: bf16[2,32,32], index: 8, kind: input, shape index: {}]
  %s9 = inlined_call_operand.vmem [shape: f32[2,1,32], index: 9, kind: input, shape index: {}]
  %s10 = inlined_call_operand.vmem [shape: f32[2,1,32], index: 10, kind: input, shape index: {}]
  %s11 = inlined_call_operand.vmem [shape: f32[2,1,32], index: 11, kind: input, shape index: {}]
  %s12 = inlined_call_operand.vmem [shape: bf16[2,32,64], index: 12, kind: input, shape index: {}]
  %s13 = inlined_call_operand.vmem [shape: f32[2,1,64], index: 13, kind: input, shape index: {}]
  %s14 = inlined_call_operand.vmem [shape: bf16[2,64,32], index: 14, kind: input, shape index: {}]
  %s15 = inlined_call_operand.vmem [shape: f32[2,1,32], index: 15, kind: input, shape index: {}]
  %s16 = inlined_call_operand.hbm [shape: bf16[1024,512], index: 16, kind: input, shape index: {}]
  %s17 = inlined_call_operand.vmem [shape: f32[1,512], index: 17, kind: input, shape index: {}]
  %s18 = inlined_call_operand.vmem [shape: bf16[512,128], index: 18, kind: input, shape index: {}]
  %s19 = inlined_call_operand.vmem [shape: f32[1,128], index: 19, kind: input, shape index: {}]
  %s20 = inlined_call_operand.vmem [shape: bf16[128,4], index: 20, kind: input, shape index: {}]
  %s21 = inlined_call_operand.vmem [shape: f32[1,4], index: 21, kind: input, shape index: {}]
  %s22 = inlined_call_operand.hbm [shape: f32[2,4], index: 22, kind: output, shape index: {}]
  %s23 = sld [smem:[#allocation0]]
  $region102: #{forward.1} parent=0
    _
  %s25 = ssub.s32 1, %s23
  %s26 = scalar_select 0, %s25, %s23
  $region1: #{forward.1} parent=0
    #allocation2 [shape = 'u8[1048576]{0}', space=vmem, size = 0x100000, scoped, tag = 'input window, operand 16, single buffered']
    #allocation3 [shape = 's32[1]{0}', space=sflag, size = 0x4, scoped, tag = 'scoped memory for forward.1']
    #allocation4 [shape = 's32[1]{0}', space=sflag, size = 0x4, scoped, tag = 'scoped memory for forward.1']
    #allocation5 [shape = 'u8[1024]{0}', space=vmem, size = 0x400, scoped, tag = 'output window, operand 0, single buffered']
    %27 = vsyncpa [#allocation3], 0
    %28 = vsyncpa [#allocation4], 0
    // Predicated region
    $region2: #{forward.1} parent=1 // pred_check
      _
    $region3: #{forward.1} parent=1 // pred_check_branch
      %30 = sbr.rel (0) target = $region5
    $region4: #{forward.1} parent=1 // pred_region
      _
    $region5: #{forward.1} parent=1 // pred_fallthru
      _
    // Predicated region
    $region6: #{forward.1} parent=1 // pred_check
      _
    $region7: #{forward.1} parent=1 // pred_check_branch
      %32 = sbr.rel (0) target = $region9
    $region8: #{forward.1} parent=1 // pred_region
      _
    $region9: #{forward.1} parent=1 // pred_fallthru
      _
    // Predicated region
    $region10: #{forward.1} parent=1 // pred_check
      _
    $region11: #{forward.1} parent=1 // pred_check_branch
      %34 = sbr.rel (0) target = $region13
    $region12: #{forward.1} parent=1 // pred_region
      _
    $region13: #{forward.1} parent=1 // pred_fallthru
      _
    // Predicated region
    $region14: #{forward.1} parent=1 // pred_check
      _
    $region15: #{forward.1} parent=1 // pred_check_branch
      %36 = sbr.rel (0) target = $region17
    $region16: #{forward.1} parent=1 // pred_region
      _
    $region17: #{forward.1} parent=1 // pred_fallthru
      _
    // Predicated region
    $region18: #{forward.1} parent=1 // pred_check
      _
    $region19: #{forward.1} parent=1 // pred_check_branch
      %38 = sbr.rel (0) target = $region21
    $region20: #{forward.1} parent=1 // pred_region
      _
    $region21: #{forward.1} parent=1 // pred_fallthru
      _
    // Predicated region
    $region22: #{forward.1} parent=1 // pred_check
      _
    $region23: #{forward.1} parent=1 // pred_check_branch
      %40 = sbr.rel (0) target = $region25
    $region24: #{forward.1} parent=1 // pred_region
      _
    $region25: #{forward.1} parent=1 // pred_fallthru
      _
    // Predicated region
    $region26: #{forward.1} parent=1 // pred_check
      _
    $region27: #{forward.1} parent=1 // pred_check_branch
      %42 = sbr.rel (0) target = $region29
    $region28: #{forward.1} parent=1 // pred_region
      _
    $region29: #{forward.1} parent=1 // pred_fallthru
      _
    // Predicated region
    $region30: #{forward.1} parent=1 // pred_check
      _
    $region31: #{forward.1} parent=1 // pred_check_branch
      %44 = sbr.rel (0) target = $region33
    $region32: #{forward.1} parent=1 // pred_region
      _
    $region33: #{forward.1} parent=1 // pred_fallthru
      _
    // Predicated region
    $region34: #{forward.1} parent=1 // pred_check
      _
    $region35: #{forward.1} parent=1 // pred_check_branch
      %46 = sbr.rel (0) target = $region37
    $region36: #{forward.1} parent=1 // pred_region
      _
    $region37: #{forward.1} parent=1 // pred_fallthru
      _
    // Predicated region
    $region38: #{forward.1} parent=1 // pred_check
      _
    $region39: #{forward.1} parent=1 // pred_check_branch
      %48 = sbr.rel (0) target = $region41
    $region40: #{forward.1} parent=1 // pred_region
      _
    $region41: #{forward.1} parent=1 // pred_fallthru
      _
    // Predicated region
    $region42: #{forward.1} parent=1 // pred_check
      _
    $region43: #{forward.1} parent=1 // pred_check_branch
      %50 = sbr.rel (0) target = $region45
    $region44: #{forward.1} parent=1 // pred_region
      _
    $region45: #{forward.1} parent=1 // pred_fallthru
      _
    // Predicated region
    $region46: #{forward.1} parent=1 // pred_check
      _
    $region47: #{forward.1} parent=1 // pred_check_branch
      %52 = sbr.rel (0) target = $region49
    $region48: #{forward.1} parent=1 // pred_region
      _
    $region49: #{forward.1} parent=1 // pred_fallthru
      _
    // Predicated region
    $region50: #{forward.1} parent=1 // pred_check
      _
    $region51: #{forward.1} parent=1 // pred_check_branch
      %54 = sbr.rel (0) target = $region53
    $region52: #{forward.1} parent=1 // pred_region
      _
    $region53: #{forward.1} parent=1 // pred_fallthru
      _
    // Predicated region
    $region54: #{forward.1} parent=1 // pred_check
      _
    $region55: #{forward.1} parent=1 // pred_check_branch
      %56 = sbr.rel (0) target = $region57
    $region56: #{forward.1} parent=1 // pred_region
      _
    $region57: #{forward.1} parent=1 // pred_fallthru
      _
    // Predicated region
    $region58: #{forward.1} parent=1 // pred_check
      _
    $region59: #{forward.1} parent=1 // pred_check_branch
      %58 = sbr.rel (0) target = $region61
    $region60: #{forward.1} parent=1 // pred_region
      _
    $region61: #{forward.1} parent=1 // pred_fallthru
      _
    // Predicated region
    $region62: #{forward.1} parent=1 // pred_check
      _
    $region63: #{forward.1} parent=1 // pred_check_branch
      %60 = sbr.rel (0) target = $region65
    $region64: #{forward.1} parent=1 // pred_region
      _
    $region65: #{forward.1} parent=1 // pred_fallthru
      _
    // Predicated region
    $region66: #{forward.1} parent=1 // pred_check
      _
    $region67: #{forward.1} parent=1 // pred_check_branch
      %62 = sbr.rel (0) target = $region69
    $region68: #{forward.1} parent=1 // pred_region
      %s64 = ssub.s32 32768, 32768
      %65 = vsyncadd [#allocation3], %s64
      %s66 = sshll.u32 [#allocation2], 4
      %s67 = int_to_ptr.vmem [resolvable:$true] %s66
      %72 = dma.hbm_to_vmem [thread:$0]  %s16, 32768, %s67, [#allocation3], 256, 256, 16
    $region69: #{forward.1} parent=1 // pred_fallthru
      _
    // Predicated region
    $region70: #{forward.1} parent=1 // pred_check
      _
    $region71: #{forward.1} parent=1 // pred_check_branch
      %74 = sbr.rel (0) target = $region73
    $region72: #{forward.1} parent=1 // pred_region
      _
    $region73: #{forward.1} parent=1 // pred_fallthru
      _
    // Predicated region
    $region74: #{forward.1} parent=1 // pred_check
      _
    $region75: #{forward.1} parent=1 // pred_check_branch
      %76 = sbr.rel (0) target = $region77
    $region76: #{forward.1} parent=1 // pred_region
      _
    $region77: #{forward.1} parent=1 // pred_fallthru
      _
    // Predicated region
    $region78: #{forward.1} parent=1 // pred_check
      _
    $region79: #{forward.1} parent=1 // pred_check_branch
      %78 = sbr.rel (0) target = $region81
    $region80: #{forward.1} parent=1 // pred_region
      _
    $region81: #{forward.1} parent=1 // pred_fallthru
      _
    // Predicated region
    $region82: #{forward.1} parent=1 // pred_check
      _
    $region83: #{forward.1} parent=1 // pred_check_branch
      %80 = sbr.rel (0) target = $region85
    $region84: #{forward.1} parent=1 // pred_region
      _
    $region85: #{forward.1} parent=1 // pred_fallthru
      _
    // Predicated region
    $region86: #{forward.1} parent=1 // pred_check
      _
    $region87: #{forward.1} parent=1 // pred_check_branch
      %82 = sbr.rel (0) target = $region89
    $region88: #{forward.1} parent=1 // pred_region
      _
    $region89: #{forward.1} parent=1 // pred_fallthru
      _
    // Predicated region
    $region90: #{forward.1} parent=1 // pred_check
      _
    $region91: #{forward.1} parent=1 // pred_check_branch
      %84 = sbr.rel (0) target = $region93
    $region92: #{forward.1} parent=1 // pred_region
      %85 = dma.done [#allocation3], 32768
    $region93: #{forward.1} parent=1 // pred_fallthru
      _
    %v87 = vld [vmem:[%s0] sm:$0xff]
    %v88 = vld [vmem:[%s0 + $0x8] sm:$0xff]
    %v89 = vld [vmem:[%s0 + $0x10] sm:$0xff]
    %v90 = vld [vmem:[%s0 + $0x18] sm:$0xff]
    %v91 = vld [vmem:[%s0 + $0x20] sm:$0xff]
    %v92 = vld [vmem:[%s0 + $0x28] sm:$0xff]
    %v93 = vld [vmem:[%s0 + $0x30] sm:$0xff]
    %v94 = vld [vmem:[%s0 + $0x38] sm:$0xff]
    %v95 = vld [vmem:[%s0 + $0x40] sm:$0xff]
    %v96 = vld [vmem:[%s0 + $0x48] sm:$0xff]
    %v97 = vld [vmem:[%s0 + $0x50] sm:$0xff]
    %v98 = vld [vmem:[%s0 + $0x58] sm:$0xff]
    %v99 = vld [vmem:[%s0 + $0x60] sm:$0xff]
    %v100 = vld [vmem:[%s0 + $0x68] sm:$0xff]
    %v101 = vld [vmem:[%s0 + $0x70] sm:$0xff]
    %v102 = vld [vmem:[%s0 + $0x78] sm:$0xff]
    %v103 = vpack.c.bf16 %v89, %v87
    %v104 = vpack.c.bf16 %v90, %v88
    %v105 = vpack.c.bf16 %v93, %v91
    %v106 = vpack.c.bf16 %v94, %v92
    %v107 = vpack.c.bf16 %v97, %v95
    %v108 = vpack.c.bf16 %v98, %v96
    %v109 = vpack.c.bf16 %v101, %v99
    %v110 = vpack.c.bf16 %v102, %v100
    %v111 = vld [vmem:[%s1] sm:$0xf]
    %v112 = vld [vmem:[%s1 + $0x4] sm:$0xf]
    %v113 = vld [vmem:[%s1 + $0x8] sm:$0xf]
    %v114 = vld [vmem:[%s1 + $0xc] sm:$0xf]
    %v115 = vld [vmem:[%s1 + $0x10] sm:$0xf]
    %v116 = vld [vmem:[%s1 + $0x14] sm:$0xf]
    %v117 = vld [vmem:[%s1 + $0x18] sm:$0xf]
    %v118 = vld [vmem:[%s1 + $0x1c] sm:$0xf]
    %v119 = vld [vmem:[%s1 + $0x20] sm:$0xf]
    %v120 = vld [vmem:[%s1 + $0x24] sm:$0xf]
    %v121 = vld [vmem:[%s1 + $0x28] sm:$0xf]
    %v122 = vld [vmem:[%s1 + $0x2c] sm:$0xf]
    %v123 = vld [vmem:[%s1 + $0x30] sm:$0xf]
    %v124 = vld [vmem:[%s1 + $0x34] sm:$0xf]
    %v125 = vld [vmem:[%s1 + $0x38] sm:$0xf]
    %v126 = vld [vmem:[%s1 + $0x3c] sm:$0xf]
    %v127 = vld [vmem:[%s1 + $0x40] sm:$0xf]
    %v128 = vld [vmem:[%s1 + $0x44] sm:$0xf]
    %v129 = vld [vmem:[%s1 + $0x48] sm:$0xf]
    %v130 = vld [vmem:[%s1 + $0x4c] sm:$0xf]
    %v151 = vunpack.c.l.b16 %v111
    %v152 = vunpack.c.l.b16 %v112
    %v153 = vunpack.c.l.b16 %v113
    %v154 = vunpack.c.l.b16 %v114
    %v155 = vunpack.c.l.b16 %v115
    %v156 = vunpack.c.l.b16 %v116
    %v157 = vunpack.c.l.b16 %v117
    %v158 = vunpack.c.l.b16 %v118
    %v159 = vunpack.c.l.b16 %v119
    %v160 = vunpack.c.l.b16 %v120
    %v161 = vunpack.c.l.b16 %v121
    %v162 = vunpack.c.l.b16 %v122
    %v163 = vunpack.c.l.b16 %v123
    %v164 = vunpack.c.l.b16 %v124
    %v165 = vunpack.c.l.b16 %v125
    %v166 = vunpack.c.l.b16 %v126
    %v167 = vunpack.c.l.b16 %v127
    %v168 = vunpack.c.l.b16 %v128
    %v169 = vunpack.c.l.b16 %v129
    %v170 = vunpack.c.l.b16 %v130
    %v171 = vpack.c.b16 %v152, %v151
    %v172 = vpack.c.b16 %v154, %v153
    %v173 = vpack.c.b16 %v156, %v155
    %v174 = vpack.c.b16 %v158, %v157
    %v175 = vpack.c.b16 %v160, %v159
    %v176 = vpack.c.b16 %v162, %v161
    %v177 = vpack.c.b16 %v164, %v163
    %v178 = vpack.c.b16 %v166, %v165
    %v179 = vpack.c.b16 %v168, %v167
    %v180 = vpack.c.b16 %v170, %v169
    %vm191 = vcmask 261120
    %v193 = vsel %vm191, %v104, 0
    %v196 = vsel %vm191, %v106, 0
    %v199 = vsel %vm191, %v108, 0
    %v202 = vsel %vm191, %v110, 0
    %204 = vmatprep.subr.bf16.mxu0 0
    %205 = vmatpush1.bf16.msra.mxu0 %v178
    %206 = vmatprep.subr.bf16.mxu0 0
    %207 = vmatpush1.bf16.msra.mxu0 %v177
    %208 = vmatprep.subr.bf16.mxu0 0
    %209 = vmatpush1.bf16.msra.mxu0 %v176
    %210 = vmatprep.subr.bf16.mxu0 0
    %211 = vmatpush1.bf16.msra.mxu0 %v175
    %212 = vmatprep.subr.bf16.mxu0 0
    %213 = vmatpush1.bf16.msra.mxu0 %v174
    %214 = vmatprep.subr.bf16.mxu0 0
    %215 = vmatpush1.bf16.msra.mxu0 %v173
    %216 = vmatprep.subr.bf16.mxu0 0
    %217 = vmatpush1.bf16.msra.mxu0 %v172
    %218 = vmatprep.subr.bf16.mxu0 0
    %219 = vmatpush1.bf16.msra.mxu0 %v171
    %220 = vmatprep.subr.bf16.mxu0 0
    %221 = vmatpush2.bf16.msra.mxu0 0
    %222 = vmatprep.subr.bf16.mxu0 0
    %223 = vmatpush2.bf16.msra.mxu0 0
    %224 = vmatprep.subr.bf16.mxu0 0
    %225 = vmatpush2.bf16.msra.mxu0 0
    %226 = vmatprep.subr.bf16.mxu0 0
    %227 = vmatpush2.bf16.msra.mxu0 0
    %228 = vmatprep.subr.bf16.mxu0 0
    %229 = vmatpush2.bf16.msra.mxu0 0
    %230 = vmatprep.subr.bf16.mxu0 0
    %231 = vmatpush2.bf16.msra.mxu0 0
    %232 = vmatprep.subr.bf16.mxu0 0
    %233 = vmatpush2.bf16.msra.mxu0 %v180
    %234 = vmatprep.subr.bf16.mxu0 0
    %235 = vmatpush2.bf16.msra.mxu0 %v179
    %236 = vmatprep.mubr.bf16.mxu0 %v193
    %237 = vmatmul.mubr.bf16.gmra.mxu0 %v103
    %v238 = vpop.f32.mrf.mxu0
    %v239 = vadd.f32 0.0, %v238
    %v240 = vpop.f32.mrf.mxu0
    %v241 = vpop.f32.mrf.mxu0
    %v242 = vadd.f32 0.0, %v241
    %v243 = vpop.f32.mrf.mxu0
    %244 = vmatprep.mubr.bf16.mxu0 %v196
    %245 = vmatmul.mubr.bf16.gmra.mxu0 %v105
    %v246 = vpop.f32.mrf.mxu0
    %v247 = vadd.f32 0.0, %v246
    %v248 = vpop.f32.mrf.mxu0
    %v249 = vpop.f32.mrf.mxu0
    %v250 = vadd.f32 0.0, %v249
    %v251 = vpop.f32.mrf.mxu0
    %252 = vmatprep.mubr.bf16.mxu0 %v199
    %253 = vmatmul.mubr.bf16.gmra.mxu0 %v107
    %v254 = vpop.f32.mrf.mxu0
    %v255 = vadd.f32 0.0, %v254
    %v256 = vpop.f32.mrf.mxu0
    %v257 = vpop.f32.mrf.mxu0
    %v258 = vadd.f32 0.0, %v257
    %v259 = vpop.f32.mrf.mxu0
    %260 = vmatprep.mubr.bf16.mxu0 %v202
    %261 = vmatmul.mubr.bf16.gmra.mxu0 %v109
    %v262 = vpop.f32.mrf.mxu0
    %v263 = vadd.f32 0.0, %v262
    %v264 = vpop.f32.mrf.mxu0
    %v265 = vpop.f32.mrf.mxu0
    %v266 = vadd.f32 0.0, %v265
    %v267 = vpop.f32.mrf.mxu0
    %268 = vdwg.mxu0
    %v269 = vmul.f32 %v239, %v239
    %v270 = vmul.f32 %v242, %v242
    %v271 = vmul.f32 %v247, %v247
    %v272 = vmul.f32 %v250, %v250
    %v273 = vmul.f32 %v255, %v255
    %v274 = vmul.f32 %v258, %v258
    %v275 = vmul.f32 %v263, %v263
    %v276 = vmul.f32 %v266, %v266
    %285 = vrot.lane.b32.xlu0 %v269, 112
    %v286 = vpop.permute.xlu0 %285
    %287 = vrot.lane.b32.xlu0 %v270, 112
    %v288 = vpop.permute.xlu0 %287
    %289 = vrot.lane.b32.xlu0 %v271, 112
    %v290 = vpop.permute.xlu0 %289
    %291 = vrot.lane.b32.xlu0 %v272, 112
    %v292 = vpop.permute.xlu0 %291
    %293 = vrot.lane.b32.xlu0 %v273, 112
    %v294 = vpop.permute.xlu0 %293
    %295 = vrot.lane.b32.xlu0 %v274, 112
    %v296 = vpop.permute.xlu0 %295
    %297 = vrot.lane.b32.xlu0 %v275, 112
    %v298 = vpop.permute.xlu0 %297
    %299 = vrot.lane.b32.xlu0 %v276, 112
    %v300 = vpop.permute.xlu0 %299
    %v309 = vadd.f32 %v269, %v286
    %v310 = vadd.f32 %v270, %v288
    %v311 = vadd.f32 %v271, %v290
    %v312 = vadd.f32 %v272, %v292
    %v313 = vadd.f32 %v273, %v294
    %v314 = vadd.f32 %v274, %v296
    %v315 = vadd.f32 %v275, %v298
    %v316 = vadd.f32 %v276, %v300
    %v317 = vlaneseq
    %v318 = vand.u32 %v317, 127
    %v319 = vadd.s32 %v318, 128
    %v320 = vlaneseq
    %v321 = vshrl.u32 %v320, 7
    %v322 = vadd.s32 %v321, 8
    %v323 = vand.u32 %v318, 15
    %v324 = vand.u32 %v319, 15
    %vm325 = vcmp.eq.s32.totalorder %v323, %v321
    %vm326 = vcmp.eq.s32.totalorder %v324, %v321
    %vm327 = vcmp.eq.s32.totalorder %v323, %v322
    %vm328 = vcmp.eq.s32.totalorder %v324, %v322
    %v329 = vsel %vm325, 1.0, 0.0
    %v330 = vsel %vm326, 1.0, 0.0
    %v331 = vsel %vm327, 1.0, 0.0
    %v332 = vsel %vm328, 1.0, 0.0
    %v333 = vpack.c.bf16 %v331, %v329
    %v334 = vpack.c.bf16 %v332, %v330
    %v335 = vpack.c.bf16 %v310, %v309
    %v336 = vpack.c.bf16 %v312, %v311
    %v337 = vpack.c.bf16 %v314, %v313
    %v338 = vpack.c.bf16 %v316, %v315
    %vm339 = vcmask 130048
    %v341 = vsel %vm339, %v335, 0
    %v344 = vsel %vm339, %v336, 0
    %v347 = vsel %vm339, %v337, 0
    %v350 = vsel %vm339, %v338, 0
    %352 = vmatprep.subr.bf16.mxu0 0
    %353 = vmatpush1.bf16.msra.mxu0 0
    %354 = vmatprep.subr.bf16.mxu0 0
    %355 = vmatpush1.bf16.msra.mxu0 0
    %356 = vmatprep.subr.bf16.mxu0 0
    %357 = vmatpush1.bf16.msra.mxu0 0
    %358 = vmatprep.subr.bf16.mxu0 0
    %359 = vmatpush1.bf16.msra.mxu0 0
    %360 = vmatprep.subr.bf16.mxu0 0
    %361 = vmatpush1.bf16.msra.mxu0 0
    %362 = vmatprep.subr.bf16.mxu0 0
    %363 = vmatpush1.bf16.msra.mxu0 0
    %364 = vmatprep.subr.bf16.mxu0 0
    %365 = vmatpush1.bf16.msra.mxu0 0
    %366 = vmatprep.subr.bf16.mxu0 %v334
    %367 = vmatpush1.bf16.msra.mxu0 %v333
    %368 = vmatprep.subr.bf16.mxu0 0
    %369 = vmatpush2.bf16.msra.mxu0 0
    %370 = vmatprep.subr.bf16.mxu0 0
    %371 = vmatpush2.bf16.msra.mxu0 0
    %372 = vmatprep.subr.bf16.mxu0 0
    %373 = vmatpush2.bf16.msra.mxu0 0
    %374 = vmatprep.subr.bf16.mxu0 0
    %375 = vmatpush2.bf16.msra.mxu0 0
    %376 = vmatprep.subr.bf16.mxu0 0
    %377 = vmatpush2.bf16.msra.mxu0 0
    %378 = vmatprep.subr.bf16.mxu0 0
    %379 = vmatpush2.bf16.msra.mxu0 0
    %380 = vmatprep.subr.bf16.mxu0 0
    %381 = vmatpush2.bf16.msra.mxu0 0
    %382 = vmatprep.subr.bf16.mxu0 0
    %383 = vmatpush2.bf16.msra.mxu0 0
    %384 = vmatprep.mubr.bf16.mxu0 0
    %385 = vmatmul.mubr.bf16.gmra.mxu0 %v341
    %v386 = vpop.f32.mrf.mxu0
    %v387 = vadd.f32 0.0, %v386
    %v388 = vpop.f32.mrf.mxu0
    %v389 = vadd.f32 0.0, %v388
    %v390 = vpop.f32.mrf.mxu0
    %v391 = vadd.f32 0.0, %v390
    %v392 = vpop.f32.mrf.mxu0
    %v393 = vadd.f32 0.0, %v392
    %394 = vmatprep.mubr.bf16.mxu0 0
    %395 = vmatmul.mubr.bf16.gmra.mxu0 %v344
    %v396 = vpop.f32.mrf.mxu0
    %v397 = vadd.f32 0.0, %v396
    %v398 = vpop.f32.mrf.mxu0
    %v399 = vadd.f32 0.0, %v398
    %v400 = vpop.f32.mrf.mxu0
    %v401 = vadd.f32 0.0, %v400
    %v402 = vpop.f32.mrf.mxu0
    %v403 = vadd.f32 0.0, %v402
    %404 = vmatprep.mubr.bf16.mxu0 0
    %405 = vmatmul.mubr.bf16.gmra.mxu0 %v347
    %v406 = vpop.f32.mrf.mxu0
    %v407 = vadd.f32 0.0, %v406
    %v408 = vpop.f32.mrf.mxu0
    %v409 = vadd.f32 0.0, %v408
    %v410 = vpop.f32.mrf.mxu0
    %v411 = vadd.f32 0.0, %v410
    %v412 = vpop.f32.mrf.mxu0
    %v413 = vadd.f32 0.0, %v412
    %414 = vmatprep.mubr.bf16.mxu0 0
    %415 = vmatmul.mubr.bf16.gmra.mxu0 %v350
    %v416 = vpop.f32.mrf.mxu0
    %v417 = vadd.f32 0.0, %v416
    %v418 = vpop.f32.mrf.mxu0
    %v419 = vadd.f32 0.0, %v418
    %v420 = vpop.f32.mrf.mxu0
    %v421 = vadd.f32 0.0, %v420
    %v422 = vpop.f32.mrf.mxu0
    %v423 = vadd.f32 0.0, %v422
    %424 = vdwg.mxu0
    %v425 = vadd.s32 %v321, 16
    %v426 = vadd.s32 %v321, 24
    %v427 = vadd.s32 %v321, 32
    %v428 = vadd.s32 %v321, 40
    %v429 = vadd.s32 %v321, 48
    %v430 = vadd.s32 %v321, 56
    %v431 = vshra.s32 %v318, 4
    %v432 = vshra.s32 %v319, 4
    %v433 = vand.u32 %v321, 15
    %v434 = vand.u32 %v322, 15
    %v435 = vand.u32 %v425, 15
    %v436 = vand.u32 %v426, 15
    %v437 = vand.u32 %v427, 15
    %v438 = vand.u32 %v428, 15
    %v439 = vand.u32 %v429, 15
    %v440 = vand.u32 %v430, 15
    %vm441 = vcmp.eq.s32.totalorder %v431, %v433
    %vm442 = vcmp.eq.s32.totalorder %v432, %v433
    %vm443 = vcmp.eq.s32.totalorder %v431, %v434
    %vm444 = vcmp.eq.s32.totalorder %v432, %v434
    %vm445 = vcmp.eq.s32.totalorder %v431, %v435
    %vm446 = vcmp.eq.s32.totalorder %v432, %v435
    %vm447 = vcmp.eq.s32.totalorder %v431, %v436
    %vm448 = vcmp.eq.s32.totalorder %v432, %v436
    %vm449 = vcmp.eq.s32.totalorder %v431, %v437
    %vm450 = vcmp.eq.s32.totalorder %v432, %v437
    %vm451 = vcmp.eq.s32.totalorder %v431, %v438
    %vm452 = vcmp.eq.s32.totalorder %v432, %v438
    %vm453 = vcmp.eq.s32.totalorder %v431, %v439
    %vm454 = vcmp.eq.s32.totalorder %v432, %v439
    %vm455 = vcmp.eq.s32.totalorder %v431, %v440
    %vm456 = vcmp.eq.s32.totalorder %v432, %v440
    %v457 = vsel %vm441, %v387, 0.0
    %v458 = vsel %vm442, %v389, 0.0
    %v459 = vsel %vm443, %v391, 0.0
    %v460 = vsel %vm444, %v393, 0.0
    %v461 = vsel %vm445, %v397, 0.0
    %v462 = vsel %vm446, %v399, 0.0
    %v463 = vsel %vm447, %v401, 0.0
    %v464 = vsel %vm448, %v403, 0.0
    %v465 = vsel %vm449, %v407, 0.0
    %v466 = vsel %vm450, %v409, 0.0
    %v467 = vsel %vm451, %v411, 0.0
    %v468 = vsel %vm452, %v413, 0.0
    %v469 = vsel %vm453, %v417, 0.0
    %v470 = vsel %vm454, %v419, 0.0
    %v471 = vsel %vm455, %v421, 0.0
    %v472 = vsel %vm456, %v423, 0.0
    %v473 = vshra.s32 %v321, 5
    %v474 = vshra.s32 %v322, 5
    %v475 = vshra.s32 %v425, 5
    %v476 = vshra.s32 %v426, 5
    %v477 = vshra.s32 %v427, 5
    %v478 = vshra.s32 %v428, 5
    %v479 = vshra.s32 %v429, 5
    %v480 = vshra.s32 %v430, 5
    %v481 = vmul.u32 %v473, 2
    %v482 = vmul.u32 %v474, 2
    %v483 = vmul.u32 %v475, 2
    %v484 = vmul.u32 %v476, 2
    %v485 = vmul.u32 %v477, 2
    %v486 = vmul.u32 %v478, 2
    %v487 = vmul.u32 %v479, 2
    %v488 = vmul.u32 %v480, 2
    %v489 = vand.u32 %v321, 31
    %v490 = vand.u32 %v322, 31
    %v491 = vand.u32 %v425, 31
    %v492 = vand.u32 %v426, 31
    %v493 = vand.u32 %v427, 31
    %v494 = vand.u32 %v428, 31
    %v495 = vand.u32 %v429, 31
    %v496 = vand.u32 %v430, 31
    %v497 = vshra.s32 %v489, 4
    %v498 = vshra.s32 %v490, 4
    %v499 = vshra.s32 %v491, 4
    %v500 = vshra.s32 %v492, 4
    %v501 = vshra.s32 %v493, 4
    %v502 = vshra.s32 %v494, 4
    %v503 = vshra.s32 %v495, 4
    %v504 = vshra.s32 %v496, 4
    %v505 = vadd.s32 %v481, %v497
    %v506 = vadd.s32 %v482, %v498
    %v507 = vadd.s32 %v483, %v499
    %v508 = vadd.s32 %v484, %v500
    %v509 = vadd.s32 %v485, %v501
    %v510 = vadd.s32 %v486, %v502
    %v511 = vadd.s32 %v487, %v503
    %v512 = vadd.s32 %v488, %v504
    %vm513 = vcmp.eq.s32.totalorder %v431, %v505
    %vm514 = vcmp.eq.s32.totalorder %v431, %v506
    %vm515 = vcmp.eq.s32.totalorder %v431, %v507
    %vm516 = vcmp.eq.s32.totalorder %v431, %v508
    %vm517 = vcmp.eq.s32.totalorder %v431, %v509
    %vm518 = vcmp.eq.s32.totalorder %v431, %v510
    %vm519 = vcmp.eq.s32.totalorder %v431, %v511
    %vm520 = vcmp.eq.s32.totalorder %v431, %v512
    %v521 = vsel %vm513, 1.0, 0.0
    %v522 = vsel %vm514, 1.0, 0.0
    %v523 = vsel %vm515, 1.0, 0.0
    %v524 = vsel %vm516, 1.0, 0.0
    %v525 = vsel %vm517, 1.0, 0.0
    %v526 = vsel %vm518, 1.0, 0.0
    %v527 = vsel %vm519, 1.0, 0.0
    %v528 = vsel %vm520, 1.0, 0.0
    %v529 = vpack.c.bf16 %v522, %v521
    %v530 = vpack.c.bf16 %v524, %v523
    %v531 = vpack.c.bf16 %v526, %v525
    %v532 = vpack.c.bf16 %v528, %v527
    %v533 = vpack.c.bf16 %v459, %v457
    %v534 = vpack.c.bf16 %v460, %v458
    %v535 = vpack.c.bf16 %v463, %v461
    %v536 = vpack.c.bf16 %v464, %v462
    %v537 = vpack.c.bf16 %v467, %v465
    %v538 = vpack.c.bf16 %v468, %v466
    %v539 = vpack.c.bf16 %v471, %v469
    %v540 = vpack.c.bf16 %v472, %v470
    %vm541 = vcmask 523264
    %v543 = vsel %vm541, %v529, 0
    %v546 = vsel %vm541, %v530, 0
    %v549 = vsel %vm541, %v531, 0
    %v552 = vsel %vm541, %v532, 0
    %554 = vmatprep.subr.bf16.mxu0 0
    %555 = vmatpush1.bf16.msra.mxu0 0
    %556 = vmatprep.subr.bf16.mxu0 0
    %557 = vmatpush1.bf16.msra.mxu0 0
    %558 = vmatprep.subr.bf16.mxu0 0
    %559 = vmatpush1.bf16.msra.mxu0 0
    %560 = vmatprep.subr.bf16.mxu0 0
    %561 = vmatpush1.bf16.msra.mxu0 0
    %562 = vmatprep.subr.bf16.mxu0 %v540
    %563 = vmatpush1.bf16.msra.mxu0 %v539
    %564 = vmatprep.subr.bf16.mxu0 %v538
    %565 = vmatpush1.bf16.msra.mxu0 %v537
    %566 = vmatprep.subr.bf16.mxu0 %v536
    %567 = vmatpush1.bf16.msra.mxu0 %v535
    %568 = vmatprep.subr.bf16.mxu0 %v534
    %569 = vmatpush1.bf16.msra.mxu0 %v533
    %570 = vmatprep.subr.bf16.mxu0 0
    %571 = vmatpush2.bf16.msra.mxu0 0
    %572 = vmatprep.subr.bf16.mxu0 0
    %573 = vmatpush2.bf16.msra.mxu0 0
    %574 = vmatprep.subr.bf16.mxu0 0
    %575 = vmatpush2.bf16.msra.mxu0 0
    %576 = vmatprep.subr.bf16.mxu0 0
    %577 = vmatpush2.bf16.msra.mxu0 0
    %578 = vmatprep.subr.bf16.mxu0 0
    %579 = vmatpush2.bf16.msra.mxu0 0
    %580 = vmatprep.subr.bf16.mxu0 0
    %581 = vmatpush2.bf16.msra.mxu0 0
    %582 = vmatprep.subr.bf16.mxu0 0
    %583 = vmatpush2.bf16.msra.mxu0 0
    %584 = vmatprep.subr.bf16.mxu0 0
    %585 = vmatpush2.bf16.msra.mxu0 0
    %586 = vmatprep.mubr.bf16.mxu0 0
    %587 = vmatmul.mubr.bf16.gmra.mxu0 %v543
    %v588 = vpop.f32.mrf.mxu0
    %v589 = vadd.f32 0.0, %v588
    %v590 = vpop.f32.mrf.mxu0
    %v591 = vadd.f32 0.0, %v590
    %v592 = vpop.f32.mrf.mxu0
    %v593 = vadd.f32 0.0, %v592
    %v594 = vpop.f32.mrf.mxu0
    %v595 = vadd.f32 0.0, %v594
    %596 = vmatprep.mubr.bf16.mxu0 0
    %597 = vmatmul.mubr.bf16.gmra.mxu0 %v546
    %v598 = vpop.f32.mrf.mxu0
    %v599 = vadd.f32 0.0, %v598
    %v600 = vpop.f32.mrf.mxu0
    %v601 = vadd.f32 0.0, %v600
    %v602 = vpop.f32.mrf.mxu0
    %v603 = vadd.f32 0.0, %v602
    %v604 = vpop.f32.mrf.mxu0
    %v605 = vadd.f32 0.0, %v604
    %606 = vmatprep.mubr.bf16.mxu0 0
    %607 = vmatmul.mubr.bf16.gmra.mxu0 %v549
    %v608 = vpop.f32.mrf.mxu0
    %v609 = vadd.f32 0.0, %v608
    %v610 = vpop.f32.mrf.mxu0
    %v611 = vadd.f32 0.0, %v610
    %v612 = vpop.f32.mrf.mxu0
    %v613 = vadd.f32 0.0, %v612
    %v614 = vpop.f32.mrf.mxu0
    %v615 = vadd.f32 0.0, %v614
    %616 = vmatprep.mubr.bf16.mxu0 0
    %617 = vmatmul.mubr.bf16.gmra.mxu0 %v552
    %v618 = vpop.f32.mrf.mxu0
    %v619 = vadd.f32 0.0, %v618
    %v620 = vpop.f32.mrf.mxu0
    %v621 = vadd.f32 0.0, %v620
    %v622 = vpop.f32.mrf.mxu0
    %v623 = vadd.f32 0.0, %v622
    %v624 = vpop.f32.mrf.mxu0
    %v625 = vadd.f32 0.0, %v624
    %626 = vdwg.mxu0
    %v627 = vshra.s32 %v323, 2
    %v628 = vshra.s32 %v324, 2
    %v629 = vmul.u32 %v627, 4
    %v630 = vmul.u32 %v628, 4
    %v631 = vshra.s32 %v431, 2
    %v632 = vshra.s32 %v432, 2
    %v633 = vadd.s32 %v629, %v631
    %v634 = vadd.s32 %v630, %v632
    %vm635 = vcmp.eq.s32.totalorder %v633, %v433
    %vm636 = vcmp.eq.s32.totalorder %v634, %v433
    %vm637 = vcmp.eq.s32.totalorder %v633, %v434
    %vm638 = vcmp.eq.s32.totalorder %v634, %v434
    %vm639 = vcmp.eq.s32.totalorder %v633, %v435
    %vm640 = vcmp.eq.s32.totalorder %v634, %v435
    %vm641 = vcmp.eq.s32.totalorder %v633, %v436
    %vm642 = vcmp.eq.s32.totalorder %v634, %v436
    %vm643 = vcmp.eq.s32.totalorder %v633, %v437
    %vm644 = vcmp.eq.s32.totalorder %v634, %v437
    %vm645 = vcmp.eq.s32.totalorder %v633, %v438
    %vm646 = vcmp.eq.s32.totalorder %v634, %v438
    %vm647 = vcmp.eq.s32.totalorder %v633, %v439
    %vm648 = vcmp.eq.s32.totalorder %v634, %v439
    %vm649 = vcmp.eq.s32.totalorder %v633, %v440
    %vm650 = vcmp.eq.s32.totalorder %v634, %v440
    %v651 = vsel %vm635, %v589, 0.0
    %v652 = vsel %vm636, %v591, 0.0
    %v653 = vsel %vm637, %v593, 0.0
    %v654 = vsel %vm638, %v595, 0.0
    %v655 = vsel %vm639, %v599, 0.0
    %v656 = vsel %vm640, %v601, 0.0
    %v657 = vsel %vm641, %v603, 0.0
    %v658 = vsel %vm642, %v605, 0.0
    %v659 = vsel %vm643, %v609, 0.0
    %v660 = vsel %vm644, %v611, 0.0
    %v661 = vsel %vm645, %v613, 0.0
    %v662 = vsel %vm646, %v615, 0.0
    %v663 = vsel %vm647, %v619, 0.0
    %v664 = vsel %vm648, %v621, 0.0
    %v665 = vsel %vm649, %v623, 0.0
    %v666 = vsel %vm650, %v625, 0.0
    %v667 = vpack.c.bf16 %v653, %v651
    %v668 = vpack.c.bf16 %v654, %v652
    %v669 = vpack.c.bf16 %v657, %v655
    %v670 = vpack.c.bf16 %v658, %v656
    %v671 = vpack.c.bf16 %v661, %v659
    %v672 = vpack.c.bf16 %v662, %v660
    %v673 = vpack.c.bf16 %v665, %v663
    %v674 = vpack.c.bf16 %v666, %v664
    %v675 = vld [vmem:[%s2] sm:$0xf]
    %v676 = vld [vmem:[%s2 + $0x4] sm:$0xf]
    %v677 = vld [vmem:[%s2 + $0x8] sm:$0xf]
    %v678 = vld [vmem:[%s2 + $0xc] sm:$0xf]
    %v679 = vld [vmem:[%s2 + $0x10] sm:$0xf]
    %v680 = vld [vmem:[%s2 + $0x14] sm:$0xf]
    %v681 = vld [vmem:[%s2 + $0x18] sm:$0xf]
    %v682 = vld [vmem:[%s2 + $0x1c] sm:$0xf]
    %v683 = vld [vmem:[%s2 + $0x20] sm:$0xf]
    %v684 = vld [vmem:[%s2 + $0x24] sm:$0xf]
    %v685 = vld [vmem:[%s2 + $0x28] sm:$0xf]
    %v686 = vld [vmem:[%s2 + $0x2c] sm:$0xf]
    %v687 = vld [vmem:[%s2 + $0x30] sm:$0xf]
    %v688 = vld [vmem:[%s2 + $0x34] sm:$0xf]
    %v689 = vld [vmem:[%s2 + $0x38] sm:$0xf]
    %v690 = vld [vmem:[%s2 + $0x3c] sm:$0xf]
    %v691 = vld [vmem:[%s2 + $0x40] sm:$0xf]
    %v692 = vld [vmem:[%s2 + $0x44] sm:$0xf]
    %v693 = vld [vmem:[%s2 + $0x48] sm:$0xf]
    %v694 = vld [vmem:[%s2 + $0x4c] sm:$0xf]
    %v695 = vld [vmem:[%s2 + $0x50] sm:$0xf]
    %v696 = vld [vmem:[%s2 + $0x54] sm:$0xf]
    %v697 = vld [vmem:[%s2 + $0x58] sm:$0xf]
    %v698 = vld [vmem:[%s2 + $0x5c] sm:$0xf]
    %v699 = vld [vmem:[%s2 + $0x60] sm:$0xf]
    %v700 = vld [vmem:[%s2 + $0x64] sm:$0xf]
    %v701 = vld [vmem:[%s2 + $0x68] sm:$0xf]
    %v702 = vld [vmem:[%s2 + $0x6c] sm:$0xf]
    %v703 = vld [vmem:[%s2 + $0x70] sm:$0xf]
    %v704 = vld [vmem:[%s2 + $0x74] sm:$0xf]
    %v705 = vld [vmem:[%s2 + $0x78] sm:$0xf]
    %v706 = vld [vmem:[%s2 + $0x7c] sm:$0xf]
    %v707 = vld [vmem:[%s3] sm:$0xff]
    %v708 = vld [vmem:[%s3 + $0x8] sm:$0xff]
    %v709 = vld [vmem:[%s3 + $0x10] sm:$0xff]
    %v710 = vld [vmem:[%s3 + $0x18] sm:$0xff]
    %v711 = vld [vmem:[%s3 + $0x20] sm:$0xff]
    %v712 = vld [vmem:[%s3 + $0x28] sm:$0xff]
    %v713 = vld [vmem:[%s3 + $0x30] sm:$0xff]
    %v714 = vld [vmem:[%s3 + $0x38] sm:$0xff]
    %v747 = vunpack.c.l.b16 %v675
    %v748 = vunpack.c.l.b16 %v676
    %v749 = vunpack.c.l.b16 %v677
    %v750 = vunpack.c.l.b16 %v678
    %v751 = vunpack.c.l.b16 %v679
    %v752 = vunpack.c.l.b16 %v680
    %v753 = vunpack.c.l.b16 %v681
    %v754 = vunpack.c.l.b16 %v682
    %v755 = vunpack.c.l.b16 %v683
    %v756 = vunpack.c.l.b16 %v684
    %v757 = vunpack.c.l.b16 %v685
    %v758 = vunpack.c.l.b16 %v686
    %v759 = vunpack.c.l.b16 %v687
    %v760 = vunpack.c.l.b16 %v688
    %v761 = vunpack.c.l.b16 %v689
    %v762 = vunpack.c.l.b16 %v690
    %v763 = vunpack.c.l.b16 %v691
    %v764 = vunpack.c.l.b16 %v692
    %v765 = vunpack.c.l.b16 %v693
    %v766 = vunpack.c.l.b16 %v694
    %v767 = vunpack.c.l.b16 %v695
    %v768 = vunpack.c.l.b16 %v696
    %v769 = vunpack.c.l.b16 %v697
    %v770 = vunpack.c.l.b16 %v698
    %v771 = vunpack.c.l.b16 %v699
    %v772 = vunpack.c.l.b16 %v700
    %v773 = vunpack.c.l.b16 %v701
    %v774 = vunpack.c.l.b16 %v702
    %v775 = vunpack.c.l.b16 %v703
    %v776 = vunpack.c.l.b16 %v704
    %v777 = vunpack.c.l.b16 %v705
    %v778 = vunpack.c.l.b16 %v706
    %v779 = vpack.c.b16 %v748, %v747
    %v780 = vpack.c.b16 %v750, %v749
    %v781 = vpack.c.b16 %v752, %v751
    %v782 = vpack.c.b16 %v754, %v753
    %v783 = vpack.c.b16 %v756, %v755
    %v784 = vpack.c.b16 %v758, %v757
    %v785 = vpack.c.b16 %v760, %v759
    %v786 = vpack.c.b16 %v762, %v761
    %v787 = vpack.c.b16 %v764, %v763
    %v788 = vpack.c.b16 %v766, %v765
    %v789 = vpack.c.b16 %v768, %v767
    %v790 = vpack.c.b16 %v770, %v769
    %v791 = vpack.c.b16 %v772, %v771
    %v792 = vpack.c.b16 %v774, %v773
    %v793 = vpack.c.b16 %v776, %v775
    %v794 = vpack.c.b16 %v778, %v777
    %811 = vmatprep.subr.bf16.mxu0 0
    %812 = vmatpush1.bf16.msra.mxu0 %v786
    %813 = vmatprep.subr.bf16.mxu0 0
    %814 = vmatpush1.bf16.msra.mxu0 %v785
    %815 = vmatprep.subr.bf16.mxu0 0
    %816 = vmatpush1.bf16.msra.mxu0 %v784
    %817 = vmatprep.subr.bf16.mxu0 0
    %818 = vmatpush1.bf16.msra.mxu0 %v783
    %819 = vmatprep.subr.bf16.mxu0 0
    %820 = vmatpush1.bf16.msra.mxu0 %v782
    %821 = vmatprep.subr.bf16.mxu0 0
    %822 = vmatpush1.bf16.msra.mxu0 %v781
    %823 = vmatprep.subr.bf16.mxu0 0
    %824 = vmatpush1.bf16.msra.mxu0 %v780
    %825 = vmatprep.subr.bf16.mxu0 0
    %826 = vmatpush1.bf16.msra.mxu0 %v779
    %827 = vmatprep.subr.bf16.mxu0 0
    %828 = vmatpush2.bf16.msra.mxu0 %v794
    %829 = vmatprep.subr.bf16.mxu0 0
    %830 = vmatpush2.bf16.msra.mxu0 %v793
    %831 = vmatprep.subr.bf16.mxu0 0
    %832 = vmatpush2.bf16.msra.mxu0 %v792
    %833 = vmatprep.subr.bf16.mxu0 0
    %834 = vmatpush2.bf16.msra.mxu0 %v791
    %835 = vmatprep.subr.bf16.mxu0 0
    %836 = vmatpush2.bf16.msra.mxu0 %v790
    %837 = vmatprep.subr.bf16.mxu0 0
    %838 = vmatpush2.bf16.msra.mxu0 %v789
    %839 = vmatprep.subr.bf16.mxu0 0
    %840 = vmatpush2.bf16.msra.mxu0 %v788
    %841 = vmatprep.subr.bf16.mxu0 0
    %842 = vmatpush2.bf16.msra.mxu0 %v787
    %843 = vmatprep.mubr.bf16.mxu0 %v668
    %844 = vmatmul.mubr.bf16.gmra.mxu0 %v667
    %v845 = vpop.f32.mrf.mxu0
    %v846 = vadd.f32 %v707, %v845
    %v847 = vpop.f32.mrf.mxu0
    %v848 = vpop.f32.mrf.mxu0
    %v849 = vadd.f32 %v708, %v848
    %v850 = vpop.f32.mrf.mxu0
    %851 = vmatprep.mubr.bf16.mxu0 %v670
    %852 = vmatmul.mubr.bf16.gmra.mxu0 %v669
    %v853 = vpop.f32.mrf.mxu0
    %v854 = vadd.f32 %v709, %v853
    %v855 = vpop.f32.mrf.mxu0
    %v856 = vpop.f32.mrf.mxu0
    %v857 = vadd.f32 %v710, %v856
    %v858 = vpop.f32.mrf.mxu0
    %859 = vmatprep.mubr.bf16.mxu0 %v672
    %860 = vmatmul.mubr.bf16.gmra.mxu0 %v671
    %v861 = vpop.f32.mrf.mxu0
    %v862 = vadd.f32 %v711, %v861
    %v863 = vpop.f32.mrf.mxu0
    %v864 = vpop.f32.mrf.mxu0
    %v865 = vadd.f32 %v712, %v864
    %v866 = vpop.f32.mrf.mxu0
    %867 = vmatprep.mubr.bf16.mxu0 %v674
    %868 = vmatmul.mubr.bf16.gmra.mxu0 %v673
    %v869 = vpop.f32.mrf.mxu0
    %v870 = vadd.f32 %v713, %v869
    %v871 = vpop.f32.mrf.mxu0
    %v872 = vpop.f32.mrf.mxu0
    %v873 = vadd.f32 %v714, %v872
    %v874 = vpop.f32.mrf.mxu0
    %875 = vdwg.mxu0
    %v876 = vshra.s32 %v318, 5
    %vm877 = vcmp.eq.s32.totalorder %v473, %v876
    %vm878 = vcmp.eq.s32.totalorder %v474, %v876
    %vm879 = vcmp.eq.s32.totalorder %v475, %v876
    %vm880 = vcmp.eq.s32.totalorder %v476, %v876
    %vm881 = vcmp.eq.s32.totalorder %v477, %v876
    %vm882 = vcmp.eq.s32.totalorder %v478, %v876
    %vm883 = vcmp.eq.s32.totalorder %v479, %v876
    %vm884 = vcmp.eq.s32.totalorder %v480, %v876
    %v885 = vsel %vm877, 0.0, -1e+09
    %v886 = vsel %vm878, 0.0, -1e+09
    %v887 = vsel %vm879, 0.0, -1e+09
    %v888 = vsel %vm880, 0.0, -1e+09
    %v889 = vsel %vm881, 0.0, -1e+09
    %v890 = vsel %vm882, 0.0, -1e+09
    %v891 = vsel %vm883, 0.0, -1e+09
    %v892 = vsel %vm884, 0.0, -1e+09
    %v893 = vld [vmem:[%s4] sm:$0x1]
    %v894 = vld [vmem:[%s5] sm:$0x1]
    %v895 = vsel %vm191, %v846, 0.0
    %896 = vadd.xlane.f32.xlu0 %v895
    %v897 = vpop.xlane.xlu0 %896
    %v898 = vsel %vm191, %v849, 0.0
    %899 = vadd.xlane.f32.xlu0 %v898
    %v900 = vpop.xlane.xlu0 %899
    %v901 = vsel %vm191, %v854, 0.0
    %902 = vadd.xlane.f32.xlu0 %v901
    %v903 = vpop.xlane.xlu0 %902
    %v904 = vsel %vm191, %v857, 0.0
    %905 = vadd.xlane.f32.xlu0 %v904
    %v906 = vpop.xlane.xlu0 %905
    %v907 = vsel %vm191, %v862, 0.0
    %908 = vadd.xlane.f32.xlu0 %v907
    %v909 = vpop.xlane.xlu0 %908
    %v910 = vsel %vm191, %v865, 0.0
    %911 = vadd.xlane.f32.xlu0 %v910
    %v912 = vpop.xlane.xlu0 %911
    %v913 = vsel %vm191, %v870, 0.0
    %914 = vadd.xlane.f32.xlu0 %v913
    %v915 = vpop.xlane.xlu0 %914
    %v916 = vsel %vm191, %v873, 0.0
    %917 = vadd.xlane.f32.xlu0 %v916
    %v918 = vpop.xlane.xlu0 %917
    %v919 = vrcp.pop 32.0
    %v920 = vmul.f32 %v897, %v919
    %v921 = vmul.f32 %v900, %v919
    %v922 = vmul.f32 %v903, %v919
    %v923 = vmul.f32 %v906, %v919
    %v924 = vmul.f32 %v909, %v919
    %v925 = vmul.f32 %v912, %v919
    %v926 = vmul.f32 %v915, %v919
    %v927 = vmul.f32 %v918, %v919
    %v928 = vsub.f32 %v846, %v920
    %v929 = vsub.f32 %v849, %v921
    %v930 = vsub.f32 %v854, %v922
    %v931 = vsub.f32 %v857, %v923
    %v932 = vsub.f32 %v862, %v924
    %v933 = vsub.f32 %v865, %v925
    %v934 = vsub.f32 %v870, %v926
    %v935 = vsub.f32 %v873, %v927
    %v936 = vmul.f32 %v928, %v928
    %v937 = vmul.f32 %v929, %v929
    %v938 = vmul.f32 %v930, %v930
    %v939 = vmul.f32 %v931, %v931
    %v940 = vmul.f32 %v932, %v932
    %v941 = vmul.f32 %v933, %v933
    %v942 = vmul.f32 %v934, %v934
    %v943 = vmul.f32 %v935, %v935
    %v944 = vsel %vm191, %v936, 0.0
    %945 = vadd.xlane.f32.xlu0 %v944
    %v946 = vpop.xlane.xlu0 %945
    %v947 = vsel %vm191, %v937, 0.0
    %948 = vadd.xlane.f32.xlu0 %v947
    %v949 = vpop.xlane.xlu0 %948
    %v950 = vsel %vm191, %v938, 0.0
    %951 = vadd.xlane.f32.xlu0 %v950
    %v952 = vpop.xlane.xlu0 %951
    %v953 = vsel %vm191, %v939, 0.0
    %954 = vadd.xlane.f32.xlu0 %v953
    %v955 = vpop.xlane.xlu0 %954
    %v956 = vsel %vm191, %v940, 0.0
    %957 = vadd.xlane.f32.xlu0 %v956
    %v958 = vpop.xlane.xlu0 %957
    %v959 = vsel %vm191, %v941, 0.0
    %960 = vadd.xlane.f32.xlu0 %v959
    %v961 = vpop.xlane.xlu0 %960
    %v962 = vsel %vm191, %v942, 0.0
    %963 = vadd.xlane.f32.xlu0 %v962
    %v964 = vpop.xlane.xlu0 %963
    %v965 = vsel %vm191, %v943, 0.0
    %966 = vadd.xlane.f32.xlu0 %v965
    %v967 = vpop.xlane.xlu0 %966
    %v968 = vmul.f32 %v946, %v919
    %v969 = vmul.f32 %v949, %v919
    %v970 = vmul.f32 %v952, %v919
    %v971 = vmul.f32 %v955, %v919
    %v972 = vmul.f32 %v958, %v919
    %v973 = vmul.f32 %v961, %v919
    %v974 = vmul.f32 %v964, %v919
    %v975 = vmul.f32 %v967, %v919
    %v976 = vadd.f32 %v968, 1e-05
    %v977 = vadd.f32 %v969, 1e-05
    %v978 = vadd.f32 %v970, 1e-05
    %v979 = vadd.f32 %v971, 1e-05
    %v980 = vadd.f32 %v972, 1e-05
    %v981 = vadd.f32 %v973, 1e-05
    %v982 = vadd.f32 %v974, 1e-05
    %v983 = vadd.f32 %v975, 1e-05
    %v984 = vrsqrt.pop %v976
    %v985 = vrsqrt.pop %v977
    %v986 = vrsqrt.pop %v978
    %v987 = vrsqrt.pop %v979
    %v988 = vrsqrt.pop %v980
    %v989 = vrsqrt.pop %v981
    %v990 = vrsqrt.pop %v982
    %v991 = vrsqrt.pop %v983
    %v992 = vmul.f32 %v928, %v984
    %v993 = vmul.f32 %v929, %v985
    %v994 = vmul.f32 %v930, %v986
    %v995 = vmul.f32 %v931, %v987
    %v996 = vmul.f32 %v932, %v988
    %v997 = vmul.f32 %v933, %v989
    %v998 = vmul.f32 %v934, %v990
    %v999 = vmul.f32 %v935, %v991
    %v1001 = vlaneseq
    %v1002 = vshrl.u32 %v1001, 7
    %v1003 = vsub.s32 0, %v1002
    %v1004 = vrot.slane %v893, %v1003
    %v1006 = vmul.f32 %v992, %v1004
    %v1007 = vmul.f32 %v993, %v1004
    %v1008 = vmul.f32 %v994, %v1004
    %v1009 = vmul.f32 %v995, %v1004
    %v1010 = vmul.f32 %v996, %v1004
    %v1011 = vmul.f32 %v997, %v1004
    %v1012 = vmul.f32 %v998, %v1004
    %v1013 = vmul.f32 %v999, %v1004
    %v1015 = vlaneseq
    %v1016 = vshrl.u32 %v1015, 7
    %v1017 = vsub.s32 0, %v1016
    %v1018 = vrot.slane %v894, %v1017
    %v1020 = vadd.f32 %v1006, %v1018
    %v1021 = vadd.f32 %v1007, %v1018
    %v1022 = vadd.f32 %v1008, %v1018
    %v1023 = vadd.f32 %v1009, %v1018
    %v1024 = vadd.f32 %v1010, %v1018
    %v1025 = vadd.f32 %v1011, %v1018
    %v1026 = vadd.f32 %v1012, %v1018
    %v1027 = vadd.f32 %v1013, %v1018
    %v1028 = vpack.c.bf16 %v1021, %v1020
    %v1029 = vpack.c.bf16 %v1023, %v1022
    %v1030 = vpack.c.bf16 %v1025, %v1024
    %v1031 = vpack.c.bf16 %v1027, %v1026
    %v1032 = vld [vmem:[%s6] sm:$0xf]
    %v1033 = vld [vmem:[%s6 + $0x4] sm:$0xf]
    %v1034 = vld [vmem:[%s6 + $0x8] sm:$0xf]
    %v1035 = vld [vmem:[%s6 + $0xc] sm:$0xf]
    %v1036 = vld [vmem:[%s7] sm:$0x1]
    %v1038 = vlaneseq
    %v1039 = vshrl.u32 %v1038, 7
    %v1040 = vsub.s32 0, %v1039
    %v1041 = vrot.slane %v1036, %v1040
    %v1047 = vunpack.c.l.b16 %v1032
    %v1048 = vunpack.c.l.b16 %v1033
    %v1049 = vunpack.c.l.b16 %v1034
    %v1050 = vunpack.c.l.b16 %v1035
    %v1051 = vpack.c.b16 %v1048, %v1047
    %v1052 = vpack.c.b16 %v1050, %v1049
    %v1056 = vsel %vm191, %v1028, 0
    %v1059 = vsel %vm191, %v1029, 0
    %v1062 = vsel %vm191, %v1030, 0
    %v1065 = vsel %vm191, %v1031, 0
    %1067 = vmatprep.subr.bf16.mxu0 0
    %1068 = vmatpush1.bf16.msra.mxu0 0
    %1069 = vmatprep.subr.bf16.mxu0 0
    %1070 = vmatpush1.bf16.msra.mxu0 0
    %1071 = vmatprep.subr.bf16.mxu0 0
    %1072 = vmatpush1.bf16.msra.mxu0 0
    %1073 = vmatprep.subr.bf16.mxu0 0
    %1074 = vmatpush1.bf16.msra.mxu0 0
    %1075 = vmatprep.subr.bf16.mxu0 0
    %1076 = vmatpush1.bf16.msra.mxu0 0
    %1077 = vmatprep.subr.bf16.mxu0 0
    %1078 = vmatpush1.bf16.msra.mxu0 0
    %1079 = vmatprep.subr.bf16.mxu0 0
    %1080 = vmatpush1.bf16.msra.mxu0 %v1052
    %1081 = vmatprep.subr.bf16.mxu0 0
    %1082 = vmatpush1.bf16.msra.mxu0 %v1051
    %1083 = vmatprep.subr.bf16.mxu0 0
    %1084 = vmatpush2.bf16.msra.mxu0 0
    %1085 = vmatprep.subr.bf16.mxu0 0
    %1086 = vmatpush2.bf16.msra.mxu0 0
    %1087 = vmatprep.subr.bf16.mxu0 0
    %1088 = vmatpush2.bf16.msra.mxu0 0
    %1089 = vmatprep.subr.bf16.mxu0 0
    %1090 = vmatpush2.bf16.msra.mxu0 0
    %1091 = vmatprep.subr.bf16.mxu0 0
    %1092 = vmatpush2.bf16.msra.mxu0 0
    %1093 = vmatprep.subr.bf16.mxu0 0
    %1094 = vmatpush2.bf16.msra.mxu0 0
    %1095 = vmatprep.subr.bf16.mxu0 0
    %1096 = vmatpush2.bf16.msra.mxu0 0
    %1097 = vmatprep.subr.bf16.mxu0 0
    %1098 = vmatpush2.bf16.msra.mxu0 0
    %1099 = vmatprep.mubr.bf16.mxu0 0
    %1100 = vmatmul.mubr.bf16.gmra.mxu0 %v1056
    %v1101 = vpop.f32.mrf.mxu0
    %v1102 = vadd.f32 %v1041, %v1101
    %v1103 = vpop.f32.mrf.mxu0
    %v1104 = vpop.f32.mrf.mxu0
    %v1105 = vadd.f32 %v1041, %v1104
    %v1106 = vpop.f32.mrf.mxu0
    %1107 = vmatprep.mubr.bf16.mxu0 0
    %1108 = vmatmul.mubr.bf16.gmra.mxu0 %v1059
    %v1109 = vpop.f32.mrf.mxu0
    %v1110 = vadd.f32 %v1041, %v1109
    %v1111 = vpop.f32.mrf.mxu0
    %v1112 = vpop.f32.mrf.mxu0
    %v1113 = vadd.f32 %v1041, %v1112
    %v1114 = vpop.f32.mrf.mxu0
    %1115 = vmatprep.mubr.bf16.mxu0 0
    %1116 = vmatmul.mubr.bf16.gmra.mxu0 %v1062
    %v1117 = vpop.f32.mrf.mxu0
    %v1118 = vadd.f32 %v1041, %v1117
    %v1119 = vpop.f32.mrf.mxu0
    %v1120 = vpop.f32.mrf.mxu0
    %v1121 = vadd.f32 %v1041, %v1120
    %v1122 = vpop.f32.mrf.mxu0
    %1123 = vmatprep.mubr.bf16.mxu0 0
    %1124 = vmatmul.mubr.bf16.gmra.mxu0 %v1065
    %v1125 = vpop.f32.mrf.mxu0
    %v1126 = vadd.f32 %v1041, %v1125
    %v1127 = vpop.f32.mrf.mxu0
    %v1128 = vpop.f32.mrf.mxu0
    %v1129 = vadd.f32 %v1041, %v1128
    %v1130 = vpop.f32.mrf.mxu0
    %1131 = vdwg.mxu0
    %v1132 = vpack.c.bf16 %v1105, %v1102
    %v1133 = vpack.c.bf16 %v1113, %v1110
    %v1134 = vpack.c.bf16 %v1121, %v1118
    %v1135 = vpack.c.bf16 %v1129, %v1126
    %1140 = vrot.lane.b32.xlu0 %v1132, 96
    %v1141 = vpop.permute.xlu0 %1140
    %1142 = vrot.lane.b32.xlu0 %v1133, 96
    %v1143 = vpop.permute.xlu0 %1142
    %1144 = vrot.lane.b32.xlu0 %v1134, 96
    %v1145 = vpop.permute.xlu0 %1144
    %1146 = vrot.lane.b32.xlu0 %v1135, 96
    %v1147 = vpop.permute.xlu0 %1146
    %vm1148 = vcmask 64512
    %v1150 = vsel %vm1148, %v1132, 0
    %v1153 = vsel %vm1148, %v1133, 0
    %v1156 = vsel %vm1148, %v1134, 0
    %v1159 = vsel %vm1148, %v1135, 0
    %v1162 = vsel %vm1148, %v1141, 0
    %v1165 = vsel %vm1148, %v1143, 0
    %v1168 = vsel %vm1148, %v1145, 0
    %v1171 = vsel %vm1148, %v1147, 0
    %1173 = vmatprep.subr.bf16.mxu0 0
    %1174 = vmatpush1.bf16.xpose.msra.mxu0 0
    %1175 = vmatprep.subr.bf16.mxu0 0
    %1176 = vmatpush1.bf16.xpose.msra.mxu0 0
    %1177 = vmatprep.subr.bf16.mxu0 0
    %1178 = vmatpush1.bf16.xpose.msra.mxu0 0
    %1179 = vmatprep.subr.bf16.mxu0 0
    %1180 = vmatpush1.bf16.xpose.msra.mxu0 0
    %1181 = vmatprep.subr.bf16.mxu0 0
    %1182 = vmatpush1.bf16.xpose.msra.mxu0 %v1171
    %1183 = vmatprep.subr.bf16.mxu0 0
    %1184 = vmatpush1.bf16.xpose.msra.mxu0 %v1168
    %1185 = vmatprep.subr.bf16.mxu0 0
    %1186 = vmatpush1.bf16.xpose.msra.mxu0 %v1165
    %1187 = vmatprep.subr.bf16.mxu0 0
    %1188 = vmatpush1.bf16.xpose.msra.mxu0 %v1162
    %1189 = vmatprep.subr.bf16.mxu0 0
    %1190 = vmatpush2.bf16.xpose.msra.mxu0 0
    %1191 = vmatprep.subr.bf16.mxu0 0
    %1192 = vmatpush2.bf16.xpose.msra.mxu0 0
    %1193 = vmatprep.subr.bf16.mxu0 0
    %1194 = vmatpush2.bf16.xpose.msra.mxu0 0
    %1195 = vmatprep.subr.bf16.mxu0 0
    %1196 = vmatpush2.bf16.xpose.msra.mxu0 0
    %1197 = vmatprep.subr.bf16.mxu0 0
    %1198 = vmatpush2.bf16.xpose.msra.mxu0 0
    %1199 = vmatprep.subr.bf16.mxu0 0
    %1200 = vmatpush2.bf16.xpose.msra.mxu0 0
    %1201 = vmatprep.subr.bf16.mxu0 0
    %1202 = vmatpush2.bf16.xpose.msra.mxu0 0
    %1203 = vmatprep.subr.bf16.mxu0 0
    %1204 = vmatpush2.bf16.xpose.msra.mxu0 0
    %1205 = vmatprep.mubr.bf16.mxu0 0
    %1206 = vmatmul.mubr.bf16.gmra.mxu0 %v1150
    %v1207 = vpop.f32.mrf.mxu0
    %v1208 = vadd.f32 0.0, %v1207
    %v1209 = vpop.f32.mrf.mxu0
    %v1210 = vpop.f32.mrf.mxu0
    %v1211 = vadd.f32 0.0, %v1210
    %v1212 = vpop.f32.mrf.mxu0
    %1213 = vmatprep.mubr.bf16.mxu0 0
    %1214 = vmatmul.mubr.bf16.gmra.mxu0 %v1153
    %v1215 = vpop.f32.mrf.mxu0
    %v1216 = vadd.f32 0.0, %v1215
    %v1217 = vpop.f32.mrf.mxu0
    %v1218 = vpop.f32.mrf.mxu0
    %v1219 = vadd.f32 0.0, %v1218
    %v1220 = vpop.f32.mrf.mxu0
    %1221 = vmatprep.mubr.bf16.mxu0 0
    %1222 = vmatmul.mubr.bf16.gmra.mxu0 %v1156
    %v1223 = vpop.f32.mrf.mxu0
    %v1224 = vadd.f32 0.0, %v1223
    %v1225 = vpop.f32.mrf.mxu0
    %v1226 = vpop.f32.mrf.mxu0
    %v1227 = vadd.f32 0.0, %v1226
    %v1228 = vpop.f32.mrf.mxu0
    %1229 = vmatprep.mubr.bf16.mxu0 0
    %1230 = vmatmul.mubr.bf16.gmra.mxu0 %v1159
    %v1231 = vpop.f32.mrf.mxu0
    %v1232 = vadd.f32 0.0, %v1231
    %v1233 = vpop.f32.mrf.mxu0
    %v1234 = vpop.f32.mrf.mxu0
    %v1235 = vadd.f32 0.0, %v1234
    %v1236 = vpop.f32.mrf.mxu0
    %1237 = vdwg.mxu0
    %v1238 = vmul.f32 %v1208, 0.35355338
    %v1239 = vmul.f32 %v1211, 0.35355338
    %v1240 = vmul.f32 %v1216, 0.35355338
    %v1241 = vmul.f32 %v1219, 0.35355338
    %v1242 = vmul.f32 %v1224, 0.35355338
    %v1243 = vmul.f32 %v1227, 0.35355338
    %v1244 = vmul.f32 %v1232, 0.35355338
    %v1245 = vmul.f32 %v1235, 0.35355338
    %v1246 = vadd.f32 %v1238, %v885
    %v1247 = vadd.f32 %v1239, %v886
    %v1248 = vadd.f32 %v1240, %v887
    %v1249 = vadd.f32 %v1241, %v888
    %v1250 = vadd.f32 %v1242, %v889
    %v1251 = vadd.f32 %v1243, %v890
    %v1252 = vadd.f32 %v1244, %v891
    %v1253 = vadd.f32 %v1245, %v892
    %v1254 = vsel %vm541, %v1246, -inf
    %1255 = vmax.xlane.f32.xlu0 %v1254
    %v1256 = vpop.xlane.xlu0 %1255
    %v1257 = vsel %vm541, %v1247, -inf
    %1258 = vmax.xlane.f32.xlu0 %v1257
    %v1259 = vpop.xlane.xlu0 %1258
    %v1260 = vsel %vm541, %v1248, -inf
    %1261 = vmax.xlane.f32.xlu0 %v1260
    %v1262 = vpop.xlane.xlu0 %1261
    %v1263 = vsel %vm541, %v1249, -inf
    %1264 = vmax.xlane.f32.xlu0 %v1263
    %v1265 = vpop.xlane.xlu0 %1264
    %v1266 = vsel %vm541, %v1250, -inf
    %1267 = vmax.xlane.f32.xlu0 %v1266
    %v1268 = vpop.xlane.xlu0 %1267
    %v1269 = vsel %vm541, %v1251, -inf
    %1270 = vmax.xlane.f32.xlu0 %v1269
    %v1271 = vpop.xlane.xlu0 %1270
    %v1272 = vsel %vm541, %v1252, -inf
    %1273 = vmax.xlane.f32.xlu0 %v1272
    %v1274 = vpop.xlane.xlu0 %1273
    %v1275 = vsel %vm541, %v1253, -inf
    %1276 = vmax.xlane.f32.xlu0 %v1275
    %v1277 = vpop.xlane.xlu0 %1276
    %v1278 = vsub.f32 %v1246, %v1256
    %v1279 = vsub.f32 %v1247, %v1259
    %v1280 = vsub.f32 %v1248, %v1262
    %v1281 = vsub.f32 %v1249, %v1265
    %v1282 = vsub.f32 %v1250, %v1268
    %v1283 = vsub.f32 %v1251, %v1271
    %v1284 = vsub.f32 %v1252, %v1274
    %v1285 = vsub.f32 %v1253, %v1277
    %v1286 = vmul.f32 %v1278, 1.442695
    %v1287 = vpow.pop %v1286
    %v1288 = vmul.f32 %v1279, 1.442695
    %v1289 = vpow.pop %v1288
    %v1290 = vmul.f32 %v1280, 1.442695
    %v1291 = vpow.pop %v1290
    %v1292 = vmul.f32 %v1281, 1.442695
    %v1293 = vpow.pop %v1292
    %v1294 = vmul.f32 %v1282, 1.442695
    %v1295 = vpow.pop %v1294
    %v1296 = vmul.f32 %v1283, 1.442695
    %v1297 = vpow.pop %v1296
    %v1298 = vmul.f32 %v1284, 1.442695
    %v1299 = vpow.pop %v1298
    %v1300 = vmul.f32 %v1285, 1.442695
    %v1301 = vpow.pop %v1300
    %v1302 = vsel %vm541, %v1287, 0.0
    %1303 = vadd.xlane.f32.xlu0 %v1302
    %v1304 = vpop.xlane.xlu0 %1303
    %v1305 = vsel %vm541, %v1289, 0.0
    %1306 = vadd.xlane.f32.xlu0 %v1305
    %v1307 = vpop.xlane.xlu0 %1306
    %v1308 = vsel %vm541, %v1291, 0.0
    %1309 = vadd.xlane.f32.xlu0 %v1308
    %v1310 = vpop.xlane.xlu0 %1309
    %v1311 = vsel %vm541, %v1293, 0.0
    %1312 = vadd.xlane.f32.xlu0 %v1311
    %v1313 = vpop.xlane.xlu0 %1312
    %v1314 = vsel %vm541, %v1295, 0.0
    %1315 = vadd.xlane.f32.xlu0 %v1314
    %v1316 = vpop.xlane.xlu0 %1315
    %v1317 = vsel %vm541, %v1297, 0.0
    %1318 = vadd.xlane.f32.xlu0 %v1317
    %v1319 = vpop.xlane.xlu0 %1318
    %v1320 = vsel %vm541, %v1299, 0.0
    %1321 = vadd.xlane.f32.xlu0 %v1320
    %v1322 = vpop.xlane.xlu0 %1321
    %v1323 = vsel %vm541, %v1301, 0.0
    %1324 = vadd.xlane.f32.xlu0 %v1323
    %v1325 = vpop.xlane.xlu0 %1324
    %v1326 = vrcp.pop %v1304
    %v1327 = vrcp.pop %v1307
    %v1328 = vrcp.pop %v1310
    %v1329 = vrcp.pop %v1313
    %v1330 = vrcp.pop %v1316
    %v1331 = vrcp.pop %v1319
    %v1332 = vrcp.pop %v1322
    %v1333 = vrcp.pop %v1325
    %v1334 = vmul.f32 %v1287, %v1326
    %v1335 = vmul.f32 %v1289, %v1327
    %v1336 = vmul.f32 %v1291, %v1328
    %v1337 = vmul.f32 %v1293, %v1329
    %v1338 = vmul.f32 %v1295, %v1330
    %v1339 = vmul.f32 %v1297, %v1331
    %v1340 = vmul.f32 %v1299, %v1332
    %v1341 = vmul.f32 %v1301, %v1333
    %v1342 = vpack.c.bf16 %v1335, %v1334
    %v1343 = vpack.c.bf16 %v1337, %v1336
    %v1344 = vpack.c.bf16 %v1339, %v1338
    %v1345 = vpack.c.bf16 %v1341, %v1340
    %1346 = vrot.lane.b32.xlu0 %v1132, 64
    %v1347 = vpop.permute.xlu0 %1346
    %1348 = vrot.lane.b32.xlu0 %v1133, 64
    %v1349 = vpop.permute.xlu0 %1348
    %1350 = vrot.lane.b32.xlu0 %v1134, 64
    %v1351 = vpop.permute.xlu0 %1350
    %1352 = vrot.lane.b32.xlu0 %v1135, 64
    %v1353 = vpop.permute.xlu0 %1352
    %v1359 = vsel %vm541, %v1342, 0
    %v1362 = vsel %vm541, %v1343, 0
    %v1365 = vsel %vm541, %v1344, 0
    %v1368 = vsel %vm541, %v1345, 0
    %1370 = vmatprep.subr.bf16.mxu0 0
    %1371 = vmatpush1.bf16.msra.mxu0 0
    %1372 = vmatprep.subr.bf16.mxu0 0
    %1373 = vmatpush1.bf16.msra.mxu0 0
    %1374 = vmatprep.subr.bf16.mxu0 0
    %1375 = vmatpush1.bf16.msra.mxu0 0
    %1376 = vmatprep.subr.bf16.mxu0 0
    %1377 = vmatpush1.bf16.msra.mxu0 0
    %1378 = vmatprep.subr.bf16.mxu0 0
    %1379 = vmatpush1.bf16.msra.mxu0 %v1353
    %1380 = vmatprep.subr.bf16.mxu0 0
    %1381 = vmatpush1.bf16.msra.mxu0 %v1351
    %1382 = vmatprep.subr.bf16.mxu0 0
    %1383 = vmatpush1.bf16.msra.mxu0 %v1349
    %1384 = vmatprep.subr.bf16.mxu0 0
    %1385 = vmatpush1.bf16.msra.mxu0 %v1347
    %1386 = vmatprep.subr.bf16.mxu0 0
    %1387 = vmatpush2.bf16.msra.mxu0 0
    %1388 = vmatprep.subr.bf16.mxu0 0
    %1389 = vmatpush2.bf16.msra.mxu0 0
    %1390 = vmatprep.subr.bf16.mxu0 0
    %1391 = vmatpush2.bf16.msra.mxu0 0
    %1392 = vmatprep.subr.bf16.mxu0 0
    %1393 = vmatpush2.bf16.msra.mxu0 0
    %1394 = vmatprep.subr.bf16.mxu0 0
    %1395 = vmatpush2.bf16.msra.mxu0 0
    %1396 = vmatprep.subr.bf16.mxu0 0
    %1397 = vmatpush2.bf16.msra.mxu0 0
    %1398 = vmatprep.subr.bf16.mxu0 0
    %1399 = vmatpush2.bf16.msra.mxu0 0
    %1400 = vmatprep.subr.bf16.mxu0 0
    %1401 = vmatpush2.bf16.msra.mxu0 0
    %1402 = vmatprep.mubr.bf16.mxu0 0
    %1403 = vmatmul.mubr.bf16.gmra.mxu0 %v1359
    %v1404 = vpop.f32.mrf.mxu0
    %v1405 = vadd.f32 0.0, %v1404
    %v1406 = vpop.f32.mrf.mxu0
    %v1407 = vpop.f32.mrf.mxu0
    %v1408 = vadd.f32 0.0, %v1407
    %v1409 = vpop.f32.mrf.mxu0
    %1410 = vmatprep.mubr.bf16.mxu0 0
    %1411 = vmatmul.mubr.bf16.gmra.mxu0 %v1362
    %v1412 = vpop.f32.mrf.mxu0
    %v1413 = vadd.f32 0.0, %v1412
    %v1414 = vpop.f32.mrf.mxu0
    %v1415 = vpop.f32.mrf.mxu0
    %v1416 = vadd.f32 0.0, %v1415
    %v1417 = vpop.f32.mrf.mxu0
    %1418 = vmatprep.mubr.bf16.mxu0 0
    %1419 = vmatmul.mubr.bf16.gmra.mxu0 %v1365
    %v1420 = vpop.f32.mrf.mxu0
    %v1421 = vadd.f32 0.0, %v1420
    %v1422 = vpop.f32.mrf.mxu0
    %v1423 = vpop.f32.mrf.mxu0
    %v1424 = vadd.f32 0.0, %v1423
    %v1425 = vpop.f32.mrf.mxu0
    %1426 = vmatprep.mubr.bf16.mxu0 0
    %1427 = vmatmul.mubr.bf16.gmra.mxu0 %v1368
    %v1428 = vpop.f32.mrf.mxu0
    %v1429 = vadd.f32 0.0, %v1428
    %v1430 = vpop.f32.mrf.mxu0
    %v1431 = vpop.f32.mrf.mxu0
    %v1432 = vadd.f32 0.0, %v1431
    %v1433 = vpop.f32.mrf.mxu0
    %1434 = vdwg.mxu0
    %1435 = vrot.lane.b32.xlu0 %v1132, 120
    %v1436 = vpop.permute.xlu0 %1435
    %1437 = vrot.lane.b32.xlu0 %v1133, 120
    %v1438 = vpop.permute.xlu0 %1437
    %1439 = vrot.lane.b32.xlu0 %v1134, 120
    %v1440 = vpop.permute.xlu0 %1439
    %1441 = vrot.lane.b32.xlu0 %v1135, 120
    %v1442 = vpop.permute.xlu0 %1441
    %1443 = vrot.lane.b32.xlu0 %v1132, 88
    %v1444 = vpop.permute.xlu0 %1443
    %1445 = vrot.lane.b32.xlu0 %v1133, 88
    %v1446 = vpop.permute.xlu0 %1445
    %1447 = vrot.lane.b32.xlu0 %v1134, 88
    %v1448 = vpop.permute.xlu0 %1447
    %1449 = vrot.lane.b32.xlu0 %v1135, 88
    %v1450 = vpop.permute.xlu0 %1449
    %v1452 = vsel %vm1148, %v1436, 0
    %v1455 = vsel %vm1148, %v1438, 0
    %v1458 = vsel %vm1148, %v1440, 0
    %v1461 = vsel %vm1148, %v1442, 0
    %v1464 = vsel %vm1148, %v1444, 0
    %v1467 = vsel %vm1148, %v1446, 0
    %v1470 = vsel %vm1148, %v1448, 0
    %v1473 = vsel %vm1148, %v1450, 0
    %1475 = vmatprep.subr.bf16.mxu0 0
    %1476 = vmatpush1.bf16.xpose.msra.mxu0 0
    %1477 = vmatprep.subr.bf16.mxu0 0
    %1478 = vmatpush1.bf16.xpose.msra.mxu0 0
    %1479 = vmatprep.subr.bf16.mxu0 0
    %1480 = vmatpush1.bf16.xpose.msra.mxu0 0
    %1481 = vmatprep.subr.bf16.mxu0 0
    %1482 = vmatpush1.bf16.xpose.msra.mxu0 0
    %1483 = vmatprep.subr.bf16.mxu0 0
    %1484 = vmatpush1.bf16.xpose.msra.mxu0 %v1473
    %1485 = vmatprep.subr.bf16.mxu0 0
    %1486 = vmatpush1.bf16.xpose.msra.mxu0 %v1470
    %1487 = vmatprep.subr.bf16.mxu0 0
    %1488 = vmatpush1.bf16.xpose.msra.mxu0 %v1467
    %1489 = vmatprep.subr.bf16.mxu0 0
    %1490 = vmatpush1.bf16.xpose.msra.mxu0 %v1464
    %1491 = vmatprep.subr.bf16.mxu0 0
    %1492 = vmatpush2.bf16.xpose.msra.mxu0 0
    %1493 = vmatprep.subr.bf16.mxu0 0
    %1494 = vmatpush2.bf16.xpose.msra.mxu0 0
    %1495 = vmatprep.subr.bf16.mxu0 0
    %1496 = vmatpush2.bf16.xpose.msra.mxu0 0
    %1497 = vmatprep.subr.bf16.mxu0 0
    %1498 = vmatpush2.bf16.xpose.msra.mxu0 0
    %1499 = vmatprep.subr.bf16.mxu0 0
    %1500 = vmatpush2.bf16.xpose.msra.mxu0 0
    %1501 = vmatprep.subr.bf16.mxu0 0
    %1502 = vmatpush2.bf16.xpose.msra.mxu0 0
    %1503 = vmatprep.subr.bf16.mxu0 0
    %1504 = vmatpush2.bf16.xpose.msra.mxu0 0
    %1505 = vmatprep.subr.bf16.mxu0 0
    %1506 = vmatpush2.bf16.xpose.msra.mxu0 0
    %1507 = vmatprep.mubr.bf16.mxu0 0
    %1508 = vmatmul.mubr.bf16.gmra.mxu0 %v1452
    %v1509 = vpop.f32.mrf.mxu0
    %v1510 = vadd.f32 0.0, %v1509
    %v1511 = vpop.f32.mrf.mxu0
    %v1512 = vpop.f32.mrf.mxu0
    %v1513 = vadd.f32 0.0, %v1512
    %v1514 = vpop.f32.mrf.mxu0
    %1515 = vmatprep.mubr.bf16.mxu0 0
    %1516 = vmatmul.mubr.bf16.gmra.mxu0 %v1455
    %v1517 = vpop.f32.mrf.mxu0
    %v1518 = vadd.f32 0.0, %v1517
    %v1519 = vpop.f32.mrf.mxu0
    %v1520 = vpop.f32.mrf.mxu0
    %v1521 = vadd.f32 0.0, %v1520
    %v1522 = vpop.f32.mrf.mxu0
    %1523 = vmatprep.mubr.bf16.mxu0 0
    %1524 = vmatmul.mubr.bf16.gmra.mxu0 %v1458
    %v1525 = vpop.f32.mrf.mxu0
    %v1526 = vadd.f32 0.0, %v1525
    %v1527 = vpop.f32.mrf.mxu0
    %v1528 = vpop.f32.mrf.mxu0
    %v1529 = vadd.f32 0.0, %v1528
    %v1530 = vpop.f32.mrf.mxu0
    %1531 = vmatprep.mubr.bf16.mxu0 0
    %1532 = vmatmul.mubr.bf16.gmra.mxu0 %v1461
    %v1533 = vpop.f32.mrf.mxu0
    %v1534 = vadd.f32 0.0, %v1533
    %v1535 = vpop.f32.mrf.mxu0
    %v1536 = vpop.f32.mrf.mxu0
    %v1537 = vadd.f32 0.0, %v1536
    %v1538 = vpop.f32.mrf.mxu0
    %1539 = vdwg.mxu0
    %v1540 = vmul.f32 %v1510, 0.35355338
    %v1541 = vmul.f32 %v1513, 0.35355338
    %v1542 = vmul.f32 %v1518, 0.35355338
    %v1543 = vmul.f32 %v1521, 0.35355338
    %v1544 = vmul.f32 %v1526, 0.35355338
    %v1545 = vmul.f32 %v1529, 0.35355338
    %v1546 = vmul.f32 %v1534, 0.35355338
    %v1547 = vmul.f32 %v1537, 0.35355338
    %v1548 = vadd.f32 %v1540, %v885
    %v1549 = vadd.f32 %v1541, %v886
    %v1550 = vadd.f32 %v1542, %v887
    %v1551 = vadd.f32 %v1543, %v888
    %v1552 = vadd.f32 %v1544, %v889
    %v1553 = vadd.f32 %v1545, %v890
    %v1554 = vadd.f32 %v1546, %v891
    %v1555 = vadd.f32 %v1547, %v892
    %v1556 = vsel %vm541, %v1548, -inf
    %1557 = vmax.xlane.f32.xlu0 %v1556
    %v1558 = vpop.xlane.xlu0 %1557
    %v1559 = vsel %vm541, %v1549, -inf
    %1560 = vmax.xlane.f32.xlu0 %v1559
    %v1561 = vpop.xlane.xlu0 %1560
    %v1562 = vsel %vm541, %v1550, -inf
    %1563 = vmax.xlane.f32.xlu0 %v1562
    %v1564 = vpop.xlane.xlu0 %1563
    %v1565 = vsel %vm541, %v1551, -inf
    %1566 = vmax.xlane.f32.xlu0 %v1565
    %v1567 = vpop.xlane.xlu0 %1566
    %v1568 = vsel %vm541, %v1552, -inf
    %1569 = vmax.xlane.f32.xlu0 %v1568
    %v1570 = vpop.xlane.xlu0 %1569
    %v1571 = vsel %vm541, %v1553, -inf
    %1572 = vmax.xlane.f32.xlu0 %v1571
    %v1573 = vpop.xlane.xlu0 %1572
    %v1574 = vsel %vm541, %v1554, -inf
    %1575 = vmax.xlane.f32.xlu0 %v1574
    %v1576 = vpop.xlane.xlu0 %1575
    %v1577 = vsel %vm541, %v1555, -inf
    %1578 = vmax.xlane.f32.xlu0 %v1577
    %v1579 = vpop.xlane.xlu0 %1578
    %v1580 = vsub.f32 %v1548, %v1558
    %v1581 = vsub.f32 %v1549, %v1561
    %v1582 = vsub.f32 %v1550, %v1564
    %v1583 = vsub.f32 %v1551, %v1567
    %v1584 = vsub.f32 %v1552, %v1570
    %v1585 = vsub.f32 %v1553, %v1573
    %v1586 = vsub.f32 %v1554, %v1576
    %v1587 = vsub.f32 %v1555, %v1579
    %v1588 = vmul.f32 %v1580, 1.442695
    %v1589 = vpow.pop %v1588
    %v1590 = vmul.f32 %v1581, 1.442695
    %v1591 = vpow.pop %v1590
    %v1592 = vmul.f32 %v1582, 1.442695
    %v1593 = vpow.pop %v1592
    %v1594 = vmul.f32 %v1583, 1.442695
    %v1595 = vpow.pop %v1594
    %v1596 = vmul.f32 %v1584, 1.442695
    %v1597 = vpow.pop %v1596
    %v1598 = vmul.f32 %v1585, 1.442695
    %v1599 = vpow.pop %v1598
    %v1600 = vmul.f32 %v1586, 1.442695
    %v1601 = vpow.pop %v1600
    %v1602 = vmul.f32 %v1587, 1.442695
    %v1603 = vpow.pop %v1602
    %v1604 = vsel %vm541, %v1589, 0.0
    %1605 = vadd.xlane.f32.xlu0 %v1604
    %v1606 = vpop.xlane.xlu0 %1605
    %v1607 = vsel %vm541, %v1591, 0.0
    %1608 = vadd.xlane.f32.xlu0 %v1607
    %v1609 = vpop.xlane.xlu0 %1608
    %v1610 = vsel %vm541, %v1593, 0.0
    %1611 = vadd.xlane.f32.xlu0 %v1610
    %v1612 = vpop.xlane.xlu0 %1611
    %v1613 = vsel %vm541, %v1595, 0.0
    %1614 = vadd.xlane.f32.xlu0 %v1613
    %v1615 = vpop.xlane.xlu0 %1614
    %v1616 = vsel %vm541, %v1597, 0.0
    %1617 = vadd.xlane.f32.xlu0 %v1616
    %v1618 = vpop.xlane.xlu0 %1617
    %v1619 = vsel %vm541, %v1599, 0.0
    %1620 = vadd.xlane.f32.xlu0 %v1619
    %v1621 = vpop.xlane.xlu0 %1620
    %v1622 = vsel %vm541, %v1601, 0.0
    %1623 = vadd.xlane.f32.xlu0 %v1622
    %v1624 = vpop.xlane.xlu0 %1623
    %v1625 = vsel %vm541, %v1603, 0.0
    %1626 = vadd.xlane.f32.xlu0 %v1625
    %v1627 = vpop.xlane.xlu0 %1626
    %v1628 = vrcp.pop %v1606
    %v1629 = vrcp.pop %v1609
    %v1630 = vrcp.pop %v1612
    %v1631 = vrcp.pop %v1615
    %v1632 = vrcp.pop %v1618
    %v1633 = vrcp.pop %v1621
    %v1634 = vrcp.pop %v1624
    %v1635 = vrcp.pop %v1627
    %v1636 = vmul.f32 %v1589, %v1628
    %v1637 = vmul.f32 %v1591, %v1629
    %v1638 = vmul.f32 %v1593, %v1630
    %v1639 = vmul.f32 %v1595, %v1631
    %v1640 = vmul.f32 %v1597, %v1632
    %v1641 = vmul.f32 %v1599, %v1633
    %v1642 = vmul.f32 %v1601, %v1634
    %v1643 = vmul.f32 %v1603, %v1635
    %v1644 = vpack.c.bf16 %v1637, %v1636
    %v1645 = vpack.c.bf16 %v1639, %v1638
    %v1646 = vpack.c.bf16 %v1641, %v1640
    %v1647 = vpack.c.bf16 %v1643, %v1642
    %1648 = vrot.lane.b32.xlu0 %v1132, 56
    %v1649 = vpop.permute.xlu0 %1648
    %1650 = vrot.lane.b32.xlu0 %v1133, 56
    %v1651 = vpop.permute.xlu0 %1650
    %1652 = vrot.lane.b32.xlu0 %v1134, 56
    %v1653 = vpop.permute.xlu0 %1652
    %1654 = vrot.lane.b32.xlu0 %v1135, 56
    %v1655 = vpop.permute.xlu0 %1654
    %v1661 = vsel %vm541, %v1644, 0
    %v1664 = vsel %vm541, %v1645, 0
    %v1667 = vsel %vm541, %v1646, 0
    %v1670 = vsel %vm541, %v1647, 0
    %1672 = vmatprep.subr.bf16.mxu0 0
    %1673 = vmatpush1.bf16.msra.mxu0 0
    %1674 = vmatprep.subr.bf16.mxu0 0
    %1675 = vmatpush1.bf16.msra.mxu0 0
    %1676 = vmatprep.subr.bf16.mxu0 0
    %1677 = vmatpush1.bf16.msra.mxu0 0
    %1678 = vmatprep.subr.bf16.mxu0 0
    %1679 = vmatpush1.bf16.msra.mxu0 0
    %1680 = vmatprep.subr.bf16.mxu0 0
    %1681 = vmatpush1.bf16.msra.mxu0 %v1655
    %1682 = vmatprep.subr.bf16.mxu0 0
    %1683 = vmatpush1.bf16.msra.mxu0 %v1653
    %1684 = vmatprep.subr.bf16.mxu0 0
    %1685 = vmatpush1.bf16.msra.mxu0 %v1651
    %1686 = vmatprep.subr.bf16.mxu0 0
    %1687 = vmatpush1.bf16.msra.mxu0 %v1649
    %1688 = vmatprep.subr.bf16.mxu0 0
    %1689 = vmatpush2.bf16.msra.mxu0 0
    %1690 = vmatprep.subr.bf16.mxu0 0
    %1691 = vmatpush2.bf16.msra.mxu0 0
    %1692 = vmatprep.subr.bf16.mxu0 0
    %1693 = vmatpush2.bf16.msra.mxu0 0
    %1694 = vmatprep.subr.bf16.mxu0 0
    %1695 = vmatpush2.bf16.msra.mxu0 0
    %1696 = vmatprep.subr.bf16.mxu0 0
    %1697 = vmatpush2.bf16.msra.mxu0 0
    %1698 = vmatprep.subr.bf16.mxu0 0
    %1699 = vmatpush2.bf16.msra.mxu0 0
    %1700 = vmatprep.subr.bf16.mxu0 0
    %1701 = vmatpush2.bf16.msra.mxu0 0
    %1702 = vmatprep.subr.bf16.mxu0 0
    %1703 = vmatpush2.bf16.msra.mxu0 0
    %1704 = vmatprep.mubr.bf16.mxu0 0
    %1705 = vmatmul.mubr.bf16.gmra.mxu0 %v1661
    %v1706 = vpop.f32.mrf.mxu0
    %v1707 = vadd.f32 0.0, %v1706
    %v1708 = vpop.f32.mrf.mxu0
    %v1709 = vpop.f32.mrf.mxu0
    %v1710 = vadd.f32 0.0, %v1709
    %v1711 = vpop.f32.mrf.mxu0
    %1712 = vmatprep.mubr.bf16.mxu0 0
    %1713 = vmatmul.mubr.bf16.gmra.mxu0 %v1664
    %v1714 = vpop.f32.mrf.mxu0
    %v1715 = vadd.f32 0.0, %v1714
    %v1716 = vpop.f32.mrf.mxu0
    %v1717 = vpop.f32.mrf.mxu0
    %v1718 = vadd.f32 0.0, %v1717
    %v1719 = vpop.f32.mrf.mxu0
    %1720 = vmatprep.mubr.bf16.mxu0 0
    %1721 = vmatmul.mubr.bf16.gmra.mxu0 %v1667
    %v1722 = vpop.f32.mrf.mxu0
    %v1723 = vadd.f32 0.0, %v1722
    %v1724 = vpop.f32.mrf.mxu0
    %v1725 = vpop.f32.mrf.mxu0
    %v1726 = vadd.f32 0.0, %v1725
    %v1727 = vpop.f32.mrf.mxu0
    %1728 = vmatprep.mubr.bf16.mxu0 0
    %1729 = vmatmul.mubr.bf16.gmra.mxu0 %v1670
    %v1730 = vpop.f32.mrf.mxu0
    %v1731 = vadd.f32 0.0, %v1730
    %v1732 = vpop.f32.mrf.mxu0
    %v1733 = vpop.f32.mrf.mxu0
    %v1734 = vadd.f32 0.0, %v1733
    %v1735 = vpop.f32.mrf.mxu0
    %1736 = vdwg.mxu0
    %1737 = vrot.lane.b32.xlu0 %v1132, 112
    %v1738 = vpop.permute.xlu0 %1737
    %1739 = vrot.lane.b32.xlu0 %v1133, 112
    %v1740 = vpop.permute.xlu0 %1739
    %1741 = vrot.lane.b32.xlu0 %v1134, 112
    %v1742 = vpop.permute.xlu0 %1741
    %1743 = vrot.lane.b32.xlu0 %v1135, 112
    %v1744 = vpop.permute.xlu0 %1743
    %1745 = vrot.lane.b32.xlu0 %v1132, 80
    %v1746 = vpop.permute.xlu0 %1745
    %1747 = vrot.lane.b32.xlu0 %v1133, 80
    %v1748 = vpop.permute.xlu0 %1747
    %1749 = vrot.lane.b32.xlu0 %v1134, 80
    %v1750 = vpop.permute.xlu0 %1749
    %1751 = vrot.lane.b32.xlu0 %v1135, 80
    %v1752 = vpop.permute.xlu0 %1751
    %v1754 = vsel %vm1148, %v1738, 0
    %v1757 = vsel %vm1148, %v1740, 0
    %v1760 = vsel %vm1148, %v1742, 0
    %v1763 = vsel %vm1148, %v1744, 0
    %v1766 = vsel %vm1148, %v1746, 0
    %v1769 = vsel %vm1148, %v1748, 0
    %v1772 = vsel %vm1148, %v1750, 0
    %v1775 = vsel %vm1148, %v1752, 0
    %1777 = vmatprep.subr.bf16.mxu0 0
    %1778 = vmatpush1.bf16.xpose.msra.mxu0 0
    %1779 = vmatprep.subr.bf16.mxu0 0
    %1780 = vmatpush1.bf16.xpose.msra.mxu0 0
    %1781 = vmatprep.subr.bf16.mxu0 0
    %1782 = vmatpush1.bf16.xpose.msra.mxu0 0
    %1783 = vmatprep.subr.bf16.mxu0 0
    %1784 = vmatpush1.bf16.xpose.msra.mxu0 0
    %1785 = vmatprep.subr.bf16.mxu0 0
    %1786 = vmatpush1.bf16.xpose.msra.mxu0 %v1775
    %1787 = vmatprep.subr.bf16.mxu0 0
    %1788 = vmatpush1.bf16.xpose.msra.mxu0 %v1772
    %1789 = vmatprep.subr.bf16.mxu0 0
    %1790 = vmatpush1.bf16.xpose.msra.mxu0 %v1769
    %1791 = vmatprep.subr.bf16.mxu0 0
    %1792 = vmatpush1.bf16.xpose.msra.mxu0 %v1766
    %1793 = vmatprep.subr.bf16.mxu0 0
    %1794 = vmatpush2.bf16.xpose.msra.mxu0 0
    %1795 = vmatprep.subr.bf16.mxu0 0
    %1796 = vmatpush2.bf16.xpose.msra.mxu0 0
    %1797 = vmatprep.subr.bf16.mxu0 0
    %1798 = vmatpush2.bf16.xpose.msra.mxu0 0
    %1799 = vmatprep.subr.bf16.mxu0 0
    %1800 = vmatpush2.bf16.xpose.msra.mxu0 0
    %1801 = vmatprep.subr.bf16.mxu0 0
    %1802 = vmatpush2.bf16.xpose.msra.mxu0 0
    %1803 = vmatprep.subr.bf16.mxu0 0
    %1804 = vmatpush2.bf16.xpose.msra.mxu0 0
    %1805 = vmatprep.subr.bf16.mxu0 0
    %1806 = vmatpush2.bf16.xpose.msra.mxu0 0
    %1807 = vmatprep.subr.bf16.mxu0 0
    %1808 = vmatpush2.bf16.xpose.msra.mxu0 0
    %1809 = vmatprep.mubr.bf16.mxu0 0
    %1810 = vmatmul.mubr.bf16.gmra.mxu0 %v1754
    %v1811 = vpop.f32.mrf.mxu0
    %v1812 = vadd.f32 0.0, %v1811
    %v1813 = vpop.f32.mrf.mxu0
    %v1814 = vpop.f32.mrf.mxu0
    %v1815 = vadd.f32 0.0, %v1814
    %v1816 = vpop.f32.mrf.mxu0
    %1817 = vmatprep.mubr.bf16.mxu0 0
    %1818 = vmatmul.mubr.bf16.gmra.mxu0 %v1757
    %v1819 = vpop.f32.mrf.mxu0
    %v1820 = vadd.f32 0.0, %v1819
    %v1821 = vpop.f32.mrf.mxu0
    %v1822 = vpop.f32.mrf.mxu0
    %v1823 = vadd.f32 0.0, %v1822
    %v1824 = vpop.f32.mrf.mxu0
    %1825 = vmatprep.mubr.bf16.mxu0 0
    %1826 = vmatmul.mubr.bf16.gmra.mxu0 %v1760
    %v1827 = vpop.f32.mrf.mxu0
    %v1828 = vadd.f32 0.0, %v1827
    %v1829 = vpop.f32.mrf.mxu0
    %v1830 = vpop.f32.mrf.mxu0
    %v1831 = vadd.f32 0.0, %v1830
    %v1832 = vpop.f32.mrf.mxu0
    %1833 = vmatprep.mubr.bf16.mxu0 0
    %1834 = vmatmul.mubr.bf16.gmra.mxu0 %v1763
    %v1835 = vpop.f32.mrf.mxu0
    %v1836 = vadd.f32 0.0, %v1835
    %v1837 = vpop.f32.mrf.mxu0
    %v1838 = vpop.f32.mrf.mxu0
    %v1839 = vadd.f32 0.0, %v1838
    %v1840 = vpop.f32.mrf.mxu0
    %1841 = vdwg.mxu0
    %v1842 = vmul.f32 %v1812, 0.35355338
    %v1843 = vmul.f32 %v1815, 0.35355338
    %v1844 = vmul.f32 %v1820, 0.35355338
    %v1845 = vmul.f32 %v1823, 0.35355338
    %v1846 = vmul.f32 %v1828, 0.35355338
    %v1847 = vmul.f32 %v1831, 0.35355338
    %v1848 = vmul.f32 %v1836, 0.35355338
    %v1849 = vmul.f32 %v1839, 0.35355338
    %v1850 = vadd.f32 %v1842, %v885
    %v1851 = vadd.f32 %v1843, %v886
    %v1852 = vadd.f32 %v1844, %v887
    %v1853 = vadd.f32 %v1845, %v888
    %v1854 = vadd.f32 %v1846, %v889
    %v1855 = vadd.f32 %v1847, %v890
    %v1856 = vadd.f32 %v1848, %v891
    %v1857 = vadd.f32 %v1849, %v892
    %v1858 = vsel %vm541, %v1850, -inf
    %1859 = vmax.xlane.f32.xlu0 %v1858
    %v1860 = vpop.xlane.xlu0 %1859
    %v1861 = vsel %vm541, %v1851, -inf
    %1862 = vmax.xlane.f32.xlu0 %v1861
    %v1863 = vpop.xlane.xlu0 %1862
    %v1864 = vsel %vm541, %v1852, -inf
    %1865 = vmax.xlane.f32.xlu0 %v1864
    %v1866 = vpop.xlane.xlu0 %1865
    %v1867 = vsel %vm541, %v1853, -inf
    %1868 = vmax.xlane.f32.xlu0 %v1867
    %v1869 = vpop.xlane.xlu0 %1868
    %v1870 = vsel %vm541, %v1854, -inf
    %1871 = vmax.xlane.f32.xlu0 %v1870
    %v1872 = vpop.xlane.xlu0 %1871
    %v1873 = vsel %vm541, %v1855, -inf
    %1874 = vmax.xlane.f32.xlu0 %v1873
    %v1875 = vpop.xlane.xlu0 %1874
    %v1876 = vsel %vm541, %v1856, -inf
    %1877 = vmax.xlane.f32.xlu0 %v1876
    %v1878 = vpop.xlane.xlu0 %1877
    %v1879 = vsel %vm541, %v1857, -inf
    %1880 = vmax.xlane.f32.xlu0 %v1879
    %v1881 = vpop.xlane.xlu0 %1880
    %v1882 = vsub.f32 %v1850, %v1860
    %v1883 = vsub.f32 %v1851, %v1863
    %v1884 = vsub.f32 %v1852, %v1866
    %v1885 = vsub.f32 %v1853, %v1869
    %v1886 = vsub.f32 %v1854, %v1872
    %v1887 = vsub.f32 %v1855, %v1875
    %v1888 = vsub.f32 %v1856, %v1878
    %v1889 = vsub.f32 %v1857, %v1881
    %v1890 = vmul.f32 %v1882, 1.442695
    %v1891 = vpow.pop %v1890
    %v1892 = vmul.f32 %v1883, 1.442695
    %v1893 = vpow.pop %v1892
    %v1894 = vmul.f32 %v1884, 1.442695
    %v1895 = vpow.pop %v1894
    %v1896 = vmul.f32 %v1885, 1.442695
    %v1897 = vpow.pop %v1896
    %v1898 = vmul.f32 %v1886, 1.442695
    %v1899 = vpow.pop %v1898
    %v1900 = vmul.f32 %v1887, 1.442695
    %v1901 = vpow.pop %v1900
    %v1902 = vmul.f32 %v1888, 1.442695
    %v1903 = vpow.pop %v1902
    %v1904 = vmul.f32 %v1889, 1.442695
    %v1905 = vpow.pop %v1904
    %v1906 = vsel %vm541, %v1891, 0.0
    %1907 = vadd.xlane.f32.xlu0 %v1906
    %v1908 = vpop.xlane.xlu0 %1907
    %v1909 = vsel %vm541, %v1893, 0.0
    %1910 = vadd.xlane.f32.xlu0 %v1909
    %v1911 = vpop.xlane.xlu0 %1910
    %v1912 = vsel %vm541, %v1895, 0.0
    %1913 = vadd.xlane.f32.xlu0 %v1912
    %v1914 = vpop.xlane.xlu0 %1913
    %v1915 = vsel %vm541, %v1897, 0.0
    %1916 = vadd.xlane.f32.xlu0 %v1915
    %v1917 = vpop.xlane.xlu0 %1916
    %v1918 = vsel %vm541, %v1899, 0.0
    %1919 = vadd.xlane.f32.xlu0 %v1918
    %v1920 = vpop.xlane.xlu0 %1919
    %v1921 = vsel %vm541, %v1901, 0.0
    %1922 = vadd.xlane.f32.xlu0 %v1921
    %v1923 = vpop.xlane.xlu0 %1922
    %v1924 = vsel %vm541, %v1903, 0.0
    %1925 = vadd.xlane.f32.xlu0 %v1924
    %v1926 = vpop.xlane.xlu0 %1925
    %v1927 = vsel %vm541, %v1905, 0.0
    %1928 = vadd.xlane.f32.xlu0 %v1927
    %v1929 = vpop.xlane.xlu0 %1928
    %v1930 = vrcp.pop %v1908
    %v1931 = vrcp.pop %v1911
    %v1932 = vrcp.pop %v1914
    %v1933 = vrcp.pop %v1917
    %v1934 = vrcp.pop %v1920
    %v1935 = vrcp.pop %v1923
    %v1936 = vrcp.pop %v1926
    %v1937 = vrcp.pop %v1929
    %v1938 = vmul.f32 %v1891, %v1930
    %v1939 = vmul.f32 %v1893, %v1931
    %v1940 = vmul.f32 %v1895, %v1932
    %v1941 = vmul.f32 %v1897, %v1933
    %v1942 = vmul.f32 %v1899, %v1934
    %v1943 = vmul.f32 %v1901, %v1935
    %v1944 = vmul.f32 %v1903, %v1936
    %v1945 = vmul.f32 %v1905, %v1937
    %v1946 = vpack.c.bf16 %v1939, %v1938
    %v1947 = vpack.c.bf16 %v1941, %v1940
    %v1948 = vpack.c.bf16 %v1943, %v1942
    %v1949 = vpack.c.bf16 %v1945, %v1944
    %1950 = vrot.lane.b32.xlu0 %v1132, 48
    %v1951 = vpop.permute.xlu0 %1950
    %1952 = vrot.lane.b32.xlu0 %v1133, 48
    %v1953 = vpop.permute.xlu0 %1952
    %1954 = vrot.lane.b32.xlu0 %v1134, 48
    %v1955 = vpop.permute.xlu0 %1954
    %1956 = vrot.lane.b32.xlu0 %v1135, 48
    %v1957 = vpop.permute.xlu0 %1956
    %v1963 = vsel %vm541, %v1946, 0
    %v1966 = vsel %vm541, %v1947, 0
    %v1969 = vsel %vm541, %v1948, 0
    %v1972 = vsel %vm541, %v1949, 0
    %1974 = vmatprep.subr.bf16.mxu0 0
    %1975 = vmatpush1.bf16.msra.mxu0 0
    %1976 = vmatprep.subr.bf16.mxu0 0
    %1977 = vmatpush1.bf16.msra.mxu0 0
    %1978 = vmatprep.subr.bf16.mxu0 0
    %1979 = vmatpush1.bf16.msra.mxu0 0
    %1980 = vmatprep.subr.bf16.mxu0 0
    %1981 = vmatpush1.bf16.msra.mxu0 0
    %1982 = vmatprep.subr.bf16.mxu0 0
    %1983 = vmatpush1.bf16.msra.mxu0 %v1957
    %1984 = vmatprep.subr.bf16.mxu0 0
    %1985 = vmatpush1.bf16.msra.mxu0 %v1955
    %1986 = vmatprep.subr.bf16.mxu0 0
    %1987 = vmatpush1.bf16.msra.mxu0 %v1953
    %1988 = vmatprep.subr.bf16.mxu0 0
    %1989 = vmatpush1.bf16.msra.mxu0 %v1951
    %1990 = vmatprep.subr.bf16.mxu0 0
    %1991 = vmatpush2.bf16.msra.mxu0 0
    %1992 = vmatprep.subr.bf16.mxu0 0
    %1993 = vmatpush2.bf16.msra.mxu0 0
    %1994 = vmatprep.subr.bf16.mxu0 0
    %1995 = vmatpush2.bf16.msra.mxu0 0
    %1996 = vmatprep.subr.bf16.mxu0 0
    %1997 = vmatpush2.bf16.msra.mxu0 0
    %1998 = vmatprep.subr.bf16.mxu0 0
    %1999 = vmatpush2.bf16.msra.mxu0 0
    %2000 = vmatprep.subr.bf16.mxu0 0
    %2001 = vmatpush2.bf16.msra.mxu0 0
    %2002 = vmatprep.subr.bf16.mxu0 0
    %2003 = vmatpush2.bf16.msra.mxu0 0
    %2004 = vmatprep.subr.bf16.mxu0 0
    %2005 = vmatpush2.bf16.msra.mxu0 0
    %2006 = vmatprep.mubr.bf16.mxu0 0
    %2007 = vmatmul.mubr.bf16.gmra.mxu0 %v1963
    %v2008 = vpop.f32.mrf.mxu0
    %v2009 = vadd.f32 0.0, %v2008
    %v2010 = vpop.f32.mrf.mxu0
    %v2011 = vpop.f32.mrf.mxu0
    %v2012 = vadd.f32 0.0, %v2011
    %v2013 = vpop.f32.mrf.mxu0
    %2014 = vmatprep.mubr.bf16.mxu0 0
    %2015 = vmatmul.mubr.bf16.gmra.mxu0 %v1966
    %v2016 = vpop.f32.mrf.mxu0
    %v2017 = vadd.f32 0.0, %v2016
    %v2018 = vpop.f32.mrf.mxu0
    %v2019 = vpop.f32.mrf.mxu0
    %v2020 = vadd.f32 0.0, %v2019
    %v2021 = vpop.f32.mrf.mxu0
    %2022 = vmatprep.mubr.bf16.mxu0 0
    %2023 = vmatmul.mubr.bf16.gmra.mxu0 %v1969
    %v2024 = vpop.f32.mrf.mxu0
    %v2025 = vadd.f32 0.0, %v2024
    %v2026 = vpop.f32.mrf.mxu0
    %v2027 = vpop.f32.mrf.mxu0
    %v2028 = vadd.f32 0.0, %v2027
    %v2029 = vpop.f32.mrf.mxu0
    %2030 = vmatprep.mubr.bf16.mxu0 0
    %2031 = vmatmul.mubr.bf16.gmra.mxu0 %v1972
    %v2032 = vpop.f32.mrf.mxu0
    %v2033 = vadd.f32 0.0, %v2032
    %v2034 = vpop.f32.mrf.mxu0
    %v2035 = vpop.f32.mrf.mxu0
    %v2036 = vadd.f32 0.0, %v2035
    %v2037 = vpop.f32.mrf.mxu0
    %2038 = vdwg.mxu0
    %2039 = vrot.lane.b32.xlu0 %v1132, 104
    %v2040 = vpop.permute.xlu0 %2039
    %2041 = vrot.lane.b32.xlu0 %v1133, 104
    %v2042 = vpop.permute.xlu0 %2041
    %2043 = vrot.lane.b32.xlu0 %v1134, 104
    %v2044 = vpop.permute.xlu0 %2043
    %2045 = vrot.lane.b32.xlu0 %v1135, 104
    %v2046 = vpop.permute.xlu0 %2045
    %2047 = vrot.lane.b32.xlu0 %v1132, 72
    %v2048 = vpop.permute.xlu0 %2047
    %2049 = vrot.lane.b32.xlu0 %v1133, 72
    %v2050 = vpop.permute.xlu0 %2049
    %2051 = vrot.lane.b32.xlu0 %v1134, 72
    %v2052 = vpop.permute.xlu0 %2051
    %2053 = vrot.lane.b32.xlu0 %v1135, 72
    %v2054 = vpop.permute.xlu0 %2053
    %v2056 = vsel %vm1148, %v2040, 0
    %v2059 = vsel %vm1148, %v2042, 0
    %v2062 = vsel %vm1148, %v2044, 0
    %v2065 = vsel %vm1148, %v2046, 0
    %v2068 = vsel %vm1148, %v2048, 0
    %v2071 = vsel %vm1148, %v2050, 0
    %v2074 = vsel %vm1148, %v2052, 0
    %v2077 = vsel %vm1148, %v2054, 0
    %2079 = vmatprep.subr.bf16.mxu0 0
    %2080 = vmatpush1.bf16.xpose.msra.mxu0 0
    %2081 = vmatprep.subr.bf16.mxu0 0
    %2082 = vmatpush1.bf16.xpose.msra.mxu0 0
    %2083 = vmatprep.subr.bf16.mxu0 0
    %2084 = vmatpush1.bf16.xpose.msra.mxu0 0
    %2085 = vmatprep.subr.bf16.mxu0 0
    %2086 = vmatpush1.bf16.xpose.msra.mxu0 0
    %2087 = vmatprep.subr.bf16.mxu0 0
    %2088 = vmatpush1.bf16.xpose.msra.mxu0 %v2077
    %2089 = vmatprep.subr.bf16.mxu0 0
    %2090 = vmatpush1.bf16.xpose.msra.mxu0 %v2074
    %2091 = vmatprep.subr.bf16.mxu0 0
    %2092 = vmatpush1.bf16.xpose.msra.mxu0 %v2071
    %2093 = vmatprep.subr.bf16.mxu0 0
    %2094 = vmatpush1.bf16.xpose.msra.mxu0 %v2068
    %2095 = vmatprep.subr.bf16.mxu0 0
    %2096 = vmatpush2.bf16.xpose.msra.mxu0 0
    %2097 = vmatprep.subr.bf16.mxu0 0
    %2098 = vmatpush2.bf16.xpose.msra.mxu0 0
    %2099 = vmatprep.subr.bf16.mxu0 0
    %2100 = vmatpush2.bf16.xpose.msra.mxu0 0
    %2101 = vmatprep.subr.bf16.mxu0 0
    %2102 = vmatpush2.bf16.xpose.msra.mxu0 0
    %2103 = vmatprep.subr.bf16.mxu0 0
    %2104 = vmatpush2.bf16.xpose.msra.mxu0 0
    %2105 = vmatprep.subr.bf16.mxu0 0
    %2106 = vmatpush2.bf16.xpose.msra.mxu0 0
    %2107 = vmatprep.subr.bf16.mxu0 0
    %2108 = vmatpush2.bf16.xpose.msra.mxu0 0
    %2109 = vmatprep.subr.bf16.mxu0 0
    %2110 = vmatpush2.bf16.xpose.msra.mxu0 0
    %2111 = vmatprep.mubr.bf16.mxu0 0
    %2112 = vmatmul.mubr.bf16.gmra.mxu0 %v2056
    %v2113 = vpop.f32.mrf.mxu0
    %v2114 = vadd.f32 0.0, %v2113
    %v2115 = vpop.f32.mrf.mxu0
    %v2116 = vpop.f32.mrf.mxu0
    %v2117 = vadd.f32 0.0, %v2116
    %v2118 = vpop.f32.mrf.mxu0
    %2119 = vmatprep.mubr.bf16.mxu0 0
    %2120 = vmatmul.mubr.bf16.gmra.mxu0 %v2059
    %v2121 = vpop.f32.mrf.mxu0
    %v2122 = vadd.f32 0.0, %v2121
    %v2123 = vpop.f32.mrf.mxu0
    %v2124 = vpop.f32.mrf.mxu0
    %v2125 = vadd.f32 0.0, %v2124
    %v2126 = vpop.f32.mrf.mxu0
    %2127 = vmatprep.mubr.bf16.mxu0 0
    %2128 = vmatmul.mubr.bf16.gmra.mxu0 %v2062
    %v2129 = vpop.f32.mrf.mxu0
    %v2130 = vadd.f32 0.0, %v2129
    %v2131 = vpop.f32.mrf.mxu0
    %v2132 = vpop.f32.mrf.mxu0
    %v2133 = vadd.f32 0.0, %v2132
    %v2134 = vpop.f32.mrf.mxu0
    %2135 = vmatprep.mubr.bf16.mxu0 0
    %2136 = vmatmul.mubr.bf16.gmra.mxu0 %v2065
    %v2137 = vpop.f32.mrf.mxu0
    %v2138 = vadd.f32 0.0, %v2137
    %v2139 = vpop.f32.mrf.mxu0
    %v2140 = vpop.f32.mrf.mxu0
    %v2141 = vadd.f32 0.0, %v2140
    %v2142 = vpop.f32.mrf.mxu0
    %2143 = vdwg.mxu0
    %v2144 = vmul.f32 %v2114, 0.35355338
    %v2145 = vmul.f32 %v2117, 0.35355338
    %v2146 = vmul.f32 %v2122, 0.35355338
    %v2147 = vmul.f32 %v2125, 0.35355338
    %v2148 = vmul.f32 %v2130, 0.35355338
    %v2149 = vmul.f32 %v2133, 0.35355338
    %v2150 = vmul.f32 %v2138, 0.35355338
    %v2151 = vmul.f32 %v2141, 0.35355338
    %v2152 = vadd.f32 %v2144, %v885
    %v2153 = vadd.f32 %v2145, %v886
    %v2154 = vadd.f32 %v2146, %v887
    %v2155 = vadd.f32 %v2147, %v888
    %v2156 = vadd.f32 %v2148, %v889
    %v2157 = vadd.f32 %v2149, %v890
    %v2158 = vadd.f32 %v2150, %v891
    %v2159 = vadd.f32 %v2151, %v892
    %v2160 = vsel %vm541, %v2152, -inf
    %2161 = vmax.xlane.f32.xlu0 %v2160
    %v2162 = vpop.xlane.xlu0 %2161
    %v2163 = vsel %vm541, %v2153, -inf
    %2164 = vmax.xlane.f32.xlu0 %v2163
    %v2165 = vpop.xlane.xlu0 %2164
    %v2166 = vsel %vm541, %v2154, -inf
    %2167 = vmax.xlane.f32.xlu0 %v2166
    %v2168 = vpop.xlane.xlu0 %2167
    %v2169 = vsel %vm541, %v2155, -inf
    %2170 = vmax.xlane.f32.xlu0 %v2169
    %v2171 = vpop.xlane.xlu0 %2170
    %v2172 = vsel %vm541, %v2156, -inf
    %2173 = vmax.xlane.f32.xlu0 %v2172
    %v2174 = vpop.xlane.xlu0 %2173
    %v2175 = vsel %vm541, %v2157, -inf
    %2176 = vmax.xlane.f32.xlu0 %v2175
    %v2177 = vpop.xlane.xlu0 %2176
    %v2178 = vsel %vm541, %v2158, -inf
    %2179 = vmax.xlane.f32.xlu0 %v2178
    %v2180 = vpop.xlane.xlu0 %2179
    %v2181 = vsel %vm541, %v2159, -inf
    %2182 = vmax.xlane.f32.xlu0 %v2181
    %v2183 = vpop.xlane.xlu0 %2182
    %v2184 = vsub.f32 %v2152, %v2162
    %v2185 = vsub.f32 %v2153, %v2165
    %v2186 = vsub.f32 %v2154, %v2168
    %v2187 = vsub.f32 %v2155, %v2171
    %v2188 = vsub.f32 %v2156, %v2174
    %v2189 = vsub.f32 %v2157, %v2177
    %v2190 = vsub.f32 %v2158, %v2180
    %v2191 = vsub.f32 %v2159, %v2183
    %v2192 = vmul.f32 %v2184, 1.442695
    %v2193 = vpow.pop %v2192
    %v2194 = vmul.f32 %v2185, 1.442695
    %v2195 = vpow.pop %v2194
    %v2196 = vmul.f32 %v2186, 1.442695
    %v2197 = vpow.pop %v2196
    %v2198 = vmul.f32 %v2187, 1.442695
    %v2199 = vpow.pop %v2198
    %v2200 = vmul.f32 %v2188, 1.442695
    %v2201 = vpow.pop %v2200
    %v2202 = vmul.f32 %v2189, 1.442695
    %v2203 = vpow.pop %v2202
    %v2204 = vmul.f32 %v2190, 1.442695
    %v2205 = vpow.pop %v2204
    %v2206 = vmul.f32 %v2191, 1.442695
    %v2207 = vpow.pop %v2206
    %v2208 = vsel %vm541, %v2193, 0.0
    %2209 = vadd.xlane.f32.xlu0 %v2208
    %v2210 = vpop.xlane.xlu0 %2209
    %v2211 = vsel %vm541, %v2195, 0.0
    %2212 = vadd.xlane.f32.xlu0 %v2211
    %v2213 = vpop.xlane.xlu0 %2212
    %v2214 = vsel %vm541, %v2197, 0.0
    %2215 = vadd.xlane.f32.xlu0 %v2214
    %v2216 = vpop.xlane.xlu0 %2215
    %v2217 = vsel %vm541, %v2199, 0.0
    %2218 = vadd.xlane.f32.xlu0 %v2217
    %v2219 = vpop.xlane.xlu0 %2218
    %v2220 = vsel %vm541, %v2201, 0.0
    %2221 = vadd.xlane.f32.xlu0 %v2220
    %v2222 = vpop.xlane.xlu0 %2221
    %v2223 = vsel %vm541, %v2203, 0.0
    %2224 = vadd.xlane.f32.xlu0 %v2223
    %v2225 = vpop.xlane.xlu0 %2224
    %v2226 = vsel %vm541, %v2205, 0.0
    %2227 = vadd.xlane.f32.xlu0 %v2226
    %v2228 = vpop.xlane.xlu0 %2227
    %v2229 = vsel %vm541, %v2207, 0.0
    %2230 = vadd.xlane.f32.xlu0 %v2229
    %v2231 = vpop.xlane.xlu0 %2230
    %v2232 = vrcp.pop %v2210
    %v2233 = vrcp.pop %v2213
    %v2234 = vrcp.pop %v2216
    %v2235 = vrcp.pop %v2219
    %v2236 = vrcp.pop %v2222
    %v2237 = vrcp.pop %v2225
    %v2238 = vrcp.pop %v2228
    %v2239 = vrcp.pop %v2231
    %v2240 = vmul.f32 %v2193, %v2232
    %v2241 = vmul.f32 %v2195, %v2233
    %v2242 = vmul.f32 %v2197, %v2234
    %v2243 = vmul.f32 %v2199, %v2235
    %v2244 = vmul.f32 %v2201, %v2236
    %v2245 = vmul.f32 %v2203, %v2237
    %v2246 = vmul.f32 %v2205, %v2238
    %v2247 = vmul.f32 %v2207, %v2239
    %v2248 = vpack.c.bf16 %v2241, %v2240
    %v2249 = vpack.c.bf16 %v2243, %v2242
    %v2250 = vpack.c.bf16 %v2245, %v2244
    %v2251 = vpack.c.bf16 %v2247, %v2246
    %2252 = vrot.lane.b32.xlu0 %v1132, 40
    %v2253 = vpop.permute.xlu0 %2252
    %2254 = vrot.lane.b32.xlu0 %v1133, 40
    %v2255 = vpop.permute.xlu0 %2254
    %2256 = vrot.lane.b32.xlu0 %v1134, 40
    %v2257 = vpop.permute.xlu0 %2256
    %2258 = vrot.lane.b32.xlu0 %v1135, 40
    %v2259 = vpop.permute.xlu0 %2258
    %v2265 = vsel %vm541, %v2248, 0
    %v2268 = vsel %vm541, %v2249, 0
    %v2271 = vsel %vm541, %v2250, 0
    %v2274 = vsel %vm541, %v2251, 0
    %2276 = vmatprep.subr.bf16.mxu0 0
    %2277 = vmatpush1.bf16.msra.mxu0 0
    %2278 = vmatprep.subr.bf16.mxu0 0
    %2279 = vmatpush1.bf16.msra.mxu0 0
    %2280 = vmatprep.subr.bf16.mxu0 0
    %2281 = vmatpush1.bf16.msra.mxu0 0
    %2282 = vmatprep.subr.bf16.mxu0 0
    %2283 = vmatpush1.bf16.msra.mxu0 0
    %2284 = vmatprep.subr.bf16.mxu0 0
    %2285 = vmatpush1.bf16.msra.mxu0 %v2259
    %2286 = vmatprep.subr.bf16.mxu0 0
    %2287 = vmatpush1.bf16.msra.mxu0 %v2257
    %2288 = vmatprep.subr.bf16.mxu0 0
    %2289 = vmatpush1.bf16.msra.mxu0 %v2255
    %2290 = vmatprep.subr.bf16.mxu0 0
    %2291 = vmatpush1.bf16.msra.mxu0 %v2253
    %2292 = vmatprep.subr.bf16.mxu0 0
    %2293 = vmatpush2.bf16.msra.mxu0 0
    %2294 = vmatprep.subr.bf16.mxu0 0
    %2295 = vmatpush2.bf16.msra.mxu0 0
    %2296 = vmatprep.subr.bf16.mxu0 0
    %2297 = vmatpush2.bf16.msra.mxu0 0
    %2298 = vmatprep.subr.bf16.mxu0 0
    %2299 = vmatpush2.bf16.msra.mxu0 0
    %2300 = vmatprep.subr.bf16.mxu0 0
    %2301 = vmatpush2.bf16.msra.mxu0 0
    %2302 = vmatprep.subr.bf16.mxu0 0
    %2303 = vmatpush2.bf16.msra.mxu0 0
    %2304 = vmatprep.subr.bf16.mxu0 0
    %2305 = vmatpush2.bf16.msra.mxu0 0
    %2306 = vmatprep.subr.bf16.mxu0 0
    %2307 = vmatpush2.bf16.msra.mxu0 0
    %2308 = vmatprep.mubr.bf16.mxu0 0
    %2309 = vmatmul.mubr.bf16.gmra.mxu0 %v2265
    %v2310 = vpop.f32.mrf.mxu0
    %v2311 = vadd.f32 0.0, %v2310
    %v2312 = vpop.f32.mrf.mxu0
    %v2313 = vpop.f32.mrf.mxu0
    %v2314 = vadd.f32 0.0, %v2313
    %v2315 = vpop.f32.mrf.mxu0
    %2316 = vmatprep.mubr.bf16.mxu0 0
    %2317 = vmatmul.mubr.bf16.gmra.mxu0 %v2268
    %v2318 = vpop.f32.mrf.mxu0
    %v2319 = vadd.f32 0.0, %v2318
    %v2320 = vpop.f32.mrf.mxu0
    %v2321 = vpop.f32.mrf.mxu0
    %v2322 = vadd.f32 0.0, %v2321
    %v2323 = vpop.f32.mrf.mxu0
    %2324 = vmatprep.mubr.bf16.mxu0 0
    %2325 = vmatmul.mubr.bf16.gmra.mxu0 %v2271
    %v2326 = vpop.f32.mrf.mxu0
    %v2327 = vadd.f32 0.0, %v2326
    %v2328 = vpop.f32.mrf.mxu0
    %v2329 = vpop.f32.mrf.mxu0
    %v2330 = vadd.f32 0.0, %v2329
    %v2331 = vpop.f32.mrf.mxu0
    %2332 = vmatprep.mubr.bf16.mxu0 0
    %2333 = vmatmul.mubr.bf16.gmra.mxu0 %v2274
    %v2334 = vpop.f32.mrf.mxu0
    %v2335 = vadd.f32 0.0, %v2334
    %v2336 = vpop.f32.mrf.mxu0
    %v2337 = vpop.f32.mrf.mxu0
    %v2338 = vadd.f32 0.0, %v2337
    %v2339 = vpop.f32.mrf.mxu0
    %2340 = vdwg.mxu0
    %2349 = vrot.lane.b32.xlu0 %v1707, 8
    %v2350 = vpop.permute.xlu0 %2349
    %2351 = vrot.lane.b32.xlu0 %v1710, 8
    %v2352 = vpop.permute.xlu0 %2351
    %2353 = vrot.lane.b32.xlu0 %v1715, 8
    %v2354 = vpop.permute.xlu0 %2353
    %2355 = vrot.lane.b32.xlu0 %v1718, 8
    %v2356 = vpop.permute.xlu0 %2355
    %2357 = vrot.lane.b32.xlu0 %v1723, 8
    %v2358 = vpop.permute.xlu0 %2357
    %2359 = vrot.lane.b32.xlu0 %v1726, 8
    %v2360 = vpop.permute.xlu0 %2359
    %2361 = vrot.lane.b32.xlu0 %v1731, 8
    %v2362 = vpop.permute.xlu0 %2361
    %2363 = vrot.lane.b32.xlu0 %v1734, 8
    %v2364 = vpop.permute.xlu0 %2363
    %2381 = vrot.lane.b32.xlu0 %v2009, 16
    %v2382 = vpop.permute.xlu0 %2381
    %2383 = vrot.lane.b32.xlu0 %v2012, 16
    %v2384 = vpop.permute.xlu0 %2383
    %2385 = vrot.lane.b32.xlu0 %v2017, 16
    %v2386 = vpop.permute.xlu0 %2385
    %2387 = vrot.lane.b32.xlu0 %v2020, 16
    %v2388 = vpop.permute.xlu0 %2387
    %2389 = vrot.lane.b32.xlu0 %v2025, 16
    %v2390 = vpop.permute.xlu0 %2389
    %2391 = vrot.lane.b32.xlu0 %v2028, 16
    %v2392 = vpop.permute.xlu0 %2391
    %2393 = vrot.lane.b32.xlu0 %v2033, 16
    %v2394 = vpop.permute.xlu0 %2393
    %2395 = vrot.lane.b32.xlu0 %v2036, 16
    %v2396 = vpop.permute.xlu0 %2395
    %2413 = vrot.lane.b32.xlu0 %v2311, 24
    %v2414 = vpop.permute.xlu0 %2413
    %2415 = vrot.lane.b32.xlu0 %v2314, 24
    %v2416 = vpop.permute.xlu0 %2415
    %2417 = vrot.lane.b32.xlu0 %v2319, 24
    %v2418 = vpop.permute.xlu0 %2417
    %2419 = vrot.lane.b32.xlu0 %v2322, 24
    %v2420 = vpop.permute.xlu0 %2419
    %2421 = vrot.lane.b32.xlu0 %v2327, 24
    %v2422 = vpop.permute.xlu0 %2421
    %2423 = vrot.lane.b32.xlu0 %v2330, 24
    %v2424 = vpop.permute.xlu0 %2423
    %2425 = vrot.lane.b32.xlu0 %v2335, 24
    %v2426 = vpop.permute.xlu0 %2425
    %2427 = vrot.lane.b32.xlu0 %v2338, 24
    %v2428 = vpop.permute.xlu0 %2427
    %v2437 = vsel %vm1148, %v1405, %v2350
    %v2438 = vsel %vm1148, %v1408, %v2352
    %v2439 = vsel %vm1148, %v1413, %v2354
    %v2440 = vsel %vm1148, %v1416, %v2356
    %v2441 = vsel %vm1148, %v1421, %v2358
    %v2442 = vsel %vm1148, %v1424, %v2360
    %v2443 = vsel %vm1148, %v1429, %v2362
    %v2444 = vsel %vm1148, %v1432, %v2364
    %v2445 = vsel %vm339, %v2437, %v2382
    %v2446 = vsel %vm339, %v2438, %v2384
    %v2447 = vsel %vm339, %v2439, %v2386
    %v2448 = vsel %vm339, %v2440, %v2388
    %v2449 = vsel %vm339, %v2441, %v2390
    %v2450 = vsel %vm339, %v2442, %v2392
    %v2451 = vsel %vm339, %v2443, %v2394
    %v2452 = vsel %vm339, %v2444, %v2396
    %vm2453 = vcmask 195584
    %v2454 = vsel %vm2453, %v2445, %v2414
    %v2455 = vsel %vm2453, %v2446, %v2416
    %v2456 = vsel %vm2453, %v2447, %v2418
    %v2457 = vsel %vm2453, %v2448, %v2420
    %v2458 = vsel %vm2453, %v2449, %v2422
    %v2459 = vsel %vm2453, %v2450, %v2424
    %v2460 = vsel %vm2453, %v2451, %v2426
    %v2461 = vsel %vm2453, %v2452, %v2428
    %v2462 = vpack.c.bf16 %v2455, %v2454
    %v2463 = vpack.c.bf16 %v2457, %v2456
    %v2464 = vpack.c.bf16 %v2459, %v2458
    %v2465 = vpack.c.bf16 %v2461, %v2460
    %v2466 = vld [vmem:[%s8] sm:$0xf]
    %v2467 = vld [vmem:[%s8 + $0x4] sm:$0xf]
    %v2468 = vld [vmem:[%s8 + $0x8] sm:$0xf]
    %v2469 = vld [vmem:[%s8 + $0xc] sm:$0xf]
    %v2470 = vld [vmem:[%s9] sm:$0x1]
    %v2472 = vlaneseq
    %v2473 = vshrl.u32 %v2472, 7
    %v2474 = vsub.s32 0, %v2473
    %v2475 = vrot.slane %v2470, %v2474
    %v2481 = vunpack.c.l.b16 %v2466
    %v2482 = vunpack.c.l.b16 %v2467
    %v2483 = vunpack.c.l.b16 %v2468
    %v2484 = vunpack.c.l.b16 %v2469
    %v2485 = vpack.c.b16 %v2482, %v2481
    %v2486 = vpack.c.b16 %v2484, %v2483
    %v2490 = vsel %vm191, %v2462, 0
    %v2493 = vsel %vm191, %v2463, 0
    %v2496 = vsel %vm191, %v2464, 0
    %v2499 = vsel %vm191, %v2465, 0
    %2501 = vmatprep.subr.bf16.mxu0 0
    %2502 = vmatpush1.bf16.msra.mxu0 0
    %2503 = vmatprep.subr.bf16.mxu0 0
    %2504 = vmatpush1.bf16.msra.mxu0 0
    %2505 = vmatprep.subr.bf16.mxu0 0
    %2506 = vmatpush1.bf16.msra.mxu0 0
    %2507 = vmatprep.subr.bf16.mxu0 0
    %2508 = vmatpush1.bf16.msra.mxu0 0
    %2509 = vmatprep.subr.bf16.mxu0 0
    %2510 = vmatpush1.bf16.msra.mxu0 0
    %2511 = vmatprep.subr.bf16.mxu0 0
    %2512 = vmatpush1.bf16.msra.mxu0 0
    %2513 = vmatprep.subr.bf16.mxu0 0
    %2514 = vmatpush1.bf16.msra.mxu0 %v2486
    %2515 = vmatprep.subr.bf16.mxu0 0
    %2516 = vmatpush1.bf16.msra.mxu0 %v2485
    %2517 = vmatprep.subr.bf16.mxu0 0
    %2518 = vmatpush2.bf16.msra.mxu0 0
    %2519 = vmatprep.subr.bf16.mxu0 0
    %2520 = vmatpush2.bf16.msra.mxu0 0
    %2521 = vmatprep.subr.bf16.mxu0 0
    %2522 = vmatpush2.bf16.msra.mxu0 0
    %2523 = vmatprep.subr.bf16.mxu0 0
    %2524 = vmatpush2.bf16.msra.mxu0 0
    %2525 = vmatprep.subr.bf16.mxu0 0
    %2526 = vmatpush2.bf16.msra.mxu0 0
    %2527 = vmatprep.subr.bf16.mxu0 0
    %2528 = vmatpush2.bf16.msra.mxu0 0
    %2529 = vmatprep.subr.bf16.mxu0 0
    %2530 = vmatpush2.bf16.msra.mxu0 0
    %2531 = vmatprep.subr.bf16.mxu0 0
    %2532 = vmatpush2.bf16.msra.mxu0 0
    %2533 = vmatprep.mubr.bf16.mxu0 0
    %2534 = vmatmul.mubr.bf16.gmra.mxu0 %v2490
    %v2535 = vpop.f32.mrf.mxu0
    %v2536 = vadd.f32 %v2475, %v2535
    %v2537 = vpop.f32.mrf.mxu0
    %v2538 = vpop.f32.mrf.mxu0
    %v2539 = vadd.f32 %v2475, %v2538
    %v2540 = vpop.f32.mrf.mxu0
    %2541 = vmatprep.mubr.bf16.mxu0 0
    %2542 = vmatmul.mubr.bf16.gmra.mxu0 %v2493
    %v2543 = vpop.f32.mrf.mxu0
    %v2544 = vadd.f32 %v2475, %v2543
    %v2545 = vpop.f32.mrf.mxu0
    %v2546 = vpop.f32.mrf.mxu0
    %v2547 = vadd.f32 %v2475, %v2546
    %v2548 = vpop.f32.mrf.mxu0
    %2549 = vmatprep.mubr.bf16.mxu0 0
    %2550 = vmatmul.mubr.bf16.gmra.mxu0 %v2496
    %v2551 = vpop.f32.mrf.mxu0
    %v2552 = vadd.f32 %v2475, %v2551
    %v2553 = vpop.f32.mrf.mxu0
    %v2554 = vpop.f32.mrf.mxu0
    %v2555 = vadd.f32 %v2475, %v2554
    %v2556 = vpop.f32.mrf.mxu0
    %2557 = vmatprep.mubr.bf16.mxu0 0
    %2558 = vmatmul.mubr.bf16.gmra.mxu0 %v2499
    %v2559 = vpop.f32.mrf.mxu0
    %v2560 = vadd.f32 %v2475, %v2559
    %v2561 = vpop.f32.mrf.mxu0
    %v2562 = vpop.f32.mrf.mxu0
    %v2563 = vadd.f32 %v2475, %v2562
    %v2564 = vpop.f32.mrf.mxu0
    %2565 = vdwg.mxu0
    %v2566 = vadd.f32 %v846, %v2536
    %v2567 = vadd.f32 %v849, %v2539
    %v2568 = vadd.f32 %v854, %v2544
    %v2569 = vadd.f32 %v857, %v2547
    %v2570 = vadd.f32 %v862, %v2552
    %v2571 = vadd.f32 %v865, %v2555
    %v2572 = vadd.f32 %v870, %v2560
    %v2573 = vadd.f32 %v873, %v2563
    %v2574 = vld [vmem:[%s10] sm:$0x1]
    %v2575 = vld [vmem:[%s11] sm:$0x1]
    %v2576 = vsel %vm191, %v2566, 0.0
    %2577 = vadd.xlane.f32.xlu0 %v2576
    %v2578 = vpop.xlane.xlu0 %2577
    %v2579 = vsel %vm191, %v2567, 0.0
    %2580 = vadd.xlane.f32.xlu0 %v2579
    %v2581 = vpop.xlane.xlu0 %2580
    %v2582 = vsel %vm191, %v2568, 0.0
    %2583 = vadd.xlane.f32.xlu0 %v2582
    %v2584 = vpop.xlane.xlu0 %2583
    %v2585 = vsel %vm191, %v2569, 0.0
    %2586 = vadd.xlane.f32.xlu0 %v2585
    %v2587 = vpop.xlane.xlu0 %2586
    %v2588 = vsel %vm191, %v2570, 0.0
    %2589 = vadd.xlane.f32.xlu0 %v2588
    %v2590 = vpop.xlane.xlu0 %2589
    %v2591 = vsel %vm191, %v2571, 0.0
    %2592 = vadd.xlane.f32.xlu0 %v2591
    %v2593 = vpop.xlane.xlu0 %2592
    %v2594 = vsel %vm191, %v2572, 0.0
    %2595 = vadd.xlane.f32.xlu0 %v2594
    %v2596 = vpop.xlane.xlu0 %2595
    %v2597 = vsel %vm191, %v2573, 0.0
    %2598 = vadd.xlane.f32.xlu0 %v2597
    %v2599 = vpop.xlane.xlu0 %2598
    %v2600 = vmul.f32 %v2578, %v919
    %v2601 = vmul.f32 %v2581, %v919
    %v2602 = vmul.f32 %v2584, %v919
    %v2603 = vmul.f32 %v2587, %v919
    %v2604 = vmul.f32 %v2590, %v919
    %v2605 = vmul.f32 %v2593, %v919
    %v2606 = vmul.f32 %v2596, %v919
    %v2607 = vmul.f32 %v2599, %v919
    %v2608 = vsub.f32 %v2566, %v2600
    %v2609 = vsub.f32 %v2567, %v2601
    %v2610 = vsub.f32 %v2568, %v2602
    %v2611 = vsub.f32 %v2569, %v2603
    %v2612 = vsub.f32 %v2570, %v2604
    %v2613 = vsub.f32 %v2571, %v2605
    %v2614 = vsub.f32 %v2572, %v2606
    %v2615 = vsub.f32 %v2573, %v2607
    %v2616 = vmul.f32 %v2608, %v2608
    %v2617 = vmul.f32 %v2609, %v2609
    %v2618 = vmul.f32 %v2610, %v2610
    %v2619 = vmul.f32 %v2611, %v2611
    %v2620 = vmul.f32 %v2612, %v2612
    %v2621 = vmul.f32 %v2613, %v2613
    %v2622 = vmul.f32 %v2614, %v2614
    %v2623 = vmul.f32 %v2615, %v2615
    %v2624 = vsel %vm191, %v2616, 0.0
    %2625 = vadd.xlane.f32.xlu0 %v2624
    %v2626 = vpop.xlane.xlu0 %2625
    %v2627 = vsel %vm191, %v2617, 0.0
    %2628 = vadd.xlane.f32.xlu0 %v2627
    %v2629 = vpop.xlane.xlu0 %2628
    %v2630 = vsel %vm191, %v2618, 0.0
    %2631 = vadd.xlane.f32.xlu0 %v2630
    %v2632 = vpop.xlane.xlu0 %2631
    %v2633 = vsel %vm191, %v2619, 0.0
    %2634 = vadd.xlane.f32.xlu0 %v2633
    %v2635 = vpop.xlane.xlu0 %2634
    %v2636 = vsel %vm191, %v2620, 0.0
    %2637 = vadd.xlane.f32.xlu0 %v2636
    %v2638 = vpop.xlane.xlu0 %2637
    %v2639 = vsel %vm191, %v2621, 0.0
    %2640 = vadd.xlane.f32.xlu0 %v2639
    %v2641 = vpop.xlane.xlu0 %2640
    %v2642 = vsel %vm191, %v2622, 0.0
    %2643 = vadd.xlane.f32.xlu0 %v2642
    %v2644 = vpop.xlane.xlu0 %2643
    %v2645 = vsel %vm191, %v2623, 0.0
    %2646 = vadd.xlane.f32.xlu0 %v2645
    %v2647 = vpop.xlane.xlu0 %2646
    %v2648 = vmul.f32 %v2626, %v919
    %v2649 = vmul.f32 %v2629, %v919
    %v2650 = vmul.f32 %v2632, %v919
    %v2651 = vmul.f32 %v2635, %v919
    %v2652 = vmul.f32 %v2638, %v919
    %v2653 = vmul.f32 %v2641, %v919
    %v2654 = vmul.f32 %v2644, %v919
    %v2655 = vmul.f32 %v2647, %v919
    %v2656 = vadd.f32 %v2648, 1e-05
    %v2657 = vadd.f32 %v2649, 1e-05
    %v2658 = vadd.f32 %v2650, 1e-05
    %v2659 = vadd.f32 %v2651, 1e-05
    %v2660 = vadd.f32 %v2652, 1e-05
    %v2661 = vadd.f32 %v2653, 1e-05
    %v2662 = vadd.f32 %v2654, 1e-05
    %v2663 = vadd.f32 %v2655, 1e-05
    %v2664 = vrsqrt.pop %v2656
    %v2665 = vrsqrt.pop %v2657
    %v2666 = vrsqrt.pop %v2658
    %v2667 = vrsqrt.pop %v2659
    %v2668 = vrsqrt.pop %v2660
    %v2669 = vrsqrt.pop %v2661
    %v2670 = vrsqrt.pop %v2662
    %v2671 = vrsqrt.pop %v2663
    %v2672 = vmul.f32 %v2608, %v2664
    %v2673 = vmul.f32 %v2609, %v2665
    %v2674 = vmul.f32 %v2610, %v2666
    %v2675 = vmul.f32 %v2611, %v2667
    %v2676 = vmul.f32 %v2612, %v2668
    %v2677 = vmul.f32 %v2613, %v2669
    %v2678 = vmul.f32 %v2614, %v2670
    %v2679 = vmul.f32 %v2615, %v2671
    %v2681 = vlaneseq
    %v2682 = vshrl.u32 %v2681, 7
    %v2683 = vsub.s32 0, %v2682
    %v2684 = vrot.slane %v2574, %v2683
    %v2686 = vmul.f32 %v2672, %v2684
    %v2687 = vmul.f32 %v2673, %v2684
    %v2688 = vmul.f32 %v2674, %v2684
    %v2689 = vmul.f32 %v2675, %v2684
    %v2690 = vmul.f32 %v2676, %v2684
    %v2691 = vmul.f32 %v2677, %v2684
    %v2692 = vmul.f32 %v2678, %v2684
    %v2693 = vmul.f32 %v2679, %v2684
    %v2695 = vlaneseq
    %v2696 = vshrl.u32 %v2695, 7
    %v2697 = vsub.s32 0, %v2696
    %v2698 = vrot.slane %v2575, %v2697
    %v2700 = vadd.f32 %v2686, %v2698
    %v2701 = vadd.f32 %v2687, %v2698
    %v2702 = vadd.f32 %v2688, %v2698
    %v2703 = vadd.f32 %v2689, %v2698
    %v2704 = vadd.f32 %v2690, %v2698
    %v2705 = vadd.f32 %v2691, %v2698
    %v2706 = vadd.f32 %v2692, %v2698
    %v2707 = vadd.f32 %v2693, %v2698
    %v2708 = vpack.c.bf16 %v2701, %v2700
    %v2709 = vpack.c.bf16 %v2703, %v2702
    %v2710 = vpack.c.bf16 %v2705, %v2704
    %v2711 = vpack.c.bf16 %v2707, %v2706
    %v2712 = vld [vmem:[%s12] sm:$0xf]
    %v2713 = vld [vmem:[%s12 + $0x4] sm:$0xf]
    %v2714 = vld [vmem:[%s12 + $0x8] sm:$0xf]
    %v2715 = vld [vmem:[%s12 + $0xc] sm:$0xf]
    %v2716 = vld [vmem:[%s13] sm:$0x1]
    %v2718 = vlaneseq
    %v2719 = vshrl.u32 %v2718, 7
    %v2720 = vsub.s32 0, %v2719
    %v2721 = vrot.slane %v2716, %v2720
    %v2727 = vunpack.c.l.b16 %v2712
    %v2728 = vunpack.c.l.b16 %v2713
    %v2729 = vunpack.c.l.b16 %v2714
    %v2730 = vunpack.c.l.b16 %v2715
    %v2731 = vpack.c.b16 %v2728, %v2727
    %v2732 = vpack.c.b16 %v2730, %v2729
    %v2736 = vsel %vm191, %v2708, 0
    %v2739 = vsel %vm191, %v2709, 0
    %v2742 = vsel %vm191, %v2710, 0
    %v2745 = vsel %vm191, %v2711, 0
    %2747 = vmatprep.subr.bf16.mxu0 0
    %2748 = vmatpush1.bf16.msra.mxu0 0
    %2749 = vmatprep.subr.bf16.mxu0 0
    %2750 = vmatpush1.bf16.msra.mxu0 0
    %2751 = vmatprep.subr.bf16.mxu0 0
    %2752 = vmatpush1.bf16.msra.mxu0 0
    %2753 = vmatprep.subr.bf16.mxu0 0
    %2754 = vmatpush1.bf16.msra.mxu0 0
    %2755 = vmatprep.subr.bf16.mxu0 0
    %2756 = vmatpush1.bf16.msra.mxu0 0
    %2757 = vmatprep.subr.bf16.mxu0 0
    %2758 = vmatpush1.bf16.msra.mxu0 0
    %2759 = vmatprep.subr.bf16.mxu0 0
    %2760 = vmatpush1.bf16.msra.mxu0 %v2732
    %2761 = vmatprep.subr.bf16.mxu0 0
    %2762 = vmatpush1.bf16.msra.mxu0 %v2731
    %2763 = vmatprep.subr.bf16.mxu0 0
    %2764 = vmatpush2.bf16.msra.mxu0 0
    %2765 = vmatprep.subr.bf16.mxu0 0
    %2766 = vmatpush2.bf16.msra.mxu0 0
    %2767 = vmatprep.subr.bf16.mxu0 0
    %2768 = vmatpush2.bf16.msra.mxu0 0
    %2769 = vmatprep.subr.bf16.mxu0 0
    %2770 = vmatpush2.bf16.msra.mxu0 0
    %2771 = vmatprep.subr.bf16.mxu0 0
    %2772 = vmatpush2.bf16.msra.mxu0 0
    %2773 = vmatprep.subr.bf16.mxu0 0
    %2774 = vmatpush2.bf16.msra.mxu0 0
    %2775 = vmatprep.subr.bf16.mxu0 0
    %2776 = vmatpush2.bf16.msra.mxu0 0
    %2777 = vmatprep.subr.bf16.mxu0 0
    %2778 = vmatpush2.bf16.msra.mxu0 0
    %2779 = vmatprep.mubr.bf16.mxu0 0
    %2780 = vmatmul.mubr.bf16.gmra.mxu0 %v2736
    %v2781 = vpop.f32.mrf.mxu0
    %v2782 = vadd.f32 %v2721, %v2781
    %v2783 = vpop.f32.mrf.mxu0
    %v2784 = vpop.f32.mrf.mxu0
    %v2785 = vadd.f32 %v2721, %v2784
    %v2786 = vpop.f32.mrf.mxu0
    %2787 = vmatprep.mubr.bf16.mxu0 0
    %2788 = vmatmul.mubr.bf16.gmra.mxu0 %v2739
    %v2789 = vpop.f32.mrf.mxu0
    %v2790 = vadd.f32 %v2721, %v2789
    %v2791 = vpop.f32.mrf.mxu0
    %v2792 = vpop.f32.mrf.mxu0
    %v2793 = vadd.f32 %v2721, %v2792
    %v2794 = vpop.f32.mrf.mxu0
    %2795 = vmatprep.mubr.bf16.mxu0 0
    %2796 = vmatmul.mubr.bf16.gmra.mxu0 %v2742
    %v2797 = vpop.f32.mrf.mxu0
    %v2798 = vadd.f32 %v2721, %v2797
    %v2799 = vpop.f32.mrf.mxu0
    %v2800 = vpop.f32.mrf.mxu0
    %v2801 = vadd.f32 %v2721, %v2800
    %v2802 = vpop.f32.mrf.mxu0
    %2803 = vmatprep.mubr.bf16.mxu0 0
    %2804 = vmatmul.mubr.bf16.gmra.mxu0 %v2745
    %v2805 = vpop.f32.mrf.mxu0
    %v2806 = vadd.f32 %v2721, %v2805
    %v2807 = vpop.f32.mrf.mxu0
    %v2808 = vpop.f32.mrf.mxu0
    %v2809 = vadd.f32 %v2721, %v2808
    %v2810 = vpop.f32.mrf.mxu0
    %2811 = vdwg.mxu0
    %v2812 = vmax.f32 %v2782, 0.0
    %v2813 = vmax.f32 %v2785, 0.0
    %v2814 = vmax.f32 %v2790, 0.0
    %v2815 = vmax.f32 %v2793, 0.0
    %v2816 = vmax.f32 %v2798, 0.0
    %v2817 = vmax.f32 %v2801, 0.0
    %v2818 = vmax.f32 %v2806, 0.0
    %v2819 = vmax.f32 %v2809, 0.0
    %v2820 = vpack.c.bf16 %v2813, %v2812
    %v2821 = vpack.c.bf16 %v2815, %v2814
    %v2822 = vpack.c.bf16 %v2817, %v2816
    %v2823 = vpack.c.bf16 %v2819, %v2818
    %v2824 = vld [vmem:[%s14] sm:$0xf]
    %v2825 = vld [vmem:[%s14 + $0x4] sm:$0xf]
    %v2826 = vld [vmem:[%s14 + $0x8] sm:$0xf]
    %v2827 = vld [vmem:[%s14 + $0xc] sm:$0xf]
    %v2828 = vld [vmem:[%s14 + $0x10] sm:$0xf]
    %v2829 = vld [vmem:[%s14 + $0x14] sm:$0xf]
    %v2830 = vld [vmem:[%s14 + $0x18] sm:$0xf]
    %v2831 = vld [vmem:[%s14 + $0x1c] sm:$0xf]
    %v2840 = vunpack.c.l.b16 %v2824
    %v2841 = vunpack.c.l.b16 %v2825
    %v2842 = vunpack.c.l.b16 %v2826
    %v2843 = vunpack.c.l.b16 %v2827
    %v2844 = vunpack.c.l.b16 %v2828
    %v2845 = vunpack.c.l.b16 %v2829
    %v2846 = vunpack.c.l.b16 %v2830
    %v2847 = vunpack.c.l.b16 %v2831
    %v2848 = vpack.c.b16 %v2841, %v2840
    %v2849 = vpack.c.b16 %v2843, %v2842
    %v2850 = vpack.c.b16 %v2845, %v2844
    %v2851 = vpack.c.b16 %v2847, %v2846
    %v2857 = vsel %vm541, %v2820, 0
    %v2860 = vsel %vm541, %v2821, 0
    %v2863 = vsel %vm541, %v2822, 0
    %v2866 = vsel %vm541, %v2823, 0
    %2868 = vmatprep.subr.bf16.mxu0 0
    %2869 = vmatpush1.bf16.msra.mxu0 0
    %2870 = vmatprep.subr.bf16.mxu0 0
    %2871 = vmatpush1.bf16.msra.mxu0 0
    %2872 = vmatprep.subr.bf16.mxu0 0
    %2873 = vmatpush1.bf16.msra.mxu0 0
    %2874 = vmatprep.subr.bf16.mxu0 0
    %2875 = vmatpush1.bf16.msra.mxu0 0
    %2876 = vmatprep.subr.bf16.mxu0 0
    %2877 = vmatpush1.bf16.msra.mxu0 %v2851
    %2878 = vmatprep.subr.bf16.mxu0 0
    %2879 = vmatpush1.bf16.msra.mxu0 %v2850
    %2880 = vmatprep.subr.bf16.mxu0 0
    %2881 = vmatpush1.bf16.msra.mxu0 %v2849
    %2882 = vmatprep.subr.bf16.mxu0 0
    %2883 = vmatpush1.bf16.msra.mxu0 %v2848
    %2884 = vmatprep.subr.bf16.mxu0 0
    %2885 = vmatpush2.bf16.msra.mxu0 0
    %2886 = vmatprep.subr.bf16.mxu0 0
    %2887 = vmatpush2.bf16.msra.mxu0 0
    %2888 = vmatprep.subr.bf16.mxu0 0
    %2889 = vmatpush2.bf16.msra.mxu0 0
    %2890 = vmatprep.subr.bf16.mxu0 0
    %2891 = vmatpush2.bf16.msra.mxu0 0
    %2892 = vmatprep.subr.bf16.mxu0 0
    %2893 = vmatpush2.bf16.msra.mxu0 0
    %2894 = vmatprep.subr.bf16.mxu0 0
    %2895 = vmatpush2.bf16.msra.mxu0 0
    %2896 = vmatprep.subr.bf16.mxu0 0
    %2897 = vmatpush2.bf16.msra.mxu0 0
    %2898 = vmatprep.subr.bf16.mxu0 0
    %2899 = vmatpush2.bf16.msra.mxu0 0
    %2900 = vmatprep.mubr.bf16.mxu0 0
    %2901 = vmatmul.mubr.bf16.gmra.mxu0 %v2857
    %v2902 = vpop.f32.mrf.mxu0
    %v2903 = vadd.f32 0.0, %v2902
    %v2904 = vpop.f32.mrf.mxu0
    %v2905 = vpop.f32.mrf.mxu0
    %v2906 = vadd.f32 0.0, %v2905
    %v2907 = vpop.f32.mrf.mxu0
    %2908 = vmatprep.mubr.bf16.mxu0 0
    %2909 = vmatmul.mubr.bf16.gmra.mxu0 %v2860
    %v2910 = vpop.f32.mrf.mxu0
    %v2911 = vadd.f32 0.0, %v2910
    %v2912 = vpop.f32.mrf.mxu0
    %v2913 = vpop.f32.mrf.mxu0
    %v2914 = vadd.f32 0.0, %v2913
    %v2915 = vpop.f32.mrf.mxu0
    %2916 = vmatprep.mubr.bf16.mxu0 0
    %2917 = vmatmul.mubr.bf16.gmra.mxu0 %v2863
    %v2918 = vpop.f32.mrf.mxu0
    %v2919 = vadd.f32 0.0, %v2918
    %v2920 = vpop.f32.mrf.mxu0
    %v2921 = vpop.f32.mrf.mxu0
    %v2922 = vadd.f32 0.0, %v2921
    %v2923 = vpop.f32.mrf.mxu0
    %2924 = vmatprep.mubr.bf16.mxu0 0
    %2925 = vmatmul.mubr.bf16.gmra.mxu0 %v2866
    %v2926 = vpop.f32.mrf.mxu0
    %v2927 = vadd.f32 0.0, %v2926
    %v2928 = vpop.f32.mrf.mxu0
    %v2929 = vpop.f32.mrf.mxu0
    %v2930 = vadd.f32 0.0, %v2929
    %v2931 = vpop.f32.mrf.mxu0
    %2932 = vdwg.mxu0
    %v2933 = vadd.f32 %v2566, %v2903
    %v2934 = vadd.f32 %v2567, %v2906
    %v2935 = vadd.f32 %v2568, %v2911
    %v2936 = vadd.f32 %v2569, %v2914
    %v2937 = vadd.f32 %v2570, %v2919
    %v2938 = vadd.f32 %v2571, %v2922
    %v2939 = vadd.f32 %v2572, %v2927
    %v2940 = vadd.f32 %v2573, %v2930
    %v2941 = vld [vmem:[%s15] sm:$0x1]
    %v2943 = vlaneseq
    %v2944 = vshrl.u32 %v2943, 7
    %v2945 = vsub.s32 0, %v2944
    %v2946 = vrot.slane %v2941, %v2945
    %v2948 = vadd.f32 %v2933, %v2946
    %v2949 = vadd.f32 %v2934, %v2946
    %v2950 = vadd.f32 %v2935, %v2946
    %v2951 = vadd.f32 %v2936, %v2946
    %v2952 = vadd.f32 %v2937, %v2946
    %v2953 = vadd.f32 %v2938, %v2946
    %v2954 = vadd.f32 %v2939, %v2946
    %v2955 = vadd.f32 %v2940, %v2946
    %s2956 = scalar_lea.vmem %s4, 1
    %v2957 = vld [vmem:[%s2956] sm:$0x1]
    %s2958 = scalar_lea.vmem %s5, 1
    %v2959 = vld [vmem:[%s2958] sm:$0x1]
    %v2960 = vsel %vm191, %v2948, 0.0
    %2961 = vadd.xlane.f32.xlu0 %v2960
    %v2962 = vpop.xlane.xlu0 %2961
    %v2963 = vsel %vm191, %v2949, 0.0
    %2964 = vadd.xlane.f32.xlu0 %v2963
    %v2965 = vpop.xlane.xlu0 %2964
    %v2966 = vsel %vm191, %v2950, 0.0
    %2967 = vadd.xlane.f32.xlu0 %v2966
    %v2968 = vpop.xlane.xlu0 %2967
    %v2969 = vsel %vm191, %v2951, 0.0
    %2970 = vadd.xlane.f32.xlu0 %v2969
    %v2971 = vpop.xlane.xlu0 %2970
    %v2972 = vsel %vm191, %v2952, 0.0
    %2973 = vadd.xlane.f32.xlu0 %v2972
    %v2974 = vpop.xlane.xlu0 %2973
    %v2975 = vsel %vm191, %v2953, 0.0
    %2976 = vadd.xlane.f32.xlu0 %v2975
    %v2977 = vpop.xlane.xlu0 %2976
    %v2978 = vsel %vm191, %v2954, 0.0
    %2979 = vadd.xlane.f32.xlu0 %v2978
    %v2980 = vpop.xlane.xlu0 %2979
    %v2981 = vsel %vm191, %v2955, 0.0
    %2982 = vadd.xlane.f32.xlu0 %v2981
    %v2983 = vpop.xlane.xlu0 %2982
    %v2984 = vmul.f32 %v2962, %v919
    %v2985 = vmul.f32 %v2965, %v919
    %v2986 = vmul.f32 %v2968, %v919
    %v2987 = vmul.f32 %v2971, %v919
    %v2988 = vmul.f32 %v2974, %v919
    %v2989 = vmul.f32 %v2977, %v919
    %v2990 = vmul.f32 %v2980, %v919
    %v2991 = vmul.f32 %v2983, %v919
    %v2992 = vsub.f32 %v2948, %v2984
    %v2993 = vsub.f32 %v2949, %v2985
    %v2994 = vsub.f32 %v2950, %v2986
    %v2995 = vsub.f32 %v2951, %v2987
    %v2996 = vsub.f32 %v2952, %v2988
    %v2997 = vsub.f32 %v2953, %v2989
    %v2998 = vsub.f32 %v2954, %v2990
    %v2999 = vsub.f32 %v2955, %v2991
    %v3000 = vmul.f32 %v2992, %v2992
    %v3001 = vmul.f32 %v2993, %v2993
    %v3002 = vmul.f32 %v2994, %v2994
    %v3003 = vmul.f32 %v2995, %v2995
    %v3004 = vmul.f32 %v2996, %v2996
    %v3005 = vmul.f32 %v2997, %v2997
    %v3006 = vmul.f32 %v2998, %v2998
    %v3007 = vmul.f32 %v2999, %v2999
    %v3008 = vsel %vm191, %v3000, 0.0
    %3009 = vadd.xlane.f32.xlu0 %v3008
    %v3010 = vpop.xlane.xlu0 %3009
    %v3011 = vsel %vm191, %v3001, 0.0
    %3012 = vadd.xlane.f32.xlu0 %v3011
    %v3013 = vpop.xlane.xlu0 %3012
    %v3014 = vsel %vm191, %v3002, 0.0
    %3015 = vadd.xlane.f32.xlu0 %v3014
    %v3016 = vpop.xlane.xlu0 %3015
    %v3017 = vsel %vm191, %v3003, 0.0
    %3018 = vadd.xlane.f32.xlu0 %v3017
    %v3019 = vpop.xlane.xlu0 %3018
    %v3020 = vsel %vm191, %v3004, 0.0
    %3021 = vadd.xlane.f32.xlu0 %v3020
    %v3022 = vpop.xlane.xlu0 %3021
    %v3023 = vsel %vm191, %v3005, 0.0
    %3024 = vadd.xlane.f32.xlu0 %v3023
    %v3025 = vpop.xlane.xlu0 %3024
    %v3026 = vsel %vm191, %v3006, 0.0
    %3027 = vadd.xlane.f32.xlu0 %v3026
    %v3028 = vpop.xlane.xlu0 %3027
    %v3029 = vsel %vm191, %v3007, 0.0
    %3030 = vadd.xlane.f32.xlu0 %v3029
    %v3031 = vpop.xlane.xlu0 %3030
    %v3032 = vmul.f32 %v3010, %v919
    %v3033 = vmul.f32 %v3013, %v919
    %v3034 = vmul.f32 %v3016, %v919
    %v3035 = vmul.f32 %v3019, %v919
    %v3036 = vmul.f32 %v3022, %v919
    %v3037 = vmul.f32 %v3025, %v919
    %v3038 = vmul.f32 %v3028, %v919
    %v3039 = vmul.f32 %v3031, %v919
    %v3040 = vadd.f32 %v3032, 1e-05
    %v3041 = vadd.f32 %v3033, 1e-05
    %v3042 = vadd.f32 %v3034, 1e-05
    %v3043 = vadd.f32 %v3035, 1e-05
    %v3044 = vadd.f32 %v3036, 1e-05
    %v3045 = vadd.f32 %v3037, 1e-05
    %v3046 = vadd.f32 %v3038, 1e-05
    %v3047 = vadd.f32 %v3039, 1e-05
    %v3048 = vrsqrt.pop %v3040
    %v3049 = vrsqrt.pop %v3041
    %v3050 = vrsqrt.pop %v3042
    %v3051 = vrsqrt.pop %v3043
    %v3052 = vrsqrt.pop %v3044
    %v3053 = vrsqrt.pop %v3045
    %v3054 = vrsqrt.pop %v3046
    %v3055 = vrsqrt.pop %v3047
    %v3056 = vmul.f32 %v2992, %v3048
    %v3057 = vmul.f32 %v2993, %v3049
    %v3058 = vmul.f32 %v2994, %v3050
    %v3059 = vmul.f32 %v2995, %v3051
    %v3060 = vmul.f32 %v2996, %v3052
    %v3061 = vmul.f32 %v2997, %v3053
    %v3062 = vmul.f32 %v2998, %v3054
    %v3063 = vmul.f32 %v2999, %v3055
    %v3065 = vlaneseq
    %v3066 = vshrl.u32 %v3065, 7
    %v3067 = vsub.s32 0, %v3066
    %v3068 = vrot.slane %v2957, %v3067
    %v3070 = vmul.f32 %v3056, %v3068
    %v3071 = vmul.f32 %v3057, %v3068
    %v3072 = vmul.f32 %v3058, %v3068
    %v3073 = vmul.f32 %v3059, %v3068
    %v3074 = vmul.f32 %v3060, %v3068
    %v3075 = vmul.f32 %v3061, %v3068
    %v3076 = vmul.f32 %v3062, %v3068
    %v3077 = vmul.f32 %v3063, %v3068
    %v3079 = vlaneseq
    %v3080 = vshrl.u32 %v3079, 7
    %v3081 = vsub.s32 0, %v3080
    %v3082 = vrot.slane %v2959, %v3081
    %v3084 = vadd.f32 %v3070, %v3082
    %v3085 = vadd.f32 %v3071, %v3082
    %v3086 = vadd.f32 %v3072, %v3082
    %v3087 = vadd.f32 %v3073, %v3082
    %v3088 = vadd.f32 %v3074, %v3082
    %v3089 = vadd.f32 %v3075, %v3082
    %v3090 = vadd.f32 %v3076, %v3082
    %v3091 = vadd.f32 %v3077, %v3082
    %v3092 = vpack.c.bf16 %v3085, %v3084
    %v3093 = vpack.c.bf16 %v3087, %v3086
    %v3094 = vpack.c.bf16 %v3089, %v3088
    %v3095 = vpack.c.bf16 %v3091, %v3090
    %s3096 = scalar_lea.vmem %s6, 16
    %v3097 = vld [vmem:[%s3096] sm:$0xf]
    %v3098 = vld [vmem:[%s3096 + $0x4] sm:$0xf]
    %v3099 = vld [vmem:[%s3096 + $0x8] sm:$0xf]
    %v3100 = vld [vmem:[%s3096 + $0xc] sm:$0xf]
    %s3101 = scalar_lea.vmem %s7, 1
    %v3102 = vld [vmem:[%s3101] sm:$0x1]
    %v3104 = vlaneseq
    %v3105 = vshrl.u32 %v3104, 7
    %v3106 = vsub.s32 0, %v3105
    %v3107 = vrot.slane %v3102, %v3106
    %v3113 = vunpack.c.l.b16 %v3097
    %v3114 = vunpack.c.l.b16 %v3098
    %v3115 = vunpack.c.l.b16 %v3099
    %v3116 = vunpack.c.l.b16 %v3100
    %v3117 = vpack.c.b16 %v3114, %v3113
    %v3118 = vpack.c.b16 %v3116, %v3115
    %v3122 = vsel %vm191, %v3092, 0
    %v3125 = vsel %vm191, %v3093, 0
    %v3128 = vsel %vm191, %v3094, 0
    %v3131 = vsel %vm191, %v3095, 0
    %3133 = vmatprep.subr.bf16.mxu0 0
    %3134 = vmatpush1.bf16.msra.mxu0 0
    %3135 = vmatprep.subr.bf16.mxu0 0
    %3136 = vmatpush1.bf16.msra.mxu0 0
    %3137 = vmatprep.subr.bf16.mxu0 0
    %3138 = vmatpush1.bf16.msra.mxu0 0
    %3139 = vmatprep.subr.bf16.mxu0 0
    %3140 = vmatpush1.bf16.msra.mxu0 0
    %3141 = vmatprep.subr.bf16.mxu0 0
    %3142 = vmatpush1.bf16.msra.mxu0 0
    %3143 = vmatprep.subr.bf16.mxu0 0
    %3144 = vmatpush1.bf16.msra.mxu0 0
    %3145 = vmatprep.subr.bf16.mxu0 0
    %3146 = vmatpush1.bf16.msra.mxu0 %v3118
    %3147 = vmatprep.subr.bf16.mxu0 0
    %3148 = vmatpush1.bf16.msra.mxu0 %v3117
    %3149 = vmatprep.subr.bf16.mxu0 0
    %3150 = vmatpush2.bf16.msra.mxu0 0
    %3151 = vmatprep.subr.bf16.mxu0 0
    %3152 = vmatpush2.bf16.msra.mxu0 0
    %3153 = vmatprep.subr.bf16.mxu0 0
    %3154 = vmatpush2.bf16.msra.mxu0 0
    %3155 = vmatprep.subr.bf16.mxu0 0
    %3156 = vmatpush2.bf16.msra.mxu0 0
    %3157 = vmatprep.subr.bf16.mxu0 0
    %3158 = vmatpush2.bf16.msra.mxu0 0
    %3159 = vmatprep.subr.bf16.mxu0 0
    %3160 = vmatpush2.bf16.msra.mxu0 0
    %3161 = vmatprep.subr.bf16.mxu0 0
    %3162 = vmatpush2.bf16.msra.mxu0 0
    %3163 = vmatprep.subr.bf16.mxu0 0
    %3164 = vmatpush2.bf16.msra.mxu0 0
    %3165 = vmatprep.mubr.bf16.mxu0 0
    %3166 = vmatmul.mubr.bf16.gmra.mxu0 %v3122
    %v3167 = vpop.f32.mrf.mxu0
    %v3168 = vadd.f32 %v3107, %v3167
    %v3169 = vpop.f32.mrf.mxu0
    %v3170 = vpop.f32.mrf.mxu0
    %v3171 = vadd.f32 %v3107, %v3170
    %v3172 = vpop.f32.mrf.mxu0
    %3173 = vmatprep.mubr.bf16.mxu0 0
    %3174 = vmatmul.mubr.bf16.gmra.mxu0 %v3125
    %v3175 = vpop.f32.mrf.mxu0
    %v3176 = vadd.f32 %v3107, %v3175
    %v3177 = vpop.f32.mrf.mxu0
    %v3178 = vpop.f32.mrf.mxu0
    %v3179 = vadd.f32 %v3107, %v3178
    %v3180 = vpop.f32.mrf.mxu0
    %3181 = vmatprep.mubr.bf16.mxu0 0
    %3182 = vmatmul.mubr.bf16.gmra.mxu0 %v3128
    %v3183 = vpop.f32.mrf.mxu0
    %v3184 = vadd.f32 %v3107, %v3183
    %v3185 = vpop.f32.mrf.mxu0
    %v3186 = vpop.f32.mrf.mxu0
    %v3187 = vadd.f32 %v3107, %v3186
    %v3188 = vpop.f32.mrf.mxu0
    %3189 = vmatprep.mubr.bf16.mxu0 0
    %3190 = vmatmul.mubr.bf16.gmra.mxu0 %v3131
    %v3191 = vpop.f32.mrf.mxu0
    %v3192 = vadd.f32 %v3107, %v3191
    %v3193 = vpop.f32.mrf.mxu0
    %v3194 = vpop.f32.mrf.mxu0
    %v3195 = vadd.f32 %v3107, %v3194
    %v3196 = vpop.f32.mrf.mxu0
    %3197 = vdwg.mxu0
    %v3198 = vpack.c.bf16 %v3171, %v3168
    %v3199 = vpack.c.bf16 %v3179, %v3176
    %v3200 = vpack.c.bf16 %v3187, %v3184
    %v3201 = vpack.c.bf16 %v3195, %v3192
    %3206 = vrot.lane.b32.xlu0 %v3198, 96
    %v3207 = vpop.permute.xlu0 %3206
    %3208 = vrot.lane.b32.xlu0 %v3199, 96
    %v3209 = vpop.permute.xlu0 %3208
    %3210 = vrot.lane.b32.xlu0 %v3200, 96
    %v3211 = vpop.permute.xlu0 %3210
    %3212 = vrot.lane.b32.xlu0 %v3201, 96
    %v3213 = vpop.permute.xlu0 %3212
    %v3215 = vsel %vm1148, %v3198, 0
    %v3218 = vsel %vm1148, %v3199, 0
    %v3221 = vsel %vm1148, %v3200, 0
    %v3224 = vsel %vm1148, %v3201, 0
    %v3227 = vsel %vm1148, %v3207, 0
    %v3230 = vsel %vm1148, %v3209, 0
    %v3233 = vsel %vm1148, %v3211, 0
    %v3236 = vsel %vm1148, %v3213, 0
    %3238 = vmatprep.subr.bf16.mxu0 0
    %3239 = vmatpush1.bf16.xpose.msra.mxu0 0
    %3240 = vmatprep.subr.bf16.mxu0 0
    %3241 = vmatpush1.bf16.xpose.msra.mxu0 0
    %3242 = vmatprep.subr.bf16.mxu0 0
    %3243 = vmatpush1.bf16.xpose.msra.mxu0 0
    %3244 = vmatprep.subr.bf16.mxu0 0
    %3245 = vmatpush1.bf16.xpose.msra.mxu0 0
    %3246 = vmatprep.subr.bf16.mxu0 0
    %3247 = vmatpush1.bf16.xpose.msra.mxu0 %v3236
    %3248 = vmatprep.subr.bf16.mxu0 0
    %3249 = vmatpush1.bf16.xpose.msra.mxu0 %v3233
    %3250 = vmatprep.subr.bf16.mxu0 0
    %3251 = vmatpush1.bf16.xpose.msra.mxu0 %v3230
    %3252 = vmatprep.subr.bf16.mxu0 0
    %3253 = vmatpush1.bf16.xpose.msra.mxu0 %v3227
    %3254 = vmatprep.subr.bf16.mxu0 0
    %3255 = vmatpush2.bf16.xpose.msra.mxu0 0
    %3256 = vmatprep.subr.bf16.mxu0 0
    %3257 = vmatpush2.bf16.xpose.msra.mxu0 0
    %3258 = vmatprep.subr.bf16.mxu0 0
    %3259 = vmatpush2.bf16.xpose.msra.mxu0 0
    %3260 = vmatprep.subr.bf16.mxu0 0
    %3261 = vmatpush2.bf16.xpose.msra.mxu0 0
    %3262 = vmatprep.subr.bf16.mxu0 0
    %3263 = vmatpush2.bf16.xpose.msra.mxu0 0
    %3264 = vmatprep.subr.bf16.mxu0 0
    %3265 = vmatpush2.bf16.xpose.msra.mxu0 0
    %3266 = vmatprep.subr.bf16.mxu0 0
    %3267 = vmatpush2.bf16.xpose.msra.mxu0 0
    %3268 = vmatprep.subr.bf16.mxu0 0
    %3269 = vmatpush2.bf16.xpose.msra.mxu0 0
    %3270 = vmatprep.mubr.bf16.mxu0 0
    %3271 = vmatmul.mubr.bf16.gmra.mxu0 %v3215
    %v3272 = vpop.f32.mrf.mxu0
    %v3273 = vadd.f32 0.0, %v3272
    %v3274 = vpop.f32.mrf.mxu0
    %v3275 = vpop.f32.mrf.mxu0
    %v3276 = vadd.f32 0.0, %v3275
    %v3277 = vpop.f32.mrf.mxu0
    %3278 = vmatprep.mubr.bf16.mxu0 0
    %3279 = vmatmul.mubr.bf16.gmra.mxu0 %v3218
    %v3280 = vpop.f32.mrf.mxu0
    %v3281 = vadd.f32 0.0, %v3280
    %v3282 = vpop.f32.mrf.mxu0
    %v3283 = vpop.f32.mrf.mxu0
    %v3284 = vadd.f32 0.0, %v3283
    %v3285 = vpop.f32.mrf.mxu0
    %3286 = vmatprep.mubr.bf16.mxu0 0
    %3287 = vmatmul.mubr.bf16.gmra.mxu0 %v3221
    %v3288 = vpop.f32.mrf.mxu0
    %v3289 = vadd.f32 0.0, %v3288
    %v3290 = vpop.f32.mrf.mxu0
    %v3291 = vpop.f32.mrf.mxu0
    %v3292 = vadd.f32 0.0, %v3291
    %v3293 = vpop.f32.mrf.mxu0
    %3294 = vmatprep.mubr.bf16.mxu0 0
    %3295 = vmatmul.mubr.bf16.gmra.mxu0 %v3224
    %v3296 = vpop.f32.mrf.mxu0
    %v3297 = vadd.f32 0.0, %v3296
    %v3298 = vpop.f32.mrf.mxu0
    %v3299 = vpop.f32.mrf.mxu0
    %v3300 = vadd.f32 0.0, %v3299
    %v3301 = vpop.f32.mrf.mxu0
    %3302 = vdwg.mxu0
    %v3303 = vmul.f32 %v3273, 0.35355338
    %v3304 = vmul.f32 %v3276, 0.35355338
    %v3305 = vmul.f32 %v3281, 0.35355338
    %v3306 = vmul.f32 %v3284, 0.35355338
    %v3307 = vmul.f32 %v3289, 0.35355338
    %v3308 = vmul.f32 %v3292, 0.35355338
    %v3309 = vmul.f32 %v3297, 0.35355338
    %v3310 = vmul.f32 %v3300, 0.35355338
    %v3311 = vadd.f32 %v3303, %v885
    %v3312 = vadd.f32 %v3304, %v886
    %v3313 = vadd.f32 %v3305, %v887
    %v3314 = vadd.f32 %v3306, %v888
    %v3315 = vadd.f32 %v3307, %v889
    %v3316 = vadd.f32 %v3308, %v890
    %v3317 = vadd.f32 %v3309, %v891
    %v3318 = vadd.f32 %v3310, %v892
    %v3319 = vsel %vm541, %v3311, -inf
    %3320 = vmax.xlane.f32.xlu0 %v3319
    %v3321 = vpop.xlane.xlu0 %3320
    %v3322 = vsel %vm541, %v3312, -inf
    %3323 = vmax.xlane.f32.xlu0 %v3322
    %v3324 = vpop.xlane.xlu0 %3323
    %v3325 = vsel %vm541, %v3313, -inf
    %3326 = vmax.xlane.f32.xlu0 %v3325
    %v3327 = vpop.xlane.xlu0 %3326
    %v3328 = vsel %vm541, %v3314, -inf
    %3329 = vmax.xlane.f32.xlu0 %v3328
    %v3330 = vpop.xlane.xlu0 %3329
    %v3331 = vsel %vm541, %v3315, -inf
    %3332 = vmax.xlane.f32.xlu0 %v3331
    %v3333 = vpop.xlane.xlu0 %3332
    %v3334 = vsel %vm541, %v3316, -inf
    %3335 = vmax.xlane.f32.xlu0 %v3334
    %v3336 = vpop.xlane.xlu0 %3335
    %v3337 = vsel %vm541, %v3317, -inf
    %3338 = vmax.xlane.f32.xlu0 %v3337
    %v3339 = vpop.xlane.xlu0 %3338
    %v3340 = vsel %vm541, %v3318, -inf
    %3341 = vmax.xlane.f32.xlu0 %v3340
    %v3342 = vpop.xlane.xlu0 %3341
    %v3343 = vsub.f32 %v3311, %v3321
    %v3344 = vsub.f32 %v3312, %v3324
    %v3345 = vsub.f32 %v3313, %v3327
    %v3346 = vsub.f32 %v3314, %v3330
    %v3347 = vsub.f32 %v3315, %v3333
    %v3348 = vsub.f32 %v3316, %v3336
    %v3349 = vsub.f32 %v3317, %v3339
    %v3350 = vsub.f32 %v3318, %v3342
    %v3351 = vmul.f32 %v3343, 1.442695
    %v3352 = vpow.pop %v3351
    %v3353 = vmul.f32 %v3344, 1.442695
    %v3354 = vpow.pop %v3353
    %v3355 = vmul.f32 %v3345, 1.442695
    %v3356 = vpow.pop %v3355
    %v3357 = vmul.f32 %v3346, 1.442695
    %v3358 = vpow.pop %v3357
    %v3359 = vmul.f32 %v3347, 1.442695
    %v3360 = vpow.pop %v3359
    %v3361 = vmul.f32 %v3348, 1.442695
    %v3362 = vpow.pop %v3361
    %v3363 = vmul.f32 %v3349, 1.442695
    %v3364 = vpow.pop %v3363
    %v3365 = vmul.f32 %v3350, 1.442695
    %v3366 = vpow.pop %v3365
    %v3367 = vsel %vm541, %v3352, 0.0
    %3368 = vadd.xlane.f32.xlu0 %v3367
    %v3369 = vpop.xlane.xlu0 %3368
    %v3370 = vsel %vm541, %v3354, 0.0
    %3371 = vadd.xlane.f32.xlu0 %v3370
    %v3372 = vpop.xlane.xlu0 %3371
    %v3373 = vsel %vm541, %v3356, 0.0
    %3374 = vadd.xlane.f32.xlu0 %v3373
    %v3375 = vpop.xlane.xlu0 %3374
    %v3376 = vsel %vm541, %v3358, 0.0
    %3377 = vadd.xlane.f32.xlu0 %v3376
    %v3378 = vpop.xlane.xlu0 %3377
    %v3379 = vsel %vm541, %v3360, 0.0
    %3380 = vadd.xlane.f32.xlu0 %v3379
    %v3381 = vpop.xlane.xlu0 %3380
    %v3382 = vsel %vm541, %v3362, 0.0
    %3383 = vadd.xlane.f32.xlu0 %v3382
    %v3384 = vpop.xlane.xlu0 %3383
    %v3385 = vsel %vm541, %v3364, 0.0
    %3386 = vadd.xlane.f32.xlu0 %v3385
    %v3387 = vpop.xlane.xlu0 %3386
    %v3388 = vsel %vm541, %v3366, 0.0
    %3389 = vadd.xlane.f32.xlu0 %v3388
    %v3390 = vpop.xlane.xlu0 %3389
    %v3391 = vrcp.pop %v3369
    %v3392 = vrcp.pop %v3372
    %v3393 = vrcp.pop %v3375
    %v3394 = vrcp.pop %v3378
    %v3395 = vrcp.pop %v3381
    %v3396 = vrcp.pop %v3384
    %v3397 = vrcp.pop %v3387
    %v3398 = vrcp.pop %v3390
    %v3399 = vmul.f32 %v3352, %v3391
    %v3400 = vmul.f32 %v3354, %v3392
    %v3401 = vmul.f32 %v3356, %v3393
    %v3402 = vmul.f32 %v3358, %v3394
    %v3403 = vmul.f32 %v3360, %v3395
    %v3404 = vmul.f32 %v3362, %v3396
    %v3405 = vmul.f32 %v3364, %v3397
    %v3406 = vmul.f32 %v3366, %v3398
    %v3407 = vpack.c.bf16 %v3400, %v3399
    %v3408 = vpack.c.bf16 %v3402, %v3401
    %v3409 = vpack.c.bf16 %v3404, %v3403
    %v3410 = vpack.c.bf16 %v3406, %v3405
    %3411 = vrot.lane.b32.xlu0 %v3198, 64
    %v3412 = vpop.permute.xlu0 %3411
    %3413 = vrot.lane.b32.xlu0 %v3199, 64
    %v3414 = vpop.permute.xlu0 %3413
    %3415 = vrot.lane.b32.xlu0 %v3200, 64
    %v3416 = vpop.permute.xlu0 %3415
    %3417 = vrot.lane.b32.xlu0 %v3201, 64
    %v3418 = vpop.permute.xlu0 %3417
    %v3424 = vsel %vm541, %v3407, 0
    %v3427 = vsel %vm541, %v3408, 0
    %v3430 = vsel %vm541, %v3409, 0
    %v3433 = vsel %vm541, %v3410, 0
    %3435 = vmatprep.subr.bf16.mxu0 0
    %3436 = vmatpush1.bf16.msra.mxu0 0
    %3437 = vmatprep.subr.bf16.mxu0 0
    %3438 = vmatpush1.bf16.msra.mxu0 0
    %3439 = vmatprep.subr.bf16.mxu0 0
    %3440 = vmatpush1.bf16.msra.mxu0 0
    %3441 = vmatprep.subr.bf16.mxu0 0
    %3442 = vmatpush1.bf16.msra.mxu0 0
    %3443 = vmatprep.subr.bf16.mxu0 0
    %3444 = vmatpush1.bf16.msra.mxu0 %v3418
    %3445 = vmatprep.subr.bf16.mxu0 0
    %3446 = vmatpush1.bf16.msra.mxu0 %v3416
    %3447 = vmatprep.subr.bf16.mxu0 0
    %3448 = vmatpush1.bf16.msra.mxu0 %v3414
    %3449 = vmatprep.subr.bf16.mxu0 0
    %3450 = vmatpush1.bf16.msra.mxu0 %v3412
    %3451 = vmatprep.subr.bf16.mxu0 0
    %3452 = vmatpush2.bf16.msra.mxu0 0
    %3453 = vmatprep.subr.bf16.mxu0 0
    %3454 = vmatpush2.bf16.msra.mxu0 0
    %3455 = vmatprep.subr.bf16.mxu0 0
    %3456 = vmatpush2.bf16.msra.mxu0 0
    %3457 = vmatprep.subr.bf16.mxu0 0
    %3458 = vmatpush2.bf16.msra.mxu0 0
    %3459 = vmatprep.subr.bf16.mxu0 0
    %3460 = vmatpush2.bf16.msra.mxu0 0
    %3461 = vmatprep.subr.bf16.mxu0 0
    %3462 = vmatpush2.bf16.msra.mxu0 0
    %3463 = vmatprep.subr.bf16.mxu0 0
    %3464 = vmatpush2.bf16.msra.mxu0 0
    %3465 = vmatprep.subr.bf16.mxu0 0
    %3466 = vmatpush2.bf16.msra.mxu0 0
    %3467 = vmatprep.mubr.bf16.mxu0 0
    %3468 = vmatmul.mubr.bf16.gmra.mxu0 %v3424
    %v3469 = vpop.f32.mrf.mxu0
    %v3470 = vadd.f32 0.0, %v3469
    %v3471 = vpop.f32.mrf.mxu0
    %v3472 = vpop.f32.mrf.mxu0
    %v3473 = vadd.f32 0.0, %v3472
    %v3474 = vpop.f32.mrf.mxu0
    %3475 = vmatprep.mubr.bf16.mxu0 0
    %3476 = vmatmul.mubr.bf16.gmra.mxu0 %v3427
    %v3477 = vpop.f32.mrf.mxu0
    %v3478 = vadd.f32 0.0, %v3477
    %v3479 = vpop.f32.mrf.mxu0
    %v3480 = vpop.f32.mrf.mxu0
    %v3481 = vadd.f32 0.0, %v3480
    %v3482 = vpop.f32.mrf.mxu0
    %3483 = vmatprep.mubr.bf16.mxu0 0
    %3484 = vmatmul.mubr.bf16.gmra.mxu0 %v3430
    %v3485 = vpop.f32.mrf.mxu0
    %v3486 = vadd.f32 0.0, %v3485
    %v3487 = vpop.f32.mrf.mxu0
    %v3488 = vpop.f32.mrf.mxu0
    %v3489 = vadd.f32 0.0, %v3488
    %v3490 = vpop.f32.mrf.mxu0
    %3491 = vmatprep.mubr.bf16.mxu0 0
    %3492 = vmatmul.mubr.bf16.gmra.mxu0 %v3433
    %v3493 = vpop.f32.mrf.mxu0
    %v3494 = vadd.f32 0.0, %v3493
    %v3495 = vpop.f32.mrf.mxu0
    %v3496 = vpop.f32.mrf.mxu0
    %v3497 = vadd.f32 0.0, %v3496
    %v3498 = vpop.f32.mrf.mxu0
    %3499 = vdwg.mxu0
    %3500 = vrot.lane.b32.xlu0 %v3198, 120
    %v3501 = vpop.permute.xlu0 %3500
    %3502 = vrot.lane.b32.xlu0 %v3199, 120
    %v3503 = vpop.permute.xlu0 %3502
    %3504 = vrot.lane.b32.xlu0 %v3200, 120
    %v3505 = vpop.permute.xlu0 %3504
    %3506 = vrot.lane.b32.xlu0 %v3201, 120
    %v3507 = vpop.permute.xlu0 %3506
    %3508 = vrot.lane.b32.xlu0 %v3198, 88
    %v3509 = vpop.permute.xlu0 %3508
    %3510 = vrot.lane.b32.xlu0 %v3199, 88
    %v3511 = vpop.permute.xlu0 %3510
    %3512 = vrot.lane.b32.xlu0 %v3200, 88
    %v3513 = vpop.permute.xlu0 %3512
    %3514 = vrot.lane.b32.xlu0 %v3201, 88
    %v3515 = vpop.permute.xlu0 %3514
    %v3517 = vsel %vm1148, %v3501, 0
    %v3520 = vsel %vm1148, %v3503, 0
    %v3523 = vsel %vm1148, %v3505, 0
    %v3526 = vsel %vm1148, %v3507, 0
    %v3529 = vsel %vm1148, %v3509, 0
    %v3532 = vsel %vm1148, %v3511, 0
    %v3535 = vsel %vm1148, %v3513, 0
    %v3538 = vsel %vm1148, %v3515, 0
    %3540 = vmatprep.subr.bf16.mxu0 0
    %3541 = vmatpush1.bf16.xpose.msra.mxu0 0
    %3542 = vmatprep.subr.bf16.mxu0 0
    %3543 = vmatpush1.bf16.xpose.msra.mxu0 0
    %3544 = vmatprep.subr.bf16.mxu0 0
    %3545 = vmatpush1.bf16.xpose.msra.mxu0 0
    %3546 = vmatprep.subr.bf16.mxu0 0
    %3547 = vmatpush1.bf16.xpose.msra.mxu0 0
    %3548 = vmatprep.subr.bf16.mxu0 0
    %3549 = vmatpush1.bf16.xpose.msra.mxu0 %v3538
    %3550 = vmatprep.subr.bf16.mxu0 0
    %3551 = vmatpush1.bf16.xpose.msra.mxu0 %v3535
    %3552 = vmatprep.subr.bf16.mxu0 0
    %3553 = vmatpush1.bf16.xpose.msra.mxu0 %v3532
    %3554 = vmatprep.subr.bf16.mxu0 0
    %3555 = vmatpush1.bf16.xpose.msra.mxu0 %v3529
    %3556 = vmatprep.subr.bf16.mxu0 0
    %3557 = vmatpush2.bf16.xpose.msra.mxu0 0
    %3558 = vmatprep.subr.bf16.mxu0 0
    %3559 = vmatpush2.bf16.xpose.msra.mxu0 0
    %3560 = vmatprep.subr.bf16.mxu0 0
    %3561 = vmatpush2.bf16.xpose.msra.mxu0 0
    %3562 = vmatprep.subr.bf16.mxu0 0
    %3563 = vmatpush2.bf16.xpose.msra.mxu0 0
    %3564 = vmatprep.subr.bf16.mxu0 0
    %3565 = vmatpush2.bf16.xpose.msra.mxu0 0
    %3566 = vmatprep.subr.bf16.mxu0 0
    %3567 = vmatpush2.bf16.xpose.msra.mxu0 0
    %3568 = vmatprep.subr.bf16.mxu0 0
    %3569 = vmatpush2.bf16.xpose.msra.mxu0 0
    %3570 = vmatprep.subr.bf16.mxu0 0
    %3571 = vmatpush2.bf16.xpose.msra.mxu0 0
    %3572 = vmatprep.mubr.bf16.mxu0 0
    %3573 = vmatmul.mubr.bf16.gmra.mxu0 %v3517
    %v3574 = vpop.f32.mrf.mxu0
    %v3575 = vadd.f32 0.0, %v3574
    %v3576 = vpop.f32.mrf.mxu0
    %v3577 = vpop.f32.mrf.mxu0
    %v3578 = vadd.f32 0.0, %v3577
    %v3579 = vpop.f32.mrf.mxu0
    %3580 = vmatprep.mubr.bf16.mxu0 0
    %3581 = vmatmul.mubr.bf16.gmra.mxu0 %v3520
    %v3582 = vpop.f32.mrf.mxu0
    %v3583 = vadd.f32 0.0, %v3582
    %v3584 = vpop.f32.mrf.mxu0
    %v3585 = vpop.f32.mrf.mxu0
    %v3586 = vadd.f32 0.0, %v3585
    %v3587 = vpop.f32.mrf.mxu0
    %3588 = vmatprep.mubr.bf16.mxu0 0
    %3589 = vmatmul.mubr.bf16.gmra.mxu0 %v3523
    %v3590 = vpop.f32.mrf.mxu0
    %v3591 = vadd.f32 0.0, %v3590
    %v3592 = vpop.f32.mrf.mxu0
    %v3593 = vpop.f32.mrf.mxu0
    %v3594 = vadd.f32 0.0, %v3593
    %v3595 = vpop.f32.mrf.mxu0
    %3596 = vmatprep.mubr.bf16.mxu0 0
    %3597 = vmatmul.mubr.bf16.gmra.mxu0 %v3526
    %v3598 = vpop.f32.mrf.mxu0
    %v3599 = vadd.f32 0.0, %v3598
    %v3600 = vpop.f32.mrf.mxu0
    %v3601 = vpop.f32.mrf.mxu0
    %v3602 = vadd.f32 0.0, %v3601
    %v3603 = vpop.f32.mrf.mxu0
    %3604 = vdwg.mxu0
    %v3605 = vmul.f32 %v3575, 0.35355338
    %v3606 = vmul.f32 %v3578, 0.35355338
    %v3607 = vmul.f32 %v3583, 0.35355338
    %v3608 = vmul.f32 %v3586, 0.35355338
    %v3609 = vmul.f32 %v3591, 0.35355338
    %v3610 = vmul.f32 %v3594, 0.35355338
    %v3611 = vmul.f32 %v3599, 0.35355338
    %v3612 = vmul.f32 %v3602, 0.35355338
    %v3613 = vadd.f32 %v3605, %v885
    %v3614 = vadd.f32 %v3606, %v886
    %v3615 = vadd.f32 %v3607, %v887
    %v3616 = vadd.f32 %v3608, %v888
    %v3617 = vadd.f32 %v3609, %v889
    %v3618 = vadd.f32 %v3610, %v890
    %v3619 = vadd.f32 %v3611, %v891
    %v3620 = vadd.f32 %v3612, %v892
    %v3621 = vsel %vm541, %v3613, -inf
    %3622 = vmax.xlane.f32.xlu0 %v3621
    %v3623 = vpop.xlane.xlu0 %3622
    %v3624 = vsel %vm541, %v3614, -inf
    %3625 = vmax.xlane.f32.xlu0 %v3624
    %v3626 = vpop.xlane.xlu0 %3625
    %v3627 = vsel %vm541, %v3615, -inf
    %3628 = vmax.xlane.f32.xlu0 %v3627
    %v3629 = vpop.xlane.xlu0 %3628
    %v3630 = vsel %vm541, %v3616, -inf
    %3631 = vmax.xlane.f32.xlu0 %v3630
    %v3632 = vpop.xlane.xlu0 %3631
    %v3633 = vsel %vm541, %v3617, -inf
    %3634 = vmax.xlane.f32.xlu0 %v3633
    %v3635 = vpop.xlane.xlu0 %3634
    %v3636 = vsel %vm541, %v3618, -inf
    %3637 = vmax.xlane.f32.xlu0 %v3636
    %v3638 = vpop.xlane.xlu0 %3637
    %v3639 = vsel %vm541, %v3619, -inf
    %3640 = vmax.xlane.f32.xlu0 %v3639
    %v3641 = vpop.xlane.xlu0 %3640
    %v3642 = vsel %vm541, %v3620, -inf
    %3643 = vmax.xlane.f32.xlu0 %v3642
    %v3644 = vpop.xlane.xlu0 %3643
    %v3645 = vsub.f32 %v3613, %v3623
    %v3646 = vsub.f32 %v3614, %v3626
    %v3647 = vsub.f32 %v3615, %v3629
    %v3648 = vsub.f32 %v3616, %v3632
    %v3649 = vsub.f32 %v3617, %v3635
    %v3650 = vsub.f32 %v3618, %v3638
    %v3651 = vsub.f32 %v3619, %v3641
    %v3652 = vsub.f32 %v3620, %v3644
    %v3653 = vmul.f32 %v3645, 1.442695
    %v3654 = vpow.pop %v3653
    %v3655 = vmul.f32 %v3646, 1.442695
    %v3656 = vpow.pop %v3655
    %v3657 = vmul.f32 %v3647, 1.442695
    %v3658 = vpow.pop %v3657
    %v3659 = vmul.f32 %v3648, 1.442695
    %v3660 = vpow.pop %v3659
    %v3661 = vmul.f32 %v3649, 1.442695
    %v3662 = vpow.pop %v3661
    %v3663 = vmul.f32 %v3650, 1.442695
    %v3664 = vpow.pop %v3663
    %v3665 = vmul.f32 %v3651, 1.442695
    %v3666 = vpow.pop %v3665
    %v3667 = vmul.f32 %v3652, 1.442695
    %v3668 = vpow.pop %v3667
    %v3669 = vsel %vm541, %v3654, 0.0
    %3670 = vadd.xlane.f32.xlu0 %v3669
    %v3671 = vpop.xlane.xlu0 %3670
    %v3672 = vsel %vm541, %v3656, 0.0
    %3673 = vadd.xlane.f32.xlu0 %v3672
    %v3674 = vpop.xlane.xlu0 %3673
    %v3675 = vsel %vm541, %v3658, 0.0
    %3676 = vadd.xlane.f32.xlu0 %v3675
    %v3677 = vpop.xlane.xlu0 %3676
    %v3678 = vsel %vm541, %v3660, 0.0
    %3679 = vadd.xlane.f32.xlu0 %v3678
    %v3680 = vpop.xlane.xlu0 %3679
    %v3681 = vsel %vm541, %v3662, 0.0
    %3682 = vadd.xlane.f32.xlu0 %v3681
    %v3683 = vpop.xlane.xlu0 %3682
    %v3684 = vsel %vm541, %v3664, 0.0
    %3685 = vadd.xlane.f32.xlu0 %v3684
    %v3686 = vpop.xlane.xlu0 %3685
    %v3687 = vsel %vm541, %v3666, 0.0
    %3688 = vadd.xlane.f32.xlu0 %v3687
    %v3689 = vpop.xlane.xlu0 %3688
    %v3690 = vsel %vm541, %v3668, 0.0
    %3691 = vadd.xlane.f32.xlu0 %v3690
    %v3692 = vpop.xlane.xlu0 %3691
    %v3693 = vrcp.pop %v3671
    %v3694 = vrcp.pop %v3674
    %v3695 = vrcp.pop %v3677
    %v3696 = vrcp.pop %v3680
    %v3697 = vrcp.pop %v3683
    %v3698 = vrcp.pop %v3686
    %v3699 = vrcp.pop %v3689
    %v3700 = vrcp.pop %v3692
    %v3701 = vmul.f32 %v3654, %v3693
    %v3702 = vmul.f32 %v3656, %v3694
    %v3703 = vmul.f32 %v3658, %v3695
    %v3704 = vmul.f32 %v3660, %v3696
    %v3705 = vmul.f32 %v3662, %v3697
    %v3706 = vmul.f32 %v3664, %v3698
    %v3707 = vmul.f32 %v3666, %v3699
    %v3708 = vmul.f32 %v3668, %v3700
    %v3709 = vpack.c.bf16 %v3702, %v3701
    %v3710 = vpack.c.bf16 %v3704, %v3703
    %v3711 = vpack.c.bf16 %v3706, %v3705
    %v3712 = vpack.c.bf16 %v3708, %v3707
    %3713 = vrot.lane.b32.xlu0 %v3198, 56
    %v3714 = vpop.permute.xlu0 %3713
    %3715 = vrot.lane.b32.xlu0 %v3199, 56
    %v3716 = vpop.permute.xlu0 %3715
    %3717 = vrot.lane.b32.xlu0 %v3200, 56
    %v3718 = vpop.permute.xlu0 %3717
    %3719 = vrot.lane.b32.xlu0 %v3201, 56
    %v3720 = vpop.permute.xlu0 %3719
    %v3726 = vsel %vm541, %v3709, 0
    %v3729 = vsel %vm541, %v3710, 0
    %v3732 = vsel %vm541, %v3711, 0
    %v3735 = vsel %vm541, %v3712, 0
    %3737 = vmatprep.subr.bf16.mxu0 0
    %3738 = vmatpush1.bf16.msra.mxu0 0
    %3739 = vmatprep.subr.bf16.mxu0 0
    %3740 = vmatpush1.bf16.msra.mxu0 0
    %3741 = vmatprep.subr.bf16.mxu0 0
    %3742 = vmatpush1.bf16.msra.mxu0 0
    %3743 = vmatprep.subr.bf16.mxu0 0
    %3744 = vmatpush1.bf16.msra.mxu0 0
    %3745 = vmatprep.subr.bf16.mxu0 0
    %3746 = vmatpush1.bf16.msra.mxu0 %v3720
    %3747 = vmatprep.subr.bf16.mxu0 0
    %3748 = vmatpush1.bf16.msra.mxu0 %v3718
    %3749 = vmatprep.subr.bf16.mxu0 0
    %3750 = vmatpush1.bf16.msra.mxu0 %v3716
    %3751 = vmatprep.subr.bf16.mxu0 0
    %3752 = vmatpush1.bf16.msra.mxu0 %v3714
    %3753 = vmatprep.subr.bf16.mxu0 0
    %3754 = vmatpush2.bf16.msra.mxu0 0
    %3755 = vmatprep.subr.bf16.mxu0 0
    %3756 = vmatpush2.bf16.msra.mxu0 0
    %3757 = vmatprep.subr.bf16.mxu0 0
    %3758 = vmatpush2.bf16.msra.mxu0 0
    %3759 = vmatprep.subr.bf16.mxu0 0
    %3760 = vmatpush2.bf16.msra.mxu0 0
    %3761 = vmatprep.subr.bf16.mxu0 0
    %3762 = vmatpush2.bf16.msra.mxu0 0
    %3763 = vmatprep.subr.bf16.mxu0 0
    %3764 = vmatpush2.bf16.msra.mxu0 0
    %3765 = vmatprep.subr.bf16.mxu0 0
    %3766 = vmatpush2.bf16.msra.mxu0 0
    %3767 = vmatprep.subr.bf16.mxu0 0
    %3768 = vmatpush2.bf16.msra.mxu0 0
    %3769 = vmatprep.mubr.bf16.mxu0 0
    %3770 = vmatmul.mubr.bf16.gmra.mxu0 %v3726
    %v3771 = vpop.f32.mrf.mxu0
    %v3772 = vadd.f32 0.0, %v3771
    %v3773 = vpop.f32.mrf.mxu0
    %v3774 = vpop.f32.mrf.mxu0
    %v3775 = vadd.f32 0.0, %v3774
    %v3776 = vpop.f32.mrf.mxu0
    %3777 = vmatprep.mubr.bf16.mxu0 0
    %3778 = vmatmul.mubr.bf16.gmra.mxu0 %v3729
    %v3779 = vpop.f32.mrf.mxu0
    %v3780 = vadd.f32 0.0, %v3779
    %v3781 = vpop.f32.mrf.mxu0
    %v3782 = vpop.f32.mrf.mxu0
    %v3783 = vadd.f32 0.0, %v3782
    %v3784 = vpop.f32.mrf.mxu0
    %3785 = vmatprep.mubr.bf16.mxu0 0
    %3786 = vmatmul.mubr.bf16.gmra.mxu0 %v3732
    %v3787 = vpop.f32.mrf.mxu0
    %v3788 = vadd.f32 0.0, %v3787
    %v3789 = vpop.f32.mrf.mxu0
    %v3790 = vpop.f32.mrf.mxu0
    %v3791 = vadd.f32 0.0, %v3790
    %v3792 = vpop.f32.mrf.mxu0
    %3793 = vmatprep.mubr.bf16.mxu0 0
    %3794 = vmatmul.mubr.bf16.gmra.mxu0 %v3735
    %v3795 = vpop.f32.mrf.mxu0
    %v3796 = vadd.f32 0.0, %v3795
    %v3797 = vpop.f32.mrf.mxu0
    %v3798 = vpop.f32.mrf.mxu0
    %v3799 = vadd.f32 0.0, %v3798
    %v3800 = vpop.f32.mrf.mxu0
    %3801 = vdwg.mxu0
    %3802 = vrot.lane.b32.xlu0 %v3198, 112
    %v3803 = vpop.permute.xlu0 %3802
    %3804 = vrot.lane.b32.xlu0 %v3199, 112
    %v3805 = vpop.permute.xlu0 %3804
    %3806 = vrot.lane.b32.xlu0 %v3200, 112
    %v3807 = vpop.permute.xlu0 %3806
    %3808 = vrot.lane.b32.xlu0 %v3201, 112
    %v3809 = vpop.permute.xlu0 %3808
    %3810 = vrot.lane.b32.xlu0 %v3198, 80
    %v3811 = vpop.permute.xlu0 %3810
    %3812 = vrot.lane.b32.xlu0 %v3199, 80
    %v3813 = vpop.permute.xlu0 %3812
    %3814 = vrot.lane.b32.xlu0 %v3200, 80
    %v3815 = vpop.permute.xlu0 %3814
    %3816 = vrot.lane.b32.xlu0 %v3201, 80
    %v3817 = vpop.permute.xlu0 %3816
    %v3819 = vsel %vm1148, %v3803, 0
    %v3822 = vsel %vm1148, %v3805, 0
    %v3825 = vsel %vm1148, %v3807, 0
    %v3828 = vsel %vm1148, %v3809, 0
    %v3831 = vsel %vm1148, %v3811, 0
    %v3834 = vsel %vm1148, %v3813, 0
    %v3837 = vsel %vm1148, %v3815, 0
    %v3840 = vsel %vm1148, %v3817, 0
    %3842 = vmatprep.subr.bf16.mxu0 0
    %3843 = vmatpush1.bf16.xpose.msra.mxu0 0
    %3844 = vmatprep.subr.bf16.mxu0 0
    %3845 = vmatpush1.bf16.xpose.msra.mxu0 0
    %3846 = vmatprep.subr.bf16.mxu0 0
    %3847 = vmatpush1.bf16.xpose.msra.mxu0 0
    %3848 = vmatprep.subr.bf16.mxu0 0
    %3849 = vmatpush1.bf16.xpose.msra.mxu0 0
    %3850 = vmatprep.subr.bf16.mxu0 0
    %3851 = vmatpush1.bf16.xpose.msra.mxu0 %v3840
    %3852 = vmatprep.subr.bf16.mxu0 0
    %3853 = vmatpush1.bf16.xpose.msra.mxu0 %v3837
    %3854 = vmatprep.subr.bf16.mxu0 0
    %3855 = vmatpush1.bf16.xpose.msra.mxu0 %v3834
    %3856 = vmatprep.subr.bf16.mxu0 0
    %3857 = vmatpush1.bf16.xpose.msra.mxu0 %v3831
    %3858 = vmatprep.subr.bf16.mxu0 0
    %3859 = vmatpush2.bf16.xpose.msra.mxu0 0
    %3860 = vmatprep.subr.bf16.mxu0 0
    %3861 = vmatpush2.bf16.xpose.msra.mxu0 0
    %3862 = vmatprep.subr.bf16.mxu0 0
    %3863 = vmatpush2.bf16.xpose.msra.mxu0 0
    %3864 = vmatprep.subr.bf16.mxu0 0
    %3865 = vmatpush2.bf16.xpose.msra.mxu0 0
    %3866 = vmatprep.subr.bf16.mxu0 0
    %3867 = vmatpush2.bf16.xpose.msra.mxu0 0
    %3868 = vmatprep.subr.bf16.mxu0 0
    %3869 = vmatpush2.bf16.xpose.msra.mxu0 0
    %3870 = vmatprep.subr.bf16.mxu0 0
    %3871 = vmatpush2.bf16.xpose.msra.mxu0 0
    %3872 = vmatprep.subr.bf16.mxu0 0
    %3873 = vmatpush2.bf16.xpose.msra.mxu0 0
    %3874 = vmatprep.mubr.bf16.mxu0 0
    %3875 = vmatmul.mubr.bf16.gmra.mxu0 %v3819
    %v3876 = vpop.f32.mrf.mxu0
    %v3877 = vadd.f32 0.0, %v3876
    %v3878 = vpop.f32.mrf.mxu0
    %v3879 = vpop.f32.mrf.mxu0
    %v3880 = vadd.f32 0.0, %v3879
    %v3881 = vpop.f32.mrf.mxu0
    %3882 = vmatprep.mubr.bf16.mxu0 0
    %3883 = vmatmul.mubr.bf16.gmra.mxu0 %v3822
    %v3884 = vpop.f32.mrf.mxu0
    %v3885 = vadd.f32 0.0, %v3884
    %v3886 = vpop.f32.mrf.mxu0
    %v3887 = vpop.f32.mrf.mxu0
    %v3888 = vadd.f32 0.0, %v3887
    %v3889 = vpop.f32.mrf.mxu0
    %3890 = vmatprep.mubr.bf16.mxu0 0
    %3891 = vmatmul.mubr.bf16.gmra.mxu0 %v3825
    %v3892 = vpop.f32.mrf.mxu0
    %v3893 = vadd.f32 0.0, %v3892
    %v3894 = vpop.f32.mrf.mxu0
    %v3895 = vpop.f32.mrf.mxu0
    %v3896 = vadd.f32 0.0, %v3895
    %v3897 = vpop.f32.mrf.mxu0
    %3898 = vmatprep.mubr.bf16.mxu0 0
    %3899 = vmatmul.mubr.bf16.gmra.mxu0 %v3828
    %v3900 = vpop.f32.mrf.mxu0
    %v3901 = vadd.f32 0.0, %v3900
    %v3902 = vpop.f32.mrf.mxu0
    %v3903 = vpop.f32.mrf.mxu0
    %v3904 = vadd.f32 0.0, %v3903
    %v3905 = vpop.f32.mrf.mxu0
    %3906 = vdwg.mxu0
    %v3907 = vmul.f32 %v3877, 0.35355338
    %v3908 = vmul.f32 %v3880, 0.35355338
    %v3909 = vmul.f32 %v3885, 0.35355338
    %v3910 = vmul.f32 %v3888, 0.35355338
    %v3911 = vmul.f32 %v3893, 0.35355338
    %v3912 = vmul.f32 %v3896, 0.35355338
    %v3913 = vmul.f32 %v3901, 0.35355338
    %v3914 = vmul.f32 %v3904, 0.35355338
    %v3915 = vadd.f32 %v3907, %v885
    %v3916 = vadd.f32 %v3908, %v886
    %v3917 = vadd.f32 %v3909, %v887
    %v3918 = vadd.f32 %v3910, %v888
    %v3919 = vadd.f32 %v3911, %v889
    %v3920 = vadd.f32 %v3912, %v890
    %v3921 = vadd.f32 %v3913, %v891
    %v3922 = vadd.f32 %v3914, %v892
    %v3923 = vsel %vm541, %v3915, -inf
    %3924 = vmax.xlane.f32.xlu0 %v3923
    %v3925 = vpop.xlane.xlu0 %3924
    %v3926 = vsel %vm541, %v3916, -inf
    %3927 = vmax.xlane.f32.xlu0 %v3926
    %v3928 = vpop.xlane.xlu0 %3927
    %v3929 = vsel %vm541, %v3917, -inf
    %3930 = vmax.xlane.f32.xlu0 %v3929
    %v3931 = vpop.xlane.xlu0 %3930
    %v3932 = vsel %vm541, %v3918, -inf
    %3933 = vmax.xlane.f32.xlu0 %v3932
    %v3934 = vpop.xlane.xlu0 %3933
    %v3935 = vsel %vm541, %v3919, -inf
    %3936 = vmax.xlane.f32.xlu0 %v3935
    %v3937 = vpop.xlane.xlu0 %3936
    %v3938 = vsel %vm541, %v3920, -inf
    %3939 = vmax.xlane.f32.xlu0 %v3938
    %v3940 = vpop.xlane.xlu0 %3939
    %v3941 = vsel %vm541, %v3921, -inf
    %3942 = vmax.xlane.f32.xlu0 %v3941
    %v3943 = vpop.xlane.xlu0 %3942
    %v3944 = vsel %vm541, %v3922, -inf
    %3945 = vmax.xlane.f32.xlu0 %v3944
    %v3946 = vpop.xlane.xlu0 %3945
    %v3947 = vsub.f32 %v3915, %v3925
    %v3948 = vsub.f32 %v3916, %v3928
    %v3949 = vsub.f32 %v3917, %v3931
    %v3950 = vsub.f32 %v3918, %v3934
    %v3951 = vsub.f32 %v3919, %v3937
    %v3952 = vsub.f32 %v3920, %v3940
    %v3953 = vsub.f32 %v3921, %v3943
    %v3954 = vsub.f32 %v3922, %v3946
    %v3955 = vmul.f32 %v3947, 1.442695
    %v3956 = vpow.pop %v3955
    %v3957 = vmul.f32 %v3948, 1.442695
    %v3958 = vpow.pop %v3957
    %v3959 = vmul.f32 %v3949, 1.442695
    %v3960 = vpow.pop %v3959
    %v3961 = vmul.f32 %v3950, 1.442695
    %v3962 = vpow.pop %v3961
    %v3963 = vmul.f32 %v3951, 1.442695
    %v3964 = vpow.pop %v3963
    %v3965 = vmul.f32 %v3952, 1.442695
    %v3966 = vpow.pop %v3965
    %v3967 = vmul.f32 %v3953, 1.442695
    %v3968 = vpow.pop %v3967
    %v3969 = vmul.f32 %v3954, 1.442695
    %v3970 = vpow.pop %v3969
    %v3971 = vsel %vm541, %v3956, 0.0
    %3972 = vadd.xlane.f32.xlu0 %v3971
    %v3973 = vpop.xlane.xlu0 %3972
    %v3974 = vsel %vm541, %v3958, 0.0
    %3975 = vadd.xlane.f32.xlu0 %v3974
    %v3976 = vpop.xlane.xlu0 %3975
    %v3977 = vsel %vm541, %v3960, 0.0
    %3978 = vadd.xlane.f32.xlu0 %v3977
    %v3979 = vpop.xlane.xlu0 %3978
    %v3980 = vsel %vm541, %v3962, 0.0
    %3981 = vadd.xlane.f32.xlu0 %v3980
    %v3982 = vpop.xlane.xlu0 %3981
    %v3983 = vsel %vm541, %v3964, 0.0
    %3984 = vadd.xlane.f32.xlu0 %v3983
    %v3985 = vpop.xlane.xlu0 %3984
    %v3986 = vsel %vm541, %v3966, 0.0
    %3987 = vadd.xlane.f32.xlu0 %v3986
    %v3988 = vpop.xlane.xlu0 %3987
    %v3989 = vsel %vm541, %v3968, 0.0
    %3990 = vadd.xlane.f32.xlu0 %v3989
    %v3991 = vpop.xlane.xlu0 %3990
    %v3992 = vsel %vm541, %v3970, 0.0
    %3993 = vadd.xlane.f32.xlu0 %v3992
    %v3994 = vpop.xlane.xlu0 %3993
    %v3995 = vrcp.pop %v3973
    %v3996 = vrcp.pop %v3976
    %v3997 = vrcp.pop %v3979
    %v3998 = vrcp.pop %v3982
    %v3999 = vrcp.pop %v3985
    %v4000 = vrcp.pop %v3988
    %v4001 = vrcp.pop %v3991
    %v4002 = vrcp.pop %v3994
    %v4003 = vmul.f32 %v3956, %v3995
    %v4004 = vmul.f32 %v3958, %v3996
    %v4005 = vmul.f32 %v3960, %v3997
    %v4006 = vmul.f32 %v3962, %v3998
    %v4007 = vmul.f32 %v3964, %v3999
    %v4008 = vmul.f32 %v3966, %v4000
    %v4009 = vmul.f32 %v3968, %v4001
    %v4010 = vmul.f32 %v3970, %v4002
    %v4011 = vpack.c.bf16 %v4004, %v4003
    %v4012 = vpack.c.bf16 %v4006, %v4005
    %v4013 = vpack.c.bf16 %v4008, %v4007
    %v4014 = vpack.c.bf16 %v4010, %v4009
    %4015 = vrot.lane.b32.xlu0 %v3198, 48
    %v4016 = vpop.permute.xlu0 %4015
    %4017 = vrot.lane.b32.xlu0 %v3199, 48
    %v4018 = vpop.permute.xlu0 %4017
    %4019 = vrot.lane.b32.xlu0 %v3200, 48
    %v4020 = vpop.permute.xlu0 %4019
    %4021 = vrot.lane.b32.xlu0 %v3201, 48
    %v4022 = vpop.permute.xlu0 %4021
    %v4028 = vsel %vm541, %v4011, 0
    %v4031 = vsel %vm541, %v4012, 0
    %v4034 = vsel %vm541, %v4013, 0
    %v4037 = vsel %vm541, %v4014, 0
    %4039 = vmatprep.subr.bf16.mxu0 0
    %4040 = vmatpush1.bf16.msra.mxu0 0
    %4041 = vmatprep.subr.bf16.mxu0 0
    %4042 = vmatpush1.bf16.msra.mxu0 0
    %4043 = vmatprep.subr.bf16.mxu0 0
    %4044 = vmatpush1.bf16.msra.mxu0 0
    %4045 = vmatprep.subr.bf16.mxu0 0
    %4046 = vmatpush1.bf16.msra.mxu0 0
    %4047 = vmatprep.subr.bf16.mxu0 0
    %4048 = vmatpush1.bf16.msra.mxu0 %v4022
    %4049 = vmatprep.subr.bf16.mxu0 0
    %4050 = vmatpush1.bf16.msra.mxu0 %v4020
    %4051 = vmatprep.subr.bf16.mxu0 0
    %4052 = vmatpush1.bf16.msra.mxu0 %v4018
    %4053 = vmatprep.subr.bf16.mxu0 0
    %4054 = vmatpush1.bf16.msra.mxu0 %v4016
    %4055 = vmatprep.subr.bf16.mxu0 0
    %4056 = vmatpush2.bf16.msra.mxu0 0
    %4057 = vmatprep.subr.bf16.mxu0 0
    %4058 = vmatpush2.bf16.msra.mxu0 0
    %4059 = vmatprep.subr.bf16.mxu0 0
    %4060 = vmatpush2.bf16.msra.mxu0 0
    %4061 = vmatprep.subr.bf16.mxu0 0
    %4062 = vmatpush2.bf16.msra.mxu0 0
    %4063 = vmatprep.subr.bf16.mxu0 0
    %4064 = vmatpush2.bf16.msra.mxu0 0
    %4065 = vmatprep.subr.bf16.mxu0 0
    %4066 = vmatpush2.bf16.msra.mxu0 0
    %4067 = vmatprep.subr.bf16.mxu0 0
    %4068 = vmatpush2.bf16.msra.mxu0 0
    %4069 = vmatprep.subr.bf16.mxu0 0
    %4070 = vmatpush2.bf16.msra.mxu0 0
    %4071 = vmatprep.mubr.bf16.mxu0 0
    %4072 = vmatmul.mubr.bf16.gmra.mxu0 %v4028
    %v4073 = vpop.f32.mrf.mxu0
    %v4074 = vadd.f32 0.0, %v4073
    %v4075 = vpop.f32.mrf.mxu0
    %v4076 = vpop.f32.mrf.mxu0
    %v4077 = vadd.f32 0.0, %v4076
    %v4078 = vpop.f32.mrf.mxu0
    %4079 = vmatprep.mubr.bf16.mxu0 0
    %4080 = vmatmul.mubr.bf16.gmra.mxu0 %v4031
    %v4081 = vpop.f32.mrf.mxu0
    %v4082 = vadd.f32 0.0, %v4081
    %v4083 = vpop.f32.mrf.mxu0
    %v4084 = vpop.f32.mrf.mxu0
    %v4085 = vadd.f32 0.0, %v4084
    %v4086 = vpop.f32.mrf.mxu0
    %4087 = vmatprep.mubr.bf16.mxu0 0
    %4088 = vmatmul.mubr.bf16.gmra.mxu0 %v4034
    %v4089 = vpop.f32.mrf.mxu0
    %v4090 = vadd.f32 0.0, %v4089
    %v4091 = vpop.f32.mrf.mxu0
    %v4092 = vpop.f32.mrf.mxu0
    %v4093 = vadd.f32 0.0, %v4092
    %v4094 = vpop.f32.mrf.mxu0
    %4095 = vmatprep.mubr.bf16.mxu0 0
    %4096 = vmatmul.mubr.bf16.gmra.mxu0 %v4037
    %v4097 = vpop.f32.mrf.mxu0
    %v4098 = vadd.f32 0.0, %v4097
    %v4099 = vpop.f32.mrf.mxu0
    %v4100 = vpop.f32.mrf.mxu0
    %v4101 = vadd.f32 0.0, %v4100
    %v4102 = vpop.f32.mrf.mxu0
    %4103 = vdwg.mxu0
    %4104 = vrot.lane.b32.xlu0 %v3198, 104
    %v4105 = vpop.permute.xlu0 %4104
    %4106 = vrot.lane.b32.xlu0 %v3199, 104
    %v4107 = vpop.permute.xlu0 %4106
    %4108 = vrot.lane.b32.xlu0 %v3200, 104
    %v4109 = vpop.permute.xlu0 %4108
    %4110 = vrot.lane.b32.xlu0 %v3201, 104
    %v4111 = vpop.permute.xlu0 %4110
    %4112 = vrot.lane.b32.xlu0 %v3198, 72
    %v4113 = vpop.permute.xlu0 %4112
    %4114 = vrot.lane.b32.xlu0 %v3199, 72
    %v4115 = vpop.permute.xlu0 %4114
    %4116 = vrot.lane.b32.xlu0 %v3200, 72
    %v4117 = vpop.permute.xlu0 %4116
    %4118 = vrot.lane.b32.xlu0 %v3201, 72
    %v4119 = vpop.permute.xlu0 %4118
    %v4121 = vsel %vm1148, %v4105, 0
    %v4124 = vsel %vm1148, %v4107, 0
    %v4127 = vsel %vm1148, %v4109, 0
    %v4130 = vsel %vm1148, %v4111, 0
    %v4133 = vsel %vm1148, %v4113, 0
    %v4136 = vsel %vm1148, %v4115, 0
    %v4139 = vsel %vm1148, %v4117, 0
    %v4142 = vsel %vm1148, %v4119, 0
    %4144 = vmatprep.subr.bf16.mxu0 0
    %4145 = vmatpush1.bf16.xpose.msra.mxu0 0
    %4146 = vmatprep.subr.bf16.mxu0 0
    %4147 = vmatpush1.bf16.xpose.msra.mxu0 0
    %4148 = vmatprep.subr.bf16.mxu0 0
    %4149 = vmatpush1.bf16.xpose.msra.mxu0 0
    %4150 = vmatprep.subr.bf16.mxu0 0
    %4151 = vmatpush1.bf16.xpose.msra.mxu0 0
    %4152 = vmatprep.subr.bf16.mxu0 0
    %4153 = vmatpush1.bf16.xpose.msra.mxu0 %v4142
    %4154 = vmatprep.subr.bf16.mxu0 0
    %4155 = vmatpush1.bf16.xpose.msra.mxu0 %v4139
    %4156 = vmatprep.subr.bf16.mxu0 0
    %4157 = vmatpush1.bf16.xpose.msra.mxu0 %v4136
    %4158 = vmatprep.subr.bf16.mxu0 0
    %4159 = vmatpush1.bf16.xpose.msra.mxu0 %v4133
    %4160 = vmatprep.subr.bf16.mxu0 0
    %4161 = vmatpush2.bf16.xpose.msra.mxu0 0
    %4162 = vmatprep.subr.bf16.mxu0 0
    %4163 = vmatpush2.bf16.xpose.msra.mxu0 0
    %4164 = vmatprep.subr.bf16.mxu0 0
    %4165 = vmatpush2.bf16.xpose.msra.mxu0 0
    %4166 = vmatprep.subr.bf16.mxu0 0
    %4167 = vmatpush2.bf16.xpose.msra.mxu0 0
    %4168 = vmatprep.subr.bf16.mxu0 0
    %4169 = vmatpush2.bf16.xpose.msra.mxu0 0
    %4170 = vmatprep.subr.bf16.mxu0 0
    %4171 = vmatpush2.bf16.xpose.msra.mxu0 0
    %4172 = vmatprep.subr.bf16.mxu0 0
    %4173 = vmatpush2.bf16.xpose.msra.mxu0 0
    %4174 = vmatprep.subr.bf16.mxu0 0
    %4175 = vmatpush2.bf16.xpose.msra.mxu0 0
    %4176 = vmatprep.mubr.bf16.mxu0 0
    %4177 = vmatmul.mubr.bf16.gmra.mxu0 %v4121
    %v4178 = vpop.f32.mrf.mxu0
    %v4179 = vadd.f32 0.0, %v4178
    %v4180 = vpop.f32.mrf.mxu0
    %v4181 = vpop.f32.mrf.mxu0
    %v4182 = vadd.f32 0.0, %v4181
    %v4183 = vpop.f32.mrf.mxu0
    %4184 = vmatprep.mubr.bf16.mxu0 0
    %4185 = vmatmul.mubr.bf16.gmra.mxu0 %v4124
    %v4186 = vpop.f32.mrf.mxu0
    %v4187 = vadd.f32 0.0, %v4186
    %v4188 = vpop.f32.mrf.mxu0
    %v4189 = vpop.f32.mrf.mxu0
    %v4190 = vadd.f32 0.0, %v4189
    %v4191 = vpop.f32.mrf.mxu0
    %4192 = vmatprep.mubr.bf16.mxu0 0
    %4193 = vmatmul.mubr.bf16.gmra.mxu0 %v4127
    %v4194 = vpop.f32.mrf.mxu0
    %v4195 = vadd.f32 0.0, %v4194
    %v4196 = vpop.f32.mrf.mxu0
    %v4197 = vpop.f32.mrf.mxu0
    %v4198 = vadd.f32 0.0, %v4197
    %v4199 = vpop.f32.mrf.mxu0
    %4200 = vmatprep.mubr.bf16.mxu0 0
    %4201 = vmatmul.mubr.bf16.gmra.mxu0 %v4130
    %v4202 = vpop.f32.mrf.mxu0
    %v4203 = vadd.f32 0.0, %v4202
    %v4204 = vpop.f32.mrf.mxu0
    %v4205 = vpop.f32.mrf.mxu0
    %v4206 = vadd.f32 0.0, %v4205
    %v4207 = vpop.f32.mrf.mxu0
    %4208 = vdwg.mxu0
    %v4209 = vmul.f32 %v4179, 0.35355338
    %v4210 = vmul.f32 %v4182, 0.35355338
    %v4211 = vmul.f32 %v4187, 0.35355338
    %v4212 = vmul.f32 %v4190, 0.35355338
    %v4213 = vmul.f32 %v4195, 0.35355338
    %v4214 = vmul.f32 %v4198, 0.35355338
    %v4215 = vmul.f32 %v4203, 0.35355338
    %v4216 = vmul.f32 %v4206, 0.35355338
    %v4217 = vadd.f32 %v4209, %v885
    %v4218 = vadd.f32 %v4210, %v886
    %v4219 = vadd.f32 %v4211, %v887
    %v4220 = vadd.f32 %v4212, %v888
    %v4221 = vadd.f32 %v4213, %v889
    %v4222 = vadd.f32 %v4214, %v890
    %v4223 = vadd.f32 %v4215, %v891
    %v4224 = vadd.f32 %v4216, %v892
    %v4225 = vsel %vm541, %v4217, -inf
    %4226 = vmax.xlane.f32.xlu0 %v4225
    %v4227 = vpop.xlane.xlu0 %4226
    %v4228 = vsel %vm541, %v4218, -inf
    %4229 = vmax.xlane.f32.xlu0 %v4228
    %v4230 = vpop.xlane.xlu0 %4229
    %v4231 = vsel %vm541, %v4219, -inf
    %4232 = vmax.xlane.f32.xlu0 %v4231
    %v4233 = vpop.xlane.xlu0 %4232
    %v4234 = vsel %vm541, %v4220, -inf
    %4235 = vmax.xlane.f32.xlu0 %v4234
    %v4236 = vpop.xlane.xlu0 %4235
    %v4237 = vsel %vm541, %v4221, -inf
    %4238 = vmax.xlane.f32.xlu0 %v4237
    %v4239 = vpop.xlane.xlu0 %4238
    %v4240 = vsel %vm541, %v4222, -inf
    %4241 = vmax.xlane.f32.xlu0 %v4240
    %v4242 = vpop.xlane.xlu0 %4241
    %v4243 = vsel %vm541, %v4223, -inf
    %4244 = vmax.xlane.f32.xlu0 %v4243
    %v4245 = vpop.xlane.xlu0 %4244
    %v4246 = vsel %vm541, %v4224, -inf
    %4247 = vmax.xlane.f32.xlu0 %v4246
    %v4248 = vpop.xlane.xlu0 %4247
    %v4249 = vsub.f32 %v4217, %v4227
    %v4250 = vsub.f32 %v4218, %v4230
    %v4251 = vsub.f32 %v4219, %v4233
    %v4252 = vsub.f32 %v4220, %v4236
    %v4253 = vsub.f32 %v4221, %v4239
    %v4254 = vsub.f32 %v4222, %v4242
    %v4255 = vsub.f32 %v4223, %v4245
    %v4256 = vsub.f32 %v4224, %v4248
    %v4257 = vmul.f32 %v4249, 1.442695
    %v4258 = vpow.pop %v4257
    %v4259 = vmul.f32 %v4250, 1.442695
    %v4260 = vpow.pop %v4259
    %v4261 = vmul.f32 %v4251, 1.442695
    %v4262 = vpow.pop %v4261
    %v4263 = vmul.f32 %v4252, 1.442695
    %v4264 = vpow.pop %v4263
    %v4265 = vmul.f32 %v4253, 1.442695
    %v4266 = vpow.pop %v4265
    %v4267 = vmul.f32 %v4254, 1.442695
    %v4268 = vpow.pop %v4267
    %v4269 = vmul.f32 %v4255, 1.442695
    %v4270 = vpow.pop %v4269
    %v4271 = vmul.f32 %v4256, 1.442695
    %v4272 = vpow.pop %v4271
    %v4273 = vsel %vm541, %v4258, 0.0
    %4274 = vadd.xlane.f32.xlu0 %v4273
    %v4275 = vpop.xlane.xlu0 %4274
    %v4276 = vsel %vm541, %v4260, 0.0
    %4277 = vadd.xlane.f32.xlu0 %v4276
    %v4278 = vpop.xlane.xlu0 %4277
    %v4279 = vsel %vm541, %v4262, 0.0
    %4280 = vadd.xlane.f32.xlu0 %v4279
    %v4281 = vpop.xlane.xlu0 %4280
    %v4282 = vsel %vm541, %v4264, 0.0
    %4283 = vadd.xlane.f32.xlu0 %v4282
    %v4284 = vpop.xlane.xlu0 %4283
    %v4285 = vsel %vm541, %v4266, 0.0
    %4286 = vadd.xlane.f32.xlu0 %v4285
    %v4287 = vpop.xlane.xlu0 %4286
    %v4288 = vsel %vm541, %v4268, 0.0
    %4289 = vadd.xlane.f32.xlu0 %v4288
    %v4290 = vpop.xlane.xlu0 %4289
    %v4291 = vsel %vm541, %v4270, 0.0
    %4292 = vadd.xlane.f32.xlu0 %v4291
    %v4293 = vpop.xlane.xlu0 %4292
    %v4294 = vsel %vm541, %v4272, 0.0
    %4295 = vadd.xlane.f32.xlu0 %v4294
    %v4296 = vpop.xlane.xlu0 %4295
    %v4297 = vrcp.pop %v4275
    %v4298 = vrcp.pop %v4278
    %v4299 = vrcp.pop %v4281
    %v4300 = vrcp.pop %v4284
    %v4301 = vrcp.pop %v4287
    %v4302 = vrcp.pop %v4290
    %v4303 = vrcp.pop %v4293
    %v4304 = vrcp.pop %v4296
    %v4305 = vmul.f32 %v4258, %v4297
    %v4306 = vmul.f32 %v4260, %v4298
    %v4307 = vmul.f32 %v4262, %v4299
    %v4308 = vmul.f32 %v4264, %v4300
    %v4309 = vmul.f32 %v4266, %v4301
    %v4310 = vmul.f32 %v4268, %v4302
    %v4311 = vmul.f32 %v4270, %v4303
    %v4312 = vmul.f32 %v4272, %v4304
    %v4313 = vpack.c.bf16 %v4306, %v4305
    %v4314 = vpack.c.bf16 %v4308, %v4307
    %v4315 = vpack.c.bf16 %v4310, %v4309
    %v4316 = vpack.c.bf16 %v4312, %v4311
    %4317 = vrot.lane.b32.xlu0 %v3198, 40
    %v4318 = vpop.permute.xlu0 %4317
    %4319 = vrot.lane.b32.xlu0 %v3199, 40
    %v4320 = vpop.permute.xlu0 %4319
    %4321 = vrot.lane.b32.xlu0 %v3200, 40
    %v4322 = vpop.permute.xlu0 %4321
    %4323 = vrot.lane.b32.xlu0 %v3201, 40
    %v4324 = vpop.permute.xlu0 %4323
    %v4330 = vsel %vm541, %v4313, 0
    %v4333 = vsel %vm541, %v4314, 0
    %v4336 = vsel %vm541, %v4315, 0
    %v4339 = vsel %vm541, %v4316, 0
    %4341 = vmatprep.subr.bf16.mxu0 0
    %4342 = vmatpush1.bf16.msra.mxu0 0
    %4343 = vmatprep.subr.bf16.mxu0 0
    %4344 = vmatpush1.bf16.msra.mxu0 0
    %4345 = vmatprep.subr.bf16.mxu0 0
    %4346 = vmatpush1.bf16.msra.mxu0 0
    %4347 = vmatprep.subr.bf16.mxu0 0
    %4348 = vmatpush1.bf16.msra.mxu0 0
    %4349 = vmatprep.subr.bf16.mxu0 0
    %4350 = vmatpush1.bf16.msra.mxu0 %v4324
    %4351 = vmatprep.subr.bf16.mxu0 0
    %4352 = vmatpush1.bf16.msra.mxu0 %v4322
    %4353 = vmatprep.subr.bf16.mxu0 0
    %4354 = vmatpush1.bf16.msra.mxu0 %v4320
    %4355 = vmatprep.subr.bf16.mxu0 0
    %4356 = vmatpush1.bf16.msra.mxu0 %v4318
    %4357 = vmatprep.subr.bf16.mxu0 0
    %4358 = vmatpush2.bf16.msra.mxu0 0
    %4359 = vmatprep.subr.bf16.mxu0 0
    %4360 = vmatpush2.bf16.msra.mxu0 0
    %4361 = vmatprep.subr.bf16.mxu0 0
    %4362 = vmatpush2.bf16.msra.mxu0 0
    %4363 = vmatprep.subr.bf16.mxu0 0
    %4364 = vmatpush2.bf16.msra.mxu0 0
    %4365 = vmatprep.subr.bf16.mxu0 0
    %4366 = vmatpush2.bf16.msra.mxu0 0
    %4367 = vmatprep.subr.bf16.mxu0 0
    %4368 = vmatpush2.bf16.msra.mxu0 0
    %4369 = vmatprep.subr.bf16.mxu0 0
    %4370 = vmatpush2.bf16.msra.mxu0 0
    %4371 = vmatprep.subr.bf16.mxu0 0
    %4372 = vmatpush2.bf16.msra.mxu0 0
    %4373 = vmatprep.mubr.bf16.mxu0 0
    %4374 = vmatmul.mubr.bf16.gmra.mxu0 %v4330
    %v4375 = vpop.f32.mrf.mxu0
    %v4376 = vadd.f32 0.0, %v4375
    %v4377 = vpop.f32.mrf.mxu0
    %v4378 = vpop.f32.mrf.mxu0
    %v4379 = vadd.f32 0.0, %v4378
    %v4380 = vpop.f32.mrf.mxu0
    %4381 = vmatprep.mubr.bf16.mxu0 0
    %4382 = vmatmul.mubr.bf16.gmra.mxu0 %v4333
    %v4383 = vpop.f32.mrf.mxu0
    %v4384 = vadd.f32 0.0, %v4383
    %v4385 = vpop.f32.mrf.mxu0
    %v4386 = vpop.f32.mrf.mxu0
    %v4387 = vadd.f32 0.0, %v4386
    %v4388 = vpop.f32.mrf.mxu0
    %4389 = vmatprep.mubr.bf16.mxu0 0
    %4390 = vmatmul.mubr.bf16.gmra.mxu0 %v4336
    %v4391 = vpop.f32.mrf.mxu0
    %v4392 = vadd.f32 0.0, %v4391
    %v4393 = vpop.f32.mrf.mxu0
    %v4394 = vpop.f32.mrf.mxu0
    %v4395 = vadd.f32 0.0, %v4394
    %v4396 = vpop.f32.mrf.mxu0
    %4397 = vmatprep.mubr.bf16.mxu0 0
    %4398 = vmatmul.mubr.bf16.gmra.mxu0 %v4339
    %v4399 = vpop.f32.mrf.mxu0
    %v4400 = vadd.f32 0.0, %v4399
    %v4401 = vpop.f32.mrf.mxu0
    %v4402 = vpop.f32.mrf.mxu0
    %v4403 = vadd.f32 0.0, %v4402
    %v4404 = vpop.f32.mrf.mxu0
    %4405 = vdwg.mxu0
    %4414 = vrot.lane.b32.xlu0 %v3772, 8
    %v4415 = vpop.permute.xlu0 %4414
    %4416 = vrot.lane.b32.xlu0 %v3775, 8
    %v4417 = vpop.permute.xlu0 %4416
    %4418 = vrot.lane.b32.xlu0 %v3780, 8
    %v4419 = vpop.permute.xlu0 %4418
    %4420 = vrot.lane.b32.xlu0 %v3783, 8
    %v4421 = vpop.permute.xlu0 %4420
    %4422 = vrot.lane.b32.xlu0 %v3788, 8
    %v4423 = vpop.permute.xlu0 %4422
    %4424 = vrot.lane.b32.xlu0 %v3791, 8
    %v4425 = vpop.permute.xlu0 %4424
    %4426 = vrot.lane.b32.xlu0 %v3796, 8
    %v4427 = vpop.permute.xlu0 %4426
    %4428 = vrot.lane.b32.xlu0 %v3799, 8
    %v4429 = vpop.permute.xlu0 %4428
    %4446 = vrot.lane.b32.xlu0 %v4074, 16
    %v4447 = vpop.permute.xlu0 %4446
    %4448 = vrot.lane.b32.xlu0 %v4077, 16
    %v4449 = vpop.permute.xlu0 %4448
    %4450 = vrot.lane.b32.xlu0 %v4082, 16
    %v4451 = vpop.permute.xlu0 %4450
    %4452 = vrot.lane.b32.xlu0 %v4085, 16
    %v4453 = vpop.permute.xlu0 %4452
    %4454 = vrot.lane.b32.xlu0 %v4090, 16
    %v4455 = vpop.permute.xlu0 %4454
    %4456 = vrot.lane.b32.xlu0 %v4093, 16
    %v4457 = vpop.permute.xlu0 %4456
    %4458 = vrot.lane.b32.xlu0 %v4098, 16
    %v4459 = vpop.permute.xlu0 %4458
    %4460 = vrot.lane.b32.xlu0 %v4101, 16
    %v4461 = vpop.permute.xlu0 %4460
    %4478 = vrot.lane.b32.xlu0 %v4376, 24
    %v4479 = vpop.permute.xlu0 %4478
    %4480 = vrot.lane.b32.xlu0 %v4379, 24
    %v4481 = vpop.permute.xlu0 %4480
    %4482 = vrot.lane.b32.xlu0 %v4384, 24
    %v4483 = vpop.permute.xlu0 %4482
    %4484 = vrot.lane.b32.xlu0 %v4387, 24
    %v4485 = vpop.permute.xlu0 %4484
    %4486 = vrot.lane.b32.xlu0 %v4392, 24
    %v4487 = vpop.permute.xlu0 %4486
    %4488 = vrot.lane.b32.xlu0 %v4395, 24
    %v4489 = vpop.permute.xlu0 %4488
    %4490 = vrot.lane.b32.xlu0 %v4400, 24
    %v4491 = vpop.permute.xlu0 %4490
    %4492 = vrot.lane.b32.xlu0 %v4403, 24
    %v4493 = vpop.permute.xlu0 %4492
    %v4502 = vsel %vm1148, %v3470, %v4415
    %v4503 = vsel %vm1148, %v3473, %v4417
    %v4504 = vsel %vm1148, %v3478, %v4419
    %v4505 = vsel %vm1148, %v3481, %v4421
    %v4506 = vsel %vm1148, %v3486, %v4423
    %v4507 = vsel %vm1148, %v3489, %v4425
    %v4508 = vsel %vm1148, %v3494, %v4427
    %v4509 = vsel %vm1148, %v3497, %v4429
    %v4510 = vsel %vm339, %v4502, %v4447
    %v4511 = vsel %vm339, %v4503, %v4449
    %v4512 = vsel %vm339, %v4504, %v4451
    %v4513 = vsel %vm339, %v4505, %v4453
    %v4514 = vsel %vm339, %v4506, %v4455
    %v4515 = vsel %vm339, %v4507, %v4457
    %v4516 = vsel %vm339, %v4508, %v4459
    %v4517 = vsel %vm339, %v4509, %v4461
    %v4518 = vsel %vm2453, %v4510, %v4479
    %v4519 = vsel %vm2453, %v4511, %v4481
    %v4520 = vsel %vm2453, %v4512, %v4483
    %v4521 = vsel %vm2453, %v4513, %v4485
    %v4522 = vsel %vm2453, %v4514, %v4487
    %v4523 = vsel %vm2453, %v4515, %v4489
    %v4524 = vsel %vm2453, %v4516, %v4491
    %v4525 = vsel %vm2453, %v4517, %v4493
    %v4526 = vpack.c.bf16 %v4519, %v4518
    %v4527 = vpack.c.bf16 %v4521, %v4520
    %v4528 = vpack.c.bf16 %v4523, %v4522
    %v4529 = vpack.c.bf16 %v4525, %v4524
    %s4530 = scalar_lea.vmem %s8, 16
    %v4531 = vld [vmem:[%s4530] sm:$0xf]
    %v4532 = vld [vmem:[%s4530 + $0x4] sm:$0xf]
    %v4533 = vld [vmem:[%s4530 + $0x8] sm:$0xf]
    %v4534 = vld [vmem:[%s4530 + $0xc] sm:$0xf]
    %s4535 = scalar_lea.vmem %s9, 1
    %v4536 = vld [vmem:[%s4535] sm:$0x1]
    %v4538 = vlaneseq
    %v4539 = vshrl.u32 %v4538, 7
    %v4540 = vsub.s32 0, %v4539
    %v4541 = vrot.slane %v4536, %v4540
    %v4547 = vunpack.c.l.b16 %v4531
    %v4548 = vunpack.c.l.b16 %v4532
    %v4549 = vunpack.c.l.b16 %v4533
    %v4550 = vunpack.c.l.b16 %v4534
    %v4551 = vpack.c.b16 %v4548, %v4547
    %v4552 = vpack.c.b16 %v4550, %v4549
    %v4556 = vsel %vm191, %v4526, 0
    %v4559 = vsel %vm191, %v4527, 0
    %v4562 = vsel %vm191, %v4528, 0
    %v4565 = vsel %vm191, %v4529, 0
    %4567 = vmatprep.subr.bf16.mxu0 0
    %4568 = vmatpush1.bf16.msra.mxu0 0
    %4569 = vmatprep.subr.bf16.mxu0 0
    %4570 = vmatpush1.bf16.msra.mxu0 0
    %4571 = vmatprep.subr.bf16.mxu0 0
    %4572 = vmatpush1.bf16.msra.mxu0 0
    %4573 = vmatprep.subr.bf16.mxu0 0
    %4574 = vmatpush1.bf16.msra.mxu0 0
    %4575 = vmatprep.subr.bf16.mxu0 0
    %4576 = vmatpush1.bf16.msra.mxu0 0
    %4577 = vmatprep.subr.bf16.mxu0 0
    %4578 = vmatpush1.bf16.msra.mxu0 0
    %4579 = vmatprep.subr.bf16.mxu0 0
    %4580 = vmatpush1.bf16.msra.mxu0 %v4552
    %4581 = vmatprep.subr.bf16.mxu0 0
    %4582 = vmatpush1.bf16.msra.mxu0 %v4551
    %4583 = vmatprep.subr.bf16.mxu0 0
    %4584 = vmatpush2.bf16.msra.mxu0 0
    %4585 = vmatprep.subr.bf16.mxu0 0
    %4586 = vmatpush2.bf16.msra.mxu0 0
    %4587 = vmatprep.subr.bf16.mxu0 0
    %4588 = vmatpush2.bf16.msra.mxu0 0
    %4589 = vmatprep.subr.bf16.mxu0 0
    %4590 = vmatpush2.bf16.msra.mxu0 0
    %4591 = vmatprep.subr.bf16.mxu0 0
    %4592 = vmatpush2.bf16.msra.mxu0 0
    %4593 = vmatprep.subr.bf16.mxu0 0
    %4594 = vmatpush2.bf16.msra.mxu0 0
    %4595 = vmatprep.subr.bf16.mxu0 0
    %4596 = vmatpush2.bf16.msra.mxu0 0
    %4597 = vmatprep.subr.bf16.mxu0 0
    %4598 = vmatpush2.bf16.msra.mxu0 0
    %4599 = vmatprep.mubr.bf16.mxu0 0
    %4600 = vmatmul.mubr.bf16.gmra.mxu0 %v4556
    %v4601 = vpop.f32.mrf.mxu0
    %v4602 = vadd.f32 %v4541, %v4601
    %v4603 = vpop.f32.mrf.mxu0
    %v4604 = vpop.f32.mrf.mxu0
    %v4605 = vadd.f32 %v4541, %v4604
    %v4606 = vpop.f32.mrf.mxu0
    %4607 = vmatprep.mubr.bf16.mxu0 0
    %4608 = vmatmul.mubr.bf16.gmra.mxu0 %v4559
    %v4609 = vpop.f32.mrf.mxu0
    %v4610 = vadd.f32 %v4541, %v4609
    %v4611 = vpop.f32.mrf.mxu0
    %v4612 = vpop.f32.mrf.mxu0
    %v4613 = vadd.f32 %v4541, %v4612
    %v4614 = vpop.f32.mrf.mxu0
    %4615 = vmatprep.mubr.bf16.mxu0 0
    %4616 = vmatmul.mubr.bf16.gmra.mxu0 %v4562
    %v4617 = vpop.f32.mrf.mxu0
    %v4618 = vadd.f32 %v4541, %v4617
    %v4619 = vpop.f32.mrf.mxu0
    %v4620 = vpop.f32.mrf.mxu0
    %v4621 = vadd.f32 %v4541, %v4620
    %v4622 = vpop.f32.mrf.mxu0
    %4623 = vmatprep.mubr.bf16.mxu0 0
    %4624 = vmatmul.mubr.bf16.gmra.mxu0 %v4565
    %v4625 = vpop.f32.mrf.mxu0
    %v4626 = vadd.f32 %v4541, %v4625
    %v4627 = vpop.f32.mrf.mxu0
    %v4628 = vpop.f32.mrf.mxu0
    %v4629 = vadd.f32 %v4541, %v4628
    %v4630 = vpop.f32.mrf.mxu0
    %4631 = vdwg.mxu0
    %v4632 = vadd.f32 %v2948, %v4602
    %v4633 = vadd.f32 %v2949, %v4605
    %v4634 = vadd.f32 %v2950, %v4610
    %v4635 = vadd.f32 %v2951, %v4613
    %v4636 = vadd.f32 %v2952, %v4618
    %v4637 = vadd.f32 %v2953, %v4621
    %v4638 = vadd.f32 %v2954, %v4626
    %v4639 = vadd.f32 %v2955, %v4629
    %s4640 = scalar_lea.vmem %s10, 1
    %v4641 = vld [vmem:[%s4640] sm:$0x1]
    %s4642 = scalar_lea.vmem %s11, 1
    %v4643 = vld [vmem:[%s4642] sm:$0x1]
    %v4644 = vsel %vm191, %v4632, 0.0
    %4645 = vadd.xlane.f32.xlu0 %v4644
    %v4646 = vpop.xlane.xlu0 %4645
    %v4647 = vsel %vm191, %v4633, 0.0
    %4648 = vadd.xlane.f32.xlu0 %v4647
    %v4649 = vpop.xlane.xlu0 %4648
    %v4650 = vsel %vm191, %v4634, 0.0
    %4651 = vadd.xlane.f32.xlu0 %v4650
    %v4652 = vpop.xlane.xlu0 %4651
    %v4653 = vsel %vm191, %v4635, 0.0
    %4654 = vadd.xlane.f32.xlu0 %v4653
    %v4655 = vpop.xlane.xlu0 %4654
    %v4656 = vsel %vm191, %v4636, 0.0
    %4657 = vadd.xlane.f32.xlu0 %v4656
    %v4658 = vpop.xlane.xlu0 %4657
    %v4659 = vsel %vm191, %v4637, 0.0
    %4660 = vadd.xlane.f32.xlu0 %v4659
    %v4661 = vpop.xlane.xlu0 %4660
    %v4662 = vsel %vm191, %v4638, 0.0
    %4663 = vadd.xlane.f32.xlu0 %v4662
    %v4664 = vpop.xlane.xlu0 %4663
    %v4665 = vsel %vm191, %v4639, 0.0
    %4666 = vadd.xlane.f32.xlu0 %v4665
    %v4667 = vpop.xlane.xlu0 %4666
    %v4668 = vmul.f32 %v4646, %v919
    %v4669 = vmul.f32 %v4649, %v919
    %v4670 = vmul.f32 %v4652, %v919
    %v4671 = vmul.f32 %v4655, %v919
    %v4672 = vmul.f32 %v4658, %v919
    %v4673 = vmul.f32 %v4661, %v919
    %v4674 = vmul.f32 %v4664, %v919
    %v4675 = vmul.f32 %v4667, %v919
    %v4676 = vsub.f32 %v4632, %v4668
    %v4677 = vsub.f32 %v4633, %v4669
    %v4678 = vsub.f32 %v4634, %v4670
    %v4679 = vsub.f32 %v4635, %v4671
    %v4680 = vsub.f32 %v4636, %v4672
    %v4681 = vsub.f32 %v4637, %v4673
    %v4682 = vsub.f32 %v4638, %v4674
    %v4683 = vsub.f32 %v4639, %v4675
    %v4684 = vmul.f32 %v4676, %v4676
    %v4685 = vmul.f32 %v4677, %v4677
    %v4686 = vmul.f32 %v4678, %v4678
    %v4687 = vmul.f32 %v4679, %v4679
    %v4688 = vmul.f32 %v4680, %v4680
    %v4689 = vmul.f32 %v4681, %v4681
    %v4690 = vmul.f32 %v4682, %v4682
    %v4691 = vmul.f32 %v4683, %v4683
    %v4692 = vsel %vm191, %v4684, 0.0
    %4693 = vadd.xlane.f32.xlu0 %v4692
    %v4694 = vpop.xlane.xlu0 %4693
    %v4695 = vsel %vm191, %v4685, 0.0
    %4696 = vadd.xlane.f32.xlu0 %v4695
    %v4697 = vpop.xlane.xlu0 %4696
    %v4698 = vsel %vm191, %v4686, 0.0
    %4699 = vadd.xlane.f32.xlu0 %v4698
    %v4700 = vpop.xlane.xlu0 %4699
    %v4701 = vsel %vm191, %v4687, 0.0
    %4702 = vadd.xlane.f32.xlu0 %v4701
    %v4703 = vpop.xlane.xlu0 %4702
    %v4704 = vsel %vm191, %v4688, 0.0
    %4705 = vadd.xlane.f32.xlu0 %v4704
    %v4706 = vpop.xlane.xlu0 %4705
    %v4707 = vsel %vm191, %v4689, 0.0
    %4708 = vadd.xlane.f32.xlu0 %v4707
    %v4709 = vpop.xlane.xlu0 %4708
    %v4710 = vsel %vm191, %v4690, 0.0
    %4711 = vadd.xlane.f32.xlu0 %v4710
    %v4712 = vpop.xlane.xlu0 %4711
    %v4713 = vsel %vm191, %v4691, 0.0
    %4714 = vadd.xlane.f32.xlu0 %v4713
    %v4715 = vpop.xlane.xlu0 %4714
    %v4716 = vmul.f32 %v4694, %v919
    %v4717 = vmul.f32 %v4697, %v919
    %v4718 = vmul.f32 %v4700, %v919
    %v4719 = vmul.f32 %v4703, %v919
    %v4720 = vmul.f32 %v4706, %v919
    %v4721 = vmul.f32 %v4709, %v919
    %v4722 = vmul.f32 %v4712, %v919
    %v4723 = vmul.f32 %v4715, %v919
    %v4724 = vadd.f32 %v4716, 1e-05
    %v4725 = vadd.f32 %v4717, 1e-05
    %v4726 = vadd.f32 %v4718, 1e-05
    %v4727 = vadd.f32 %v4719, 1e-05
    %v4728 = vadd.f32 %v4720, 1e-05
    %v4729 = vadd.f32 %v4721, 1e-05
    %v4730 = vadd.f32 %v4722, 1e-05
    %v4731 = vadd.f32 %v4723, 1e-05
    %v4732 = vrsqrt.pop %v4724
    %v4733 = vrsqrt.pop %v4725
    %v4734 = vrsqrt.pop %v4726
    %v4735 = vrsqrt.pop %v4727
    %v4736 = vrsqrt.pop %v4728
    %v4737 = vrsqrt.pop %v4729
    %v4738 = vrsqrt.pop %v4730
    %v4739 = vrsqrt.pop %v4731
    %v4740 = vmul.f32 %v4676, %v4732
    %v4741 = vmul.f32 %v4677, %v4733
    %v4742 = vmul.f32 %v4678, %v4734
    %v4743 = vmul.f32 %v4679, %v4735
    %v4744 = vmul.f32 %v4680, %v4736
    %v4745 = vmul.f32 %v4681, %v4737
    %v4746 = vmul.f32 %v4682, %v4738
    %v4747 = vmul.f32 %v4683, %v4739
    %v4749 = vlaneseq
    %v4750 = vshrl.u32 %v4749, 7
    %v4751 = vsub.s32 0, %v4750
    %v4752 = vrot.slane %v4641, %v4751
    %v4754 = vmul.f32 %v4740, %v4752
    %v4755 = vmul.f32 %v4741, %v4752
    %v4756 = vmul.f32 %v4742, %v4752
    %v4757 = vmul.f32 %v4743, %v4752
    %v4758 = vmul.f32 %v4744, %v4752
    %v4759 = vmul.f32 %v4745, %v4752
    %v4760 = vmul.f32 %v4746, %v4752
    %v4761 = vmul.f32 %v4747, %v4752
    %v4763 = vlaneseq
    %v4764 = vshrl.u32 %v4763, 7
    %v4765 = vsub.s32 0, %v4764
    %v4766 = vrot.slane %v4643, %v4765
    %v4768 = vadd.f32 %v4754, %v4766
    %v4769 = vadd.f32 %v4755, %v4766
    %v4770 = vadd.f32 %v4756, %v4766
    %v4771 = vadd.f32 %v4757, %v4766
    %v4772 = vadd.f32 %v4758, %v4766
    %v4773 = vadd.f32 %v4759, %v4766
    %v4774 = vadd.f32 %v4760, %v4766
    %v4775 = vadd.f32 %v4761, %v4766
    %v4776 = vpack.c.bf16 %v4769, %v4768
    %v4777 = vpack.c.bf16 %v4771, %v4770
    %v4778 = vpack.c.bf16 %v4773, %v4772
    %v4779 = vpack.c.bf16 %v4775, %v4774
    %s4780 = scalar_lea.vmem %s12, 16
    %v4781 = vld [vmem:[%s4780] sm:$0xf]
    %v4782 = vld [vmem:[%s4780 + $0x4] sm:$0xf]
    %v4783 = vld [vmem:[%s4780 + $0x8] sm:$0xf]
    %v4784 = vld [vmem:[%s4780 + $0xc] sm:$0xf]
    %s4785 = scalar_lea.vmem %s13, 1
    %v4786 = vld [vmem:[%s4785] sm:$0x1]
    %v4788 = vlaneseq
    %v4789 = vshrl.u32 %v4788, 7
    %v4790 = vsub.s32 0, %v4789
    %v4791 = vrot.slane %v4786, %v4790
    %v4797 = vunpack.c.l.b16 %v4781
    %v4798 = vunpack.c.l.b16 %v4782
    %v4799 = vunpack.c.l.b16 %v4783
    %v4800 = vunpack.c.l.b16 %v4784
    %v4801 = vpack.c.b16 %v4798, %v4797
    %v4802 = vpack.c.b16 %v4800, %v4799
    %v4806 = vsel %vm191, %v4776, 0
    %v4809 = vsel %vm191, %v4777, 0
    %v4812 = vsel %vm191, %v4778, 0
    %v4815 = vsel %vm191, %v4779, 0
    %4817 = vmatprep.subr.bf16.mxu0 0
    %4818 = vmatpush1.bf16.msra.mxu0 0
    %4819 = vmatprep.subr.bf16.mxu0 0
    %4820 = vmatpush1.bf16.msra.mxu0 0
    %4821 = vmatprep.subr.bf16.mxu0 0
    %4822 = vmatpush1.bf16.msra.mxu0 0
    %4823 = vmatprep.subr.bf16.mxu0 0
    %4824 = vmatpush1.bf16.msra.mxu0 0
    %4825 = vmatprep.subr.bf16.mxu0 0
    %4826 = vmatpush1.bf16.msra.mxu0 0
    %4827 = vmatprep.subr.bf16.mxu0 0
    %4828 = vmatpush1.bf16.msra.mxu0 0
    %4829 = vmatprep.subr.bf16.mxu0 0
    %4830 = vmatpush1.bf16.msra.mxu0 %v4802
    %4831 = vmatprep.subr.bf16.mxu0 0
    %4832 = vmatpush1.bf16.msra.mxu0 %v4801
    %4833 = vmatprep.subr.bf16.mxu0 0
    %4834 = vmatpush2.bf16.msra.mxu0 0
    %4835 = vmatprep.subr.bf16.mxu0 0
    %4836 = vmatpush2.bf16.msra.mxu0 0
    %4837 = vmatprep.subr.bf16.mxu0 0
    %4838 = vmatpush2.bf16.msra.mxu0 0
    %4839 = vmatprep.subr.bf16.mxu0 0
    %4840 = vmatpush2.bf16.msra.mxu0 0
    %4841 = vmatprep.subr.bf16.mxu0 0
    %4842 = vmatpush2.bf16.msra.mxu0 0
    %4843 = vmatprep.subr.bf16.mxu0 0
    %4844 = vmatpush2.bf16.msra.mxu0 0
    %4845 = vmatprep.subr.bf16.mxu0 0
    %4846 = vmatpush2.bf16.msra.mxu0 0
    %4847 = vmatprep.subr.bf16.mxu0 0
    %4848 = vmatpush2.bf16.msra.mxu0 0
    %4849 = vmatprep.mubr.bf16.mxu0 0
    %4850 = vmatmul.mubr.bf16.gmra.mxu0 %v4806
    %v4851 = vpop.f32.mrf.mxu0
    %v4852 = vadd.f32 %v4791, %v4851
    %v4853 = vpop.f32.mrf.mxu0
    %v4854 = vpop.f32.mrf.mxu0
    %v4855 = vadd.f32 %v4791, %v4854
    %v4856 = vpop.f32.mrf.mxu0
    %4857 = vmatprep.mubr.bf16.mxu0 0
    %4858 = vmatmul.mubr.bf16.gmra.mxu0 %v4809
    %v4859 = vpop.f32.mrf.mxu0
    %v4860 = vadd.f32 %v4791, %v4859
    %v4861 = vpop.f32.mrf.mxu0
    %v4862 = vpop.f32.mrf.mxu0
    %v4863 = vadd.f32 %v4791, %v4862
    %v4864 = vpop.f32.mrf.mxu0
    %4865 = vmatprep.mubr.bf16.mxu0 0
    %4866 = vmatmul.mubr.bf16.gmra.mxu0 %v4812
    %v4867 = vpop.f32.mrf.mxu0
    %v4868 = vadd.f32 %v4791, %v4867
    %v4869 = vpop.f32.mrf.mxu0
    %v4870 = vpop.f32.mrf.mxu0
    %v4871 = vadd.f32 %v4791, %v4870
    %v4872 = vpop.f32.mrf.mxu0
    %4873 = vmatprep.mubr.bf16.mxu0 0
    %4874 = vmatmul.mubr.bf16.gmra.mxu0 %v4815
    %v4875 = vpop.f32.mrf.mxu0
    %v4876 = vadd.f32 %v4791, %v4875
    %v4877 = vpop.f32.mrf.mxu0
    %v4878 = vpop.f32.mrf.mxu0
    %v4879 = vadd.f32 %v4791, %v4878
    %v4880 = vpop.f32.mrf.mxu0
    %4881 = vdwg.mxu0
    %v4882 = vmax.f32 %v4852, 0.0
    %v4883 = vmax.f32 %v4855, 0.0
    %v4884 = vmax.f32 %v4860, 0.0
    %v4885 = vmax.f32 %v4863, 0.0
    %v4886 = vmax.f32 %v4868, 0.0
    %v4887 = vmax.f32 %v4871, 0.0
    %v4888 = vmax.f32 %v4876, 0.0
    %v4889 = vmax.f32 %v4879, 0.0
    %v4890 = vpack.c.bf16 %v4883, %v4882
    %v4891 = vpack.c.bf16 %v4885, %v4884
    %v4892 = vpack.c.bf16 %v4887, %v4886
    %v4893 = vpack.c.bf16 %v4889, %v4888
    %s4894 = scalar_lea.vmem %s14, 32
    %v4895 = vld [vmem:[%s4894] sm:$0xf]
    %v4896 = vld [vmem:[%s4894 + $0x4] sm:$0xf]
    %v4897 = vld [vmem:[%s4894 + $0x8] sm:$0xf]
    %v4898 = vld [vmem:[%s4894 + $0xc] sm:$0xf]
    %v4899 = vld [vmem:[%s4894 + $0x10] sm:$0xf]
    %v4900 = vld [vmem:[%s4894 + $0x14] sm:$0xf]
    %v4901 = vld [vmem:[%s4894 + $0x18] sm:$0xf]
    %v4902 = vld [vmem:[%s4894 + $0x1c] sm:$0xf]
    %v4911 = vunpack.c.l.b16 %v4895
    %v4912 = vunpack.c.l.b16 %v4896
    %v4913 = vunpack.c.l.b16 %v4897
    %v4914 = vunpack.c.l.b16 %v4898
    %v4915 = vunpack.c.l.b16 %v4899
    %v4916 = vunpack.c.l.b16 %v4900
    %v4917 = vunpack.c.l.b16 %v4901
    %v4918 = vunpack.c.l.b16 %v4902
    %v4919 = vpack.c.b16 %v4912, %v4911
    %v4920 = vpack.c.b16 %v4914, %v4913
    %v4921 = vpack.c.b16 %v4916, %v4915
    %v4922 = vpack.c.b16 %v4918, %v4917
    %v4928 = vsel %vm541, %v4890, 0
    %v4931 = vsel %vm541, %v4891, 0
    %v4934 = vsel %vm541, %v4892, 0
    %v4937 = vsel %vm541, %v4893, 0
    %4939 = vmatprep.subr.bf16.mxu0 0
    %4940 = vmatpush1.bf16.msra.mxu0 0
    %4941 = vmatprep.subr.bf16.mxu0 0
    %4942 = vmatpush1.bf16.msra.mxu0 0
    %4943 = vmatprep.subr.bf16.mxu0 0
    %4944 = vmatpush1.bf16.msra.mxu0 0
    %4945 = vmatprep.subr.bf16.mxu0 0
    %4946 = vmatpush1.bf16.msra.mxu0 0
    %4947 = vmatprep.subr.bf16.mxu0 0
    %4948 = vmatpush1.bf16.msra.mxu0 %v4922
    %4949 = vmatprep.subr.bf16.mxu0 0
    %4950 = vmatpush1.bf16.msra.mxu0 %v4921
    %4951 = vmatprep.subr.bf16.mxu0 0
    %4952 = vmatpush1.bf16.msra.mxu0 %v4920
    %4953 = vmatprep.subr.bf16.mxu0 0
    %4954 = vmatpush1.bf16.msra.mxu0 %v4919
    %4955 = vmatprep.subr.bf16.mxu0 0
    %4956 = vmatpush2.bf16.msra.mxu0 0
    %4957 = vmatprep.subr.bf16.mxu0 0
    %4958 = vmatpush2.bf16.msra.mxu0 0
    %4959 = vmatprep.subr.bf16.mxu0 0
    %4960 = vmatpush2.bf16.msra.mxu0 0
    %4961 = vmatprep.subr.bf16.mxu0 0
    %4962 = vmatpush2.bf16.msra.mxu0 0
    %4963 = vmatprep.subr.bf16.mxu0 0
    %4964 = vmatpush2.bf16.msra.mxu0 0
    %4965 = vmatprep.subr.bf16.mxu0 0
    %4966 = vmatpush2.bf16.msra.mxu0 0
    %4967 = vmatprep.subr.bf16.mxu0 0
    %4968 = vmatpush2.bf16.msra.mxu0 0
    %4969 = vmatprep.subr.bf16.mxu0 0
    %4970 = vmatpush2.bf16.msra.mxu0 0
    %4971 = vmatprep.mubr.bf16.mxu0 0
    %4972 = vmatmul.mubr.bf16.gmra.mxu0 %v4928
    %v4973 = vpop.f32.mrf.mxu0
    %v4974 = vadd.f32 0.0, %v4973
    %v4975 = vpop.f32.mrf.mxu0
    %v4976 = vpop.f32.mrf.mxu0
    %v4977 = vadd.f32 0.0, %v4976
    %v4978 = vpop.f32.mrf.mxu0
    %4979 = vmatprep.mubr.bf16.mxu0 0
    %4980 = vmatmul.mubr.bf16.gmra.mxu0 %v4931
    %v4981 = vpop.f32.mrf.mxu0
    %v4982 = vadd.f32 0.0, %v4981
    %v4983 = vpop.f32.mrf.mxu0
    %v4984 = vpop.f32.mrf.mxu0
    %v4985 = vadd.f32 0.0, %v4984
    %v4986 = vpop.f32.mrf.mxu0
    %4987 = vmatprep.mubr.bf16.mxu0 0
    %4988 = vmatmul.mubr.bf16.gmra.mxu0 %v4934
    %v4989 = vpop.f32.mrf.mxu0
    %v4990 = vadd.f32 0.0, %v4989
    %v4991 = vpop.f32.mrf.mxu0
    %v4992 = vpop.f32.mrf.mxu0
    %v4993 = vadd.f32 0.0, %v4992
    %v4994 = vpop.f32.mrf.mxu0
    %4995 = vmatprep.mubr.bf16.mxu0 0
    %4996 = vmatmul.mubr.bf16.gmra.mxu0 %v4937
    %v4997 = vpop.f32.mrf.mxu0
    %v4998 = vadd.f32 0.0, %v4997
    %v4999 = vpop.f32.mrf.mxu0
    %v5000 = vpop.f32.mrf.mxu0
    %v5001 = vadd.f32 0.0, %v5000
    %v5002 = vpop.f32.mrf.mxu0
    %5003 = vdwg.mxu0
    %v5004 = vadd.f32 %v4632, %v4974
    %v5005 = vadd.f32 %v4633, %v4977
    %v5006 = vadd.f32 %v4634, %v4982
    %v5007 = vadd.f32 %v4635, %v4985
    %v5008 = vadd.f32 %v4636, %v4990
    %v5009 = vadd.f32 %v4637, %v4993
    %v5010 = vadd.f32 %v4638, %v4998
    %v5011 = vadd.f32 %v4639, %v5001
    %s5012 = scalar_lea.vmem %s15, 1
    %v5013 = vld [vmem:[%s5012] sm:$0x1]
    %v5015 = vlaneseq
    %v5016 = vshrl.u32 %v5015, 7
    %v5017 = vsub.s32 0, %v5016
    %v5018 = vrot.slane %v5013, %v5017
    %v5020 = vadd.f32 %v5004, %v5018
    %v5021 = vadd.f32 %v5005, %v5018
    %v5022 = vadd.f32 %v5006, %v5018
    %v5023 = vadd.f32 %v5007, %v5018
    %v5024 = vadd.f32 %v5008, %v5018
    %v5025 = vadd.f32 %v5009, %v5018
    %v5026 = vadd.f32 %v5010, %v5018
    %v5027 = vadd.f32 %v5011, %v5018
    %v5028 = vadd.s32 %v318, 256
    %v5029 = vadd.s32 %v318, 384
    %v5030 = vadd.s32 %v318, 512
    %v5031 = vadd.s32 %v318, 640
    %v5032 = vadd.s32 %v318, 768
    %v5033 = vadd.s32 %v318, 896
    %v5034 = vand.u32 %v318, 31
    %v5035 = vand.u32 %v319, 31
    %v5036 = vand.u32 %v5028, 31
    %v5037 = vand.u32 %v5029, 31
    %v5038 = vand.u32 %v5030, 31
    %v5039 = vand.u32 %v5031, 31
    %v5040 = vand.u32 %v5032, 31
    %v5041 = vand.u32 %v5033, 31
    %vm5042 = vcmp.eq.s32.totalorder %v5034, %v321
    %vm5043 = vcmp.eq.s32.totalorder %v5035, %v321
    %vm5044 = vcmp.eq.s32.totalorder %v5036, %v321
    %vm5045 = vcmp.eq.s32.totalorder %v5037, %v321
    %vm5046 = vcmp.eq.s32.totalorder %v5038, %v321
    %vm5047 = vcmp.eq.s32.totalorder %v5039, %v321
    %vm5048 = vcmp.eq.s32.totalorder %v5040, %v321
    %vm5049 = vcmp.eq.s32.totalorder %v5041, %v321
    %vm5050 = vcmp.eq.s32.totalorder %v5034, %v322
    %vm5051 = vcmp.eq.s32.totalorder %v5035, %v322
    %vm5052 = vcmp.eq.s32.totalorder %v5036, %v322
    %vm5053 = vcmp.eq.s32.totalorder %v5037, %v322
    %vm5054 = vcmp.eq.s32.totalorder %v5038, %v322
    %vm5055 = vcmp.eq.s32.totalorder %v5039, %v322
    %vm5056 = vcmp.eq.s32.totalorder %v5040, %v322
    %vm5057 = vcmp.eq.s32.totalorder %v5041, %v322
    %vm5058 = vcmp.eq.s32.totalorder %v5034, %v425
    %vm5059 = vcmp.eq.s32.totalorder %v5035, %v425
    %vm5060 = vcmp.eq.s32.totalorder %v5036, %v425
    %vm5061 = vcmp.eq.s32.totalorder %v5037, %v425
    %vm5062 = vcmp.eq.s32.totalorder %v5038, %v425
    %vm5063 = vcmp.eq.s32.totalorder %v5039, %v425
    %vm5064 = vcmp.eq.s32.totalorder %v5040, %v425
    %vm5065 = vcmp.eq.s32.totalorder %v5041, %v425
    %vm5066 = vcmp.eq.s32.totalorder %v5034, %v426
    %vm5067 = vcmp.eq.s32.totalorder %v5035, %v426
    %vm5068 = vcmp.eq.s32.totalorder %v5036, %v426
    %vm5069 = vcmp.eq.s32.totalorder %v5037, %v426
    %vm5070 = vcmp.eq.s32.totalorder %v5038, %v426
    %vm5071 = vcmp.eq.s32.totalorder %v5039, %v426
    %vm5072 = vcmp.eq.s32.totalorder %v5040, %v426
    %vm5073 = vcmp.eq.s32.totalorder %v5041, %v426
    %v5074 = vsel %vm5042, 1.0, 0.0
    %v5075 = vsel %vm5043, 1.0, 0.0
    %v5076 = vsel %vm5044, 1.0, 0.0
    %v5077 = vsel %vm5045, 1.0, 0.0
    %v5078 = vsel %vm5046, 1.0, 0.0
    %v5079 = vsel %vm5047, 1.0, 0.0
    %v5080 = vsel %vm5048, 1.0, 0.0
    %v5081 = vsel %vm5049, 1.0, 0.0
    %v5082 = vsel %vm5050, 1.0, 0.0
    %v5083 = vsel %vm5051, 1.0, 0.0
    %v5084 = vsel %vm5052, 1.0, 0.0
    %v5085 = vsel %vm5053, 1.0, 0.0
    %v5086 = vsel %vm5054, 1.0, 0.0
    %v5087 = vsel %vm5055, 1.0, 0.0
    %v5088 = vsel %vm5056, 1.0, 0.0
    %v5089 = vsel %vm5057, 1.0, 0.0
    %v5090 = vsel %vm5058, 1.0, 0.0
    %v5091 = vsel %vm5059, 1.0, 0.0
    %v5092 = vsel %vm5060, 1.0, 0.0
    %v5093 = vsel %vm5061, 1.0, 0.0
    %v5094 = vsel %vm5062, 1.0, 0.0
    %v5095 = vsel %vm5063, 1.0, 0.0
    %v5096 = vsel %vm5064, 1.0, 0.0
    %v5097 = vsel %vm5065, 1.0, 0.0
    %v5098 = vsel %vm5066, 1.0, 0.0
    %v5099 = vsel %vm5067, 1.0, 0.0
    %v5100 = vsel %vm5068, 1.0, 0.0
    %v5101 = vsel %vm5069, 1.0, 0.0
    %v5102 = vsel %vm5070, 1.0, 0.0
    %v5103 = vsel %vm5071, 1.0, 0.0
    %v5104 = vsel %vm5072, 1.0, 0.0
    %v5105 = vsel %vm5073, 1.0, 0.0
    %v5106 = vpack.c.bf16 %v5082, %v5074
    %v5107 = vpack.c.bf16 %v5083, %v5075
    %v5108 = vpack.c.bf16 %v5084, %v5076
    %v5109 = vpack.c.bf16 %v5085, %v5077
    %v5110 = vpack.c.bf16 %v5086, %v5078
    %v5111 = vpack.c.bf16 %v5087, %v5079
    %v5112 = vpack.c.bf16 %v5088, %v5080
    %v5113 = vpack.c.bf16 %v5089, %v5081
    %v5114 = vpack.c.bf16 %v5098, %v5090
    %v5115 = vpack.c.bf16 %v5099, %v5091
    %v5116 = vpack.c.bf16 %v5100, %v5092
    %v5117 = vpack.c.bf16 %v5101, %v5093
    %v5118 = vpack.c.bf16 %v5102, %v5094
    %v5119 = vpack.c.bf16 %v5103, %v5095
    %v5120 = vpack.c.bf16 %v5104, %v5096
    %v5121 = vpack.c.bf16 %v5105, %v5097
    %v5122 = vpack.c.bf16 %v5021, %v5020
    %v5123 = vpack.c.bf16 %v5023, %v5022
    %v5124 = vpack.c.bf16 %v5025, %v5024
    %v5125 = vpack.c.bf16 %v5027, %v5026
    %v5127 = vsel %vm191, %v5122, 0
    %v5130 = vsel %vm191, %v5123, 0
    %v5133 = vsel %vm191, %v5124, 0
    %v5136 = vsel %vm191, %v5125, 0
    %5138 = vmatprep.subr.bf16.mxu0 0
    %5139 = vmatpush1.bf16.msra.mxu0 0
    %5140 = vmatprep.subr.bf16.mxu0 0
    %5141 = vmatpush1.bf16.msra.mxu0 0
    %5142 = vmatprep.subr.bf16.mxu0 0
    %5143 = vmatpush1.bf16.msra.mxu0 0
    %5144 = vmatprep.subr.bf16.mxu0 0
    %5145 = vmatpush1.bf16.msra.mxu0 0
    %5146 = vmatprep.subr.bf16.mxu0 0
    %5147 = vmatpush1.bf16.msra.mxu0 0
    %5148 = vmatprep.subr.bf16.mxu0 0
    %5149 = vmatpush1.bf16.msra.mxu0 0
    %5150 = vmatprep.subr.bf16.mxu0 %v5115
    %5151 = vmatpush1.bf16.msra.mxu0 %v5114
    %5152 = vmatprep.subr.bf16.mxu0 %v5107
    %5153 = vmatpush1.bf16.msra.mxu0 %v5106
    %5154 = vmatprep.subr.bf16.mxu0 0
    %5155 = vmatpush2.bf16.msra.mxu0 0
    %5156 = vmatprep.subr.bf16.mxu0 0
    %5157 = vmatpush2.bf16.msra.mxu0 0
    %5158 = vmatprep.subr.bf16.mxu0 0
    %5159 = vmatpush2.bf16.msra.mxu0 0
    %5160 = vmatprep.subr.bf16.mxu0 0
    %5161 = vmatpush2.bf16.msra.mxu0 0
    %5162 = vmatprep.subr.bf16.mxu0 0
    %5163 = vmatpush2.bf16.msra.mxu0 0
    %5164 = vmatprep.subr.bf16.mxu0 0
    %5165 = vmatpush2.bf16.msra.mxu0 0
    %5166 = vmatprep.subr.bf16.mxu0 0
    %5167 = vmatpush2.bf16.msra.mxu0 0
    %5168 = vmatprep.subr.bf16.mxu0 0
    %5169 = vmatpush2.bf16.msra.mxu0 0
    %5170 = vmatprep.mubr.bf16.mxu0 0
    %5171 = vmatmul.mubr.bf16.gmra.mxu0 %v5127
    %v5172 = vpop.f32.mrf.mxu0
    %v5173 = vadd.f32 0.0, %v5172
    %v5174 = vpop.f32.mrf.mxu0
    %v5175 = vadd.f32 0.0, %v5174
    %v5176 = vpop.f32.mrf.mxu0
    %v5177 = vadd.f32 0.0, %v5176
    %v5178 = vpop.f32.mrf.mxu0
    %v5179 = vadd.f32 0.0, %v5178
    %5180 = vmatprep.mubr.bf16.mxu0 0
    %5181 = vmatmul.mubr.bf16.gmra.mxu0 %v5130
    %v5182 = vpop.f32.mrf.mxu0
    %v5183 = vadd.f32 0.0, %v5182
    %v5184 = vpop.f32.mrf.mxu0
    %v5185 = vadd.f32 0.0, %v5184
    %v5186 = vpop.f32.mrf.mxu0
    %v5187 = vadd.f32 0.0, %v5186
    %v5188 = vpop.f32.mrf.mxu0
    %v5189 = vadd.f32 0.0, %v5188
    %5190 = vmatprep.mubr.bf16.mxu0 0
    %5191 = vmatmul.mubr.bf16.gmra.mxu0 %v5133
    %v5192 = vpop.f32.mrf.mxu0
    %v5193 = vadd.f32 0.0, %v5192
    %v5194 = vpop.f32.mrf.mxu0
    %v5195 = vadd.f32 0.0, %v5194
    %v5196 = vpop.f32.mrf.mxu0
    %v5197 = vadd.f32 0.0, %v5196
    %v5198 = vpop.f32.mrf.mxu0
    %v5199 = vadd.f32 0.0, %v5198
    %5200 = vmatprep.mubr.bf16.mxu0 0
    %5201 = vmatmul.mubr.bf16.gmra.mxu0 %v5136
    %v5202 = vpop.f32.mrf.mxu0
    %v5203 = vadd.f32 0.0, %v5202
    %v5204 = vpop.f32.mrf.mxu0
    %v5205 = vadd.f32 0.0, %v5204
    %v5206 = vpop.f32.mrf.mxu0
    %v5207 = vadd.f32 0.0, %v5206
    %v5208 = vpop.f32.mrf.mxu0
    %v5209 = vadd.f32 0.0, %v5208
    %5210 = vdwg.mxu0
    %5211 = vmatprep.subr.bf16.mxu0 0
    %5212 = vmatpush1.bf16.msra.mxu0 0
    %5213 = vmatprep.subr.bf16.mxu0 0
    %5214 = vmatpush1.bf16.msra.mxu0 0
    %5215 = vmatprep.subr.bf16.mxu0 0
    %5216 = vmatpush1.bf16.msra.mxu0 0
    %5217 = vmatprep.subr.bf16.mxu0 0
    %5218 = vmatpush1.bf16.msra.mxu0 0
    %5219 = vmatprep.subr.bf16.mxu0 0
    %5220 = vmatpush1.bf16.msra.mxu0 0
    %5221 = vmatprep.subr.bf16.mxu0 0
    %5222 = vmatpush1.bf16.msra.mxu0 0
    %5223 = vmatprep.subr.bf16.mxu0 %v5117
    %5224 = vmatpush1.bf16.msra.mxu0 %v5116
    %5225 = vmatprep.subr.bf16.mxu0 %v5109
    %5226 = vmatpush1.bf16.msra.mxu0 %v5108
    %5227 = vmatprep.subr.bf16.mxu0 0
    %5228 = vmatpush2.bf16.msra.mxu0 0
    %5229 = vmatprep.subr.bf16.mxu0 0
    %5230 = vmatpush2.bf16.msra.mxu0 0
    %5231 = vmatprep.subr.bf16.mxu0 0
    %5232 = vmatpush2.bf16.msra.mxu0 0
    %5233 = vmatprep.subr.bf16.mxu0 0
    %5234 = vmatpush2.bf16.msra.mxu0 0
    %5235 = vmatprep.subr.bf16.mxu0 0
    %5236 = vmatpush2.bf16.msra.mxu0 0
    %5237 = vmatprep.subr.bf16.mxu0 0
    %5238 = vmatpush2.bf16.msra.mxu0 0
    %5239 = vmatprep.subr.bf16.mxu0 0
    %5240 = vmatpush2.bf16.msra.mxu0 0
    %5241 = vmatprep.subr.bf16.mxu0 0
    %5242 = vmatpush2.bf16.msra.mxu0 0
    %5243 = vmatprep.mubr.bf16.mxu0 0
    %5244 = vmatmul.mubr.bf16.gmra.mxu0 %v5127
    %v5245 = vpop.f32.mrf.mxu0
    %v5246 = vadd.f32 0.0, %v5245
    %v5247 = vpop.f32.mrf.mxu0
    %v5248 = vadd.f32 0.0, %v5247
    %v5249 = vpop.f32.mrf.mxu0
    %v5250 = vadd.f32 0.0, %v5249
    %v5251 = vpop.f32.mrf.mxu0
    %v5252 = vadd.f32 0.0, %v5251
    %5253 = vmatprep.mubr.bf16.mxu0 0
    %5254 = vmatmul.mubr.bf16.gmra.mxu0 %v5130
    %v5255 = vpop.f32.mrf.mxu0
    %v5256 = vadd.f32 0.0, %v5255
    %v5257 = vpop.f32.mrf.mxu0
    %v5258 = vadd.f32 0.0, %v5257
    %v5259 = vpop.f32.mrf.mxu0
    %v5260 = vadd.f32 0.0, %v5259
    %v5261 = vpop.f32.mrf.mxu0
    %v5262 = vadd.f32 0.0, %v5261
    %5263 = vmatprep.mubr.bf16.mxu0 0
    %5264 = vmatmul.mubr.bf16.gmra.mxu0 %v5133
    %v5265 = vpop.f32.mrf.mxu0
    %v5266 = vadd.f32 0.0, %v5265
    %v5267 = vpop.f32.mrf.mxu0
    %v5268 = vadd.f32 0.0, %v5267
    %v5269 = vpop.f32.mrf.mxu0
    %v5270 = vadd.f32 0.0, %v5269
    %v5271 = vpop.f32.mrf.mxu0
    %v5272 = vadd.f32 0.0, %v5271
    %5273 = vmatprep.mubr.bf16.mxu0 0
    %5274 = vmatmul.mubr.bf16.gmra.mxu0 %v5136
    %v5275 = vpop.f32.mrf.mxu0
    %v5276 = vadd.f32 0.0, %v5275
    %v5277 = vpop.f32.mrf.mxu0
    %v5278 = vadd.f32 0.0, %v5277
    %v5279 = vpop.f32.mrf.mxu0
    %v5280 = vadd.f32 0.0, %v5279
    %v5281 = vpop.f32.mrf.mxu0
    %v5282 = vadd.f32 0.0, %v5281
    %5283 = vdwg.mxu0
    %5284 = vmatprep.subr.bf16.mxu0 0
    %5285 = vmatpush1.bf16.msra.mxu0 0
    %5286 = vmatprep.subr.bf16.mxu0 0
    %5287 = vmatpush1.bf16.msra.mxu0 0
    %5288 = vmatprep.subr.bf16.mxu0 0
    %5289 = vmatpush1.bf16.msra.mxu0 0
    %5290 = vmatprep.subr.bf16.mxu0 0
    %5291 = vmatpush1.bf16.msra.mxu0 0
    %5292 = vmatprep.subr.bf16.mxu0 0
    %5293 = vmatpush1.bf16.msra.mxu0 0
    %5294 = vmatprep.subr.bf16.mxu0 0
    %5295 = vmatpush1.bf16.msra.mxu0 0
    %5296 = vmatprep.subr.bf16.mxu0 %v5119
    %5297 = vmatpush1.bf16.msra.mxu0 %v5118
    %5298 = vmatprep.subr.bf16.mxu0 %v5111
    %5299 = vmatpush1.bf16.msra.mxu0 %v5110
    %5300 = vmatprep.subr.bf16.mxu0 0
    %5301 = vmatpush2.bf16.msra.mxu0 0
    %5302 = vmatprep.subr.bf16.mxu0 0
    %5303 = vmatpush2.bf16.msra.mxu0 0
    %5304 = vmatprep.subr.bf16.mxu0 0
    %5305 = vmatpush2.bf16.msra.mxu0 0
    %5306 = vmatprep.subr.bf16.mxu0 0
    %5307 = vmatpush2.bf16.msra.mxu0 0
    %5308 = vmatprep.subr.bf16.mxu0 0
    %5309 = vmatpush2.bf16.msra.mxu0 0
    %5310 = vmatprep.subr.bf16.mxu0 0
    %5311 = vmatpush2.bf16.msra.mxu0 0
    %5312 = vmatprep.subr.bf16.mxu0 0
    %5313 = vmatpush2.bf16.msra.mxu0 0
    %5314 = vmatprep.subr.bf16.mxu0 0
    %5315 = vmatpush2.bf16.msra.mxu0 0
    %5316 = vmatprep.mubr.bf16.mxu0 0
    %5317 = vmatmul.mubr.bf16.gmra.mxu0 %v5127
    %v5318 = vpop.f32.mrf.mxu0
    %v5319 = vadd.f32 0.0, %v5318
    %v5320 = vpop.f32.mrf.mxu0
    %v5321 = vadd.f32 0.0, %v5320
    %v5322 = vpop.f32.mrf.mxu0
    %v5323 = vadd.f32 0.0, %v5322
    %v5324 = vpop.f32.mrf.mxu0
    %v5325 = vadd.f32 0.0, %v5324
    %5326 = vmatprep.mubr.bf16.mxu0 0
    %5327 = vmatmul.mubr.bf16.gmra.mxu0 %v5130
    %v5328 = vpop.f32.mrf.mxu0
    %v5329 = vadd.f32 0.0, %v5328
    %v5330 = vpop.f32.mrf.mxu0
    %v5331 = vadd.f32 0.0, %v5330
    %v5332 = vpop.f32.mrf.mxu0
    %v5333 = vadd.f32 0.0, %v5332
    %v5334 = vpop.f32.mrf.mxu0
    %v5335 = vadd.f32 0.0, %v5334
    %5336 = vmatprep.mubr.bf16.mxu0 0
    %5337 = vmatmul.mubr.bf16.gmra.mxu0 %v5133
    %v5338 = vpop.f32.mrf.mxu0
    %v5339 = vadd.f32 0.0, %v5338
    %v5340 = vpop.f32.mrf.mxu0
    %v5341 = vadd.f32 0.0, %v5340
    %v5342 = vpop.f32.mrf.mxu0
    %v5343 = vadd.f32 0.0, %v5342
    %v5344 = vpop.f32.mrf.mxu0
    %v5345 = vadd.f32 0.0, %v5344
    %5346 = vmatprep.mubr.bf16.mxu0 0
    %5347 = vmatmul.mubr.bf16.gmra.mxu0 %v5136
    %v5348 = vpop.f32.mrf.mxu0
    %v5349 = vadd.f32 0.0, %v5348
    %v5350 = vpop.f32.mrf.mxu0
    %v5351 = vadd.f32 0.0, %v5350
    %v5352 = vpop.f32.mrf.mxu0
    %v5353 = vadd.f32 0.0, %v5352
    %v5354 = vpop.f32.mrf.mxu0
    %v5355 = vadd.f32 0.0, %v5354
    %5356 = vdwg.mxu0
    %5357 = vmatprep.subr.bf16.mxu0 0
    %5358 = vmatpush1.bf16.msra.mxu0 0
    %5359 = vmatprep.subr.bf16.mxu0 0
    %5360 = vmatpush1.bf16.msra.mxu0 0
    %5361 = vmatprep.subr.bf16.mxu0 0
    %5362 = vmatpush1.bf16.msra.mxu0 0
    %5363 = vmatprep.subr.bf16.mxu0 0
    %5364 = vmatpush1.bf16.msra.mxu0 0
    %5365 = vmatprep.subr.bf16.mxu0 0
    %5366 = vmatpush1.bf16.msra.mxu0 0
    %5367 = vmatprep.subr.bf16.mxu0 0
    %5368 = vmatpush1.bf16.msra.mxu0 0
    %5369 = vmatprep.subr.bf16.mxu0 %v5121
    %5370 = vmatpush1.bf16.msra.mxu0 %v5120
    %5371 = vmatprep.subr.bf16.mxu0 %v5113
    %5372 = vmatpush1.bf16.msra.mxu0 %v5112
    %5373 = vmatprep.subr.bf16.mxu0 0
    %5374 = vmatpush2.bf16.msra.mxu0 0
    %5375 = vmatprep.subr.bf16.mxu0 0
    %5376 = vmatpush2.bf16.msra.mxu0 0
    %5377 = vmatprep.subr.bf16.mxu0 0
    %5378 = vmatpush2.bf16.msra.mxu0 0
    %5379 = vmatprep.subr.bf16.mxu0 0
    %5380 = vmatpush2.bf16.msra.mxu0 0
    %5381 = vmatprep.subr.bf16.mxu0 0
    %5382 = vmatpush2.bf16.msra.mxu0 0
    %5383 = vmatprep.subr.bf16.mxu0 0
    %5384 = vmatpush2.bf16.msra.mxu0 0
    %5385 = vmatprep.subr.bf16.mxu0 0
    %5386 = vmatpush2.bf16.msra.mxu0 0
    %5387 = vmatprep.subr.bf16.mxu0 0
    %5388 = vmatpush2.bf16.msra.mxu0 0
    %5389 = vmatprep.mubr.bf16.mxu0 0
    %5390 = vmatmul.mubr.bf16.gmra.mxu0 %v5127
    %v5391 = vpop.f32.mrf.mxu0
    %v5392 = vadd.f32 0.0, %v5391
    %v5393 = vpop.f32.mrf.mxu0
    %v5394 = vadd.f32 0.0, %v5393
    %v5395 = vpop.f32.mrf.mxu0
    %v5396 = vadd.f32 0.0, %v5395
    %v5397 = vpop.f32.mrf.mxu0
    %v5398 = vadd.f32 0.0, %v5397
    %5399 = vmatprep.mubr.bf16.mxu0 0
    %5400 = vmatmul.mubr.bf16.gmra.mxu0 %v5130
    %v5401 = vpop.f32.mrf.mxu0
    %v5402 = vadd.f32 0.0, %v5401
    %v5403 = vpop.f32.mrf.mxu0
    %v5404 = vadd.f32 0.0, %v5403
    %v5405 = vpop.f32.mrf.mxu0
    %v5406 = vadd.f32 0.0, %v5405
    %v5407 = vpop.f32.mrf.mxu0
    %v5408 = vadd.f32 0.0, %v5407
    %5409 = vmatprep.mubr.bf16.mxu0 0
    %5410 = vmatmul.mubr.bf16.gmra.mxu0 %v5133
    %v5411 = vpop.f32.mrf.mxu0
    %v5412 = vadd.f32 0.0, %v5411
    %v5413 = vpop.f32.mrf.mxu0
    %v5414 = vadd.f32 0.0, %v5413
    %v5415 = vpop.f32.mrf.mxu0
    %v5416 = vadd.f32 0.0, %v5415
    %v5417 = vpop.f32.mrf.mxu0
    %v5418 = vadd.f32 0.0, %v5417
    %5419 = vmatprep.mubr.bf16.mxu0 0
    %5420 = vmatmul.mubr.bf16.gmra.mxu0 %v5136
    %v5421 = vpop.f32.mrf.mxu0
    %v5422 = vadd.f32 0.0, %v5421
    %v5423 = vpop.f32.mrf.mxu0
    %v5424 = vadd.f32 0.0, %v5423
    %v5425 = vpop.f32.mrf.mxu0
    %v5426 = vadd.f32 0.0, %v5425
    %v5427 = vpop.f32.mrf.mxu0
    %v5428 = vadd.f32 0.0, %v5427
    %5429 = vdwg.mxu0
    %v5430 = vshra.s32 %v319, 5
    %v5431 = vshra.s32 %v5028, 5
    %v5432 = vshra.s32 %v5029, 5
    %v5433 = vshra.s32 %v5030, 5
    %v5434 = vshra.s32 %v5031, 5
    %v5435 = vshra.s32 %v5032, 5
    %v5436 = vshra.s32 %v5033, 5
    %vm5437 = vcmp.eq.s32.totalorder %v876, %v489
    %vm5438 = vcmp.eq.s32.totalorder %v5430, %v489
    %vm5439 = vcmp.eq.s32.totalorder %v5431, %v489
    %vm5440 = vcmp.eq.s32.totalorder %v5432, %v489
    %vm5441 = vcmp.eq.s32.totalorder %v5433, %v489
    %vm5442 = vcmp.eq.s32.totalorder %v5434, %v489
    %vm5443 = vcmp.eq.s32.totalorder %v5435, %v489
    %vm5444 = vcmp.eq.s32.totalorder %v5436, %v489
    %vm5445 = vcmp.eq.s32.totalorder %v876, %v490
    %vm5446 = vcmp.eq.s32.totalorder %v5430, %v490
    %vm5447 = vcmp.eq.s32.totalorder %v5431, %v490
    %vm5448 = vcmp.eq.s32.totalorder %v5432, %v490
    %vm5449 = vcmp.eq.s32.totalorder %v5433, %v490
    %vm5450 = vcmp.eq.s32.totalorder %v5434, %v490
    %vm5451 = vcmp.eq.s32.totalorder %v5435, %v490
    %vm5452 = vcmp.eq.s32.totalorder %v5436, %v490
    %vm5453 = vcmp.eq.s32.totalorder %v876, %v491
    %vm5454 = vcmp.eq.s32.totalorder %v5430, %v491
    %vm5455 = vcmp.eq.s32.totalorder %v5431, %v491
    %vm5456 = vcmp.eq.s32.totalorder %v5432, %v491
    %vm5457 = vcmp.eq.s32.totalorder %v5433, %v491
    %vm5458 = vcmp.eq.s32.totalorder %v5434, %v491
    %vm5459 = vcmp.eq.s32.totalorder %v5435, %v491
    %vm5460 = vcmp.eq.s32.totalorder %v5436, %v491
    %vm5461 = vcmp.eq.s32.totalorder %v876, %v492
    %vm5462 = vcmp.eq.s32.totalorder %v5430, %v492
    %vm5463 = vcmp.eq.s32.totalorder %v5431, %v492
    %vm5464 = vcmp.eq.s32.totalorder %v5432, %v492
    %vm5465 = vcmp.eq.s32.totalorder %v5433, %v492
    %vm5466 = vcmp.eq.s32.totalorder %v5434, %v492
    %vm5467 = vcmp.eq.s32.totalorder %v5435, %v492
    %vm5468 = vcmp.eq.s32.totalorder %v5436, %v492
    %vm5469 = vcmp.eq.s32.totalorder %v876, %v493
    %vm5470 = vcmp.eq.s32.totalorder %v5430, %v493
    %vm5471 = vcmp.eq.s32.totalorder %v5431, %v493
    %vm5472 = vcmp.eq.s32.totalorder %v5432, %v493
    %vm5473 = vcmp.eq.s32.totalorder %v5433, %v493
    %vm5474 = vcmp.eq.s32.totalorder %v5434, %v493
    %vm5475 = vcmp.eq.s32.totalorder %v5435, %v493
    %vm5476 = vcmp.eq.s32.totalorder %v5436, %v493
    %vm5477 = vcmp.eq.s32.totalorder %v876, %v494
    %vm5478 = vcmp.eq.s32.totalorder %v5430, %v494
    %vm5479 = vcmp.eq.s32.totalorder %v5431, %v494
    %vm5480 = vcmp.eq.s32.totalorder %v5432, %v494
    %vm5481 = vcmp.eq.s32.totalorder %v5433, %v494
    %vm5482 = vcmp.eq.s32.totalorder %v5434, %v494
    %vm5483 = vcmp.eq.s32.totalorder %v5435, %v494
    %vm5484 = vcmp.eq.s32.totalorder %v5436, %v494
    %vm5485 = vcmp.eq.s32.totalorder %v876, %v495
    %vm5486 = vcmp.eq.s32.totalorder %v5430, %v495
    %vm5487 = vcmp.eq.s32.totalorder %v5431, %v495
    %vm5488 = vcmp.eq.s32.totalorder %v5432, %v495
    %vm5489 = vcmp.eq.s32.totalorder %v5433, %v495
    %vm5490 = vcmp.eq.s32.totalorder %v5434, %v495
    %vm5491 = vcmp.eq.s32.totalorder %v5435, %v495
    %vm5492 = vcmp.eq.s32.totalorder %v5436, %v495
    %vm5493 = vcmp.eq.s32.totalorder %v876, %v496
    %vm5494 = vcmp.eq.s32.totalorder %v5430, %v496
    %vm5495 = vcmp.eq.s32.totalorder %v5431, %v496
    %vm5496 = vcmp.eq.s32.totalorder %v5432, %v496
    %vm5497 = vcmp.eq.s32.totalorder %v5433, %v496
    %vm5498 = vcmp.eq.s32.totalorder %v5434, %v496
    %vm5499 = vcmp.eq.s32.totalorder %v5435, %v496
    %vm5500 = vcmp.eq.s32.totalorder %v5436, %v496
    %v5501 = vsel %vm5437, %v5173, 0.0
    %v5502 = vsel %vm5438, %v5175, 0.0
    %v5503 = vsel %vm5439, %v5246, 0.0
    %v5504 = vsel %vm5440, %v5248, 0.0
    %v5505 = vsel %vm5441, %v5319, 0.0
    %v5506 = vsel %vm5442, %v5321, 0.0
    %v5507 = vsel %vm5443, %v5392, 0.0
    %v5508 = vsel %vm5444, %v5394, 0.0
    %v5509 = vsel %vm5445, %v5177, 0.0
    %v5510 = vsel %vm5446, %v5179, 0.0
    %v5511 = vsel %vm5447, %v5250, 0.0
    %v5512 = vsel %vm5448, %v5252, 0.0
    %v5513 = vsel %vm5449, %v5323, 0.0
    %v5514 = vsel %vm5450, %v5325, 0.0
    %v5515 = vsel %vm5451, %v5396, 0.0
    %v5516 = vsel %vm5452, %v5398, 0.0
    %v5517 = vsel %vm5453, %v5183, 0.0
    %v5518 = vsel %vm5454, %v5185, 0.0
    %v5519 = vsel %vm5455, %v5256, 0.0
    %v5520 = vsel %vm5456, %v5258, 0.0
    %v5521 = vsel %vm5457, %v5329, 0.0
    %v5522 = vsel %vm5458, %v5331, 0.0
    %v5523 = vsel %vm5459, %v5402, 0.0
    %v5524 = vsel %vm5460, %v5404, 0.0
    %v5525 = vsel %vm5461, %v5187, 0.0
    %v5526 = vsel %vm5462, %v5189, 0.0
    %v5527 = vsel %vm5463, %v5260, 0.0
    %v5528 = vsel %vm5464, %v5262, 0.0
    %v5529 = vsel %vm5465, %v5333, 0.0
    %v5530 = vsel %vm5466, %v5335, 0.0
    %v5531 = vsel %vm5467, %v5406, 0.0
    %v5532 = vsel %vm5468, %v5408, 0.0
    %v5533 = vsel %vm5469, %v5193, 0.0
    %v5534 = vsel %vm5470, %v5195, 0.0
    %v5535 = vsel %vm5471, %v5266, 0.0
    %v5536 = vsel %vm5472, %v5268, 0.0
    %v5537 = vsel %vm5473, %v5339, 0.0
    %v5538 = vsel %vm5474, %v5341, 0.0
    %v5539 = vsel %vm5475, %v5412, 0.0
    %v5540 = vsel %vm5476, %v5414, 0.0
    %v5541 = vsel %vm5477, %v5197, 0.0
    %v5542 = vsel %vm5478, %v5199, 0.0
    %v5543 = vsel %vm5479, %v5270, 0.0
    %v5544 = vsel %vm5480, %v5272, 0.0
    %v5545 = vsel %vm5481, %v5343, 0.0
    %v5546 = vsel %vm5482, %v5345, 0.0
    %v5547 = vsel %vm5483, %v5416, 0.0
    %v5548 = vsel %vm5484, %v5418, 0.0
    %v5549 = vsel %vm5485, %v5203, 0.0
    %v5550 = vsel %vm5486, %v5205, 0.0
    %v5551 = vsel %vm5487, %v5276, 0.0
    %v5552 = vsel %vm5488, %v5278, 0.0
    %v5553 = vsel %vm5489, %v5349, 0.0
    %v5554 = vsel %vm5490, %v5351, 0.0
    %v5555 = vsel %vm5491, %v5422, 0.0
    %v5556 = vsel %vm5492, %v5424, 0.0
    %v5557 = vsel %vm5493, %v5207, 0.0
    %v5558 = vsel %vm5494, %v5209, 0.0
    %v5559 = vsel %vm5495, %v5280, 0.0
    %v5560 = vsel %vm5496, %v5282, 0.0
    %v5561 = vsel %vm5497, %v5353, 0.0
    %v5562 = vsel %vm5498, %v5355, 0.0
    %v5563 = vsel %vm5499, %v5426, 0.0
    %v5564 = vsel %vm5500, %v5428, 0.0
    %v5565 = vpack.c.bf16 %v5509, %v5501
    %v5566 = vpack.c.bf16 %v5510, %v5502
    %v5567 = vpack.c.bf16 %v5511, %v5503
    %v5568 = vpack.c.bf16 %v5512, %v5504
    %v5569 = vpack.c.bf16 %v5513, %v5505
    %v5570 = vpack.c.bf16 %v5514, %v5506
    %v5571 = vpack.c.bf16 %v5515, %v5507
    %v5572 = vpack.c.bf16 %v5516, %v5508
    %v5573 = vpack.c.bf16 %v5525, %v5517
    %v5574 = vpack.c.bf16 %v5526, %v5518
    %v5575 = vpack.c.bf16 %v5527, %v5519
    %v5576 = vpack.c.bf16 %v5528, %v5520
    %v5577 = vpack.c.bf16 %v5529, %v5521
    %v5578 = vpack.c.bf16 %v5530, %v5522
    %v5579 = vpack.c.bf16 %v5531, %v5523
    %v5580 = vpack.c.bf16 %v5532, %v5524
    %v5581 = vpack.c.bf16 %v5541, %v5533
    %v5582 = vpack.c.bf16 %v5542, %v5534
    %v5583 = vpack.c.bf16 %v5543, %v5535
    %v5584 = vpack.c.bf16 %v5544, %v5536
    %v5585 = vpack.c.bf16 %v5545, %v5537
    %v5586 = vpack.c.bf16 %v5546, %v5538
    %v5587 = vpack.c.bf16 %v5547, %v5539
    %v5588 = vpack.c.bf16 %v5548, %v5540
    %v5589 = vpack.c.bf16 %v5557, %v5549
    %v5590 = vpack.c.bf16 %v5558, %v5550
    %v5591 = vpack.c.bf16 %v5559, %v5551
    %v5592 = vpack.c.bf16 %v5560, %v5552
    %v5593 = vpack.c.bf16 %v5561, %v5553
    %v5594 = vpack.c.bf16 %v5562, %v5554
    %v5595 = vpack.c.bf16 %v5563, %v5555
    %v5596 = vpack.c.bf16 %v5564, %v5556
    %v5597 = vld [vmem:[#allocation2] sm:$0xff]
    %v5598 = vld [vmem:[#allocation2 + $0x8] sm:$0xff]
    %v5599 = vld [vmem:[#allocation2 + $0x10] sm:$0xff]
    %v5600 = vld [vmem:[#allocation2 + $0x18] sm:$0xff]
    %v5601 = vld [vmem:[#allocation2 + $0x20] sm:$0xff]
    %v5602 = vld [vmem:[#allocation2 + $0x28] sm:$0xff]
    %v5603 = vld [vmem:[#allocation2 + $0x30] sm:$0xff]
    %v5604 = vld [vmem:[#allocation2 + $0x38] sm:$0xff]
    %v5605 = vld [vmem:[#allocation2 + $0x40] sm:$0xff]
    %v5606 = vld [vmem:[#allocation2 + $0x48] sm:$0xff]
    %v5607 = vld [vmem:[#allocation2 + $0x50] sm:$0xff]
    %v5608 = vld [vmem:[#allocation2 + $0x58] sm:$0xff]
    %v5609 = vld [vmem:[#allocation2 + $0x60] sm:$0xff]
    %v5610 = vld [vmem:[#allocation2 + $0x68] sm:$0xff]
    %v5611 = vld [vmem:[#allocation2 + $0x70] sm:$0xff]
    %v5612 = vld [vmem:[#allocation2 + $0x78] sm:$0xff]
    %v5613 = vld [vmem:[#allocation2 + $0x80] sm:$0xff]
    %v5614 = vld [vmem:[#allocation2 + $0x88] sm:$0xff]
    %v5615 = vld [vmem:[#allocation2 + $0x90] sm:$0xff]
    %v5616 = vld [vmem:[#allocation2 + $0x98] sm:$0xff]
    %v5617 = vld [vmem:[#allocation2 + $0xa0] sm:$0xff]
    %v5618 = vld [vmem:[#allocation2 + $0xa8] sm:$0xff]
    %v5619 = vld [vmem:[#allocation2 + $0xb0] sm:$0xff]
    %v5620 = vld [vmem:[#allocation2 + $0xb8] sm:$0xff]
    %v5621 = vld [vmem:[#allocation2 + $0xc0] sm:$0xff]
    %v5622 = vld [vmem:[#allocation2 + $0xc8] sm:$0xff]
    %v5623 = vld [vmem:[#allocation2 + $0xd0] sm:$0xff]
    %v5624 = vld [vmem:[#allocation2 + $0xd8] sm:$0xff]
    %v5625 = vld [vmem:[#allocation2 + $0xe0] sm:$0xff]
    %v5626 = vld [vmem:[#allocation2 + $0xe8] sm:$0xff]
    %v5627 = vld [vmem:[#allocation2 + $0xf0] sm:$0xff]
    %v5628 = vld [vmem:[#allocation2 + $0xf8] sm:$0xff]
    %v5629 = vld [vmem:[#allocation2 + $0x100] sm:$0xff]
    %v5630 = vld [vmem:[#allocation2 + $0x108] sm:$0xff]
    %v5631 = vld [vmem:[#allocation2 + $0x110] sm:$0xff]
    %v5632 = vld [vmem:[#allocation2 + $0x118] sm:$0xff]
    %v5633 = vld [vmem:[#allocation2 + $0x120] sm:$0xff]
    %v5634 = vld [vmem:[#allocation2 + $0x128] sm:$0xff]
    %v5635 = vld [vmem:[#allocation2 + $0x130] sm:$0xff]
    %v5636 = vld [vmem:[#allocation2 + $0x138] sm:$0xff]
    %v5637 = vld [vmem:[#allocation2 + $0x140] sm:$0xff]
    %v5638 = vld [vmem:[#allocation2 + $0x148] sm:$0xff]
    %v5639 = vld [vmem:[#allocation2 + $0x150] sm:$0xff]
    %v5640 = vld [vmem:[#allocation2 + $0x158] sm:$0xff]
    %v5641 = vld [vmem:[#allocation2 + $0x160] sm:$0xff]
    %v5642 = vld [vmem:[#allocation2 + $0x168] sm:$0xff]
    %v5643 = vld [vmem:[#allocation2 + $0x170] sm:$0xff]
    %v5644 = vld [vmem:[#allocation2 + $0x178] sm:$0xff]
    %v5645 = vld [vmem:[#allocation2 + $0x180] sm:$0xff]
    %v5646 = vld [vmem:[#allocation2 + $0x188] sm:$0xff]
    %v5647 = vld [vmem:[#allocation2 + $0x190] sm:$0xff]
    %v5648 = vld [vmem:[#allocation2 + $0x198] sm:$0xff]
    %v5649 = vld [vmem:[#allocation2 + $0x1a0] sm:$0xff]
    %v5650 = vld [vmem:[#allocation2 + $0x1a8] sm:$0xff]
    %v5651 = vld [vmem:[#allocation2 + $0x1b0] sm:$0xff]
    %v5652 = vld [vmem:[#allocation2 + $0x1b8] sm:$0xff]
    %v5653 = vld [vmem:[#allocation2 + $0x1c0] sm:$0xff]
    %v5654 = vld [vmem:[#allocation2 + $0x1c8] sm:$0xff]
    %v5655 = vld [vmem:[#allocation2 + $0x1d0] sm:$0xff]
    %v5656 = vld [vmem:[#allocation2 + $0x1d8] sm:$0xff]
    %v5657 = vld [vmem:[#allocation2 + $0x1e0] sm:$0xff]
    %v5658 = vld [vmem:[#allocation2 + $0x1e8] sm:$0xff]
    %v5659 = vld [vmem:[#allocation2 + $0x1f0] sm:$0xff]
    %v5660 = vld [vmem:[#allocation2 + $0x1f8] sm:$0xff]
    %v5661 = vld [vmem:[#allocation2 + $0x200] sm:$0xff]
    %v5662 = vld [vmem:[#allocation2 + $0x208] sm:$0xff]
    %v5663 = vld [vmem:[#allocation2 + $0x210] sm:$0xff]
    %v5664 = vld [vmem:[#allocation2 + $0x218] sm:$0xff]
    %v5665 = vld [vmem:[#allocation2 + $0x220] sm:$0xff]
    %v5666 = vld [vmem:[#allocation2 + $0x228] sm:$0xff]
    %v5667 = vld [vmem:[#allocation2 + $0x230] sm:$0xff]
    %v5668 = vld [vmem:[#allocation2 + $0x238] sm:$0xff]
    %v5669 = vld [vmem:[#allocation2 + $0x240] sm:$0xff]
    %v5670 = vld [vmem:[#allocation2 + $0x248] sm:$0xff]
    %v5671 = vld [vmem:[#allocation2 + $0x250] sm:$0xff]
    %v5672 = vld [vmem:[#allocation2 + $0x258] sm:$0xff]
    %v5673 = vld [vmem:[#allocation2 + $0x260] sm:$0xff]
    %v5674 = vld [vmem:[#allocation2 + $0x268] sm:$0xff]
    %v5675 = vld [vmem:[#allocation2 + $0x270] sm:$0xff]
    %v5676 = vld [vmem:[#allocation2 + $0x278] sm:$0xff]
    %v5677 = vld [vmem:[#allocation2 + $0x280] sm:$0xff]
    %v5678 = vld [vmem:[#allocation2 + $0x288] sm:$0xff]
    %v5679 = vld [vmem:[#allocation2 + $0x290] sm:$0xff]
    %v5680 = vld [vmem:[#allocation2 + $0x298] sm:$0xff]
    %v5681 = vld [vmem:[#allocation2 + $0x2a0] sm:$0xff]
    %v5682 = vld [vmem:[#allocation2 + $0x2a8] sm:$0xff]
    %v5683 = vld [vmem:[#allocation2 + $0x2b0] sm:$0xff]
    %v5684 = vld [vmem:[#allocation2 + $0x2b8] sm:$0xff]
    %v5685 = vld [vmem:[#allocation2 + $0x2c0] sm:$0xff]
    %v5686 = vld [vmem:[#allocation2 + $0x2c8] sm:$0xff]
    %v5687 = vld [vmem:[#allocation2 + $0x2d0] sm:$0xff]
    %v5688 = vld [vmem:[#allocation2 + $0x2d8] sm:$0xff]
    %v5689 = vld [vmem:[#allocation2 + $0x2e0] sm:$0xff]
    %v5690 = vld [vmem:[#allocation2 + $0x2e8] sm:$0xff]
    %v5691 = vld [vmem:[#allocation2 + $0x2f0] sm:$0xff]
    %v5692 = vld [vmem:[#allocation2 + $0x2f8] sm:$0xff]
    %v5693 = vld [vmem:[#allocation2 + $0x300] sm:$0xff]
    %v5694 = vld [vmem:[#allocation2 + $0x308] sm:$0xff]
    %v5695 = vld [vmem:[#allocation2 + $0x310] sm:$0xff]
    %v5696 = vld [vmem:[#allocation2 + $0x318] sm:$0xff]
    %v5697 = vld [vmem:[#allocation2 + $0x320] sm:$0xff]
    %v5698 = vld [vmem:[#allocation2 + $0x328] sm:$0xff]
    %v5699 = vld [vmem:[#allocation2 + $0x330] sm:$0xff]
    %v5700 = vld [vmem:[#allocation2 + $0x338] sm:$0xff]
    %v5701 = vld [vmem:[#allocation2 + $0x340] sm:$0xff]
    %v5702 = vld [vmem:[#allocation2 + $0x348] sm:$0xff]
    %v5703 = vld [vmem:[#allocation2 + $0x350] sm:$0xff]
    %v5704 = vld [vmem:[#allocation2 + $0x358] sm:$0xff]
    %v5705 = vld [vmem:[#allocation2 + $0x360] sm:$0xff]
    %v5706 = vld [vmem:[#allocation2 + $0x368] sm:$0xff]
    %v5707 = vld [vmem:[#allocation2 + $0x370] sm:$0xff]
    %v5708 = vld [vmem:[#allocation2 + $0x378] sm:$0xff]
    %v5709 = vld [vmem:[#allocation2 + $0x380] sm:$0xff]
    %v5710 = vld [vmem:[#allocation2 + $0x388] sm:$0xff]
    %v5711 = vld [vmem:[#allocation2 + $0x390] sm:$0xff]
    %v5712 = vld [vmem:[#allocation2 + $0x398] sm:$0xff]
    %v5713 = vld [vmem:[#allocation2 + $0x3a0] sm:$0xff]
    %v5714 = vld [vmem:[#allocation2 + $0x3a8] sm:$0xff]
    %v5715 = vld [vmem:[#allocation2 + $0x3b0] sm:$0xff]
    %v5716 = vld [vmem:[#allocation2 + $0x3b8] sm:$0xff]
    %v5717 = vld [vmem:[#allocation2 + $0x3c0] sm:$0xff]
    %v5718 = vld [vmem:[#allocation2 + $0x3c8] sm:$0xff]
    %v5719 = vld [vmem:[#allocation2 + $0x3d0] sm:$0xff]
    %v5720 = vld [vmem:[#allocation2 + $0x3d8] sm:$0xff]
    %v5721 = vld [vmem:[#allocation2 + $0x3e0] sm:$0xff]
    %v5722 = vld [vmem:[#allocation2 + $0x3e8] sm:$0xff]
    %v5723 = vld [vmem:[#allocation2 + $0x3f0] sm:$0xff]
    %v5724 = vld [vmem:[#allocation2 + $0x3f8] sm:$0xff]
    %v5725 = vld [vmem:[#allocation2 + $0x400] sm:$0xff]
    %v5726 = vld [vmem:[#allocation2 + $0x408] sm:$0xff]
    %v5727 = vld [vmem:[#allocation2 + $0x410] sm:$0xff]
    %v5728 = vld [vmem:[#allocation2 + $0x418] sm:$0xff]
    %v5729 = vld [vmem:[#allocation2 + $0x420] sm:$0xff]
    %v5730 = vld [vmem:[#allocation2 + $0x428] sm:$0xff]
    %v5731 = vld [vmem:[#allocation2 + $0x430] sm:$0xff]
    %v5732 = vld [vmem:[#allocation2 + $0x438] sm:$0xff]
    %v5733 = vld [vmem:[#allocation2 + $0x440] sm:$0xff]
    %v5734 = vld [vmem:[#allocation2 + $0x448] sm:$0xff]
    %v5735 = vld [vmem:[#allocation2 + $0x450] sm:$0xff]
    %v5736 = vld [vmem:[#allocation2 + $0x458] sm:$0xff]
    %v5737 = vld [vmem:[#allocation2 + $0x460] sm:$0xff]
    %v5738 = vld [vmem:[#allocation2 + $0x468] sm:$0xff]
    %v5739 = vld [vmem:[#allocation2 + $0x470] sm:$0xff]
    %v5740 = vld [vmem:[#allocation2 + $0x478] sm:$0xff]
    %v5741 = vld [vmem:[#allocation2 + $0x480] sm:$0xff]
    %v5742 = vld [vmem:[#allocation2 + $0x488] sm:$0xff]
    %v5743 = vld [vmem:[#allocation2 + $0x490] sm:$0xff]
    %v5744 = vld [vmem:[#allocation2 + $0x498] sm:$0xff]
    %v5745 = vld [vmem:[#allocation2 + $0x4a0] sm:$0xff]
    %v5746 = vld [vmem:[#allocation2 + $0x4a8] sm:$0xff]
    %v5747 = vld [vmem:[#allocation2 + $0x4b0] sm:$0xff]
    %v5748 = vld [vmem:[#allocation2 + $0x4b8] sm:$0xff]
    %v5749 = vld [vmem:[#allocation2 + $0x4c0] sm:$0xff]
    %v5750 = vld [vmem:[#allocation2 + $0x4c8] sm:$0xff]
    %v5751 = vld [vmem:[#allocation2 + $0x4d0] sm:$0xff]
    %v5752 = vld [vmem:[#allocation2 + $0x4d8] sm:$0xff]
    %v5753 = vld [vmem:[#allocation2 + $0x4e0] sm:$0xff]
    %v5754 = vld [vmem:[#allocation2 + $0x4e8] sm:$0xff]
    %v5755 = vld [vmem:[#allocation2 + $0x4f0] sm:$0xff]
    %v5756 = vld [vmem:[#allocation2 + $0x4f8] sm:$0xff]
    %v5757 = vld [vmem:[#allocation2 + $0x500] sm:$0xff]
    %v5758 = vld [vmem:[#allocation2 + $0x508] sm:$0xff]
    %v5759 = vld [vmem:[#allocation2 + $0x510] sm:$0xff]
    %v5760 = vld [vmem:[#allocation2 + $0x518] sm:$0xff]
    %v5761 = vld [vmem:[#allocation2 + $0x520] sm:$0xff]
    %v5762 = vld [vmem:[#allocation2 + $0x528] sm:$0xff]
    %v5763 = vld [vmem:[#allocation2 + $0x530] sm:$0xff]
    %v5764 = vld [vmem:[#allocation2 + $0x538] sm:$0xff]
    %v5765 = vld [vmem:[#allocation2 + $0x540] sm:$0xff]
    %v5766 = vld [vmem:[#allocation2 + $0x548] sm:$0xff]
    %v5767 = vld [vmem:[#allocation2 + $0x550] sm:$0xff]
    %v5768 = vld [vmem:[#allocation2 + $0x558] sm:$0xff]
    %v5769 = vld [vmem:[#allocation2 + $0x560] sm:$0xff]
    %v5770 = vld [vmem:[#allocation2 + $0x568] sm:$0xff]
    %v5771 = vld [vmem:[#allocation2 + $0x570] sm:$0xff]
    %v5772 = vld [vmem:[#allocation2 + $0x578] sm:$0xff]
    %v5773 = vld [vmem:[#allocation2 + $0x580] sm:$0xff]
    %v5774 = vld [vmem:[#allocation2 + $0x588] sm:$0xff]
    %v5775 = vld [vmem:[#allocation2 + $0x590] sm:$0xff]
    %v5776 = vld [vmem:[#allocation2 + $0x598] sm:$0xff]
    %v5777 = vld [vmem:[#allocation2 + $0x5a0] sm:$0xff]
    %v5778 = vld [vmem:[#allocation2 + $0x5a8] sm:$0xff]
    %v5779 = vld [vmem:[#allocation2 + $0x5b0] sm:$0xff]
    %v5780 = vld [vmem:[#allocation2 + $0x5b8] sm:$0xff]
    %v5781 = vld [vmem:[#allocation2 + $0x5c0] sm:$0xff]
    %v5782 = vld [vmem:[#allocation2 + $0x5c8] sm:$0xff]
    %v5783 = vld [vmem:[#allocation2 + $0x5d0] sm:$0xff]
    %v5784 = vld [vmem:[#allocation2 + $0x5d8] sm:$0xff]
    %v5785 = vld [vmem:[#allocation2 + $0x5e0] sm:$0xff]
    %v5786 = vld [vmem:[#allocation2 + $0x5e8] sm:$0xff]
    %v5787 = vld [vmem:[#allocation2 + $0x5f0] sm:$0xff]
    %v5788 = vld [vmem:[#allocation2 + $0x5f8] sm:$0xff]
    %v5789 = vld [vmem:[#allocation2 + $0x600] sm:$0xff]
    %v5790 = vld [vmem:[#allocation2 + $0x608] sm:$0xff]
    %v5791 = vld [vmem:[#allocation2 + $0x610] sm:$0xff]
    %v5792 = vld [vmem:[#allocation2 + $0x618] sm:$0xff]
    %v5793 = vld [vmem:[#allocation2 + $0x620] sm:$0xff]
    %v5794 = vld [vmem:[#allocation2 + $0x628] sm:$0xff]
    %v5795 = vld [vmem:[#allocation2 + $0x630] sm:$0xff]
    %v5796 = vld [vmem:[#allocation2 + $0x638] sm:$0xff]
    %v5797 = vld [vmem:[#allocation2 + $0x640] sm:$0xff]
    %v5798 = vld [vmem:[#allocation2 + $0x648] sm:$0xff]
    %v5799 = vld [vmem:[#allocation2 + $0x650] sm:$0xff]
    %v5800 = vld [vmem:[#allocation2 + $0x658] sm:$0xff]
    %v5801 = vld [vmem:[#allocation2 + $0x660] sm:$0xff]
    %v5802 = vld [vmem:[#allocation2 + $0x668] sm:$0xff]
    %v5803 = vld [vmem:[#allocation2 + $0x670] sm:$0xff]
    %v5804 = vld [vmem:[#allocation2 + $0x678] sm:$0xff]
    %v5805 = vld [vmem:[#allocation2 + $0x680] sm:$0xff]
    %v5806 = vld [vmem:[#allocation2 + $0x688] sm:$0xff]
    %v5807 = vld [vmem:[#allocation2 + $0x690] sm:$0xff]
    %v5808 = vld [vmem:[#allocation2 + $0x698] sm:$0xff]
    %v5809 = vld [vmem:[#allocation2 + $0x6a0] sm:$0xff]
    %v5810 = vld [vmem:[#allocation2 + $0x6a8] sm:$0xff]
    %v5811 = vld [vmem:[#allocation2 + $0x6b0] sm:$0xff]
    %v5812 = vld [vmem:[#allocation2 + $0x6b8] sm:$0xff]
    %v5813 = vld [vmem:[#allocation2 + $0x6c0] sm:$0xff]
    %v5814 = vld [vmem:[#allocation2 + $0x6c8] sm:$0xff]
    %v5815 = vld [vmem:[#allocation2 + $0x6d0] sm:$0xff]
    %v5816 = vld [vmem:[#allocation2 + $0x6d8] sm:$0xff]
    %v5817 = vld [vmem:[#allocation2 + $0x6e0] sm:$0xff]
    %v5818 = vld [vmem:[#allocation2 + $0x6e8] sm:$0xff]
    %v5819 = vld [vmem:[#allocation2 + $0x6f0] sm:$0xff]
    %v5820 = vld [vmem:[#allocation2 + $0x6f8] sm:$0xff]
    %v5821 = vld [vmem:[#allocation2 + $0x700] sm:$0xff]
    %v5822 = vld [vmem:[#allocation2 + $0x708] sm:$0xff]
    %v5823 = vld [vmem:[#allocation2 + $0x710] sm:$0xff]
    %v5824 = vld [vmem:[#allocation2 + $0x718] sm:$0xff]
    %v5825 = vld [vmem:[#allocation2 + $0x720] sm:$0xff]
    %v5826 = vld [vmem:[#allocation2 + $0x728] sm:$0xff]
    %v5827 = vld [vmem:[#allocation2 + $0x730] sm:$0xff]
    %v5828 = vld [vmem:[#allocation2 + $0x738] sm:$0xff]
    %v5829 = vld [vmem:[#allocation2 + $0x740] sm:$0xff]
    %v5830 = vld [vmem:[#allocation2 + $0x748] sm:$0xff]
    %v5831 = vld [vmem:[#allocation2 + $0x750] sm:$0xff]
    %v5832 = vld [vmem:[#allocation2 + $0x758] sm:$0xff]
    %v5833 = vld [vmem:[#allocation2 + $0x760] sm:$0xff]
    %v5834 = vld [vmem:[#allocation2 + $0x768] sm:$0xff]
    %v5835 = vld [vmem:[#allocation2 + $0x770] sm:$0xff]
    %v5836 = vld [vmem:[#allocation2 + $0x778] sm:$0xff]
    %v5837 = vld [vmem:[#allocation2 + $0x780] sm:$0xff]
    %v5838 = vld [vmem:[#allocation2 + $0x788] sm:$0xff]
    %v5839 = vld [vmem:[#allocation2 + $0x790] sm:$0xff]
    %v5840 = vld [vmem:[#allocation2 + $0x798] sm:$0xff]
    %v5841 = vld [vmem:[#allocation2 + $0x7a0] sm:$0xff]
    %v5842 = vld [vmem:[#allocation2 + $0x7a8] sm:$0xff]
    %v5843 = vld [vmem:[#allocation2 + $0x7b0] sm:$0xff]
    %v5844 = vld [vmem:[#allocation2 + $0x7b8] sm:$0xff]
    %v5845 = vld [vmem:[#allocation2 + $0x7c0] sm:$0xff]
    %v5846 = vld [vmem:[#allocation2 + $0x7c8] sm:$0xff]
    %v5847 = vld [vmem:[#allocation2 + $0x7d0] sm:$0xff]
    %v5848 = vld [vmem:[#allocation2 + $0x7d8] sm:$0xff]
    %v5849 = vld [vmem:[#allocation2 + $0x7e0] sm:$0xff]
    %v5850 = vld [vmem:[#allocation2 + $0x7e8] sm:$0xff]
    %v5851 = vld [vmem:[#allocation2 + $0x7f0] sm:$0xff]
    %v5852 = vld [vmem:[#allocation2 + $0x7f8] sm:$0xff]
    %v6109 = vunpack.c.l.b16 %v5597
    %v6110 = vunpack.c.h.b16 %v5597
    %v6111 = vunpack.c.l.b16 %v5598
    %v6112 = vunpack.c.h.b16 %v5598
    %v6113 = vunpack.c.l.b16 %v5599
    %v6114 = vunpack.c.h.b16 %v5599
    %v6115 = vunpack.c.l.b16 %v5600
    %v6116 = vunpack.c.h.b16 %v5600
    %v6117 = vunpack.c.l.b16 %v5601
    %v6118 = vunpack.c.h.b16 %v5601
    %v6119 = vunpack.c.l.b16 %v5602
    %v6120 = vunpack.c.h.b16 %v5602
    %v6121 = vunpack.c.l.b16 %v5603
    %v6122 = vunpack.c.h.b16 %v5603
    %v6123 = vunpack.c.l.b16 %v5604
    %v6124 = vunpack.c.h.b16 %v5604
    %v6125 = vunpack.c.l.b16 %v5605
    %v6126 = vunpack.c.h.b16 %v5605
    %v6127 = vunpack.c.l.b16 %v5606
    %v6128 = vunpack.c.h.b16 %v5606
    %v6129 = vunpack.c.l.b16 %v5607
    %v6130 = vunpack.c.h.b16 %v5607
    %v6131 = vunpack.c.l.b16 %v5608
    %v6132 = vunpack.c.h.b16 %v5608
    %v6133 = vunpack.c.l.b16 %v5609
    %v6134 = vunpack.c.h.b16 %v5609
    %v6135 = vunpack.c.l.b16 %v5610
    %v6136 = vunpack.c.h.b16 %v5610
    %v6137 = vunpack.c.l.b16 %v5611
    %v6138 = vunpack.c.h.b16 %v5611
    %v6139 = vunpack.c.l.b16 %v5612
    %v6140 = vunpack.c.h.b16 %v5612
    %v6141 = vunpack.c.l.b16 %v5613
    %v6142 = vunpack.c.h.b16 %v5613
    %v6143 = vunpack.c.l.b16 %v5614
    %v6144 = vunpack.c.h.b16 %v5614
    %v6145 = vunpack.c.l.b16 %v5615
    %v6146 = vunpack.c.h.b16 %v5615
    %v6147 = vunpack.c.l.b16 %v5616
    %v6148 = vunpack.c.h.b16 %v5616
    %v6149 = vunpack.c.l.b16 %v5617
    %v6150 = vunpack.c.h.b16 %v5617
    %v6151 = vunpack.c.l.b16 %v5618
    %v6152 = vunpack.c.h.b16 %v5618
    %v6153 = vunpack.c.l.b16 %v5619
    %v6154 = vunpack.c.h.b16 %v5619
    %v6155 = vunpack.c.l.b16 %v5620
    %v6156 = vunpack.c.h.b16 %v5620
    %v6157 = vunpack.c.l.b16 %v5621
    %v6158 = vunpack.c.h.b16 %v5621
    %v6159 = vunpack.c.l.b16 %v5622
    %v6160 = vunpack.c.h.b16 %v5622
    %v6161 = vunpack.c.l.b16 %v5623
    %v6162 = vunpack.c.h.b16 %v5623
    %v6163 = vunpack.c.l.b16 %v5624
    %v6164 = vunpack.c.h.b16 %v5624
    %v6165 = vunpack.c.l.b16 %v5625
    %v6166 = vunpack.c.h.b16 %v5625
    %v6167 = vunpack.c.l.b16 %v5626
    %v6168 = vunpack.c.h.b16 %v5626
    %v6169 = vunpack.c.l.b16 %v5627
    %v6170 = vunpack.c.h.b16 %v5627
    %v6171 = vunpack.c.l.b16 %v5628
    %v6172 = vunpack.c.h.b16 %v5628
    %v6173 = vunpack.c.l.b16 %v5629
    %v6174 = vunpack.c.h.b16 %v5629
    %v6175 = vunpack.c.l.b16 %v5630
    %v6176 = vunpack.c.h.b16 %v5630
    %v6177 = vunpack.c.l.b16 %v5631
    %v6178 = vunpack.c.h.b16 %v5631
    %v6179 = vunpack.c.l.b16 %v5632
    %v6180 = vunpack.c.h.b16 %v5632
    %v6181 = vunpack.c.l.b16 %v5633
    %v6182 = vunpack.c.h.b16 %v5633
    %v6183 = vunpack.c.l.b16 %v5634
    %v6184 = vunpack.c.h.b16 %v5634
    %v6185 = vunpack.c.l.b16 %v5635
    %v6186 = vunpack.c.h.b16 %v5635
    %v6187 = vunpack.c.l.b16 %v5636
    %v6188 = vunpack.c.h.b16 %v5636
    %v6189 = vunpack.c.l.b16 %v5637
    %v6190 = vunpack.c.h.b16 %v5637
    %v6191 = vunpack.c.l.b16 %v5638
    %v6192 = vunpack.c.h.b16 %v5638
    %v6193 = vunpack.c.l.b16 %v5639
    %v6194 = vunpack.c.h.b16 %v5639
    %v6195 = vunpack.c.l.b16 %v5640
    %v6196 = vunpack.c.h.b16 %v5640
    %v6197 = vunpack.c.l.b16 %v5641
    %v6198 = vunpack.c.h.b16 %v5641
    %v6199 = vunpack.c.l.b16 %v5642
    %v6200 = vunpack.c.h.b16 %v5642
    %v6201 = vunpack.c.l.b16 %v5643
    %v6202 = vunpack.c.h.b16 %v5643
    %v6203 = vunpack.c.l.b16 %v5644
    %v6204 = vunpack.c.h.b16 %v5644
    %v6205 = vunpack.c.l.b16 %v5645
    %v6206 = vunpack.c.h.b16 %v5645
    %v6207 = vunpack.c.l.b16 %v5646
    %v6208 = vunpack.c.h.b16 %v5646
    %v6209 = vunpack.c.l.b16 %v5647
    %v6210 = vunpack.c.h.b16 %v5647
    %v6211 = vunpack.c.l.b16 %v5648
    %v6212 = vunpack.c.h.b16 %v5648
    %v6213 = vunpack.c.l.b16 %v5649
    %v6214 = vunpack.c.h.b16 %v5649
    %v6215 = vunpack.c.l.b16 %v5650
    %v6216 = vunpack.c.h.b16 %v5650
    %v6217 = vunpack.c.l.b16 %v5651
    %v6218 = vunpack.c.h.b16 %v5651
    %v6219 = vunpack.c.l.b16 %v5652
    %v6220 = vunpack.c.h.b16 %v5652
    %v6221 = vunpack.c.l.b16 %v5653
    %v6222 = vunpack.c.h.b16 %v5653
    %v6223 = vunpack.c.l.b16 %v5654
    %v6224 = vunpack.c.h.b16 %v5654
    %v6225 = vunpack.c.l.b16 %v5655
    %v6226 = vunpack.c.h.b16 %v5655
    %v6227 = vunpack.c.l.b16 %v5656
    %v6228 = vunpack.c.h.b16 %v5656
    %v6229 = vunpack.c.l.b16 %v5657
    %v6230 = vunpack.c.h.b16 %v5657
    %v6231 = vunpack.c.l.b16 %v5658
    %v6232 = vunpack.c.h.b16 %v5658
    %v6233 = vunpack.c.l.b16 %v5659
    %v6234 = vunpack.c.h.b16 %v5659
    %v6235 = vunpack.c.l.b16 %v5660
    %v6236 = vunpack.c.h.b16 %v5660
    %v6237 = vunpack.c.l.b16 %v5661
    %v6238 = vunpack.c.h.b16 %v5661
    %v6239 = vunpack.c.l.b16 %v5662
    %v6240 = vunpack.c.h.b16 %v5662
    %v6241 = vunpack.c.l.b16 %v5663
    %v6242 = vunpack.c.h.b16 %v5663
    %v6243 = vunpack.c.l.b16 %v5664
    %v6244 = vunpack.c.h.b16 %v5664
    %v6245 = vunpack.c.l.b16 %v5665
    %v6246 = vunpack.c.h.b16 %v5665
    %v6247 = vunpack.c.l.b16 %v5666
    %v6248 = vunpack.c.h.b16 %v5666
    %v6249 = vunpack.c.l.b16 %v5667
    %v6250 = vunpack.c.h.b16 %v5667
    %v6251 = vunpack.c.l.b16 %v5668
    %v6252 = vunpack.c.h.b16 %v5668
    %v6253 = vunpack.c.l.b16 %v5669
    %v6254 = vunpack.c.h.b16 %v5669
    %v6255 = vunpack.c.l.b16 %v5670
    %v6256 = vunpack.c.h.b16 %v5670
    %v6257 = vunpack.c.l.b16 %v5671
    %v6258 = vunpack.c.h.b16 %v5671
    %v6259 = vunpack.c.l.b16 %v5672
    %v6260 = vunpack.c.h.b16 %v5672
    %v6261 = vunpack.c.l.b16 %v5673
    %v6262 = vunpack.c.h.b16 %v5673
    %v6263 = vunpack.c.l.b16 %v5674
    %v6264 = vunpack.c.h.b16 %v5674
    %v6265 = vunpack.c.l.b16 %v5675
    %v6266 = vunpack.c.h.b16 %v5675
    %v6267 = vunpack.c.l.b16 %v5676
    %v6268 = vunpack.c.h.b16 %v5676
    %v6269 = vunpack.c.l.b16 %v5677
    %v6270 = vunpack.c.h.b16 %v5677
    %v6271 = vunpack.c.l.b16 %v5678
    %v6272 = vunpack.c.h.b16 %v5678
    %v6273 = vunpack.c.l.b16 %v5679
    %v6274 = vunpack.c.h.b16 %v5679
    %v6275 = vunpack.c.l.b16 %v5680
    %v6276 = vunpack.c.h.b16 %v5680
    %v6277 = vunpack.c.l.b16 %v5681
    %v6278 = vunpack.c.h.b16 %v5681
    %v6279 = vunpack.c.l.b16 %v5682
    %v6280 = vunpack.c.h.b16 %v5682
    %v6281 = vunpack.c.l.b16 %v5683
    %v6282 = vunpack.c.h.b16 %v5683
    %v6283 = vunpack.c.l.b16 %v5684
    %v6284 = vunpack.c.h.b16 %v5684
    %v6285 = vunpack.c.l.b16 %v5685
    %v6286 = vunpack.c.h.b16 %v5685
    %v6287 = vunpack.c.l.b16 %v5686
    %v6288 = vunpack.c.h.b16 %v5686
    %v6289 = vunpack.c.l.b16 %v5687
    %v6290 = vunpack.c.h.b16 %v5687
    %v6291 = vunpack.c.l.b16 %v5688
    %v6292 = vunpack.c.h.b16 %v5688
    %v6293 = vunpack.c.l.b16 %v5689
    %v6294 = vunpack.c.h.b16 %v5689
    %v6295 = vunpack.c.l.b16 %v5690
    %v6296 = vunpack.c.h.b16 %v5690
    %v6297 = vunpack.c.l.b16 %v5691
    %v6298 = vunpack.c.h.b16 %v5691
    %v6299 = vunpack.c.l.b16 %v5692
    %v6300 = vunpack.c.h.b16 %v5692
    %v6301 = vunpack.c.l.b16 %v5693
    %v6302 = vunpack.c.h.b16 %v5693
    %v6303 = vunpack.c.l.b16 %v5694
    %v6304 = vunpack.c.h.b16 %v5694
    %v6305 = vunpack.c.l.b16 %v5695
    %v6306 = vunpack.c.h.b16 %v5695
    %v6307 = vunpack.c.l.b16 %v5696
    %v6308 = vunpack.c.h.b16 %v5696
    %v6309 = vunpack.c.l.b16 %v5697
    %v6310 = vunpack.c.h.b16 %v5697
    %v6311 = vunpack.c.l.b16 %v5698
    %v6312 = vunpack.c.h.b16 %v5698
    %v6313 = vunpack.c.l.b16 %v5699
    %v6314 = vunpack.c.h.b16 %v5699
    %v6315 = vunpack.c.l.b16 %v5700
    %v6316 = vunpack.c.h.b16 %v5700
    %v6317 = vunpack.c.l.b16 %v5701
    %v6318 = vunpack.c.h.b16 %v5701
    %v6319 = vunpack.c.l.b16 %v5702
    %v6320 = vunpack.c.h.b16 %v5702
    %v6321 = vunpack.c.l.b16 %v5703
    %v6322 = vunpack.c.h.b16 %v5703
    %v6323 = vunpack.c.l.b16 %v5704
    %v6324 = vunpack.c.h.b16 %v5704
    %v6325 = vunpack.c.l.b16 %v5705
    %v6326 = vunpack.c.h.b16 %v5705
    %v6327 = vunpack.c.l.b16 %v5706
    %v6328 = vunpack.c.h.b16 %v5706
    %v6329 = vunpack.c.l.b16 %v5707
    %v6330 = vunpack.c.h.b16 %v5707
    %v6331 = vunpack.c.l.b16 %v5708
    %v6332 = vunpack.c.h.b16 %v5708
    %v6333 = vunpack.c.l.b16 %v5709
    %v6334 = vunpack.c.h.b16 %v5709
    %v6335 = vunpack.c.l.b16 %v5710
    %v6336 = vunpack.c.h.b16 %v5710
    %v6337 = vunpack.c.l.b16 %v5711
    %v6338 = vunpack.c.h.b16 %v5711
    %v6339 = vunpack.c.l.b16 %v5712
    %v6340 = vunpack.c.h.b16 %v5712
    %v6341 = vunpack.c.l.b16 %v5713
    %v6342 = vunpack.c.h.b16 %v5713
    %v6343 = vunpack.c.l.b16 %v5714
    %v6344 = vunpack.c.h.b16 %v5714
    %v6345 = vunpack.c.l.b16 %v5715
    %v6346 = vunpack.c.h.b16 %v5715
    %v6347 = vunpack.c.l.b16 %v5716
    %v6348 = vunpack.c.h.b16 %v5716
    %v6349 = vunpack.c.l.b16 %v5717
    %v6350 = vunpack.c.h.b16 %v5717
    %v6351 = vunpack.c.l.b16 %v5718
    %v6352 = vunpack.c.h.b16 %v5718
    %v6353 = vunpack.c.l.b16 %v5719
    %v6354 = vunpack.c.h.b16 %v5719
    %v6355 = vunpack.c.l.b16 %v5720
    %v6356 = vunpack.c.h.b16 %v5720
    %v6357 = vunpack.c.l.b16 %v5721
    %v6358 = vunpack.c.h.b16 %v5721
    %v6359 = vunpack.c.l.b16 %v5722
    %v6360 = vunpack.c.h.b16 %v5722
    %v6361 = vunpack.c.l.b16 %v5723
    %v6362 = vunpack.c.h.b16 %v5723
    %v6363 = vunpack.c.l.b16 %v5724
    %v6364 = vunpack.c.h.b16 %v5724
    %v6365 = vunpack.c.l.b16 %v5725
    %v6366 = vunpack.c.h.b16 %v5725
    %v6367 = vunpack.c.l.b16 %v5726
    %v6368 = vunpack.c.h.b16 %v5726
    %v6369 = vunpack.c.l.b16 %v5727
    %v6370 = vunpack.c.h.b16 %v5727
    %v6371 = vunpack.c.l.b16 %v5728
    %v6372 = vunpack.c.h.b16 %v5728
    %v6373 = vunpack.c.l.b16 %v5729
    %v6374 = vunpack.c.h.b16 %v5729
    %v6375 = vunpack.c.l.b16 %v5730
    %v6376 = vunpack.c.h.b16 %v5730
    %v6377 = vunpack.c.l.b16 %v5731
    %v6378 = vunpack.c.h.b16 %v5731
    %v6379 = vunpack.c.l.b16 %v5732
    %v6380 = vunpack.c.h.b16 %v5732
    %v6381 = vunpack.c.l.b16 %v5733
    %v6382 = vunpack.c.h.b16 %v5733
    %v6383 = vunpack.c.l.b16 %v5734
    %v6384 = vunpack.c.h.b16 %v5734
    %v6385 = vunpack.c.l.b16 %v5735
    %v6386 = vunpack.c.h.b16 %v5735
    %v6387 = vunpack.c.l.b16 %v5736
    %v6388 = vunpack.c.h.b16 %v5736
    %v6389 = vunpack.c.l.b16 %v5737
    %v6390 = vunpack.c.h.b16 %v5737
    %v6391 = vunpack.c.l.b16 %v5738
    %v6392 = vunpack.c.h.b16 %v5738
    %v6393 = vunpack.c.l.b16 %v5739
    %v6394 = vunpack.c.h.b16 %v5739
    %v6395 = vunpack.c.l.b16 %v5740
    %v6396 = vunpack.c.h.b16 %v5740
    %v6397 = vunpack.c.l.b16 %v5741
    %v6398 = vunpack.c.h.b16 %v5741
    %v6399 = vunpack.c.l.b16 %v5742
    %v6400 = vunpack.c.h.b16 %v5742
    %v6401 = vunpack.c.l.b16 %v5743
    %v6402 = vunpack.c.h.b16 %v5743
    %v6403 = vunpack.c.l.b16 %v5744
    %v6404 = vunpack.c.h.b16 %v5744
    %v6405 = vunpack.c.l.b16 %v5745
    %v6406 = vunpack.c.h.b16 %v5745
    %v6407 = vunpack.c.l.b16 %v5746
    %v6408 = vunpack.c.h.b16 %v5746
    %v6409 = vunpack.c.l.b16 %v5747
    %v6410 = vunpack.c.h.b16 %v5747
    %v6411 = vunpack.c.l.b16 %v5748
    %v6412 = vunpack.c.h.b16 %v5748
    %v6413 = vunpack.c.l.b16 %v5749
    %v6414 = vunpack.c.h.b16 %v5749
    %v6415 = vunpack.c.l.b16 %v5750
    %v6416 = vunpack.c.h.b16 %v5750
    %v6417 = vunpack.c.l.b16 %v5751
    %v6418 = vunpack.c.h.b16 %v5751
    %v6419 = vunpack.c.l.b16 %v5752
    %v6420 = vunpack.c.h.b16 %v5752
    %v6421 = vunpack.c.l.b16 %v5753
    %v6422 = vunpack.c.h.b16 %v5753
    %v6423 = vunpack.c.l.b16 %v5754
    %v6424 = vunpack.c.h.b16 %v5754
    %v6425 = vunpack.c.l.b16 %v5755
    %v6426 = vunpack.c.h.b16 %v5755
    %v6427 = vunpack.c.l.b16 %v5756
    %v6428 = vunpack.c.h.b16 %v5756
    %v6429 = vunpack.c.l.b16 %v5757
    %v6430 = vunpack.c.h.b16 %v5757
    %v6431 = vunpack.c.l.b16 %v5758
    %v6432 = vunpack.c.h.b16 %v5758
    %v6433 = vunpack.c.l.b16 %v5759
    %v6434 = vunpack.c.h.b16 %v5759
    %v6435 = vunpack.c.l.b16 %v5760
    %v6436 = vunpack.c.h.b16 %v5760
    %v6437 = vunpack.c.l.b16 %v5761
    %v6438 = vunpack.c.h.b16 %v5761
    %v6439 = vunpack.c.l.b16 %v5762
    %v6440 = vunpack.c.h.b16 %v5762
    %v6441 = vunpack.c.l.b16 %v5763
    %v6442 = vunpack.c.h.b16 %v5763
    %v6443 = vunpack.c.l.b16 %v5764
    %v6444 = vunpack.c.h.b16 %v5764
    %v6445 = vunpack.c.l.b16 %v5765
    %v6446 = vunpack.c.h.b16 %v5765
    %v6447 = vunpack.c.l.b16 %v5766
    %v6448 = vunpack.c.h.b16 %v5766
    %v6449 = vunpack.c.l.b16 %v5767
    %v6450 = vunpack.c.h.b16 %v5767
    %v6451 = vunpack.c.l.b16 %v5768
    %v6452 = vunpack.c.h.b16 %v5768
    %v6453 = vunpack.c.l.b16 %v5769
    %v6454 = vunpack.c.h.b16 %v5769
    %v6455 = vunpack.c.l.b16 %v5770
    %v6456 = vunpack.c.h.b16 %v5770
    %v6457 = vunpack.c.l.b16 %v5771
    %v6458 = vunpack.c.h.b16 %v5771
    %v6459 = vunpack.c.l.b16 %v5772
    %v6460 = vunpack.c.h.b16 %v5772
    %v6461 = vunpack.c.l.b16 %v5773
    %v6462 = vunpack.c.h.b16 %v5773
    %v6463 = vunpack.c.l.b16 %v5774
    %v6464 = vunpack.c.h.b16 %v5774
    %v6465 = vunpack.c.l.b16 %v5775
    %v6466 = vunpack.c.h.b16 %v5775
    %v6467 = vunpack.c.l.b16 %v5776
    %v6468 = vunpack.c.h.b16 %v5776
    %v6469 = vunpack.c.l.b16 %v5777
    %v6470 = vunpack.c.h.b16 %v5777
    %v6471 = vunpack.c.l.b16 %v5778
    %v6472 = vunpack.c.h.b16 %v5778
    %v6473 = vunpack.c.l.b16 %v5779
    %v6474 = vunpack.c.h.b16 %v5779
    %v6475 = vunpack.c.l.b16 %v5780
    %v6476 = vunpack.c.h.b16 %v5780
    %v6477 = vunpack.c.l.b16 %v5781
    %v6478 = vunpack.c.h.b16 %v5781
    %v6479 = vunpack.c.l.b16 %v5782
    %v6480 = vunpack.c.h.b16 %v5782
    %v6481 = vunpack.c.l.b16 %v5783
    %v6482 = vunpack.c.h.b16 %v5783
    %v6483 = vunpack.c.l.b16 %v5784
    %v6484 = vunpack.c.h.b16 %v5784
    %v6485 = vunpack.c.l.b16 %v5785
    %v6486 = vunpack.c.h.b16 %v5785
    %v6487 = vunpack.c.l.b16 %v5786
    %v6488 = vunpack.c.h.b16 %v5786
    %v6489 = vunpack.c.l.b16 %v5787
    %v6490 = vunpack.c.h.b16 %v5787
    %v6491 = vunpack.c.l.b16 %v5788
    %v6492 = vunpack.c.h.b16 %v5788
    %v6493 = vunpack.c.l.b16 %v5789
    %v6494 = vunpack.c.h.b16 %v5789
    %v6495 = vunpack.c.l.b16 %v5790
    %v6496 = vunpack.c.h.b16 %v5790
    %v6497 = vunpack.c.l.b16 %v5791
    %v6498 = vunpack.c.h.b16 %v5791
    %v6499 = vunpack.c.l.b16 %v5792
    %v6500 = vunpack.c.h.b16 %v5792
    %v6501 = vunpack.c.l.b16 %v5793
    %v6502 = vunpack.c.h.b16 %v5793
    %v6503 = vunpack.c.l.b16 %v5794
    %v6504 = vunpack.c.h.b16 %v5794
    %v6505 = vunpack.c.l.b16 %v5795
    %v6506 = vunpack.c.h.b16 %v5795
    %v6507 = vunpack.c.l.b16 %v5796
    %v6508 = vunpack.c.h.b16 %v5796
    %v6509 = vunpack.c.l.b16 %v5797
    %v6510 = vunpack.c.h.b16 %v5797
    %v6511 = vunpack.c.l.b16 %v5798
    %v6512 = vunpack.c.h.b16 %v5798
    %v6513 = vunpack.c.l.b16 %v5799
    %v6514 = vunpack.c.h.b16 %v5799
    %v6515 = vunpack.c.l.b16 %v5800
    %v6516 = vunpack.c.h.b16 %v5800
    %v6517 = vunpack.c.l.b16 %v5801
    %v6518 = vunpack.c.h.b16 %v5801
    %v6519 = vunpack.c.l.b16 %v5802
    %v6520 = vunpack.c.h.b16 %v5802
    %v6521 = vunpack.c.l.b16 %v5803
    %v6522 = vunpack.c.h.b16 %v5803
    %v6523 = vunpack.c.l.b16 %v5804
    %v6524 = vunpack.c.h.b16 %v5804
    %v6525 = vunpack.c.l.b16 %v5805
    %v6526 = vunpack.c.h.b16 %v5805
    %v6527 = vunpack.c.l.b16 %v5806
    %v6528 = vunpack.c.h.b16 %v5806
    %v6529 = vunpack.c.l.b16 %v5807
    %v6530 = vunpack.c.h.b16 %v5807
    %v6531 = vunpack.c.l.b16 %v5808
    %v6532 = vunpack.c.h.b16 %v5808
    %v6533 = vunpack.c.l.b16 %v5809
    %v6534 = vunpack.c.h.b16 %v5809
    %v6535 = vunpack.c.l.b16 %v5810
    %v6536 = vunpack.c.h.b16 %v5810
    %v6537 = vunpack.c.l.b16 %v5811
    %v6538 = vunpack.c.h.b16 %v5811
    %v6539 = vunpack.c.l.b16 %v5812
    %v6540 = vunpack.c.h.b16 %v5812
    %v6541 = vunpack.c.l.b16 %v5813
    %v6542 = vunpack.c.h.b16 %v5813
    %v6543 = vunpack.c.l.b16 %v5814
    %v6544 = vunpack.c.h.b16 %v5814
    %v6545 = vunpack.c.l.b16 %v5815
    %v6546 = vunpack.c.h.b16 %v5815
    %v6547 = vunpack.c.l.b16 %v5816
    %v6548 = vunpack.c.h.b16 %v5816
    %v6549 = vunpack.c.l.b16 %v5817
    %v6550 = vunpack.c.h.b16 %v5817
    %v6551 = vunpack.c.l.b16 %v5818
    %v6552 = vunpack.c.h.b16 %v5818
    %v6553 = vunpack.c.l.b16 %v5819
    %v6554 = vunpack.c.h.b16 %v5819
    %v6555 = vunpack.c.l.b16 %v5820
    %v6556 = vunpack.c.h.b16 %v5820
    %v6557 = vunpack.c.l.b16 %v5821
    %v6558 = vunpack.c.h.b16 %v5821
    %v6559 = vunpack.c.l.b16 %v5822
    %v6560 = vunpack.c.h.b16 %v5822
    %v6561 = vunpack.c.l.b16 %v5823
    %v6562 = vunpack.c.h.b16 %v5823
    %v6563 = vunpack.c.l.b16 %v5824
    %v6564 = vunpack.c.h.b16 %v5824
    %v6565 = vunpack.c.l.b16 %v5825
    %v6566 = vunpack.c.h.b16 %v5825
    %v6567 = vunpack.c.l.b16 %v5826
    %v6568 = vunpack.c.h.b16 %v5826
    %v6569 = vunpack.c.l.b16 %v5827
    %v6570 = vunpack.c.h.b16 %v5827
    %v6571 = vunpack.c.l.b16 %v5828
    %v6572 = vunpack.c.h.b16 %v5828
    %v6573 = vunpack.c.l.b16 %v5829
    %v6574 = vunpack.c.h.b16 %v5829
    %v6575 = vunpack.c.l.b16 %v5830
    %v6576 = vunpack.c.h.b16 %v5830
    %v6577 = vunpack.c.l.b16 %v5831
    %v6578 = vunpack.c.h.b16 %v5831
    %v6579 = vunpack.c.l.b16 %v5832
    %v6580 = vunpack.c.h.b16 %v5832
    %v6581 = vunpack.c.l.b16 %v5833
    %v6582 = vunpack.c.h.b16 %v5833
    %v6583 = vunpack.c.l.b16 %v5834
    %v6584 = vunpack.c.h.b16 %v5834
    %v6585 = vunpack.c.l.b16 %v5835
    %v6586 = vunpack.c.h.b16 %v5835
    %v6587 = vunpack.c.l.b16 %v5836
    %v6588 = vunpack.c.h.b16 %v5836
    %v6589 = vunpack.c.l.b16 %v5837
    %v6590 = vunpack.c.h.b16 %v5837
    %v6591 = vunpack.c.l.b16 %v5838
    %v6592 = vunpack.c.h.b16 %v5838
    %v6593 = vunpack.c.l.b16 %v5839
    %v6594 = vunpack.c.h.b16 %v5839
    %v6595 = vunpack.c.l.b16 %v5840
    %v6596 = vunpack.c.h.b16 %v5840
    %v6597 = vunpack.c.l.b16 %v5841
    %v6598 = vunpack.c.h.b16 %v5841
    %v6599 = vunpack.c.l.b16 %v5842
    %v6600 = vunpack.c.h.b16 %v5842
    %v6601 = vunpack.c.l.b16 %v5843
    %v6602 = vunpack.c.h.b16 %v5843
    %v6603 = vunpack.c.l.b16 %v5844
    %v6604 = vunpack.c.h.b16 %v5844
    %v6605 = vunpack.c.l.b16 %v5845
    %v6606 = vunpack.c.h.b16 %v5845
    %v6607 = vunpack.c.l.b16 %v5846
    %v6608 = vunpack.c.h.b16 %v5846
    %v6609 = vunpack.c.l.b16 %v5847
    %v6610 = vunpack.c.h.b16 %v5847
    %v6611 = vunpack.c.l.b16 %v5848
    %v6612 = vunpack.c.h.b16 %v5848
    %v6613 = vunpack.c.l.b16 %v5849
    %v6614 = vunpack.c.h.b16 %v5849
    %v6615 = vunpack.c.l.b16 %v5850
    %v6616 = vunpack.c.h.b16 %v5850
    %v6617 = vunpack.c.l.b16 %v5851
    %v6618 = vunpack.c.h.b16 %v5851
    %v6619 = vunpack.c.l.b16 %v5852
    %v6620 = vunpack.c.h.b16 %v5852
    %v6621 = vpack.c.b16 %v6113, %v6109
    %v6622 = vpack.c.b16 %v6114, %v6110
    %v6623 = vpack.c.b16 %v6115, %v6111
    %v6624 = vpack.c.b16 %v6116, %v6112
    %v6625 = vpack.c.b16 %v6121, %v6117
    %v6626 = vpack.c.b16 %v6122, %v6118
    %v6627 = vpack.c.b16 %v6123, %v6119
    %v6628 = vpack.c.b16 %v6124, %v6120
    %v6629 = vpack.c.b16 %v6129, %v6125
    %v6630 = vpack.c.b16 %v6130, %v6126
    %v6631 = vpack.c.b16 %v6131, %v6127
    %v6632 = vpack.c.b16 %v6132, %v6128
    %v6633 = vpack.c.b16 %v6137, %v6133
    %v6634 = vpack.c.b16 %v6138, %v6134
    %v6635 = vpack.c.b16 %v6139, %v6135
    %v6636 = vpack.c.b16 %v6140, %v6136
    %v6637 = vpack.c.b16 %v6145, %v6141
    %v6638 = vpack.c.b16 %v6146, %v6142
    %v6639 = vpack.c.b16 %v6147, %v6143
    %v6640 = vpack.c.b16 %v6148, %v6144
    %v6641 = vpack.c.b16 %v6153, %v6149
    %v6642 = vpack.c.b16 %v6154, %v6150
    %v6643 = vpack.c.b16 %v6155, %v6151
    %v6644 = vpack.c.b16 %v6156, %v6152
    %v6645 = vpack.c.b16 %v6161, %v6157
    %v6646 = vpack.c.b16 %v6162, %v6158
    %v6647 = vpack.c.b16 %v6163, %v6159
    %v6648 = vpack.c.b16 %v6164, %v6160
    %v6649 = vpack.c.b16 %v6169, %v6165
    %v6650 = vpack.c.b16 %v6170, %v6166
    %v6651 = vpack.c.b16 %v6171, %v6167
    %v6652 = vpack.c.b16 %v6172, %v6168
    %v6653 = vpack.c.b16 %v6177, %v6173
    %v6654 = vpack.c.b16 %v6178, %v6174
    %v6655 = vpack.c.b16 %v6179, %v6175
    %v6656 = vpack.c.b16 %v6180, %v6176
    %v6657 = vpack.c.b16 %v6185, %v6181
    %v6658 = vpack.c.b16 %v6186, %v6182
    %v6659 = vpack.c.b16 %v6187, %v6183
    %v6660 = vpack.c.b16 %v6188, %v6184
    %v6661 = vpack.c.b16 %v6193, %v6189
    %v6662 = vpack.c.b16 %v6194, %v6190
    %v6663 = vpack.c.b16 %v6195, %v6191
    %v6664 = vpack.c.b16 %v6196, %v6192
    %v6665 = vpack.c.b16 %v6201, %v6197
    %v6666 = vpack.c.b16 %v6202, %v6198
    %v6667 = vpack.c.b16 %v6203, %v6199
    %v6668 = vpack.c.b16 %v6204, %v6200
    %v6669 = vpack.c.b16 %v6209, %v6205
    %v6670 = vpack.c.b16 %v6210, %v6206
    %v6671 = vpack.c.b16 %v6211, %v6207
    %v6672 = vpack.c.b16 %v6212, %v6208
    %v6673 = vpack.c.b16 %v6217, %v6213
    %v6674 = vpack.c.b16 %v6218, %v6214
    %v6675 = vpack.c.b16 %v6219, %v6215
    %v6676 = vpack.c.b16 %v6220, %v6216
    %v6677 = vpack.c.b16 %v6225, %v6221
    %v6678 = vpack.c.b16 %v6226, %v6222
    %v6679 = vpack.c.b16 %v6227, %v6223
    %v6680 = vpack.c.b16 %v6228, %v6224
    %v6681 = vpack.c.b16 %v6233, %v6229
    %v6682 = vpack.c.b16 %v6234, %v6230
    %v6683 = vpack.c.b16 %v6235, %v6231
    %v6684 = vpack.c.b16 %v6236, %v6232
    %v6685 = vpack.c.b16 %v6241, %v6237
    %v6686 = vpack.c.b16 %v6242, %v6238
    %v6687 = vpack.c.b16 %v6243, %v6239
    %v6688 = vpack.c.b16 %v6244, %v6240
    %v6689 = vpack.c.b16 %v6249, %v6245
    %v6690 = vpack.c.b16 %v6250, %v6246
    %v6691 = vpack.c.b16 %v6251, %v6247
    %v6692 = vpack.c.b16 %v6252, %v6248
    %v6693 = vpack.c.b16 %v6257, %v6253
    %v6694 = vpack.c.b16 %v6258, %v6254
    %v6695 = vpack.c.b16 %v6259, %v6255
    %v6696 = vpack.c.b16 %v6260, %v6256
    %v6697 = vpack.c.b16 %v6265, %v6261
    %v6698 = vpack.c.b16 %v6266, %v6262
    %v6699 = vpack.c.b16 %v6267, %v6263
    %v6700 = vpack.c.b16 %v6268, %v6264
    %v6701 = vpack.c.b16 %v6273, %v6269
    %v6702 = vpack.c.b16 %v6274, %v6270
    %v6703 = vpack.c.b16 %v6275, %v6271
    %v6704 = vpack.c.b16 %v6276, %v6272
    %v6705 = vpack.c.b16 %v6281, %v6277
    %v6706 = vpack.c.b16 %v6282, %v6278
    %v6707 = vpack.c.b16 %v6283, %v6279
    %v6708 = vpack.c.b16 %v6284, %v6280
    %v6709 = vpack.c.b16 %v6289, %v6285
    %v6710 = vpack.c.b16 %v6290, %v6286
    %v6711 = vpack.c.b16 %v6291, %v6287
    %v6712 = vpack.c.b16 %v6292, %v6288
    %v6713 = vpack.c.b16 %v6297, %v6293
    %v6714 = vpack.c.b16 %v6298, %v6294
    %v6715 = vpack.c.b16 %v6299, %v6295
    %v6716 = vpack.c.b16 %v6300, %v6296
    %v6717 = vpack.c.b16 %v6305, %v6301
    %v6718 = vpack.c.b16 %v6306, %v6302
    %v6719 = vpack.c.b16 %v6307, %v6303
    %v6720 = vpack.c.b16 %v6308, %v6304
    %v6721 = vpack.c.b16 %v6313, %v6309
    %v6722 = vpack.c.b16 %v6314, %v6310
    %v6723 = vpack.c.b16 %v6315, %v6311
    %v6724 = vpack.c.b16 %v6316, %v6312
    %v6725 = vpack.c.b16 %v6321, %v6317
    %v6726 = vpack.c.b16 %v6322, %v6318
    %v6727 = vpack.c.b16 %v6323, %v6319
    %v6728 = vpack.c.b16 %v6324, %v6320
    %v6729 = vpack.c.b16 %v6329, %v6325
    %v6730 = vpack.c.b16 %v6330, %v6326
    %v6731 = vpack.c.b16 %v6331, %v6327
    %v6732 = vpack.c.b16 %v6332, %v6328
    %v6733 = vpack.c.b16 %v6337, %v6333
    %v6734 = vpack.c.b16 %v6338, %v6334
    %v6735 = vpack.c.b16 %v6339, %v6335
    %v6736 = vpack.c.b16 %v6340, %v6336
    %v6737 = vpack.c.b16 %v6345, %v6341
    %v6738 = vpack.c.b16 %v6346, %v6342
    %v6739 = vpack.c.b16 %v6347, %v6343
    %v6740 = vpack.c.b16 %v6348, %v6344
    %v6741 = vpack.c.b16 %v6353, %v6349
    %v6742 = vpack.c.b16 %v6354, %v6350
    %v6743 = vpack.c.b16 %v6355, %v6351
    %v6744 = vpack.c.b16 %v6356, %v6352
    %v6745 = vpack.c.b16 %v6361, %v6357
    %v6746 = vpack.c.b16 %v6362, %v6358
    %v6747 = vpack.c.b16 %v6363, %v6359
    %v6748 = vpack.c.b16 %v6364, %v6360
    %v6749 = vpack.c.b16 %v6369, %v6365
    %v6750 = vpack.c.b16 %v6370, %v6366
    %v6751 = vpack.c.b16 %v6371, %v6367
    %v6752 = vpack.c.b16 %v6372, %v6368
    %v6753 = vpack.c.b16 %v6377, %v6373
    %v6754 = vpack.c.b16 %v6378, %v6374
    %v6755 = vpack.c.b16 %v6379, %v6375
    %v6756 = vpack.c.b16 %v6380, %v6376
    %v6757 = vpack.c.b16 %v6385, %v6381
    %v6758 = vpack.c.b16 %v6386, %v6382
    %v6759 = vpack.c.b16 %v6387, %v6383
    %v6760 = vpack.c.b16 %v6388, %v6384
    %v6761 = vpack.c.b16 %v6393, %v6389
    %v6762 = vpack.c.b16 %v6394, %v6390
    %v6763 = vpack.c.b16 %v6395, %v6391
    %v6764 = vpack.c.b16 %v6396, %v6392
    %v6765 = vpack.c.b16 %v6401, %v6397
    %v6766 = vpack.c.b16 %v6402, %v6398
    %v6767 = vpack.c.b16 %v6403, %v6399
    %v6768 = vpack.c.b16 %v6404, %v6400
    %v6769 = vpack.c.b16 %v6409, %v6405
    %v6770 = vpack.c.b16 %v6410, %v6406
    %v6771 = vpack.c.b16 %v6411, %v6407
    %v6772 = vpack.c.b16 %v6412, %v6408
    %v6773 = vpack.c.b16 %v6417, %v6413
    %v6774 = vpack.c.b16 %v6418, %v6414
    %v6775 = vpack.c.b16 %v6419, %v6415
    %v6776 = vpack.c.b16 %v6420, %v6416
    %v6777 = vpack.c.b16 %v6425, %v6421
    %v6778 = vpack.c.b16 %v6426, %v6422
    %v6779 = vpack.c.b16 %v6427, %v6423
    %v6780 = vpack.c.b16 %v6428, %v6424
    %v6781 = vpack.c.b16 %v6433, %v6429
    %v6782 = vpack.c.b16 %v6434, %v6430
    %v6783 = vpack.c.b16 %v6435, %v6431
    %v6784 = vpack.c.b16 %v6436, %v6432
    %v6785 = vpack.c.b16 %v6441, %v6437
    %v6786 = vpack.c.b16 %v6442, %v6438
    %v6787 = vpack.c.b16 %v6443, %v6439
    %v6788 = vpack.c.b16 %v6444, %v6440
    %v6789 = vpack.c.b16 %v6449, %v6445
    %v6790 = vpack.c.b16 %v6450, %v6446
    %v6791 = vpack.c.b16 %v6451, %v6447
    %v6792 = vpack.c.b16 %v6452, %v6448
    %v6793 = vpack.c.b16 %v6457, %v6453
    %v6794 = vpack.c.b16 %v6458, %v6454
    %v6795 = vpack.c.b16 %v6459, %v6455
    %v6796 = vpack.c.b16 %v6460, %v6456
    %v6797 = vpack.c.b16 %v6465, %v6461
    %v6798 = vpack.c.b16 %v6466, %v6462
    %v6799 = vpack.c.b16 %v6467, %v6463
    %v6800 = vpack.c.b16 %v6468, %v6464
    %v6801 = vpack.c.b16 %v6473, %v6469
    %v6802 = vpack.c.b16 %v6474, %v6470
    %v6803 = vpack.c.b16 %v6475, %v6471
    %v6804 = vpack.c.b16 %v6476, %v6472
    %v6805 = vpack.c.b16 %v6481, %v6477
    %v6806 = vpack.c.b16 %v6482, %v6478
    %v6807 = vpack.c.b16 %v6483, %v6479
    %v6808 = vpack.c.b16 %v6484, %v6480
    %v6809 = vpack.c.b16 %v6489, %v6485
    %v6810 = vpack.c.b16 %v6490, %v6486
    %v6811 = vpack.c.b16 %v6491, %v6487
    %v6812 = vpack.c.b16 %v6492, %v6488
    %v6813 = vpack.c.b16 %v6497, %v6493
    %v6814 = vpack.c.b16 %v6498, %v6494
    %v6815 = vpack.c.b16 %v6499, %v6495
    %v6816 = vpack.c.b16 %v6500, %v6496
    %v6817 = vpack.c.b16 %v6505, %v6501
    %v6818 = vpack.c.b16 %v6506, %v6502
    %v6819 = vpack.c.b16 %v6507, %v6503
    %v6820 = vpack.c.b16 %v6508, %v6504
    %v6821 = vpack.c.b16 %v6513, %v6509
    %v6822 = vpack.c.b16 %v6514, %v6510
    %v6823 = vpack.c.b16 %v6515, %v6511
    %v6824 = vpack.c.b16 %v6516, %v6512
    %v6825 = vpack.c.b16 %v6521, %v6517
    %v6826 = vpack.c.b16 %v6522, %v6518
    %v6827 = vpack.c.b16 %v6523, %v6519
    %v6828 = vpack.c.b16 %v6524, %v6520
    %v6829 = vpack.c.b16 %v6529, %v6525
    %v6830 = vpack.c.b16 %v6530, %v6526
    %v6831 = vpack.c.b16 %v6531, %v6527
    %v6832 = vpack.c.b16 %v6532, %v6528
    %v6833 = vpack.c.b16 %v6537, %v6533
    %v6834 = vpack.c.b16 %v6538, %v6534
    %v6835 = vpack.c.b16 %v6539, %v6535
    %v6836 = vpack.c.b16 %v6540, %v6536
    %v6837 = vpack.c.b16 %v6545, %v6541
    %v6838 = vpack.c.b16 %v6546, %v6542
    %v6839 = vpack.c.b16 %v6547, %v6543
    %v6840 = vpack.c.b16 %v6548, %v6544
    %v6841 = vpack.c.b16 %v6553, %v6549
    %v6842 = vpack.c.b16 %v6554, %v6550
    %v6843 = vpack.c.b16 %v6555, %v6551
    %v6844 = vpack.c.b16 %v6556, %v6552
    %v6845 = vpack.c.b16 %v6561, %v6557
    %v6846 = vpack.c.b16 %v6562, %v6558
    %v6847 = vpack.c.b16 %v6563, %v6559
    %v6848 = vpack.c.b16 %v6564, %v6560
    %v6849 = vpack.c.b16 %v6569, %v6565
    %v6850 = vpack.c.b16 %v6570, %v6566
    %v6851 = vpack.c.b16 %v6571, %v6567
    %v6852 = vpack.c.b16 %v6572, %v6568
    %v6853 = vpack.c.b16 %v6577, %v6573
    %v6854 = vpack.c.b16 %v6578, %v6574
    %v6855 = vpack.c.b16 %v6579, %v6575
    %v6856 = vpack.c.b16 %v6580, %v6576
    %v6857 = vpack.c.b16 %v6585, %v6581
    %v6858 = vpack.c.b16 %v6586, %v6582
    %v6859 = vpack.c.b16 %v6587, %v6583
    %v6860 = vpack.c.b16 %v6588, %v6584
    %v6861 = vpack.c.b16 %v6593, %v6589
    %v6862 = vpack.c.b16 %v6594, %v6590
    %v6863 = vpack.c.b16 %v6595, %v6591
    %v6864 = vpack.c.b16 %v6596, %v6592
    %v6865 = vpack.c.b16 %v6601, %v6597
    %v6866 = vpack.c.b16 %v6602, %v6598
    %v6867 = vpack.c.b16 %v6603, %v6599
    %v6868 = vpack.c.b16 %v6604, %v6600
    %v6869 = vpack.c.b16 %v6609, %v6605
    %v6870 = vpack.c.b16 %v6610, %v6606
    %v6871 = vpack.c.b16 %v6611, %v6607
    %v6872 = vpack.c.b16 %v6612, %v6608
    %v6873 = vpack.c.b16 %v6617, %v6613
    %v6874 = vpack.c.b16 %v6618, %v6614
    %v6875 = vpack.c.b16 %v6619, %v6615
    %v6876 = vpack.c.b16 %v6620, %v6616
    %7133 = vmatprep.subr.bf16.mxu0 %v6650
    %7134 = vmatpush1.bf16.msra.mxu0 %v6649
    %7135 = vmatprep.subr.bf16.mxu0 %v6646
    %7136 = vmatpush1.bf16.msra.mxu0 %v6645
    %7137 = vmatprep.subr.bf16.mxu0 %v6642
    %7138 = vmatpush1.bf16.msra.mxu0 %v6641
    %7139 = vmatprep.subr.bf16.mxu0 %v6638
    %7140 = vmatpush1.bf16.msra.mxu0 %v6637
    %7141 = vmatprep.subr.bf16.mxu0 %v6634
    %7142 = vmatpush1.bf16.msra.mxu0 %v6633
    %7143 = vmatprep.subr.bf16.mxu0 %v6630
    %7144 = vmatpush1.bf16.msra.mxu0 %v6629
    %7145 = vmatprep.subr.bf16.mxu0 %v6626
    %7146 = vmatpush1.bf16.msra.mxu0 %v6625
    %7147 = vmatprep.subr.bf16.mxu0 %v6622
    %7148 = vmatpush1.bf16.msra.mxu0 %v6621
    %7149 = vmatprep.subr.bf16.mxu0 %v6682
    %7150 = vmatpush2.bf16.msra.mxu0 %v6681
    %7151 = vmatprep.subr.bf16.mxu0 %v6678
    %7152 = vmatpush2.bf16.msra.mxu0 %v6677
    %7153 = vmatprep.subr.bf16.mxu0 %v6674
    %7154 = vmatpush2.bf16.msra.mxu0 %v6673
    %7155 = vmatprep.subr.bf16.mxu0 %v6670
    %7156 = vmatpush2.bf16.msra.mxu0 %v6669
    %7157 = vmatprep.subr.bf16.mxu0 %v6666
    %7158 = vmatpush2.bf16.msra.mxu0 %v6665
    %7159 = vmatprep.subr.bf16.mxu0 %v6662
    %7160 = vmatpush2.bf16.msra.mxu0 %v6661
    %7161 = vmatprep.subr.bf16.mxu0 %v6658
    %7162 = vmatpush2.bf16.msra.mxu0 %v6657
    %7163 = vmatprep.subr.bf16.mxu0 %v6654
    %7164 = vmatpush2.bf16.msra.mxu0 %v6653
    %7165 = vmatprep.mubr.bf16.mxu0 %v5566
    %7166 = vmatmul.mubr.bf16.gmra.mxu0 %v5565
    %v7167 = vpop.f32.mrf.mxu0
    %v7168 = vadd.f32 0.0, %v7167
    %v7169 = vpop.f32.mrf.mxu0
    %v7170 = vadd.f32 0.0, %v7169
    %v7171 = vpop.f32.mrf.mxu0
    %v7172 = vadd.f32 0.0, %v7171
    %v7173 = vpop.f32.mrf.mxu0
    %v7174 = vadd.f32 0.0, %v7173
    %7175 = vmatprep.mubr.bf16.mxu0 %v5574
    %7176 = vmatmul.mubr.bf16.gmra.mxu0 %v5573
    %v7177 = vpop.f32.mrf.mxu0
    %v7178 = vadd.f32 0.0, %v7177
    %v7179 = vpop.f32.mrf.mxu0
    %v7180 = vadd.f32 0.0, %v7179
    %v7181 = vpop.f32.mrf.mxu0
    %v7182 = vadd.f32 0.0, %v7181
    %v7183 = vpop.f32.mrf.mxu0
    %v7184 = vadd.f32 0.0, %v7183
    %7185 = vmatprep.mubr.bf16.mxu0 %v5582
    %7186 = vmatmul.mubr.bf16.gmra.mxu0 %v5581
    %v7187 = vpop.f32.mrf.mxu0
    %v7188 = vadd.f32 0.0, %v7187
    %v7189 = vpop.f32.mrf.mxu0
    %v7190 = vadd.f32 0.0, %v7189
    %v7191 = vpop.f32.mrf.mxu0
    %v7192 = vadd.f32 0.0, %v7191
    %v7193 = vpop.f32.mrf.mxu0
    %v7194 = vadd.f32 0.0, %v7193
    %7195 = vmatprep.mubr.bf16.mxu0 %v5590
    %7196 = vmatmul.mubr.bf16.gmra.mxu0 %v5589
    %v7197 = vpop.f32.mrf.mxu0
    %v7198 = vadd.f32 0.0, %v7197
    %v7199 = vpop.f32.mrf.mxu0
    %v7200 = vadd.f32 0.0, %v7199
    %v7201 = vpop.f32.mrf.mxu0
    %v7202 = vadd.f32 0.0, %v7201
    %v7203 = vpop.f32.mrf.mxu0
    %v7204 = vadd.f32 0.0, %v7203
    %7205 = vdwg.mxu0
    %7206 = vmatprep.subr.bf16.mxu0 %v6714
    %7207 = vmatpush1.bf16.msra.mxu0 %v6713
    %7208 = vmatprep.subr.bf16.mxu0 %v6710
    %7209 = vmatpush1.bf16.msra.mxu0 %v6709
    %7210 = vmatprep.subr.bf16.mxu0 %v6706
    %7211 = vmatpush1.bf16.msra.mxu0 %v6705
    %7212 = vmatprep.subr.bf16.mxu0 %v6702
    %7213 = vmatpush1.bf16.msra.mxu0 %v6701
    %7214 = vmatprep.subr.bf16.mxu0 %v6698
    %7215 = vmatpush1.bf16.msra.mxu0 %v6697
    %7216 = vmatprep.subr.bf16.mxu0 %v6694
    %7217 = vmatpush1.bf16.msra.mxu0 %v6693
    %7218 = vmatprep.subr.bf16.mxu0 %v6690
    %7219 = vmatpush1.bf16.msra.mxu0 %v6689
    %7220 = vmatprep.subr.bf16.mxu0 %v6686
    %7221 = vmatpush1.bf16.msra.mxu0 %v6685
    %7222 = vmatprep.subr.bf16.mxu0 %v6746
    %7223 = vmatpush2.bf16.msra.mxu0 %v6745
    %7224 = vmatprep.subr.bf16.mxu0 %v6742
    %7225 = vmatpush2.bf16.msra.mxu0 %v6741
    %7226 = vmatprep.subr.bf16.mxu0 %v6738
    %7227 = vmatpush2.bf16.msra.mxu0 %v6737
    %7228 = vmatprep.subr.bf16.mxu0 %v6734
    %7229 = vmatpush2.bf16.msra.mxu0 %v6733
    %7230 = vmatprep.subr.bf16.mxu0 %v6730
    %7231 = vmatpush2.bf16.msra.mxu0 %v6729
    %7232 = vmatprep.subr.bf16.mxu0 %v6726
    %7233 = vmatpush2.bf16.msra.mxu0 %v6725
    %7234 = vmatprep.subr.bf16.mxu0 %v6722
    %7235 = vmatpush2.bf16.msra.mxu0 %v6721
    %7236 = vmatprep.subr.bf16.mxu0 %v6718
    %7237 = vmatpush2.bf16.msra.mxu0 %v6717
    %7238 = vmatprep.mubr.bf16.mxu0 %v5568
    %7239 = vmatmul.mubr.bf16.gmra.mxu0 %v5567
    %v7240 = vpop.f32.mrf.mxu0
    %v7241 = vadd.f32 %v7168, %v7240
    %v7242 = vpop.f32.mrf.mxu0
    %v7243 = vadd.f32 %v7170, %v7242
    %v7244 = vpop.f32.mrf.mxu0
    %v7245 = vadd.f32 %v7172, %v7244
    %v7246 = vpop.f32.mrf.mxu0
    %v7247 = vadd.f32 %v7174, %v7246
    %7248 = vmatprep.mubr.bf16.mxu0 %v5576
    %7249 = vmatmul.mubr.bf16.gmra.mxu0 %v5575
    %v7250 = vpop.f32.mrf.mxu0
    %v7251 = vadd.f32 %v7178, %v7250
    %v7252 = vpop.f32.mrf.mxu0
    %v7253 = vadd.f32 %v7180, %v7252
    %v7254 = vpop.f32.mrf.mxu0
    %v7255 = vadd.f32 %v7182, %v7254
    %v7256 = vpop.f32.mrf.mxu0
    %v7257 = vadd.f32 %v7184, %v7256
    %7258 = vmatprep.mubr.bf16.mxu0 %v5584
    %7259 = vmatmul.mubr.bf16.gmra.mxu0 %v5583
    %v7260 = vpop.f32.mrf.mxu0
    %v7261 = vadd.f32 %v7188, %v7260
    %v7262 = vpop.f32.mrf.mxu0
    %v7263 = vadd.f32 %v7190, %v7262
    %v7264 = vpop.f32.mrf.mxu0
    %v7265 = vadd.f32 %v7192, %v7264
    %v7266 = vpop.f32.mrf.mxu0
    %v7267 = vadd.f32 %v7194, %v7266
    %7268 = vmatprep.mubr.bf16.mxu0 %v5592
    %7269 = vmatmul.mubr.bf16.gmra.mxu0 %v5591
    %v7270 = vpop.f32.mrf.mxu0
    %v7271 = vadd.f32 %v7198, %v7270
    %v7272 = vpop.f32.mrf.mxu0
    %v7273 = vadd.f32 %v7200, %v7272
    %v7274 = vpop.f32.mrf.mxu0
    %v7275 = vadd.f32 %v7202, %v7274
    %v7276 = vpop.f32.mrf.mxu0
    %v7277 = vadd.f32 %v7204, %v7276
    %7278 = vdwg.mxu0
    %7279 = vmatprep.subr.bf16.mxu0 %v6778
    %7280 = vmatpush1.bf16.msra.mxu0 %v6777
    %7281 = vmatprep.subr.bf16.mxu0 %v6774
    %7282 = vmatpush1.bf16.msra.mxu0 %v6773
    %7283 = vmatprep.subr.bf16.mxu0 %v6770
    %7284 = vmatpush1.bf16.msra.mxu0 %v6769
    %7285 = vmatprep.subr.bf16.mxu0 %v6766
    %7286 = vmatpush1.bf16.msra.mxu0 %v6765
    %7287 = vmatprep.subr.bf16.mxu0 %v6762
    %7288 = vmatpush1.bf16.msra.mxu0 %v6761
    %7289 = vmatprep.subr.bf16.mxu0 %v6758
    %7290 = vmatpush1.bf16.msra.mxu0 %v6757
    %7291 = vmatprep.subr.bf16.mxu0 %v6754
    %7292 = vmatpush1.bf16.msra.mxu0 %v6753
    %7293 = vmatprep.subr.bf16.mxu0 %v6750
    %7294 = vmatpush1.bf16.msra.mxu0 %v6749
    %7295 = vmatprep.subr.bf16.mxu0 %v6810
    %7296 = vmatpush2.bf16.msra.mxu0 %v6809
    %7297 = vmatprep.subr.bf16.mxu0 %v6806
    %7298 = vmatpush2.bf16.msra.mxu0 %v6805
    %7299 = vmatprep.subr.bf16.mxu0 %v6802
    %7300 = vmatpush2.bf16.msra.mxu0 %v6801
    %7301 = vmatprep.subr.bf16.mxu0 %v6798
    %7302 = vmatpush2.bf16.msra.mxu0 %v6797
    %7303 = vmatprep.subr.bf16.mxu0 %v6794
    %7304 = vmatpush2.bf16.msra.mxu0 %v6793
    %7305 = vmatprep.subr.bf16.mxu0 %v6790
    %7306 = vmatpush2.bf16.msra.mxu0 %v6789
    %7307 = vmatprep.subr.bf16.mxu0 %v6786
    %7308 = vmatpush2.bf16.msra.mxu0 %v6785
    %7309 = vmatprep.subr.bf16.mxu0 %v6782
    %7310 = vmatpush2.bf16.msra.mxu0 %v6781
    %7311 = vmatprep.mubr.bf16.mxu0 %v5570
    %7312 = vmatmul.mubr.bf16.gmra.mxu0 %v5569
    %v7313 = vpop.f32.mrf.mxu0
    %v7314 = vadd.f32 %v7241, %v7313
    %v7315 = vpop.f32.mrf.mxu0
    %v7316 = vadd.f32 %v7243, %v7315
    %v7317 = vpop.f32.mrf.mxu0
    %v7318 = vadd.f32 %v7245, %v7317
    %v7319 = vpop.f32.mrf.mxu0
    %v7320 = vadd.f32 %v7247, %v7319
    %7321 = vmatprep.mubr.bf16.mxu0 %v5578
    %7322 = vmatmul.mubr.bf16.gmra.mxu0 %v5577
    %v7323 = vpop.f32.mrf.mxu0
    %v7324 = vadd.f32 %v7251, %v7323
    %v7325 = vpop.f32.mrf.mxu0
    %v7326 = vadd.f32 %v7253, %v7325
    %v7327 = vpop.f32.mrf.mxu0
    %v7328 = vadd.f32 %v7255, %v7327
    %v7329 = vpop.f32.mrf.mxu0
    %v7330 = vadd.f32 %v7257, %v7329
    %7331 = vmatprep.mubr.bf16.mxu0 %v5586
    %7332 = vmatmul.mubr.bf16.gmra.mxu0 %v5585
    %v7333 = vpop.f32.mrf.mxu0
    %v7334 = vadd.f32 %v7261, %v7333
    %v7335 = vpop.f32.mrf.mxu0
    %v7336 = vadd.f32 %v7263, %v7335
    %v7337 = vpop.f32.mrf.mxu0
    %v7338 = vadd.f32 %v7265, %v7337
    %v7339 = vpop.f32.mrf.mxu0
    %v7340 = vadd.f32 %v7267, %v7339
    %7341 = vmatprep.mubr.bf16.mxu0 %v5594
    %7342 = vmatmul.mubr.bf16.gmra.mxu0 %v5593
    %v7343 = vpop.f32.mrf.mxu0
    %v7344 = vadd.f32 %v7271, %v7343
    %v7345 = vpop.f32.mrf.mxu0
    %v7346 = vadd.f32 %v7273, %v7345
    %v7347 = vpop.f32.mrf.mxu0
    %v7348 = vadd.f32 %v7275, %v7347
    %v7349 = vpop.f32.mrf.mxu0
    %v7350 = vadd.f32 %v7277, %v7349
    %7351 = vdwg.mxu0
    %7352 = vmatprep.subr.bf16.mxu0 %v6842
    %7353 = vmatpush1.bf16.msra.mxu0 %v6841
    %7354 = vmatprep.subr.bf16.mxu0 %v6838
    %7355 = vmatpush1.bf16.msra.mxu0 %v6837
    %7356 = vmatprep.subr.bf16.mxu0 %v6834
    %7357 = vmatpush1.bf16.msra.mxu0 %v6833
    %7358 = vmatprep.subr.bf16.mxu0 %v6830
    %7359 = vmatpush1.bf16.msra.mxu0 %v6829
    %7360 = vmatprep.subr.bf16.mxu0 %v6826
    %7361 = vmatpush1.bf16.msra.mxu0 %v6825
    %7362 = vmatprep.subr.bf16.mxu0 %v6822
    %7363 = vmatpush1.bf16.msra.mxu0 %v6821
    %7364 = vmatprep.subr.bf16.mxu0 %v6818
    %7365 = vmatpush1.bf16.msra.mxu0 %v6817
    %7366 = vmatprep.subr.bf16.mxu0 %v6814
    %7367 = vmatpush1.bf16.msra.mxu0 %v6813
    %7368 = vmatprep.subr.bf16.mxu0 %v6874
    %7369 = vmatpush2.bf16.msra.mxu0 %v6873
    %7370 = vmatprep.subr.bf16.mxu0 %v6870
    %7371 = vmatpush2.bf16.msra.mxu0 %v6869
    %7372 = vmatprep.subr.bf16.mxu0 %v6866
    %7373 = vmatpush2.bf16.msra.mxu0 %v6865
    %7374 = vmatprep.subr.bf16.mxu0 %v6862
    %7375 = vmatpush2.bf16.msra.mxu0 %v6861
    %7376 = vmatprep.subr.bf16.mxu0 %v6858
    %7377 = vmatpush2.bf16.msra.mxu0 %v6857
    %7378 = vmatprep.subr.bf16.mxu0 %v6854
    %7379 = vmatpush2.bf16.msra.mxu0 %v6853
    %7380 = vmatprep.subr.bf16.mxu0 %v6850
    %7381 = vmatpush2.bf16.msra.mxu0 %v6849
    %7382 = vmatprep.subr.bf16.mxu0 %v6846
    %7383 = vmatpush2.bf16.msra.mxu0 %v6845
    %7384 = vmatprep.mubr.bf16.mxu0 %v5572
    %7385 = vmatmul.mubr.bf16.gmra.mxu0 %v5571
    %v7386 = vpop.f32.mrf.mxu0
    %v7387 = vadd.f32 %v7314, %v7386
    %v7388 = vpop.f32.mrf.mxu0
    %v7389 = vadd.f32 %v7316, %v7388
    %v7390 = vpop.f32.mrf.mxu0
    %v7391 = vadd.f32 %v7318, %v7390
    %v7392 = vpop.f32.mrf.mxu0
    %v7393 = vadd.f32 %v7320, %v7392
    %7394 = vmatprep.mubr.bf16.mxu0 %v5580
    %7395 = vmatmul.mubr.bf16.gmra.mxu0 %v5579
    %v7396 = vpop.f32.mrf.mxu0
    %v7397 = vadd.f32 %v7324, %v7396
    %v7398 = vpop.f32.mrf.mxu0
    %v7399 = vadd.f32 %v7326, %v7398
    %v7400 = vpop.f32.mrf.mxu0
    %v7401 = vadd.f32 %v7328, %v7400
    %v7402 = vpop.f32.mrf.mxu0
    %v7403 = vadd.f32 %v7330, %v7402
    %7404 = vmatprep.mubr.bf16.mxu0 %v5588
    %7405 = vmatmul.mubr.bf16.gmra.mxu0 %v5587
    %v7406 = vpop.f32.mrf.mxu0
    %v7407 = vadd.f32 %v7334, %v7406
    %v7408 = vpop.f32.mrf.mxu0
    %v7409 = vadd.f32 %v7336, %v7408
    %v7410 = vpop.f32.mrf.mxu0
    %v7411 = vadd.f32 %v7338, %v7410
    %v7412 = vpop.f32.mrf.mxu0
    %v7413 = vadd.f32 %v7340, %v7412
    %7414 = vmatprep.mubr.bf16.mxu0 %v5596
    %7415 = vmatmul.mubr.bf16.gmra.mxu0 %v5595
    %v7416 = vpop.f32.mrf.mxu0
    %v7417 = vadd.f32 %v7344, %v7416
    %v7418 = vpop.f32.mrf.mxu0
    %v7419 = vadd.f32 %v7346, %v7418
    %v7420 = vpop.f32.mrf.mxu0
    %v7421 = vadd.f32 %v7348, %v7420
    %v7422 = vpop.f32.mrf.mxu0
    %v7423 = vadd.f32 %v7350, %v7422
    %7424 = vdwg.mxu0
    %7425 = vmatprep.subr.bf16.mxu0 %v6652
    %7426 = vmatpush1.bf16.msra.mxu0 %v6651
    %7427 = vmatprep.subr.bf16.mxu0 %v6648
    %7428 = vmatpush1.bf16.msra.mxu0 %v6647
    %7429 = vmatprep.subr.bf16.mxu0 %v6644
    %7430 = vmatpush1.bf16.msra.mxu0 %v6643
    %7431 = vmatprep.subr.bf16.mxu0 %v6640
    %7432 = vmatpush1.bf16.msra.mxu0 %v6639
    %7433 = vmatprep.subr.bf16.mxu0 %v6636
    %7434 = vmatpush1.bf16.msra.mxu0 %v6635
    %7435 = vmatprep.subr.bf16.mxu0 %v6632
    %7436 = vmatpush1.bf16.msra.mxu0 %v6631
    %7437 = vmatprep.subr.bf16.mxu0 %v6628
    %7438 = vmatpush1.bf16.msra.mxu0 %v6627
    %7439 = vmatprep.subr.bf16.mxu0 %v6624
    %7440 = vmatpush1.bf16.msra.mxu0 %v6623
    %7441 = vmatprep.subr.bf16.mxu0 %v6684
    %7442 = vmatpush2.bf16.msra.mxu0 %v6683
    %7443 = vmatprep.subr.bf16.mxu0 %v6680
    %7444 = vmatpush2.bf16.msra.mxu0 %v6679
    %7445 = vmatprep.subr.bf16.mxu0 %v6676
    %7446 = vmatpush2.bf16.msra.mxu0 %v6675
    %7447 = vmatprep.subr.bf16.mxu0 %v6672
    %7448 = vmatpush2.bf16.msra.mxu0 %v6671
    %7449 = vmatprep.subr.bf16.mxu0 %v6668
    %7450 = vmatpush2.bf16.msra.mxu0 %v6667
    %7451 = vmatprep.subr.bf16.mxu0 %v6664
    %7452 = vmatpush2.bf16.msra.mxu0 %v6663
    %7453 = vmatprep.subr.bf16.mxu0 %v6660
    %7454 = vmatpush2.bf16.msra.mxu0 %v6659
    %7455 = vmatprep.subr.bf16.mxu0 %v6656
    %7456 = vmatpush2.bf16.msra.mxu0 %v6655
    %7457 = vmatprep.mubr.bf16.mxu0 %v5566
    %7458 = vmatmul.mubr.bf16.gmra.mxu0 %v5565
    %v7459 = vpop.f32.mrf.mxu0
    %v7460 = vadd.f32 0.0, %v7459
    %v7461 = vpop.f32.mrf.mxu0
    %v7462 = vadd.f32 0.0, %v7461
    %v7463 = vpop.f32.mrf.mxu0
    %v7464 = vadd.f32 0.0, %v7463
    %v7465 = vpop.f32.mrf.mxu0
    %v7466 = vadd.f32 0.0, %v7465
    %7467 = vmatprep.mubr.bf16.mxu0 %v5574
    %7468 = vmatmul.mubr.bf16.gmra.mxu0 %v5573
    %v7469 = vpop.f32.mrf.mxu0
    %v7470 = vadd.f32 0.0, %v7469
    %v7471 = vpop.f32.mrf.mxu0
    %v7472 = vadd.f32 0.0, %v7471
    %v7473 = vpop.f32.mrf.mxu0
    %v7474 = vadd.f32 0.0, %v7473
    %v7475 = vpop.f32.mrf.mxu0
    %v7476 = vadd.f32 0.0, %v7475
    %7477 = vmatprep.mubr.bf16.mxu0 %v5582
    %7478 = vmatmul.mubr.bf16.gmra.mxu0 %v5581
    %v7479 = vpop.f32.mrf.mxu0
    %v7480 = vadd.f32 0.0, %v7479
    %v7481 = vpop.f32.mrf.mxu0
    %v7482 = vadd.f32 0.0, %v7481
    %v7483 = vpop.f32.mrf.mxu0
    %v7484 = vadd.f32 0.0, %v7483
    %v7485 = vpop.f32.mrf.mxu0
    %v7486 = vadd.f32 0.0, %v7485
    %7487 = vmatprep.mubr.bf16.mxu0 %v5590
    %7488 = vmatmul.mubr.bf16.gmra.mxu0 %v5589
    %v7489 = vpop.f32.mrf.mxu0
    %v7490 = vadd.f32 0.0, %v7489
    %v7491 = vpop.f32.mrf.mxu0
    %v7492 = vadd.f32 0.0, %v7491
    %v7493 = vpop.f32.mrf.mxu0
    %v7494 = vadd.f32 0.0, %v7493
    %v7495 = vpop.f32.mrf.mxu0
    %v7496 = vadd.f32 0.0, %v7495
    %7497 = vdwg.mxu0
    %7498 = vmatprep.subr.bf16.mxu0 %v6716
    %7499 = vmatpush1.bf16.msra.mxu0 %v6715
    %7500 = vmatprep.subr.bf16.mxu0 %v6712
    %7501 = vmatpush1.bf16.msra.mxu0 %v6711
    %7502 = vmatprep.subr.bf16.mxu0 %v6708
    %7503 = vmatpush1.bf16.msra.mxu0 %v6707
    %7504 = vmatprep.subr.bf16.mxu0 %v6704
    %7505 = vmatpush1.bf16.msra.mxu0 %v6703
    %7506 = vmatprep.subr.bf16.mxu0 %v6700
    %7507 = vmatpush1.bf16.msra.mxu0 %v6699
    %7508 = vmatprep.subr.bf16.mxu0 %v6696
    %7509 = vmatpush1.bf16.msra.mxu0 %v6695
    %7510 = vmatprep.subr.bf16.mxu0 %v6692
    %7511 = vmatpush1.bf16.msra.mxu0 %v6691
    %7512 = vmatprep.subr.bf16.mxu0 %v6688
    %7513 = vmatpush1.bf16.msra.mxu0 %v6687
    %7514 = vmatprep.subr.bf16.mxu0 %v6748
    %7515 = vmatpush2.bf16.msra.mxu0 %v6747
    %7516 = vmatprep.subr.bf16.mxu0 %v6744
    %7517 = vmatpush2.bf16.msra.mxu0 %v6743
    %7518 = vmatprep.subr.bf16.mxu0 %v6740
    %7519 = vmatpush2.bf16.msra.mxu0 %v6739
    %7520 = vmatprep.subr.bf16.mxu0 %v6736
    %7521 = vmatpush2.bf16.msra.mxu0 %v6735
    %7522 = vmatprep.subr.bf16.mxu0 %v6732
    %7523 = vmatpush2.bf16.msra.mxu0 %v6731
    %7524 = vmatprep.subr.bf16.mxu0 %v6728
    %7525 = vmatpush2.bf16.msra.mxu0 %v6727
    %7526 = vmatprep.subr.bf16.mxu0 %v6724
    %7527 = vmatpush2.bf16.msra.mxu0 %v6723
    %7528 = vmatprep.subr.bf16.mxu0 %v6720
    %7529 = vmatpush2.bf16.msra.mxu0 %v6719
    %7530 = vmatprep.mubr.bf16.mxu0 %v5568
    %7531 = vmatmul.mubr.bf16.gmra.mxu0 %v5567
    %v7532 = vpop.f32.mrf.mxu0
    %v7533 = vadd.f32 %v7460, %v7532
    %v7534 = vpop.f32.mrf.mxu0
    %v7535 = vadd.f32 %v7462, %v7534
    %v7536 = vpop.f32.mrf.mxu0
    %v7537 = vadd.f32 %v7464, %v7536
    %v7538 = vpop.f32.mrf.mxu0
    %v7539 = vadd.f32 %v7466, %v7538
    %7540 = vmatprep.mubr.bf16.mxu0 %v5576
    %7541 = vmatmul.mubr.bf16.gmra.mxu0 %v5575
    %v7542 = vpop.f32.mrf.mxu0
    %v7543 = vadd.f32 %v7470, %v7542
    %v7544 = vpop.f32.mrf.mxu0
    %v7545 = vadd.f32 %v7472, %v7544
    %v7546 = vpop.f32.mrf.mxu0
    %v7547 = vadd.f32 %v7474, %v7546
    %v7548 = vpop.f32.mrf.mxu0
    %v7549 = vadd.f32 %v7476, %v7548
    %7550 = vmatprep.mubr.bf16.mxu0 %v5584
    %7551 = vmatmul.mubr.bf16.gmra.mxu0 %v5583
    %v7552 = vpop.f32.mrf.mxu0
    %v7553 = vadd.f32 %v7480, %v7552
    %v7554 = vpop.f32.mrf.mxu0
    %v7555 = vadd.f32 %v7482, %v7554
    %v7556 = vpop.f32.mrf.mxu0
    %v7557 = vadd.f32 %v7484, %v7556
    %v7558 = vpop.f32.mrf.mxu0
    %v7559 = vadd.f32 %v7486, %v7558
    %7560 = vmatprep.mubr.bf16.mxu0 %v5592
    %7561 = vmatmul.mubr.bf16.gmra.mxu0 %v5591
    %v7562 = vpop.f32.mrf.mxu0
    %v7563 = vadd.f32 %v7490, %v7562
    %v7564 = vpop.f32.mrf.mxu0
    %v7565 = vadd.f32 %v7492, %v7564
    %v7566 = vpop.f32.mrf.mxu0
    %v7567 = vadd.f32 %v7494, %v7566
    %v7568 = vpop.f32.mrf.mxu0
    %v7569 = vadd.f32 %v7496, %v7568
    %7570 = vdwg.mxu0
    %7571 = vmatprep.subr.bf16.mxu0 %v6780
    %7572 = vmatpush1.bf16.msra.mxu0 %v6779
    %7573 = vmatprep.subr.bf16.mxu0 %v6776
    %7574 = vmatpush1.bf16.msra.mxu0 %v6775
    %7575 = vmatprep.subr.bf16.mxu0 %v6772
    %7576 = vmatpush1.bf16.msra.mxu0 %v6771
    %7577 = vmatprep.subr.bf16.mxu0 %v6768
    %7578 = vmatpush1.bf16.msra.mxu0 %v6767
    %7579 = vmatprep.subr.bf16.mxu0 %v6764
    %7580 = vmatpush1.bf16.msra.mxu0 %v6763
    %7581 = vmatprep.subr.bf16.mxu0 %v6760
    %7582 = vmatpush1.bf16.msra.mxu0 %v6759
    %7583 = vmatprep.subr.bf16.mxu0 %v6756
    %7584 = vmatpush1.bf16.msra.mxu0 %v6755
    %7585 = vmatprep.subr.bf16.mxu0 %v6752
    %7586 = vmatpush1.bf16.msra.mxu0 %v6751
    %7587 = vmatprep.subr.bf16.mxu0 %v6812
    %7588 = vmatpush2.bf16.msra.mxu0 %v6811
    %7589 = vmatprep.subr.bf16.mxu0 %v6808
    %7590 = vmatpush2.bf16.msra.mxu0 %v6807
    %7591 = vmatprep.subr.bf16.mxu0 %v6804
    %7592 = vmatpush2.bf16.msra.mxu0 %v6803
    %7593 = vmatprep.subr.bf16.mxu0 %v6800
    %7594 = vmatpush2.bf16.msra.mxu0 %v6799
    %7595 = vmatprep.subr.bf16.mxu0 %v6796
    %7596 = vmatpush2.bf16.msra.mxu0 %v6795
    %7597 = vmatprep.subr.bf16.mxu0 %v6792
    %7598 = vmatpush2.bf16.msra.mxu0 %v6791
    %7599 = vmatprep.subr.bf16.mxu0 %v6788
    %7600 = vmatpush2.bf16.msra.mxu0 %v6787
    %7601 = vmatprep.subr.bf16.mxu0 %v6784
    %7602 = vmatpush2.bf16.msra.mxu0 %v6783
    %7603 = vmatprep.mubr.bf16.mxu0 %v5570
    %7604 = vmatmul.mubr.bf16.gmra.mxu0 %v5569
    %v7605 = vpop.f32.mrf.mxu0
    %v7606 = vadd.f32 %v7533, %v7605
    %v7607 = vpop.f32.mrf.mxu0
    %v7608 = vadd.f32 %v7535, %v7607
    %v7609 = vpop.f32.mrf.mxu0
    %v7610 = vadd.f32 %v7537, %v7609
    %v7611 = vpop.f32.mrf.mxu0
    %v7612 = vadd.f32 %v7539, %v7611
    %7613 = vmatprep.mubr.bf16.mxu0 %v5578
    %7614 = vmatmul.mubr.bf16.gmra.mxu0 %v5577
    %v7615 = vpop.f32.mrf.mxu0
    %v7616 = vadd.f32 %v7543, %v7615
    %v7617 = vpop.f32.mrf.mxu0
    %v7618 = vadd.f32 %v7545, %v7617
    %v7619 = vpop.f32.mrf.mxu0
    %v7620 = vadd.f32 %v7547, %v7619
    %v7621 = vpop.f32.mrf.mxu0
    %v7622 = vadd.f32 %v7549, %v7621
    %7623 = vmatprep.mubr.bf16.mxu0 %v5586
    %7624 = vmatmul.mubr.bf16.gmra.mxu0 %v5585
    %v7625 = vpop.f32.mrf.mxu0
    %v7626 = vadd.f32 %v7553, %v7625
    %v7627 = vpop.f32.mrf.mxu0
    %v7628 = vadd.f32 %v7555, %v7627
    %v7629 = vpop.f32.mrf.mxu0
    %v7630 = vadd.f32 %v7557, %v7629
    %v7631 = vpop.f32.mrf.mxu0
    %v7632 = vadd.f32 %v7559, %v7631
    %7633 = vmatprep.mubr.bf16.mxu0 %v5594
    %7634 = vmatmul.mubr.bf16.gmra.mxu0 %v5593
    %v7635 = vpop.f32.mrf.mxu0
    %v7636 = vadd.f32 %v7563, %v7635
    %v7637 = vpop.f32.mrf.mxu0
    %v7638 = vadd.f32 %v7565, %v7637
    %v7639 = vpop.f32.mrf.mxu0
    %v7640 = vadd.f32 %v7567, %v7639
    %v7641 = vpop.f32.mrf.mxu0
    %v7642 = vadd.f32 %v7569, %v7641
    %7643 = vdwg.mxu0
    %7644 = vmatprep.subr.bf16.mxu0 %v6844
    %7645 = vmatpush1.bf16.msra.mxu0 %v6843
    %7646 = vmatprep.subr.bf16.mxu0 %v6840
    %7647 = vmatpush1.bf16.msra.mxu0 %v6839
    %7648 = vmatprep.subr.bf16.mxu0 %v6836
    %7649 = vmatpush1.bf16.msra.mxu0 %v6835
    %7650 = vmatprep.subr.bf16.mxu0 %v6832
    %7651 = vmatpush1.bf16.msra.mxu0 %v6831
    %7652 = vmatprep.subr.bf16.mxu0 %v6828
    %7653 = vmatpush1.bf16.msra.mxu0 %v6827
    %7654 = vmatprep.subr.bf16.mxu0 %v6824
    %7655 = vmatpush1.bf16.msra.mxu0 %v6823
    %7656 = vmatprep.subr.bf16.mxu0 %v6820
    %7657 = vmatpush1.bf16.msra.mxu0 %v6819
    %7658 = vmatprep.subr.bf16.mxu0 %v6816
    %7659 = vmatpush1.bf16.msra.mxu0 %v6815
    %7660 = vmatprep.subr.bf16.mxu0 %v6876
    %7661 = vmatpush2.bf16.msra.mxu0 %v6875
    %7662 = vmatprep.subr.bf16.mxu0 %v6872
    %7663 = vmatpush2.bf16.msra.mxu0 %v6871
    %7664 = vmatprep.subr.bf16.mxu0 %v6868
    %7665 = vmatpush2.bf16.msra.mxu0 %v6867
    %7666 = vmatprep.subr.bf16.mxu0 %v6864
    %7667 = vmatpush2.bf16.msra.mxu0 %v6863
    %7668 = vmatprep.subr.bf16.mxu0 %v6860
    %7669 = vmatpush2.bf16.msra.mxu0 %v6859
    %7670 = vmatprep.subr.bf16.mxu0 %v6856
    %7671 = vmatpush2.bf16.msra.mxu0 %v6855
    %7672 = vmatprep.subr.bf16.mxu0 %v6852
    %7673 = vmatpush2.bf16.msra.mxu0 %v6851
    %7674 = vmatprep.subr.bf16.mxu0 %v6848
    %7675 = vmatpush2.bf16.msra.mxu0 %v6847
    %7676 = vmatprep.mubr.bf16.mxu0 %v5572
    %7677 = vmatmul.mubr.bf16.gmra.mxu0 %v5571
    %v7678 = vpop.f32.mrf.mxu0
    %v7679 = vadd.f32 %v7606, %v7678
    %v7680 = vpop.f32.mrf.mxu0
    %v7681 = vadd.f32 %v7608, %v7680
    %v7682 = vpop.f32.mrf.mxu0
    %v7683 = vadd.f32 %v7610, %v7682
    %v7684 = vpop.f32.mrf.mxu0
    %v7685 = vadd.f32 %v7612, %v7684
    %7686 = vmatprep.mubr.bf16.mxu0 %v5580
    %7687 = vmatmul.mubr.bf16.gmra.mxu0 %v5579
    %v7688 = vpop.f32.mrf.mxu0
    %v7689 = vadd.f32 %v7616, %v7688
    %v7690 = vpop.f32.mrf.mxu0
    %v7691 = vadd.f32 %v7618, %v7690
    %v7692 = vpop.f32.mrf.mxu0
    %v7693 = vadd.f32 %v7620, %v7692
    %v7694 = vpop.f32.mrf.mxu0
    %v7695 = vadd.f32 %v7622, %v7694
    %7696 = vmatprep.mubr.bf16.mxu0 %v5588
    %7697 = vmatmul.mubr.bf16.gmra.mxu0 %v5587
    %v7698 = vpop.f32.mrf.mxu0
    %v7699 = vadd.f32 %v7626, %v7698
    %v7700 = vpop.f32.mrf.mxu0
    %v7701 = vadd.f32 %v7628, %v7700
    %v7702 = vpop.f32.mrf.mxu0
    %v7703 = vadd.f32 %v7630, %v7702
    %v7704 = vpop.f32.mrf.mxu0
    %v7705 = vadd.f32 %v7632, %v7704
    %7706 = vmatprep.mubr.bf16.mxu0 %v5596
    %7707 = vmatmul.mubr.bf16.gmra.mxu0 %v5595
    %v7708 = vpop.f32.mrf.mxu0
    %v7709 = vadd.f32 %v7636, %v7708
    %v7710 = vpop.f32.mrf.mxu0
    %v7711 = vadd.f32 %v7638, %v7710
    %v7712 = vpop.f32.mrf.mxu0
    %v7713 = vadd.f32 %v7640, %v7712
    %v7714 = vpop.f32.mrf.mxu0
    %v7715 = vadd.f32 %v7642, %v7714
    %7716 = vdwg.mxu0
    %vm7717 = vcmp.eq.s32.totalorder %v876, %v321
    %v7718 = vsel %vm7717, 1.0, 0.0
    %v7719 = vld [vmem:[%s17] sm:$0xf]
    %v7721 = vlaneseq
    %v7722 = vshrl.u32 %v7721, 7
    %v7723 = vsub.s32 0, %v7722
    %v7724 = vrot.slane %v7719, %v7723
    %v7725 = vlaneseq
    %v7726 = vshrl.u32 %v7725, 7
    %v7727 = vsub.s32 1, %v7726
    %v7728 = vrot.slane %v7719, %v7727
    %v7729 = vlaneseq
    %v7730 = vshrl.u32 %v7729, 7
    %v7731 = vsub.s32 2, %v7730
    %v7732 = vrot.slane %v7719, %v7731
    %v7733 = vlaneseq
    %v7734 = vshrl.u32 %v7733, 7
    %v7735 = vsub.s32 3, %v7734
    %v7736 = vrot.slane %v7719, %v7735
    %v7742 = vsel %vm541, %v7718, 0
    %7744 = vmatprep.subr.mxu0 0.0
    %7745 = vmatpush1.msra.mxu0 0.0
    %7746 = vmatprep.subr.mxu0 0.0
    %7747 = vmatpush1.msra.mxu0 0.0
    %7748 = vmatprep.subr.mxu0 0.0
    %7749 = vmatpush1.msra.mxu0 0.0
    %7750 = vmatprep.subr.mxu0 0.0
    %7751 = vmatpush1.msra.mxu0 0.0
    %7752 = vmatprep.subr.mxu0 0.0
    %7753 = vmatpush1.msra.mxu0 0.0
    %7754 = vmatprep.subr.mxu0 0.0
    %7755 = vmatpush1.msra.mxu0 0.0
    %7756 = vmatprep.subr.mxu0 0.0
    %7757 = vmatpush1.msra.mxu0 0.0
    %7758 = vmatprep.subr.mxu0 0.0
    %7759 = vmatpush1.msra.mxu0 0.0
    %7760 = vmatprep.subr.mxu0 %v7423
    %7761 = vmatpush1.msra.mxu0 %v7421
    %7762 = vmatprep.subr.mxu0 %v7419
    %7763 = vmatpush1.msra.mxu0 %v7417
    %7764 = vmatprep.subr.mxu0 %v7413
    %7765 = vmatpush1.msra.mxu0 %v7411
    %7766 = vmatprep.subr.mxu0 %v7409
    %7767 = vmatpush1.msra.mxu0 %v7407
    %7768 = vmatprep.subr.mxu0 %v7403
    %7769 = vmatpush1.msra.mxu0 %v7401
    %7770 = vmatprep.subr.mxu0 %v7399
    %7771 = vmatpush1.msra.mxu0 %v7397
    %7772 = vmatprep.subr.mxu0 %v7393
    %7773 = vmatpush1.msra.mxu0 %v7391
    %7774 = vmatprep.subr.mxu0 %v7389
    %7775 = vmatpush1.msra.mxu0 %v7387
    %7776 = vmatprep.subr.mxu0 0.0
    %7777 = vmatpush2.msra.mxu0 0.0
    %7778 = vmatprep.subr.mxu0 0.0
    %7779 = vmatpush2.msra.mxu0 0.0
    %7780 = vmatprep.subr.mxu0 0.0
    %7781 = vmatpush2.msra.mxu0 0.0
    %7782 = vmatprep.subr.mxu0 0.0
    %7783 = vmatpush2.msra.mxu0 0.0
    %7784 = vmatprep.subr.mxu0 0.0
    %7785 = vmatpush2.msra.mxu0 0.0
    %7786 = vmatprep.subr.mxu0 0.0
    %7787 = vmatpush2.msra.mxu0 0.0
    %7788 = vmatprep.subr.mxu0 0.0
    %7789 = vmatpush2.msra.mxu0 0.0
    %7790 = vmatprep.subr.mxu0 0.0
    %7791 = vmatpush2.msra.mxu0 0.0
    %7792 = vmatprep.subr.mxu0 0.0
    %7793 = vmatpush2.msra.mxu0 0.0
    %7794 = vmatprep.subr.mxu0 0.0
    %7795 = vmatpush2.msra.mxu0 0.0
    %7796 = vmatprep.subr.mxu0 0.0
    %7797 = vmatpush2.msra.mxu0 0.0
    %7798 = vmatprep.subr.mxu0 0.0
    %7799 = vmatpush2.msra.mxu0 0.0
    %7800 = vmatprep.subr.mxu0 0.0
    %7801 = vmatpush2.msra.mxu0 0.0
    %7802 = vmatprep.subr.mxu0 0.0
    %7803 = vmatpush2.msra.mxu0 0.0
    %7804 = vmatprep.subr.mxu0 0.0
    %7805 = vmatpush2.msra.mxu0 0.0
    %7806 = vmatprep.subr.mxu0 0.0
    %7807 = vmatpush2.msra.mxu0 0.0
    %7808 = vmatprep.mubr.f32.mxu0 0.0
    %7809 = vmatmul.mubr.f32.gmra.mxu0 %v7742
    %v7810 = vpop.f32.mrf.mxu0
    %v7811 = vadd.f32 %v7724, %v7810
    %v7812 = vpop.f32.mrf.mxu0
    %v7813 = vadd.f32 %v7728, %v7812
    %7814 = vdwg.mxu0
    %7815 = vmatprep.subr.mxu0 0.0
    %7816 = vmatpush1.msra.mxu0 0.0
    %7817 = vmatprep.subr.mxu0 0.0
    %7818 = vmatpush1.msra.mxu0 0.0
    %7819 = vmatprep.subr.mxu0 0.0
    %7820 = vmatpush1.msra.mxu0 0.0
    %7821 = vmatprep.subr.mxu0 0.0
    %7822 = vmatpush1.msra.mxu0 0.0
    %7823 = vmatprep.subr.mxu0 0.0
    %7824 = vmatpush1.msra.mxu0 0.0
    %7825 = vmatprep.subr.mxu0 0.0
    %7826 = vmatpush1.msra.mxu0 0.0
    %7827 = vmatprep.subr.mxu0 0.0
    %7828 = vmatpush1.msra.mxu0 0.0
    %7829 = vmatprep.subr.mxu0 0.0
    %7830 = vmatpush1.msra.mxu0 0.0
    %7831 = vmatprep.subr.mxu0 %v7715
    %7832 = vmatpush1.msra.mxu0 %v7713
    %7833 = vmatprep.subr.mxu0 %v7711
    %7834 = vmatpush1.msra.mxu0 %v7709
    %7835 = vmatprep.subr.mxu0 %v7705
    %7836 = vmatpush1.msra.mxu0 %v7703
    %7837 = vmatprep.subr.mxu0 %v7701
    %7838 = vmatpush1.msra.mxu0 %v7699
    %7839 = vmatprep.subr.mxu0 %v7695
    %7840 = vmatpush1.msra.mxu0 %v7693
    %7841 = vmatprep.subr.mxu0 %v7691
    %7842 = vmatpush1.msra.mxu0 %v7689
    %7843 = vmatprep.subr.mxu0 %v7685
    %7844 = vmatpush1.msra.mxu0 %v7683
    %7845 = vmatprep.subr.mxu0 %v7681
    %7846 = vmatpush1.msra.mxu0 %v7679
    %7847 = vmatprep.subr.mxu0 0.0
    %7848 = vmatpush2.msra.mxu0 0.0
    %7849 = vmatprep.subr.mxu0 0.0
    %7850 = vmatpush2.msra.mxu0 0.0
    %7851 = vmatprep.subr.mxu0 0.0
    %7852 = vmatpush2.msra.mxu0 0.0
    %7853 = vmatprep.subr.mxu0 0.0
    %7854 = vmatpush2.msra.mxu0 0.0
    %7855 = vmatprep.subr.mxu0 0.0
    %7856 = vmatpush2.msra.mxu0 0.0
    %7857 = vmatprep.subr.mxu0 0.0
    %7858 = vmatpush2.msra.mxu0 0.0
    %7859 = vmatprep.subr.mxu0 0.0
    %7860 = vmatpush2.msra.mxu0 0.0
    %7861 = vmatprep.subr.mxu0 0.0
    %7862 = vmatpush2.msra.mxu0 0.0
    %7863 = vmatprep.subr.mxu0 0.0
    %7864 = vmatpush2.msra.mxu0 0.0
    %7865 = vmatprep.subr.mxu0 0.0
    %7866 = vmatpush2.msra.mxu0 0.0
    %7867 = vmatprep.subr.mxu0 0.0
    %7868 = vmatpush2.msra.mxu0 0.0
    %7869 = vmatprep.subr.mxu0 0.0
    %7870 = vmatpush2.msra.mxu0 0.0
    %7871 = vmatprep.subr.mxu0 0.0
    %7872 = vmatpush2.msra.mxu0 0.0
    %7873 = vmatprep.subr.mxu0 0.0
    %7874 = vmatpush2.msra.mxu0 0.0
    %7875 = vmatprep.subr.mxu0 0.0
    %7876 = vmatpush2.msra.mxu0 0.0
    %7877 = vmatprep.subr.mxu0 0.0
    %7878 = vmatpush2.msra.mxu0 0.0
    %7879 = vmatprep.mubr.f32.mxu0 0.0
    %7880 = vmatmul.mubr.f32.gmra.mxu0 %v7742
    %v7881 = vpop.f32.mrf.mxu0
    %v7882 = vadd.f32 %v7732, %v7881
    %v7883 = vpop.f32.mrf.mxu0
    %v7884 = vadd.f32 %v7736, %v7883
    %7885 = vdwg.mxu0
    %v7886 = vmax.f32 %v7811, 0.0
    %v7887 = vmax.f32 %v7813, 0.0
    %v7888 = vmax.f32 %v7882, 0.0
    %v7889 = vmax.f32 %v7884, 0.0
    %v7890 = vpack.c.bf16 %v7886, %v7886
    %v7891 = vpack.c.bf16 %v7887, %v7887
    %v7892 = vpack.c.bf16 %v7888, %v7888
    %v7893 = vpack.c.bf16 %v7889, %v7889
    %v7894 = vld [vmem:[%s18] sm:$0xf]
    %v7895 = vld [vmem:[%s18 + $0x4] sm:$0xf]
    %v7896 = vld [vmem:[%s18 + $0x8] sm:$0xf]
    %v7897 = vld [vmem:[%s18 + $0xc] sm:$0xf]
    %v7898 = vld [vmem:[%s18 + $0x10] sm:$0xf]
    %v7899 = vld [vmem:[%s18 + $0x14] sm:$0xf]
    %v7900 = vld [vmem:[%s18 + $0x18] sm:$0xf]
    %v7901 = vld [vmem:[%s18 + $0x1c] sm:$0xf]
    %v7902 = vld [vmem:[%s18 + $0x20] sm:$0xf]
    %v7903 = vld [vmem:[%s18 + $0x24] sm:$0xf]
    %v7904 = vld [vmem:[%s18 + $0x28] sm:$0xf]
    %v7905 = vld [vmem:[%s18 + $0x2c] sm:$0xf]
    %v7906 = vld [vmem:[%s18 + $0x30] sm:$0xf]
    %v7907 = vld [vmem:[%s18 + $0x34] sm:$0xf]
    %v7908 = vld [vmem:[%s18 + $0x38] sm:$0xf]
    %v7909 = vld [vmem:[%s18 + $0x3c] sm:$0xf]
    %v7910 = vld [vmem:[%s18 + $0x40] sm:$0xf]
    %v7911 = vld [vmem:[%s18 + $0x44] sm:$0xf]
    %v7912 = vld [vmem:[%s18 + $0x48] sm:$0xf]
    %v7913 = vld [vmem:[%s18 + $0x4c] sm:$0xf]
    %v7914 = vld [vmem:[%s18 + $0x50] sm:$0xf]
    %v7915 = vld [vmem:[%s18 + $0x54] sm:$0xf]
    %v7916 = vld [vmem:[%s18 + $0x58] sm:$0xf]
    %v7917 = vld [vmem:[%s18 + $0x5c] sm:$0xf]
    %v7918 = vld [vmem:[%s18 + $0x60] sm:$0xf]
    %v7919 = vld [vmem:[%s18 + $0x64] sm:$0xf]
    %v7920 = vld [vmem:[%s18 + $0x68] sm:$0xf]
    %v7921 = vld [vmem:[%s18 + $0x6c] sm:$0xf]
    %v7922 = vld [vmem:[%s18 + $0x70] sm:$0xf]
    %v7923 = vld [vmem:[%s18 + $0x74] sm:$0xf]
    %v7924 = vld [vmem:[%s18 + $0x78] sm:$0xf]
    %v7925 = vld [vmem:[%s18 + $0x7c] sm:$0xf]
    %v7926 = vld [vmem:[%s18 + $0x80] sm:$0xf]
    %v7927 = vld [vmem:[%s18 + $0x84] sm:$0xf]
    %v7928 = vld [vmem:[%s18 + $0x88] sm:$0xf]
    %v7929 = vld [vmem:[%s18 + $0x8c] sm:$0xf]
    %v7930 = vld [vmem:[%s18 + $0x90] sm:$0xf]
    %v7931 = vld [vmem:[%s18 + $0x94] sm:$0xf]
    %v7932 = vld [vmem:[%s18 + $0x98] sm:$0xf]
    %v7933 = vld [vmem:[%s18 + $0x9c] sm:$0xf]
    %v7934 = vld [vmem:[%s18 + $0xa0] sm:$0xf]
    %v7935 = vld [vmem:[%s18 + $0xa4] sm:$0xf]
    %v7936 = vld [vmem:[%s18 + $0xa8] sm:$0xf]
    %v7937 = vld [vmem:[%s18 + $0xac] sm:$0xf]
    %v7938 = vld [vmem:[%s18 + $0xb0] sm:$0xf]
    %v7939 = vld [vmem:[%s18 + $0xb4] sm:$0xf]
    %v7940 = vld [vmem:[%s18 + $0xb8] sm:$0xf]
    %v7941 = vld [vmem:[%s18 + $0xbc] sm:$0xf]
    %v7942 = vld [vmem:[%s18 + $0xc0] sm:$0xf]
    %v7943 = vld [vmem:[%s18 + $0xc4] sm:$0xf]
    %v7944 = vld [vmem:[%s18 + $0xc8] sm:$0xf]
    %v7945 = vld [vmem:[%s18 + $0xcc] sm:$0xf]
    %v7946 = vld [vmem:[%s18 + $0xd0] sm:$0xf]
    %v7947 = vld [vmem:[%s18 + $0xd4] sm:$0xf]
    %v7948 = vld [vmem:[%s18 + $0xd8] sm:$0xf]
    %v7949 = vld [vmem:[%s18 + $0xdc] sm:$0xf]
    %v7950 = vld [vmem:[%s18 + $0xe0] sm:$0xf]
    %v7951 = vld [vmem:[%s18 + $0xe4] sm:$0xf]
    %v7952 = vld [vmem:[%s18 + $0xe8] sm:$0xf]
    %v7953 = vld [vmem:[%s18 + $0xec] sm:$0xf]
    %v7954 = vld [vmem:[%s18 + $0xf0] sm:$0xf]
    %v7955 = vld [vmem:[%s18 + $0xf4] sm:$0xf]
    %v7956 = vld [vmem:[%s18 + $0xf8] sm:$0xf]
    %v7957 = vld [vmem:[%s18 + $0xfc] sm:$0xf]
    %v7958 = vld [vmem:[%s19] sm:$0x1]
    %v7960 = vlaneseq
    %v7961 = vshrl.u32 %v7960, 7
    %v7962 = vsub.s32 0, %v7961
    %v7963 = vrot.slane %v7958, %v7962
    %v8029 = vunpack.c.l.b16 %v7894
    %v8030 = vunpack.c.l.b16 %v7895
    %v8031 = vunpack.c.l.b16 %v7896
    %v8032 = vunpack.c.l.b16 %v7897
    %v8033 = vunpack.c.l.b16 %v7898
    %v8034 = vunpack.c.l.b16 %v7899
    %v8035 = vunpack.c.l.b16 %v7900
    %v8036 = vunpack.c.l.b16 %v7901
    %v8037 = vunpack.c.l.b16 %v7902
    %v8038 = vunpack.c.l.b16 %v7903
    %v8039 = vunpack.c.l.b16 %v7904
    %v8040 = vunpack.c.l.b16 %v7905
    %v8041 = vunpack.c.l.b16 %v7906
    %v8042 = vunpack.c.l.b16 %v7907
    %v8043 = vunpack.c.l.b16 %v7908
    %v8044 = vunpack.c.l.b16 %v7909
    %v8045 = vunpack.c.l.b16 %v7910
    %v8046 = vunpack.c.l.b16 %v7911
    %v8047 = vunpack.c.l.b16 %v7912
    %v8048 = vunpack.c.l.b16 %v7913
    %v8049 = vunpack.c.l.b16 %v7914
    %v8050 = vunpack.c.l.b16 %v7915
    %v8051 = vunpack.c.l.b16 %v7916
    %v8052 = vunpack.c.l.b16 %v7917
    %v8053 = vunpack.c.l.b16 %v7918
    %v8054 = vunpack.c.l.b16 %v7919
    %v8055 = vunpack.c.l.b16 %v7920
    %v8056 = vunpack.c.l.b16 %v7921
    %v8057 = vunpack.c.l.b16 %v7922
    %v8058 = vunpack.c.l.b16 %v7923
    %v8059 = vunpack.c.l.b16 %v7924
    %v8060 = vunpack.c.l.b16 %v7925
    %v8061 = vunpack.c.l.b16 %v7926
    %v8062 = vunpack.c.l.b16 %v7927
    %v8063 = vunpack.c.l.b16 %v7928
    %v8064 = vunpack.c.l.b16 %v7929
    %v8065 = vunpack.c.l.b16 %v7930
    %v8066 = vunpack.c.l.b16 %v7931
    %v8067 = vunpack.c.l.b16 %v7932
    %v8068 = vunpack.c.l.b16 %v7933
    %v8069 = vunpack.c.l.b16 %v7934
    %v8070 = vunpack.c.l.b16 %v7935
    %v8071 = vunpack.c.l.b16 %v7936
    %v8072 = vunpack.c.l.b16 %v7937
    %v8073 = vunpack.c.l.b16 %v7938
    %v8074 = vunpack.c.l.b16 %v7939
    %v8075 = vunpack.c.l.b16 %v7940
    %v8076 = vunpack.c.l.b16 %v7941
    %v8077 = vunpack.c.l.b16 %v7942
    %v8078 = vunpack.c.l.b16 %v7943
    %v8079 = vunpack.c.l.b16 %v7944
    %v8080 = vunpack.c.l.b16 %v7945
    %v8081 = vunpack.c.l.b16 %v7946
    %v8082 = vunpack.c.l.b16 %v7947
    %v8083 = vunpack.c.l.b16 %v7948
    %v8084 = vunpack.c.l.b16 %v7949
    %v8085 = vunpack.c.l.b16 %v7950
    %v8086 = vunpack.c.l.b16 %v7951
    %v8087 = vunpack.c.l.b16 %v7952
    %v8088 = vunpack.c.l.b16 %v7953
    %v8089 = vunpack.c.l.b16 %v7954
    %v8090 = vunpack.c.l.b16 %v7955
    %v8091 = vunpack.c.l.b16 %v7956
    %v8092 = vunpack.c.l.b16 %v7957
    %v8093 = vpack.c.b16 %v8030, %v8029
    %v8094 = vpack.c.b16 %v8032, %v8031
    %v8095 = vpack.c.b16 %v8034, %v8033
    %v8096 = vpack.c.b16 %v8036, %v8035
    %v8097 = vpack.c.b16 %v8038, %v8037
    %v8098 = vpack.c.b16 %v8040, %v8039
    %v8099 = vpack.c.b16 %v8042, %v8041
    %v8100 = vpack.c.b16 %v8044, %v8043
    %v8101 = vpack.c.b16 %v8046, %v8045
    %v8102 = vpack.c.b16 %v8048, %v8047
    %v8103 = vpack.c.b16 %v8050, %v8049
    %v8104 = vpack.c.b16 %v8052, %v8051
    %v8105 = vpack.c.b16 %v8054, %v8053
    %v8106 = vpack.c.b16 %v8056, %v8055
    %v8107 = vpack.c.b16 %v8058, %v8057
    %v8108 = vpack.c.b16 %v8060, %v8059
    %v8109 = vpack.c.b16 %v8062, %v8061
    %v8110 = vpack.c.b16 %v8064, %v8063
    %v8111 = vpack.c.b16 %v8066, %v8065
    %v8112 = vpack.c.b16 %v8068, %v8067
    %v8113 = vpack.c.b16 %v8070, %v8069
    %v8114 = vpack.c.b16 %v8072, %v8071
    %v8115 = vpack.c.b16 %v8074, %v8073
    %v8116 = vpack.c.b16 %v8076, %v8075
    %v8117 = vpack.c.b16 %v8078, %v8077
    %v8118 = vpack.c.b16 %v8080, %v8079
    %v8119 = vpack.c.b16 %v8082, %v8081
    %v8120 = vpack.c.b16 %v8084, %v8083
    %v8121 = vpack.c.b16 %v8086, %v8085
    %v8122 = vpack.c.b16 %v8088, %v8087
    %v8123 = vpack.c.b16 %v8090, %v8089
    %v8124 = vpack.c.b16 %v8092, %v8091
    %8157 = vmatprep.subr.bf16.mxu0 0
    %8158 = vmatpush1.bf16.msra.mxu0 %v8100
    %8159 = vmatprep.subr.bf16.mxu0 0
    %8160 = vmatpush1.bf16.msra.mxu0 %v8099
    %8161 = vmatprep.subr.bf16.mxu0 0
    %8162 = vmatpush1.bf16.msra.mxu0 %v8098
    %8163 = vmatprep.subr.bf16.mxu0 0
    %8164 = vmatpush1.bf16.msra.mxu0 %v8097
    %8165 = vmatprep.subr.bf16.mxu0 0
    %8166 = vmatpush1.bf16.msra.mxu0 %v8096
    %8167 = vmatprep.subr.bf16.mxu0 0
    %8168 = vmatpush1.bf16.msra.mxu0 %v8095
    %8169 = vmatprep.subr.bf16.mxu0 0
    %8170 = vmatpush1.bf16.msra.mxu0 %v8094
    %8171 = vmatprep.subr.bf16.mxu0 0
    %8172 = vmatpush1.bf16.msra.mxu0 %v8093
    %8173 = vmatprep.subr.bf16.mxu0 0
    %8174 = vmatpush2.bf16.msra.mxu0 %v8108
    %8175 = vmatprep.subr.bf16.mxu0 0
    %8176 = vmatpush2.bf16.msra.mxu0 %v8107
    %8177 = vmatprep.subr.bf16.mxu0 0
    %8178 = vmatpush2.bf16.msra.mxu0 %v8106
    %8179 = vmatprep.subr.bf16.mxu0 0
    %8180 = vmatpush2.bf16.msra.mxu0 %v8105
    %8181 = vmatprep.subr.bf16.mxu0 0
    %8182 = vmatpush2.bf16.msra.mxu0 %v8104
    %8183 = vmatprep.subr.bf16.mxu0 0
    %8184 = vmatpush2.bf16.msra.mxu0 %v8103
    %8185 = vmatprep.subr.bf16.mxu0 0
    %8186 = vmatpush2.bf16.msra.mxu0 %v8102
    %8187 = vmatprep.subr.bf16.mxu0 0
    %8188 = vmatpush2.bf16.msra.mxu0 %v8101
    %8189 = vmatprep.mubr.bf16.mxu0 %v7891
    %8190 = vmatmul.mubr.bf16.gmra.mxu0 %v7890
    %v8191 = vpop.f32.mrf.mxu0
    %v8192 = vadd.f32 %v7963, %v8191
    %v8193 = vpop.f32.mrf.mxu0
    %v8194 = vpop.f32.mrf.mxu0
    %v8195 = vpop.f32.mrf.mxu0
    %8196 = vdwg.mxu0
    %8197 = vmatprep.subr.bf16.mxu0 0
    %8198 = vmatpush1.bf16.msra.mxu0 %v8116
    %8199 = vmatprep.subr.bf16.mxu0 0
    %8200 = vmatpush1.bf16.msra.mxu0 %v8115
    %8201 = vmatprep.subr.bf16.mxu0 0
    %8202 = vmatpush1.bf16.msra.mxu0 %v8114
    %8203 = vmatprep.subr.bf16.mxu0 0
    %8204 = vmatpush1.bf16.msra.mxu0 %v8113
    %8205 = vmatprep.subr.bf16.mxu0 0
    %8206 = vmatpush1.bf16.msra.mxu0 %v8112
    %8207 = vmatprep.subr.bf16.mxu0 0
    %8208 = vmatpush1.bf16.msra.mxu0 %v8111
    %8209 = vmatprep.subr.bf16.mxu0 0
    %8210 = vmatpush1.bf16.msra.mxu0 %v8110
    %8211 = vmatprep.subr.bf16.mxu0 0
    %8212 = vmatpush1.bf16.msra.mxu0 %v8109
    %8213 = vmatprep.subr.bf16.mxu0 0
    %8214 = vmatpush2.bf16.msra.mxu0 %v8124
    %8215 = vmatprep.subr.bf16.mxu0 0
    %8216 = vmatpush2.bf16.msra.mxu0 %v8123
    %8217 = vmatprep.subr.bf16.mxu0 0
    %8218 = vmatpush2.bf16.msra.mxu0 %v8122
    %8219 = vmatprep.subr.bf16.mxu0 0
    %8220 = vmatpush2.bf16.msra.mxu0 %v8121
    %8221 = vmatprep.subr.bf16.mxu0 0
    %8222 = vmatpush2.bf16.msra.mxu0 %v8120
    %8223 = vmatprep.subr.bf16.mxu0 0
    %8224 = vmatpush2.bf16.msra.mxu0 %v8119
    %8225 = vmatprep.subr.bf16.mxu0 0
    %8226 = vmatpush2.bf16.msra.mxu0 %v8118
    %8227 = vmatprep.subr.bf16.mxu0 0
    %8228 = vmatpush2.bf16.msra.mxu0 %v8117
    %8229 = vmatprep.mubr.bf16.mxu0 %v7893
    %8230 = vmatmul.mubr.bf16.gmra.mxu0 %v7892
    %v8231 = vpop.f32.mrf.mxu0
    %v8232 = vadd.f32 %v8192, %v8231
    %v8233 = vpop.f32.mrf.mxu0
    %v8234 = vpop.f32.mrf.mxu0
    %v8235 = vpop.f32.mrf.mxu0
    %8236 = vdwg.mxu0
    %v8237 = vmax.f32 %v8232, 0.0
    %v8238 = vpack.c.bf16 %v8237, %v8237
    %v8239 = vld [vmem:[%s20] sm:$0xf]
    %v8240 = vld [vmem:[%s20 + $0x4] sm:$0xf]
    %v8241 = vld [vmem:[%s20 + $0x8] sm:$0xf]
    %v8242 = vld [vmem:[%s20 + $0xc] sm:$0xf]
    %v8243 = vld [vmem:[%s20 + $0x10] sm:$0xf]
    %v8244 = vld [vmem:[%s20 + $0x14] sm:$0xf]
    %v8245 = vld [vmem:[%s20 + $0x18] sm:$0xf]
    %v8246 = vld [vmem:[%s20 + $0x1c] sm:$0xf]
    %v8247 = vld [vmem:[%s20 + $0x20] sm:$0xf]
    %v8248 = vld [vmem:[%s20 + $0x24] sm:$0xf]
    %v8249 = vld [vmem:[%s20 + $0x28] sm:$0xf]
    %v8250 = vld [vmem:[%s20 + $0x2c] sm:$0xf]
    %v8251 = vld [vmem:[%s20 + $0x30] sm:$0xf]
    %v8252 = vld [vmem:[%s20 + $0x34] sm:$0xf]
    %v8253 = vld [vmem:[%s20 + $0x38] sm:$0xf]
    %v8254 = vld [vmem:[%s20 + $0x3c] sm:$0xf]
    %v8255 = vld [vmem:[%s21] sm:$0x1]
    %v8257 = vlaneseq
    %v8258 = vshrl.u32 %v8257, 7
    %v8259 = vsub.s32 0, %v8258
    %v8260 = vrot.slane %v8255, %v8259
    %v8278 = vunpack.c.l.b16 %v8239
    %v8279 = vunpack.c.l.b16 %v8240
    %v8280 = vunpack.c.l.b16 %v8241
    %v8281 = vunpack.c.l.b16 %v8242
    %v8282 = vunpack.c.l.b16 %v8243
    %v8283 = vunpack.c.l.b16 %v8244
    %v8284 = vunpack.c.l.b16 %v8245
    %v8285 = vunpack.c.l.b16 %v8246
    %v8286 = vunpack.c.l.b16 %v8247
    %v8287 = vunpack.c.l.b16 %v8248
    %v8288 = vunpack.c.l.b16 %v8249
    %v8289 = vunpack.c.l.b16 %v8250
    %v8290 = vunpack.c.l.b16 %v8251
    %v8291 = vunpack.c.l.b16 %v8252
    %v8292 = vunpack.c.l.b16 %v8253
    %v8293 = vunpack.c.l.b16 %v8254
    %v8294 = vpack.c.b16 %v8279, %v8278
    %v8295 = vpack.c.b16 %v8281, %v8280
    %v8296 = vpack.c.b16 %v8283, %v8282
    %v8297 = vpack.c.b16 %v8285, %v8284
    %v8298 = vpack.c.b16 %v8287, %v8286
    %v8299 = vpack.c.b16 %v8289, %v8288
    %v8300 = vpack.c.b16 %v8291, %v8290
    %v8301 = vpack.c.b16 %v8293, %v8292
    %8310 = vmatprep.subr.bf16.mxu0 0
    %8311 = vmatpush1.bf16.msra.mxu0 %v8301
    %8312 = vmatprep.subr.bf16.mxu0 0
    %8313 = vmatpush1.bf16.msra.mxu0 %v8300
    %8314 = vmatprep.subr.bf16.mxu0 0
    %8315 = vmatpush1.bf16.msra.mxu0 %v8299
    %8316 = vmatprep.subr.bf16.mxu0 0
    %8317 = vmatpush1.bf16.msra.mxu0 %v8298
    %8318 = vmatprep.subr.bf16.mxu0 0
    %8319 = vmatpush1.bf16.msra.mxu0 %v8297
    %8320 = vmatprep.subr.bf16.mxu0 0
    %8321 = vmatpush1.bf16.msra.mxu0 %v8296
    %8322 = vmatprep.subr.bf16.mxu0 0
    %8323 = vmatpush1.bf16.msra.mxu0 %v8295
    %8324 = vmatprep.subr.bf16.mxu0 0
    %8325 = vmatpush1.bf16.msra.mxu0 %v8294
    %8326 = vmatprep.subr.bf16.mxu0 0
    %8327 = vmatpush2.bf16.msra.mxu0 0
    %8328 = vmatprep.subr.bf16.mxu0 0
    %8329 = vmatpush2.bf16.msra.mxu0 0
    %8330 = vmatprep.subr.bf16.mxu0 0
    %8331 = vmatpush2.bf16.msra.mxu0 0
    %8332 = vmatprep.subr.bf16.mxu0 0
    %8333 = vmatpush2.bf16.msra.mxu0 0
    %8334 = vmatprep.subr.bf16.mxu0 0
    %8335 = vmatpush2.bf16.msra.mxu0 0
    %8336 = vmatprep.subr.bf16.mxu0 0
    %8337 = vmatpush2.bf16.msra.mxu0 0
    %8338 = vmatprep.subr.bf16.mxu0 0
    %8339 = vmatpush2.bf16.msra.mxu0 0
    %8340 = vmatprep.subr.bf16.mxu0 0
    %8341 = vmatpush2.bf16.msra.mxu0 0
    %8342 = vmatprep.mubr.bf16.mxu0 0
    %8343 = vmatmul.mubr.bf16.gmra.mxu0 %v8238
    %v8344 = vpop.f32.mrf.mxu0
    %v8345 = vadd.f32 %v8260, %v8344
    %v8346 = vpop.f32.mrf.mxu0
    %v8347 = vpop.f32.mrf.mxu0
    %v8348 = vpop.f32.mrf.mxu0
    %8349 = vdwg.mxu0
    %vm8350 = vcmask 25600
    %v8351 = vsel %vm8350, %v8345, -inf
    %8352 = vmax.xlane.f32.xlu0 %v8351
    %v8353 = vpop.xlane.xlu0 %8352
    %v8354 = vsub.f32 %v8345, %v8353
    %v8355 = vmul.f32 %v8354, 1.442695
    %v8356 = vpow.pop %v8355
    %v8357 = vsel %vm8350, %v8356, 0.0
    %8358 = vadd.xlane.f32.xlu0 %v8357
    %v8359 = vpop.xlane.xlu0 %8358
    %v8360 = vrcp.pop %v8359
    %v8361 = vmul.f32 %v8356, %v8360
    %8362 = vst.msk [vmem:[#allocation5] sm:$0x3] %vm8350, %v8361
    // Predicated region
    $region94: #{forward.1} parent=1 // pred_check
      _
    $region95: #{forward.1} parent=1 // pred_check_branch
      %8364 = sbr.rel (0) target = $region97
    $region96: #{forward.1} parent=1 // pred_region
      %s8366 = ssub.s32 32, 32
      %8367 = vsyncadd [#allocation4], %s8366
      %s8369 = sshll.u32 [#allocation5], 4
      %s8370 = int_to_ptr.vmem [resolvable:$true] %s8369
      %8372 = dma.vmem_to_hbm [thread:$0]  %s8370, 32, %s22, [#allocation4]
    $region97: #{forward.1} parent=1 // pred_fallthru
      _
    // Predicated region
    $region98: #{forward.1} parent=1 // pred_check
      _
    $region99: #{forward.1} parent=1 // pred_check_branch
      %8374 = sbr.rel (0) target = $region101
    $region100: #{forward.1} parent=1 // pred_region
      %8375 = dma.done [#allocation4], 32
    $region101: #{forward.1} parent=1 // pred_fallthru
      _
    %8376 = vsyncpa [#allocation3], 1
    %8377 = vsyncpa [#allocation4], 1

</llo_original>
